<compile_context>
chip_gen: v7x
topology: tpu7x:2x2x1
jax: 0.10.0
libtpu: 0.0.40
codegen_flags: <defaults>
</compile_context>

<pallas_src>
import jax
import jax.numpy as jnp
from jax import lax
from jax.experimental import pallas as pl
from jax.experimental.pallas import tpu as pltpu

INPUT_SIZE = 69
HIDDEN_SIZE = 128
FC1_SIZE = 64
FC1_PAD = 128          # fc1 width padded to one full lane tile
OUT_ROWS = 8           # fc2 LHS padded to a full sublane tile; row 0 is the real one

_PREC = jax.lax.Precision.HIGHEST   # full-f32 MXU passes on all generations


def _make_kernel(T, B_pad, H):
    def kernel(x_ref, wih_ref, whh_ref, brnn_ref,
               w1_ref, b1_ref, w2_ref, b2_ref,
               o_ref, uh_ref):
        # (1) Hoisted input projection for ALL timesteps at once (bias folded in):
        #     UH[t*B_pad + b, :] = x[t, b, :] @ W_ih^T + (b_ih + b_hh)
        uh_ref[...] = (
            jnp.dot(x_ref[...], wih_ref[...],
                    preferred_element_type=jnp.float32, precision=_PREC)
            + brnn_ref[...])

        # (2) Serial recurrence: only h @ W_hh^T is on the critical path.
        whh = whh_ref[...]                       # load once, reused across the unroll

        def step(t, h):
            r0 = pl.multiple_of(t * B_pad, B_pad)
            u_t = uh_ref[pl.ds(r0, B_pad), :]                 # (B_pad, H)
            h_new = jnp.tanh(
                u_t + jnp.dot(h, whh,
                              preferred_element_type=jnp.float32,
                              precision=_PREC))
            uh_ref[pl.ds(r0, B_pad), :] = h_new               # overwrite U_t with h_t
            return h_new

        h0 = jnp.zeros((B_pad, H), jnp.float32)
        lax.fori_loop(0, T, step, h0, unroll=True)

        # (3) Batched head over all (t, b) rows at once; lane-dense everywhere.
        hs = uh_ref[...]                                      # (T*B_pad, H)
        z1 = (jnp.dot(hs, w1_ref[...],
                      preferred_element_type=jnp.float32, precision=_PREC)
              + b1_ref[...])                                  # (T*B_pad, FC1_PAD)
        z1 = jnp.maximum(z1, 0.0)
        # fc2 as w2 @ z1^T -> (OUT_ROWS, T*B_pad) lane-dense output slab; padded w2
        # rows/cols are zero, so only row 0 carries the real result.
        z2 = lax.dot_general(
            w2_ref[...], z1, (((1,), (1,)), ((), ())),
            preferred_element_type=jnp.float32, precision=_PREC) + b2_ref[...]
        o_ref[...] = jax.nn.sigmoid(z2)                       # (OUT_ROWS, T*B_pad)

    return kernel


def prepare_kernel_params(raw):
    """One-time layout work: transpose + zero-pad weights into kernel layout."""
    H, I = raw["w_ih"].shape
    i_pad = pl.cdiv(I, 128) * 128
    return {
        "w_ih_t": jnp.pad(raw["w_ih"].T, ((0, i_pad - I), (0, 0))),        # (I_pad, H)
        "w_hh_t": raw["w_hh"].T,                                           # (H, H)
        "b_rnn": (raw["b_ih"] + raw["b_hh"])[None, :],                     # (1, H)
        "w1_t": jnp.pad(raw["w1"].T, ((0, 0), (0, FC1_PAD - FC1_SIZE))),   # (H, 128)
        "b1": jnp.pad(raw["b1"], (0, FC1_PAD - FC1_SIZE))[None, :],        # (1, 128)
        "w2": jnp.pad(raw["w2"], ((0, OUT_ROWS - 1),
                                  (0, FC1_PAD - FC1_SIZE))),               # (8, 128)
        "b2": raw["b2"][None, :],                                          # (1, 1)
    }


def simple_rnn_forward(x, kp):
    """x: (B, T, input_size) float32 -> (B, T, 1) float32."""
    B, T, I = x.shape
    H = kp["w_hh_t"].shape[0]
    I_pad = kp["w_ih_t"].shape[0]
    B_pad = pl.cdiv(B, 8) * 8
    R = T * B_pad

    # Time-major, (t, b) flattened to rows, zero-padded to whole (8, 128) tiles.
    x_tm = jnp.transpose(x, (1, 0, 2))                                  # (T, B, I)
    x_tm = jnp.pad(x_tm, ((0, 0), (0, B_pad - B), (0, I_pad - I)))
    x_flat = x_tm.reshape(R, I_pad)

    full2d = lambda i: (0, 0)
    out = pl.pallas_call(
        _make_kernel(T, B_pad, H),
        out_shape=jax.ShapeDtypeStruct((OUT_ROWS, R), jnp.float32),
        grid_spec=pltpu.PrefetchScalarGridSpec(
            num_scalar_prefetch=0,
            grid=(1,),
            in_specs=[
                pl.BlockSpec((R, I_pad), full2d),           # x (time-major, padded)
                pl.BlockSpec((I_pad, H), full2d),           # W_ih^T (padded rows)
                pl.BlockSpec((H, H), full2d),               # W_hh^T
                pl.BlockSpec((1, H), full2d),               # b_ih + b_hh
                pl.BlockSpec((H, FC1_PAD), full2d),         # fc1 W^T (padded cols)
                pl.BlockSpec((1, FC1_PAD), full2d),         # fc1 b (padded)
                pl.BlockSpec((OUT_ROWS, FC1_PAD), full2d),  # fc2 W (row 0 real)
                pl.BlockSpec((1, 1), full2d),               # fc2 b
            ],
            out_specs=pl.BlockSpec((OUT_ROWS, R), full2d),  # lane-dense output slab
            scratch_shapes=[
                pltpu.VMEM((R, H), jnp.float32),            # U, overwritten with h_t
            ],
        ),
        compiler_params=pltpu.CompilerParams(
            dimension_semantics=("arbitrary",),
        ),
    )(x_flat, kp["w_ih_t"], kp["w_hh_t"], kp["b_rnn"],
      kp["w1_t"], kp["b1"], kp["w2"], kp["b2"])

    out = out[0].reshape(T, B_pad)[:, :B]                   # drop padded batch cols
    return jnp.transpose(out, (1, 0))[:, :, None]            # (B, T, 1)


def init_params(key, input_size=INPUT_SIZE, hidden_size=HIDDEN_SIZE):
    """Raw weights in PyTorch layout (nn.RNN / nn.Linear default init ranges)."""
    ks = jax.random.split(key, 8)
    s_rnn = 1.0 / jnp.sqrt(hidden_size)
    s_fc1 = 1.0 / jnp.sqrt(hidden_size)
    s_fc2 = 1.0 / jnp.sqrt(FC1_SIZE)
    u = lambda k, shape, s: jax.random.uniform(k, shape, jnp.float32, -s, s)
    return {
        "w_ih": u(ks[0], (hidden_size, input_size), s_rnn),
        "w_hh": u(ks[1], (hidden_size, hidden_size), s_rnn),
        "b_ih": u(ks[2], (hidden_size,), s_rnn),
        "b_hh": u(ks[3], (hidden_size,), s_rnn),
        "w1":   u(ks[4], (FC1_SIZE, hidden_size), s_fc1),
        "b1":   u(ks[5], (FC1_SIZE,), s_fc1),
        "w2":   u(ks[6], (1, FC1_SIZE), s_fc2),
        "b2":   u(ks[7], (1,), s_fc2),
    }


def _reference_forward(x, raw):
    """Pure-JAX reference reproducing the PyTorch semantics (same precision)."""
    B, T, _ = x.shape
    H = raw["w_hh"].shape[0]
    w_ih_t, w_hh_t = raw["w_ih"].T, raw["w_hh"].T
    b_rnn = raw["b_ih"] + raw["b_hh"]
    h = jnp.zeros((B, H), jnp.float32)
    outs = []
    for t in range(T):
        h = jnp.tanh(jnp.dot(x[:, t, :], w_ih_t, precision=_PREC)
                     + jnp.dot(h, w_hh_t, precision=_PREC) + b_rnn)
        z1 = jnp.maximum(jnp.dot(h, raw["w1"].T, precision=_PREC) + raw["b1"], 0.0)
        z2 = jnp.dot(z1, raw["w2"].T, precision=_PREC) + raw["b2"]
        outs.append(jax.nn.sigmoid(z2))
    return jnp.stack(outs, axis=1)                           # (B, T, 1)


if __name__ == "__main__":
    key = jax.random.PRNGKey(0)
    kx, kparam = jax.random.split(key)

    B, T = 2, 8
    x = jax.random.normal(kx, (B, T, INPUT_SIZE), jnp.float32)
    raw = init_params(kparam)
    kp = prepare_kernel_params(raw)

    out = jax.block_until_ready(simple_rnn_forward(x, kp))
    ref = _reference_forward(x, raw)

    assert out.shape == (B, T, 1), out.shape
    assert jnp.allclose(out, ref, atol=1e-5, rtol=1e-5), "mismatch vs reference"

    print("KERNEL_OK")
</pallas_src>

<mosaic_0001>
module attributes {stable_mosaic.version = 11 : i64} {
  func.func @kernel(%arg0: i32, %arg1: memref<64x128xf32, #tpu.memory_space<vmem>>, %arg2: memref<128x128xf32, #tpu.memory_space<vmem>>, %arg3: memref<128x128xf32, #tpu.memory_space<vmem>>, %arg4: memref<1x128xf32, #tpu.memory_space<vmem>>, %arg5: memref<128x128xf32, #tpu.memory_space<vmem>>, %arg6: memref<1x128xf32, #tpu.memory_space<vmem>>, %arg7: memref<8x128xf32, #tpu.memory_space<vmem>>, %arg8: memref<1x1xf32, #tpu.memory_space<vmem>>, %arg9: memref<8x64xf32, #tpu.memory_space<vmem>>, %arg10: memref<64x128xf32, #tpu.memory_space<vmem>>) attributes {dimension_semantics = [#tpu.dimension_semantics<arbitrary>], iteration_bounds = array<i64: 1>, scalar_prefetch = 0 : i64, scratch_operands = 1 : i64, tpu.core_type = #tpu.core_type<tc>, window_params = [{pipeline_mode = #tpu.pipeline_mode<synchronous>, transform_indices = @transform_0, window_bounds = array<i64: 64, 128>}, {pipeline_mode = #tpu.pipeline_mode<synchronous>, transform_indices = @transform_1, window_bounds = array<i64: 128, 128>}, {pipeline_mode = #tpu.pipeline_mode<synchronous>, transform_indices = @transform_2, window_bounds = array<i64: 128, 128>}, {pipeline_mode = #tpu.pipeline_mode<synchronous>, transform_indices = @transform_3, window_bounds = array<i64: 1, 128>}, {pipeline_mode = #tpu.pipeline_mode<synchronous>, transform_indices = @transform_4, window_bounds = array<i64: 128, 128>}, {pipeline_mode = #tpu.pipeline_mode<synchronous>, transform_indices = @transform_5, window_bounds = array<i64: 1, 128>}, {pipeline_mode = #tpu.pipeline_mode<synchronous>, transform_indices = @transform_6, window_bounds = array<i64: 8, 128>}, {pipeline_mode = #tpu.pipeline_mode<synchronous>, transform_indices = @transform_7, window_bounds = array<i64: 1, 1>}, {pipeline_mode = #tpu.pipeline_mode<synchronous>, transform_indices = @transform_8, window_bounds = array<i64: 8, 64>}]} {
    %c0 = arith.constant 0 : index
    %c0_0 = arith.constant 0 : index
    %0 = vector.load %arg1[%c0, %c0_0] : memref<64x128xf32, #tpu.memory_space<vmem>>, vector<64x128xf32>
    %c0_1 = arith.constant 0 : index
    %c0_2 = arith.constant 0 : index
    %1 = vector.load %arg2[%c0_1, %c0_2] : memref<128x128xf32, #tpu.memory_space<vmem>>, vector<128x128xf32>
    %cst = arith.constant dense<0.000000e+00> : vector<64x128xf32>
    %2 = tpu.matmul %0, %1, %cst {dimension_numbers = #tpu.dot_dimension_numbers<[1], [0], [0], [1], [0, 0, 1, 1], [], []>, precision = #tpu.contract_precision<fp32>} : vector<64x128xf32>, vector<128x128xf32>, vector<64x128xf32> -> vector<64x128xf32>
    %c0_3 = arith.constant 0 : index
    %c0_4 = arith.constant 0 : index
    %3 = vector.load %arg4[%c0_3, %c0_4] : memref<1x128xf32, #tpu.memory_space<vmem>>, vector<1x128xf32>
    %4 = vector.broadcast %3 : vector<1x128xf32> to vector<64x128xf32>
    %5 = arith.addf %2, %4 : vector<64x128xf32>
    %c0_5 = arith.constant 0 : index
    %c0_6 = arith.constant 0 : index
    %6 = vector.load %arg10[%c0_5, %c0_6] : memref<64x128xf32, #tpu.memory_space<vmem>>, vector<64x128xf32>
    tpu.vector_store %arg10[%c0_5, %c0_6], %5 {strides = array<i32>} : memref<64x128xf32, #tpu.memory_space<vmem>>, vector<64x128xf32>,
    %c0_7 = arith.constant 0 : index
    %c0_8 = arith.constant 0 : index
    %7 = vector.load %arg3[%c0_7, %c0_8] : memref<128x128xf32, #tpu.memory_space<vmem>>, vector<128x128xf32>
    %cst_9 = arith.constant 0.000000e+00 : f32
    %8 = vector.broadcast %cst_9 : f32 to vector<8x128xf32>
    %c0_i32 = arith.constant 0 : i32
    %c8_i32 = arith.constant 8 : i32
    %9 = arith.muli %c0_i32, %c8_i32 : i32
    %10 = tpu.assume_multiple %9, 8 : i32
    %11 = arith.index_cast %10 : i32 to index
    %c0_10 = arith.constant 0 : index
    %12 = vector.load %arg10[%11, %c0_10] : memref<64x128xf32, #tpu.memory_space<vmem>>, vector<8x128xf32>
    %cst_11 = arith.constant dense<0.000000e+00> : vector<8x128xf32>
    %13 = tpu.matmul %8, %7, %cst_11 {dimension_numbers = #tpu.dot_dimension_numbers<[1], [0], [0], [1], [0, 0, 1, 1], [], []>, precision = #tpu.contract_precision<fp32>} : vector<8x128xf32>, vector<128x128xf32>, vector<8x128xf32> -> vector<8x128xf32>
    %14 = arith.addf %12, %13 : vector<8x128xf32>
    %15 = math.tanh %14 : vector<8x128xf32>
    %16 = arith.index_cast %10 : i32 to index
    %c0_12 = arith.constant 0 : index
    %17 = vector.load %arg10[%16, %c0_12] : memref<64x128xf32, #tpu.memory_space<vmem>>, vector<8x128xf32>
    tpu.vector_store %arg10[%16, %c0_12], %15 {strides = array<i32>} : memref<64x128xf32, #tpu.memory_space<vmem>>, vector<8x128xf32>,
    %c1_i32 = arith.constant 1 : i32
    %c8_i32_13 = arith.constant 8 : i32
    %18 = arith.muli %c1_i32, %c8_i32_13 : i32
    %19 = tpu.assume_multiple %18, 8 : i32
    %20 = arith.index_cast %19 : i32 to index
    %c0_14 = arith.constant 0 : index
    %21 = vector.load %arg10[%20, %c0_14] : memref<64x128xf32, #tpu.memory_space<vmem>>, vector<8x128xf32>
    %cst_15 = arith.constant dense<0.000000e+00> : vector<8x128xf32>
    %22 = tpu.matmul %15, %7, %cst_15 {dimension_numbers = #tpu.dot_dimension_numbers<[1], [0], [0], [1], [0, 0, 1, 1], [], []>, precision = #tpu.contract_precision<fp32>} : vector<8x128xf32>, vector<128x128xf32>, vector<8x128xf32> -> vector<8x128xf32>
    %23 = arith.addf %21, %22 : vector<8x128xf32>
    %24 = math.tanh %23 : vector<8x128xf32>
    %25 = arith.index_cast %19 : i32 to index
    %c0_16 = arith.constant 0 : index
    %26 = vector.load %arg10[%25, %c0_16] : memref<64x128xf32, #tpu.memory_space<vmem>>, vector<8x128xf32>
    tpu.vector_store %arg10[%25, %c0_16], %24 {strides = array<i32>} : memref<64x128xf32, #tpu.memory_space<vmem>>, vector<8x128xf32>,
    %c2_i32 = arith.constant 2 : i32
    %c8_i32_17 = arith.constant 8 : i32
    %27 = arith.muli %c2_i32, %c8_i32_17 : i32
    %28 = tpu.assume_multiple %27, 8 : i32
    %29 = arith.index_cast %28 : i32 to index
    %c0_18 = arith.constant 0 : index
    %30 = vector.load %arg10[%29, %c0_18] : memref<64x128xf32, #tpu.memory_space<vmem>>, vector<8x128xf32>
    %cst_19 = arith.constant dense<0.000000e+00> : vector<8x128xf32>
    %31 = tpu.matmul %24, %7, %cst_19 {dimension_numbers = #tpu.dot_dimension_numbers<[1], [0], [0], [1], [0, 0, 1, 1], [], []>, precision = #tpu.contract_precision<fp32>} : vector<8x128xf32>, vector<128x128xf32>, vector<8x128xf32> -> vector<8x128xf32>
    %32 = arith.addf %30, %31 : vector<8x128xf32>
    %33 = math.tanh %32 : vector<8x128xf32>
    %34 = arith.index_cast %28 : i32 to index
    %c0_20 = arith.constant 0 : index
    %35 = vector.load %arg10[%34, %c0_20] : memref<64x128xf32, #tpu.memory_space<vmem>>, vector<8x128xf32>
    tpu.vector_store %arg10[%34, %c0_20], %33 {strides = array<i32>} : memref<64x128xf32, #tpu.memory_space<vmem>>, vector<8x128xf32>,
    %c3_i32 = arith.constant 3 : i32
    %c8_i32_21 = arith.constant 8 : i32
    %36 = arith.muli %c3_i32, %c8_i32_21 : i32
    %37 = tpu.assume_multiple %36, 8 : i32
    %38 = arith.index_cast %37 : i32 to index
    %c0_22 = arith.constant 0 : index
    %39 = vector.load %arg10[%38, %c0_22] : memref<64x128xf32, #tpu.memory_space<vmem>>, vector<8x128xf32>
    %cst_23 = arith.constant dense<0.000000e+00> : vector<8x128xf32>
    %40 = tpu.matmul %33, %7, %cst_23 {dimension_numbers = #tpu.dot_dimension_numbers<[1], [0], [0], [1], [0, 0, 1, 1], [], []>, precision = #tpu.contract_precision<fp32>} : vector<8x128xf32>, vector<128x128xf32>, vector<8x128xf32> -> vector<8x128xf32>
    %41 = arith.addf %39, %40 : vector<8x128xf32>
    %42 = math.tanh %41 : vector<8x128xf32>
    %43 = arith.index_cast %37 : i32 to index
    %c0_24 = arith.constant 0 : index
    %44 = vector.load %arg10[%43, %c0_24] : memref<64x128xf32, #tpu.memory_space<vmem>>, vector<8x128xf32>
    tpu.vector_store %arg10[%43, %c0_24], %42 {strides = array<i32>} : memref<64x128xf32, #tpu.memory_space<vmem>>, vector<8x128xf32>,
    %c4_i32 = arith.constant 4 : i32
    %c8_i32_25 = arith.constant 8 : i32
    %45 = arith.muli %c4_i32, %c8_i32_25 : i32
    %46 = tpu.assume_multiple %45, 8 : i32
    %47 = arith.index_cast %46 : i32 to index
    %c0_26 = arith.constant 0 : index
    %48 = vector.load %arg10[%47, %c0_26] : memref<64x128xf32, #tpu.memory_space<vmem>>, vector<8x128xf32>
    %cst_27 = arith.constant dense<0.000000e+00> : vector<8x128xf32>
    %49 = tpu.matmul %42, %7, %cst_27 {dimension_numbers = #tpu.dot_dimension_numbers<[1], [0], [0], [1], [0, 0, 1, 1], [], []>, precision = #tpu.contract_precision<fp32>} : vector<8x128xf32>, vector<128x128xf32>, vector<8x128xf32> -> vector<8x128xf32>
    %50 = arith.addf %48, %49 : vector<8x128xf32>
    %51 = math.tanh %50 : vector<8x128xf32>
    %52 = arith.index_cast %46 : i32 to index
    %c0_28 = arith.constant 0 : index
    %53 = vector.load %arg10[%52, %c0_28] : memref<64x128xf32, #tpu.memory_space<vmem>>, vector<8x128xf32>
    tpu.vector_store %arg10[%52, %c0_28], %51 {strides = array<i32>} : memref<64x128xf32, #tpu.memory_space<vmem>>, vector<8x128xf32>,
    %c5_i32 = arith.constant 5 : i32
    %c8_i32_29 = arith.constant 8 : i32
    %54 = arith.muli %c5_i32, %c8_i32_29 : i32
    %55 = tpu.assume_multiple %54, 8 : i32
    %56 = arith.index_cast %55 : i32 to index
    %c0_30 = arith.constant 0 : index
    %57 = vector.load %arg10[%56, %c0_30] : memref<64x128xf32, #tpu.memory_space<vmem>>, vector<8x128xf32>
    %cst_31 = arith.constant dense<0.000000e+00> : vector<8x128xf32>
    %58 = tpu.matmul %51, %7, %cst_31 {dimension_numbers = #tpu.dot_dimension_numbers<[1], [0], [0], [1], [0, 0, 1, 1], [], []>, precision = #tpu.contract_precision<fp32>} : vector<8x128xf32>, vector<128x128xf32>, vector<8x128xf32> -> vector<8x128xf32>
    %59 = arith.addf %57, %58 : vector<8x128xf32>
    %60 = math.tanh %59 : vector<8x128xf32>
    %61 = arith.index_cast %55 : i32 to index
    %c0_32 = arith.constant 0 : index
    %62 = vector.load %arg10[%61, %c0_32] : memref<64x128xf32, #tpu.memory_space<vmem>>, vector<8x128xf32>
    tpu.vector_store %arg10[%61, %c0_32], %60 {strides = array<i32>} : memref<64x128xf32, #tpu.memory_space<vmem>>, vector<8x128xf32>,
    %c6_i32 = arith.constant 6 : i32
    %c8_i32_33 = arith.constant 8 : i32
    %63 = arith.muli %c6_i32, %c8_i32_33 : i32
    %64 = tpu.assume_multiple %63, 8 : i32
    %65 = arith.index_cast %64 : i32 to index
    %c0_34 = arith.constant 0 : index
    %66 = vector.load %arg10[%65, %c0_34] : memref<64x128xf32, #tpu.memory_space<vmem>>, vector<8x128xf32>
    %cst_35 = arith.constant dense<0.000000e+00> : vector<8x128xf32>
    %67 = tpu.matmul %60, %7, %cst_35 {dimension_numbers = #tpu.dot_dimension_numbers<[1], [0], [0], [1], [0, 0, 1, 1], [], []>, precision = #tpu.contract_precision<fp32>} : vector<8x128xf32>, vector<128x128xf32>, vector<8x128xf32> -> vector<8x128xf32>
    %68 = arith.addf %66, %67 : vector<8x128xf32>
    %69 = math.tanh %68 : vector<8x128xf32>
    %70 = arith.index_cast %64 : i32 to index
    %c0_36 = arith.constant 0 : index
    %71 = vector.load %arg10[%70, %c0_36] : memref<64x128xf32, #tpu.memory_space<vmem>>, vector<8x128xf32>
    tpu.vector_store %arg10[%70, %c0_36], %69 {strides = array<i32>} : memref<64x128xf32, #tpu.memory_space<vmem>>, vector<8x128xf32>,
    %c7_i32 = arith.constant 7 : i32
    %c8_i32_37 = arith.constant 8 : i32
    %72 = arith.muli %c7_i32, %c8_i32_37 : i32
    %73 = tpu.assume_multiple %72, 8 : i32
    %74 = arith.index_cast %73 : i32 to index
    %c0_38 = arith.constant 0 : index
    %75 = vector.load %arg10[%74, %c0_38] : memref<64x128xf32, #tpu.memory_space<vmem>>, vector<8x128xf32>
    %cst_39 = arith.constant dense<0.000000e+00> : vector<8x128xf32>
    %76 = tpu.matmul %69, %7, %cst_39 {dimension_numbers = #tpu.dot_dimension_numbers<[1], [0], [0], [1], [0, 0, 1, 1], [], []>, precision = #tpu.contract_precision<fp32>} : vector<8x128xf32>, vector<128x128xf32>, vector<8x128xf32> -> vector<8x128xf32>
    %77 = arith.addf %75, %76 : vector<8x128xf32>
    %78 = math.tanh %77 : vector<8x128xf32>
    %79 = arith.index_cast %73 : i32 to index
    %c0_40 = arith.constant 0 : index
    %80 = vector.load %arg10[%79, %c0_40] : memref<64x128xf32, #tpu.memory_space<vmem>>, vector<8x128xf32>
    tpu.vector_store %arg10[%79, %c0_40], %78 {strides = array<i32>} : memref<64x128xf32, #tpu.memory_space<vmem>>, vector<8x128xf32>,
    %c8_i32_41 = arith.constant 8 : i32
    %c0_42 = arith.constant 0 : index
    %c0_43 = arith.constant 0 : index
    %81 = vector.load %arg10[%c0_42, %c0_43] : memref<64x128xf32, #tpu.memory_space<vmem>>, vector<64x128xf32>
    %c0_44 = arith.constant 0 : index
    %c0_45 = arith.constant 0 : index
    %82 = vector.load %arg5[%c0_44, %c0_45] : memref<128x128xf32, #tpu.memory_space<vmem>>, vector<128x128xf32>
    %cst_46 = arith.constant dense<0.000000e+00> : vector<64x128xf32>
    %83 = tpu.matmul %81, %82, %cst_46 {dimension_numbers = #tpu.dot_dimension_numbers<[1], [0], [0], [1], [0, 0, 1, 1], [], []>, precision = #tpu.contract_precision<fp32>} : vector<64x128xf32>, vector<128x128xf32>, vector<64x128xf32> -> vector<64x128xf32>
    %c0_47 = arith.constant 0 : index
    %c0_48 = arith.constant 0 : index
    %84 = vector.load %arg6[%c0_47, %c0_48] : memref<1x128xf32, #tpu.memory_space<vmem>>, vector<1x128xf32>
    %85 = vector.broadcast %84 : vector<1x128xf32> to vector<64x128xf32>
    %86 = arith.addf %83, %85 : vector<64x128xf32>
    %cst_49 = arith.constant 0.000000e+00 : f32
    %87 = vector.broadcast %cst_49 : f32 to vector<64x128xf32>
    %88 = arith.maximumf %86, %87 : vector<64x128xf32>
    %c0_50 = arith.constant 0 : index
    %c0_51 = arith.constant 0 : index
    %89 = vector.load %arg7[%c0_50, %c0_51] : memref<8x128xf32, #tpu.memory_space<vmem>>, vector<8x128xf32>
    %cst_52 = arith.constant dense<0.000000e+00> : vector<8x64xf32>
    %90 = tpu.matmul %89, %88, %cst_52 {dimension_numbers = #tpu.dot_dimension_numbers<[1], [1], [0], [0], [0, 0, 1, 0], [], []>, precision = #tpu.contract_precision<fp32>} : vector<8x128xf32>, vector<64x128xf32>, vector<8x64xf32> -> vector<8x64xf32>
    %c0_53 = arith.constant 0 : index
    %c0_54 = arith.constant 0 : index
    %91 = vector.load %arg8[%c0_53, %c0_54] : memref<1x1xf32, #tpu.memory_space<vmem>>, vector<1x1xf32>
    %92 = vector.broadcast %91 : vector<1x1xf32> to vector<8x64xf32>
    %93 = arith.addf %90, %92 : vector<8x64xf32>
    %94 = arith.negf %93 : vector<8x64xf32>
    %95 = math.exp %94 : vector<8x64xf32>
    %cst_55 = arith.constant 1.000000e+00 : f32
    %96 = vector.broadcast %cst_55 : f32 to vector<8x64xf32>
    %97 = arith.addf %96, %95 : vector<8x64xf32>
    %98 = arith.divf %96, %97 : vector<8x64xf32>
    %c0_56 = arith.constant 0 : index
    %c0_57 = arith.constant 0 : index
    %99 = vector.load %arg9[%c0_56, %c0_57] : memref<8x64xf32, #tpu.memory_space<vmem>>, vector<8x64xf32>
    tpu.vector_store %arg9[%c0_56, %c0_57], %98 {strides = array<i32>} : memref<8x64xf32, #tpu.memory_space<vmem>>, vector<8x64xf32>,
    return
  }
  func.func @transform_0(%arg0: i32) -> (i32, i32) {
    %c0_i32 = arith.constant 0 : i32
    %c0_i32_0 = arith.constant 0 : i32
    %c0_i32_1 = arith.constant 0 : i32
    return %c0_i32, %c0_i32_0 : i32, i32
  }
  func.func @transform_1(%arg0: i32) -> (i32, i32) {
    %c0_i32 = arith.constant 0 : i32
    %c0_i32_0 = arith.constant 0 : i32
    %c0_i32_1 = arith.constant 0 : i32
    return %c0_i32, %c0_i32_0 : i32, i32
  }
  func.func @transform_2(%arg0: i32) -> (i32, i32) {
    %c0_i32 = arith.constant 0 : i32
    %c0_i32_0 = arith.constant 0 : i32
    %c0_i32_1 = arith.constant 0 : i32
    return %c0_i32, %c0_i32_0 : i32, i32
  }
  func.func @transform_3(%arg0: i32) -> (i32, i32) {
    %c0_i32 = arith.constant 0 : i32
    %c0_i32_0 = arith.constant 0 : i32
    %c0_i32_1 = arith.constant 0 : i32
    return %c0_i32, %c0_i32_0 : i32, i32
  }
  func.func @transform_4(%arg0: i32) -> (i32, i32) {
    %c0_i32 = arith.constant 0 : i32
    %c0_i32_0 = arith.constant 0 : i32
    %c0_i32_1 = arith.constant 0 : i32
    return %c0_i32, %c0_i32_0 : i32, i32
  }
  func.func @transform_5(%arg0: i32) -> (i32, i32) {
    %c0_i32 = arith.constant 0 : i32
    %c0_i32_0 = arith.constant 0 : i32
    %c0_i32_1 = arith.constant 0 : i32
    return %c0_i32, %c0_i32_0 : i32, i32
  }
  func.func @transform_6(%arg0: i32) -> (i32, i32) {
    %c0_i32 = arith.constant 0 : i32
    %c0_i32_0 = arith.constant 0 : i32
    %c0_i32_1 = arith.constant 0 : i32
    return %c0_i32, %c0_i32_0 : i32, i32
  }
  func.func @transform_7(%arg0: i32) -> (i32, i32) {
    %c0_i32 = arith.constant 0 : i32
    %c0_i32_0 = arith.constant 0 : i32
    %c0_i32_1 = arith.constant 0 : i32
    return %c0_i32, %c0_i32_0 : i32, i32
  }
  func.func @transform_8(%arg0: i32) -> (i32, i32) {
    %c0_i32 = arith.constant 0 : i32
    %c0_i32_0 = arith.constant 0 : i32
    %c0_i32_1 = arith.constant 0 : i32
    return %c0_i32, %c0_i32_0 : i32, i32
  }
}

</mosaic_0001>

<llo_original>
// kernel: tpu_custom_call.1
$region0: #{tpu_custom_call.1}
  #allocation0 [shape = 'u32[]', space=smem, size = 0x4, offset = 0x4, fixed_abs, tag = 'smem constant byte address 0x4 - core index']
  #allocation1 [shape = 'u32[144,128]{1,0:T(1,128)}', space=vmem, size = 0x12000, scoped, tag = 'internal scratch']
  #allocation2 [shape = 'f32[64,128]{1,0:T(8,128)}', space=vmem, size = 0x8000, scoped, tag = 'scratch operand']
  #allocation3 [shape = 'f32[1,1]{1,0:T(1,128)S(1)}', space=vmem, size = 0x200, scoped, tag = 'scoped memory for tpu_custom_call.1']
  %s0 = inlined_call_operand.hbm [shape: f32[64,128], index: 0, kind: input, shape index: {}]
  %s1 = inlined_call_operand.hbm [shape: f32[128,128], index: 1, kind: input, shape index: {}]
  %s2 = inlined_call_operand.hbm [shape: f32[128,128], index: 2, kind: input, shape index: {}]
  %s3 = inlined_call_operand.vmem [shape: f32[1,128], index: 3, kind: input, shape index: {}]
  %s4 = inlined_call_operand.hbm [shape: f32[128,128], index: 4, kind: input, shape index: {}]
  %s5 = inlined_call_operand.vmem [shape: f32[1,128], index: 5, kind: input, shape index: {}]
  %s6 = inlined_call_operand.vmem [shape: f32[8,128], index: 6, kind: input, shape index: {}]
  %s7 = inlined_call_operand.<no memory space> [shape: f32[1,1], index: 7, kind: input, shape index: {}]
  %s8 = inlined_call_operand.hbm [shape: f32[8,64], index: 8, kind: output, shape index: {}]
  %s9 = sld [smem:[#allocation0]]
  $region58: #{tpu_custom_call.1} parent=0
    _
  %s11 = ssub.s32 1, %s9
  %s12 = scalar_select 0, %s11, %s9
  %v13 = vstv %s7
  %14 = vst [vmem:[#allocation3] sm:$0x1] %v13
  $region1: #{tpu_custom_call.1} parent=0
    #allocation4 [shape = 'u8[32768]{0}', space=vmem, size = 0x8000, scoped, tag = 'input window, operand 0, single buffered']
    #allocation5 [shape = 's32[1]{0}', space=sflag, size = 0x4, scoped, tag = 'scoped memory for tpu_custom_call.1']
    #allocation6 [shape = 's32[1]{0}', space=sflag, size = 0x4, scoped, tag = 'scoped memory for tpu_custom_call.1']
    #allocation7 [shape = 'u8[65536]{0}', space=vmem, size = 0x10000, scoped, tag = 'input window, operand 1, single buffered']
    #allocation8 [shape = 's32[1]{0}', space=sflag, size = 0x4, scoped, tag = 'scoped memory for tpu_custom_call.1']
    #allocation9 [shape = 'u8[65536]{0}', space=vmem, size = 0x10000, scoped, tag = 'input window, operand 2, single buffered']
    #allocation10 [shape = 'u8[65536]{0}', space=vmem, size = 0x10000, scoped, tag = 'input window, operand 4, single buffered']
    #allocation11 [shape = 's32[1]{0}', space=sflag, size = 0x4, scoped, tag = 'scoped memory for tpu_custom_call.1']
    #allocation12 [shape = 'u8[4096]{0}', space=vmem, size = 0x1000, scoped, tag = 'output window, operand 0, single buffered']
    %15 = vsyncpa [#allocation5], 0
    %16 = vsyncpa [#allocation8], 0
    %17 = vsyncpa [#allocation11], 0
    %18 = vsyncpa [#allocation6], 0
    // Predicated region
    $region2: #{tpu_custom_call.1} parent=1 // pred_check
      _
    $region3: #{tpu_custom_call.1} parent=1 // pred_check_branch
      %20 = sbr.rel (0) target = $region5
    $region4: #{tpu_custom_call.1} parent=1 // pred_region
      %s22 = ssub.s32 1024, 1024
      %23 = vsyncadd [#allocation5], %s22
      %s24 = sshll.u32 [#allocation4], 4
      %s25 = int_to_ptr.vmem [resolvable:$true] %s24
      %30 = dma.hbm_to_vmem [thread:$0]  %s0, 1024, %s25, [#allocation5], 128, 128, 8
    $region5: #{tpu_custom_call.1} parent=1 // pred_fallthru
      _
    // Predicated region
    $region6: #{tpu_custom_call.1} parent=1 // pred_check
      _
    $region7: #{tpu_custom_call.1} parent=1 // pred_check_branch
      %32 = sbr.rel (0) target = $region9
    $region8: #{tpu_custom_call.1} parent=1 // pred_region
      %s34 = ssub.s32 2048, 2048
      %35 = vsyncadd [#allocation8], %s34
      %s36 = sshll.u32 [#allocation7], 4
      %s37 = int_to_ptr.vmem [resolvable:$true] %s36
      %42 = dma.hbm_to_vmem [thread:$0]  %s1, 2048, %s37, [#allocation8], 128, 128, 8
    $region9: #{tpu_custom_call.1} parent=1 // pred_fallthru
      _
    // Predicated region
    $region10: #{tpu_custom_call.1} parent=1 // pred_check
      _
    $region11: #{tpu_custom_call.1} parent=1 // pred_check_branch
      %44 = sbr.rel (0) target = $region13
    $region12: #{tpu_custom_call.1} parent=1 // pred_region
      %s46 = ssub.s32 2048, 2048
      %47 = vsyncadd [#allocation8], %s46
      %s48 = sshll.u32 [#allocation9], 4
      %s49 = int_to_ptr.vmem [resolvable:$true] %s48
      %54 = dma.hbm_to_vmem [thread:$0]  %s2, 2048, %s49, [#allocation8], 128, 128, 8
    $region13: #{tpu_custom_call.1} parent=1 // pred_fallthru
      _
    // Predicated region
    $region14: #{tpu_custom_call.1} parent=1 // pred_check
      _
    $region15: #{tpu_custom_call.1} parent=1 // pred_check_branch
      %56 = sbr.rel (0) target = $region17
    $region16: #{tpu_custom_call.1} parent=1 // pred_region
      _
    $region17: #{tpu_custom_call.1} parent=1 // pred_fallthru
      _
    // Predicated region
    $region18: #{tpu_custom_call.1} parent=1 // pred_check
      _
    $region19: #{tpu_custom_call.1} parent=1 // pred_check_branch
      %58 = sbr.rel (0) target = $region21
    $region20: #{tpu_custom_call.1} parent=1 // pred_region
      %s60 = ssub.s32 2048, 2048
      %61 = vsyncadd [#allocation11], %s60
      %s62 = sshll.u32 [#allocation10], 4
      %s63 = int_to_ptr.vmem [resolvable:$true] %s62
      %68 = dma.hbm_to_vmem [thread:$0]  %s4, 2048, %s63, [#allocation11], 128, 128, 8
    $region21: #{tpu_custom_call.1} parent=1 // pred_fallthru
      _
    // Predicated region
    $region22: #{tpu_custom_call.1} parent=1 // pred_check
      _
    $region23: #{tpu_custom_call.1} parent=1 // pred_check_branch
      %70 = sbr.rel (0) target = $region25
    $region24: #{tpu_custom_call.1} parent=1 // pred_region
      _
    $region25: #{tpu_custom_call.1} parent=1 // pred_fallthru
      _
    // Predicated region
    $region26: #{tpu_custom_call.1} parent=1 // pred_check
      _
    $region27: #{tpu_custom_call.1} parent=1 // pred_check_branch
      %72 = sbr.rel (0) target = $region29
    $region28: #{tpu_custom_call.1} parent=1 // pred_region
      _
    $region29: #{tpu_custom_call.1} parent=1 // pred_fallthru
      _
    // Predicated region
    $region30: #{tpu_custom_call.1} parent=1 // pred_check
      _
    $region31: #{tpu_custom_call.1} parent=1 // pred_check_branch
      %74 = sbr.rel (0) target = $region33
    $region32: #{tpu_custom_call.1} parent=1 // pred_region
      _
    $region33: #{tpu_custom_call.1} parent=1 // pred_fallthru
      _
    // Predicated region
    $region34: #{tpu_custom_call.1} parent=1 // pred_check
      _
    $region35: #{tpu_custom_call.1} parent=1 // pred_check_branch
      %76 = sbr.rel (0) target = $region37
    $region36: #{tpu_custom_call.1} parent=1 // pred_region
      %77 = dma.done [#allocation5], 1024
    $region37: #{tpu_custom_call.1} parent=1 // pred_fallthru
      _
    // Predicated region
    $region38: #{tpu_custom_call.1} parent=1 // pred_check
      _
    $region39: #{tpu_custom_call.1} parent=1 // pred_check_branch
      %79 = sbr.rel (0) target = $region41
    $region40: #{tpu_custom_call.1} parent=1 // pred_region
      %80 = dma.done [#allocation8], 2048
    $region41: #{tpu_custom_call.1} parent=1 // pred_fallthru
      _
    // Predicated region
    $region42: #{tpu_custom_call.1} parent=1 // pred_check
      _
    $region43: #{tpu_custom_call.1} parent=1 // pred_check_branch
      %82 = sbr.rel (0) target = $region45
    $region44: #{tpu_custom_call.1} parent=1 // pred_region
      %83 = dma.done [#allocation8], 2048
    $region45: #{tpu_custom_call.1} parent=1 // pred_fallthru
      _
    // Predicated region
    $region46: #{tpu_custom_call.1} parent=1 // pred_check
      _
    $region47: #{tpu_custom_call.1} parent=1 // pred_check_branch
      %85 = sbr.rel (0) target = $region49
    $region48: #{tpu_custom_call.1} parent=1 // pred_region
      %86 = dma.done [#allocation11], 2048
    $region49: #{tpu_custom_call.1} parent=1 // pred_fallthru
      _
    %v87 = vld [vmem:[#allocation4] sm:$0xff]
    %v88 = vld [vmem:[#allocation4 + $0x8] sm:$0xff]
    %v89 = vld [vmem:[#allocation4 + $0x10] sm:$0xff]
    %v90 = vld [vmem:[#allocation4 + $0x18] sm:$0xff]
    %v91 = vld [vmem:[#allocation4 + $0x20] sm:$0xff]
    %v92 = vld [vmem:[#allocation4 + $0x28] sm:$0xff]
    %v93 = vld [vmem:[#allocation4 + $0x30] sm:$0xff]
    %v94 = vld [vmem:[#allocation4 + $0x38] sm:$0xff]
    %v95 = vld [vmem:[#allocation7] sm:$0xff]
    %v96 = vld [vmem:[#allocation7 + $0x8] sm:$0xff]
    %v97 = vld [vmem:[#allocation7 + $0x10] sm:$0xff]
    %v98 = vld [vmem:[#allocation7 + $0x18] sm:$0xff]
    %v99 = vld [vmem:[#allocation7 + $0x20] sm:$0xff]
    %v100 = vld [vmem:[#allocation7 + $0x28] sm:$0xff]
    %v101 = vld [vmem:[#allocation7 + $0x30] sm:$0xff]
    %v102 = vld [vmem:[#allocation7 + $0x38] sm:$0xff]
    %v103 = vld [vmem:[#allocation7 + $0x40] sm:$0xff]
    %v104 = vld [vmem:[#allocation7 + $0x48] sm:$0xff]
    %v105 = vld [vmem:[#allocation7 + $0x50] sm:$0xff]
    %v106 = vld [vmem:[#allocation7 + $0x58] sm:$0xff]
    %v107 = vld [vmem:[#allocation7 + $0x60] sm:$0xff]
    %v108 = vld [vmem:[#allocation7 + $0x68] sm:$0xff]
    %v109 = vld [vmem:[#allocation7 + $0x70] sm:$0xff]
    %v110 = vld [vmem:[#allocation7 + $0x78] sm:$0xff]
    %v111 = vld [vmem:[%s3] sm:$0x1]
    %v113 = vlaneseq
    %v114 = vshrl.u32 %v113, 7
    %v115 = vsub.s32 0, %v114
    %v116 = vrot.slane %v111, %v115
    %118 = vmatprep.subr.mxu0 0.0
    %v119 = vand.u32 %v95, 4294901760
    %120 = vmatpush1.msra.mxu0 %v119
    %121 = vmatprep.subr.mxu0 0.0
    %v122 = vand.u32 %v96, 4294901760
    %123 = vmatpush1.msra.mxu0 %v122
    %124 = vmatprep.subr.mxu0 0.0
    %v125 = vand.u32 %v97, 4294901760
    %126 = vmatpush1.msra.mxu0 %v125
    %127 = vmatprep.subr.mxu0 0.0
    %v128 = vand.u32 %v98, 4294901760
    %129 = vmatpush1.msra.mxu0 %v128
    %130 = vmatprep.subr.mxu0 0.0
    %v131 = vand.u32 %v99, 4294901760
    %132 = vmatpush1.msra.mxu0 %v131
    %133 = vmatprep.subr.mxu0 0.0
    %v134 = vand.u32 %v100, 4294901760
    %135 = vmatpush1.msra.mxu0 %v134
    %136 = vmatprep.subr.mxu0 0.0
    %v137 = vand.u32 %v101, 4294901760
    %138 = vmatpush1.msra.mxu0 %v137
    %139 = vmatprep.subr.mxu0 0.0
    %v140 = vand.u32 %v102, 4294901760
    %141 = vmatpush1.msra.mxu0 %v140
    %142 = vmatprep.subr.mxu0 0.0
    %v143 = vand.u32 %v103, 4294901760
    %144 = vmatpush1.msra.mxu0 %v143
    %145 = vmatprep.subr.mxu0 0.0
    %v146 = vand.u32 %v104, 4294901760
    %147 = vmatpush1.msra.mxu0 %v146
    %148 = vmatprep.subr.mxu0 0.0
    %v149 = vand.u32 %v105, 4294901760
    %150 = vmatpush1.msra.mxu0 %v149
    %151 = vmatprep.subr.mxu0 0.0
    %v152 = vand.u32 %v106, 4294901760
    %153 = vmatpush1.msra.mxu0 %v152
    %154 = vmatprep.subr.mxu0 0.0
    %v155 = vand.u32 %v107, 4294901760
    %156 = vmatpush1.msra.mxu0 %v155
    %157 = vmatprep.subr.mxu0 0.0
    %v158 = vand.u32 %v108, 4294901760
    %159 = vmatpush1.msra.mxu0 %v158
    %160 = vmatprep.subr.mxu0 0.0
    %v161 = vand.u32 %v109, 4294901760
    %162 = vmatpush1.msra.mxu0 %v161
    %163 = vmatprep.subr.mxu0 0.0
    %v164 = vand.u32 %v110, 4294901760
    %165 = vmatpush1.msra.mxu0 %v164
    %166 = vmatprep.subr.mxu0 0.0
    %167 = vmatpush1.msra.mxu0 0.0
    %168 = vmatprep.subr.mxu0 0.0
    %169 = vmatpush1.msra.mxu0 0.0
    %170 = vmatprep.subr.mxu0 0.0
    %171 = vmatpush1.msra.mxu0 0.0
    %172 = vmatprep.subr.mxu0 0.0
    %173 = vmatpush1.msra.mxu0 0.0
    %174 = vmatprep.subr.mxu0 0.0
    %175 = vmatpush1.msra.mxu0 0.0
    %176 = vmatprep.subr.mxu0 0.0
    %177 = vmatpush1.msra.mxu0 0.0
    %178 = vmatprep.subr.mxu0 0.0
    %179 = vmatpush1.msra.mxu0 0.0
    %180 = vmatprep.subr.mxu0 0.0
    %181 = vmatpush1.msra.mxu0 0.0
    %182 = vmatprep.subr.mxu0 0.0
    %183 = vmatpush1.msra.mxu0 0.0
    %184 = vmatprep.subr.mxu0 0.0
    %185 = vmatpush1.msra.mxu0 0.0
    %186 = vmatprep.subr.mxu0 0.0
    %187 = vmatpush1.msra.mxu0 0.0
    %188 = vmatprep.subr.mxu0 0.0
    %189 = vmatpush1.msra.mxu0 0.0
    %190 = vmatprep.subr.mxu0 0.0
    %191 = vmatpush1.msra.mxu0 0.0
    %192 = vmatprep.subr.mxu0 0.0
    %193 = vmatpush1.msra.mxu0 0.0
    %194 = vmatprep.subr.mxu0 0.0
    %195 = vmatpush1.msra.mxu0 0.0
    %196 = vmatprep.subr.mxu0 0.0
    %197 = vmatpush1.msra.mxu0 0.0
    %198 = vmatprep.mubr.f32.mxu0 0.0
    %v199 = vand.u32 %v87, 4294901760
    %v200 = vsub.f32 %v87, %v199
    %v201 = vand.u32 %v200, 4294901760
    %v202 = vsub.f32 %v200, %v201
    %v203 = vand.u32 %v202, 4294901760
    %204 = vmatmul.mubr.f32.gmra.mrb[0].mxu0 %v203
    %v205 = vpop.f32.mrb[0].mxu0
    %v206 = vadd.f32 %v116, %v205
    %v207 = vpop.f32.mrb[0].mxu0
    %208 = vmatprep.mubr.f32.mxu0 0.0
    %v209 = vand.u32 %v88, 4294901760
    %v210 = vsub.f32 %v88, %v209
    %v211 = vand.u32 %v210, 4294901760
    %v212 = vsub.f32 %v210, %v211
    %v213 = vand.u32 %v212, 4294901760
    %214 = vmatmul.mubr.f32.gmra.mrb[0].mxu0 %v213
    %v215 = vpop.f32.mrb[0].mxu0
    %v216 = vadd.f32 %v116, %v215
    %v217 = vpop.f32.mrb[0].mxu0
    %218 = vmatprep.mubr.f32.mxu0 0.0
    %v219 = vand.u32 %v89, 4294901760
    %v220 = vsub.f32 %v89, %v219
    %v221 = vand.u32 %v220, 4294901760
    %v222 = vsub.f32 %v220, %v221
    %v223 = vand.u32 %v222, 4294901760
    %224 = vmatmul.mubr.f32.gmra.mrb[0].mxu0 %v223
    %v225 = vpop.f32.mrb[0].mxu0
    %v226 = vadd.f32 %v116, %v225
    %v227 = vpop.f32.mrb[0].mxu0
    %228 = vmatprep.mubr.f32.mxu0 0.0
    %v229 = vand.u32 %v90, 4294901760
    %v230 = vsub.f32 %v90, %v229
    %v231 = vand.u32 %v230, 4294901760
    %v232 = vsub.f32 %v230, %v231
    %v233 = vand.u32 %v232, 4294901760
    %234 = vmatmul.mubr.f32.gmra.mrb[0].mxu0 %v233
    %v235 = vpop.f32.mrb[0].mxu0
    %v236 = vadd.f32 %v116, %v235
    %v237 = vpop.f32.mrb[0].mxu0
    %238 = vmatprep.mubr.f32.mxu0 0.0
    %v239 = vand.u32 %v91, 4294901760
    %v240 = vsub.f32 %v91, %v239
    %v241 = vand.u32 %v240, 4294901760
    %v242 = vsub.f32 %v240, %v241
    %v243 = vand.u32 %v242, 4294901760
    %244 = vmatmul.mubr.f32.gmra.mrb[0].mxu0 %v243
    %v245 = vpop.f32.mrb[0].mxu0
    %v246 = vadd.f32 %v116, %v245
    %v247 = vpop.f32.mrb[0].mxu0
    %248 = vmatprep.mubr.f32.mxu0 0.0
    %v249 = vand.u32 %v92, 4294901760
    %v250 = vsub.f32 %v92, %v249
    %v251 = vand.u32 %v250, 4294901760
    %v252 = vsub.f32 %v250, %v251
    %v253 = vand.u32 %v252, 4294901760
    %254 = vmatmul.mubr.f32.gmra.mrb[0].mxu0 %v253
    %v255 = vpop.f32.mrb[0].mxu0
    %v256 = vadd.f32 %v116, %v255
    %v257 = vpop.f32.mrb[0].mxu0
    %258 = vmatprep.mubr.f32.mxu0 0.0
    %v259 = vand.u32 %v93, 4294901760
    %v260 = vsub.f32 %v93, %v259
    %v261 = vand.u32 %v260, 4294901760
    %v262 = vsub.f32 %v260, %v261
    %v263 = vand.u32 %v262, 4294901760
    %264 = vmatmul.mubr.f32.gmra.mrb[0].mxu0 %v263
    %v265 = vpop.f32.mrb[0].mxu0
    %v266 = vadd.f32 %v116, %v265
    %v267 = vpop.f32.mrb[0].mxu0
    %268 = vmatprep.mubr.f32.mxu0 0.0
    %v269 = vand.u32 %v94, 4294901760
    %v270 = vsub.f32 %v94, %v269
    %v271 = vand.u32 %v270, 4294901760
    %v272 = vsub.f32 %v270, %v271
    %v273 = vand.u32 %v272, 4294901760
    %274 = vmatmul.mubr.f32.gmra.mrb[0].mxu0 %v273
    %v275 = vpop.f32.mrb[0].mxu0
    %v276 = vadd.f32 %v116, %v275
    %v277 = vpop.f32.mrb[0].mxu0
    %278 = vdwg.mxu0
    %279 = vmatprep.subr.mxu0 0.0
    %v280 = vand.u32 %v95, 4294901760
    %v281 = vsub.f32 %v95, %v280
    %v282 = vand.u32 %v281, 4294901760
    %v283 = vsub.f32 %v281, %v282
    %v284 = vand.u32 %v283, 4294901760
    %285 = vmatpush1.msra.mxu0 %v284
    %286 = vmatprep.subr.mxu0 0.0
    %v287 = vand.u32 %v96, 4294901760
    %v288 = vsub.f32 %v96, %v287
    %v289 = vand.u32 %v288, 4294901760
    %v290 = vsub.f32 %v288, %v289
    %v291 = vand.u32 %v290, 4294901760
    %292 = vmatpush1.msra.mxu0 %v291
    %293 = vmatprep.subr.mxu0 0.0
    %v294 = vand.u32 %v97, 4294901760
    %v295 = vsub.f32 %v97, %v294
    %v296 = vand.u32 %v295, 4294901760
    %v297 = vsub.f32 %v295, %v296
    %v298 = vand.u32 %v297, 4294901760
    %299 = vmatpush1.msra.mxu0 %v298
    %300 = vmatprep.subr.mxu0 0.0
    %v301 = vand.u32 %v98, 4294901760
    %v302 = vsub.f32 %v98, %v301
    %v303 = vand.u32 %v302, 4294901760
    %v304 = vsub.f32 %v302, %v303
    %v305 = vand.u32 %v304, 4294901760
    %306 = vmatpush1.msra.mxu0 %v305
    %307 = vmatprep.subr.mxu0 0.0
    %v308 = vand.u32 %v99, 4294901760
    %v309 = vsub.f32 %v99, %v308
    %v310 = vand.u32 %v309, 4294901760
    %v311 = vsub.f32 %v309, %v310
    %v312 = vand.u32 %v311, 4294901760
    %313 = vmatpush1.msra.mxu0 %v312
    %314 = vmatprep.subr.mxu0 0.0
    %v315 = vand.u32 %v100, 4294901760
    %v316 = vsub.f32 %v100, %v315
    %v317 = vand.u32 %v316, 4294901760
    %v318 = vsub.f32 %v316, %v317
    %v319 = vand.u32 %v318, 4294901760
    %320 = vmatpush1.msra.mxu0 %v319
    %321 = vmatprep.subr.mxu0 0.0
    %v322 = vand.u32 %v101, 4294901760
    %v323 = vsub.f32 %v101, %v322
    %v324 = vand.u32 %v323, 4294901760
    %v325 = vsub.f32 %v323, %v324
    %v326 = vand.u32 %v325, 4294901760
    %327 = vmatpush1.msra.mxu0 %v326
    %328 = vmatprep.subr.mxu0 0.0
    %v329 = vand.u32 %v102, 4294901760
    %v330 = vsub.f32 %v102, %v329
    %v331 = vand.u32 %v330, 4294901760
    %v332 = vsub.f32 %v330, %v331
    %v333 = vand.u32 %v332, 4294901760
    %334 = vmatpush1.msra.mxu0 %v333
    %335 = vmatprep.subr.mxu0 0.0
    %v336 = vand.u32 %v103, 4294901760
    %v337 = vsub.f32 %v103, %v336
    %v338 = vand.u32 %v337, 4294901760
    %v339 = vsub.f32 %v337, %v338
    %v340 = vand.u32 %v339, 4294901760
    %341 = vmatpush1.msra.mxu0 %v340
    %342 = vmatprep.subr.mxu0 0.0
    %v343 = vand.u32 %v104, 4294901760
    %v344 = vsub.f32 %v104, %v343
    %v345 = vand.u32 %v344, 4294901760
    %v346 = vsub.f32 %v344, %v345
    %v347 = vand.u32 %v346, 4294901760
    %348 = vmatpush1.msra.mxu0 %v347
    %349 = vmatprep.subr.mxu0 0.0
    %v350 = vand.u32 %v105, 4294901760
    %v351 = vsub.f32 %v105, %v350
    %v352 = vand.u32 %v351, 4294901760
    %v353 = vsub.f32 %v351, %v352
    %v354 = vand.u32 %v353, 4294901760
    %355 = vmatpush1.msra.mxu0 %v354
    %356 = vmatprep.subr.mxu0 0.0
    %v357 = vand.u32 %v106, 4294901760
    %v358 = vsub.f32 %v106, %v357
    %v359 = vand.u32 %v358, 4294901760
    %v360 = vsub.f32 %v358, %v359
    %v361 = vand.u32 %v360, 4294901760
    %362 = vmatpush1.msra.mxu0 %v361
    %363 = vmatprep.subr.mxu0 0.0
    %v364 = vand.u32 %v107, 4294901760
    %v365 = vsub.f32 %v107, %v364
    %v366 = vand.u32 %v365, 4294901760
    %v367 = vsub.f32 %v365, %v366
    %v368 = vand.u32 %v367, 4294901760
    %369 = vmatpush1.msra.mxu0 %v368
    %370 = vmatprep.subr.mxu0 0.0
    %v371 = vand.u32 %v108, 4294901760
    %v372 = vsub.f32 %v108, %v371
    %v373 = vand.u32 %v372, 4294901760
    %v374 = vsub.f32 %v372, %v373
    %v375 = vand.u32 %v374, 4294901760
    %376 = vmatpush1.msra.mxu0 %v375
    %377 = vmatprep.subr.mxu0 0.0
    %v378 = vand.u32 %v109, 4294901760
    %v379 = vsub.f32 %v109, %v378
    %v380 = vand.u32 %v379, 4294901760
    %v381 = vsub.f32 %v379, %v380
    %v382 = vand.u32 %v381, 4294901760
    %383 = vmatpush1.msra.mxu0 %v382
    %384 = vmatprep.subr.mxu0 0.0
    %v385 = vand.u32 %v110, 4294901760
    %v386 = vsub.f32 %v110, %v385
    %v387 = vand.u32 %v386, 4294901760
    %v388 = vsub.f32 %v386, %v387
    %v389 = vand.u32 %v388, 4294901760
    %390 = vmatpush1.msra.mxu0 %v389
    %391 = vmatprep.subr.mxu0 0.0
    %392 = vmatpush1.msra.mxu0 0.0
    %393 = vmatprep.subr.mxu0 0.0
    %394 = vmatpush1.msra.mxu0 0.0
    %395 = vmatprep.subr.mxu0 0.0
    %396 = vmatpush1.msra.mxu0 0.0
    %397 = vmatprep.subr.mxu0 0.0
    %398 = vmatpush1.msra.mxu0 0.0
    %399 = vmatprep.subr.mxu0 0.0
    %400 = vmatpush1.msra.mxu0 0.0
    %401 = vmatprep.subr.mxu0 0.0
    %402 = vmatpush1.msra.mxu0 0.0
    %403 = vmatprep.subr.mxu0 0.0
    %404 = vmatpush1.msra.mxu0 0.0
    %405 = vmatprep.subr.mxu0 0.0
    %406 = vmatpush1.msra.mxu0 0.0
    %407 = vmatprep.subr.mxu0 0.0
    %408 = vmatpush1.msra.mxu0 0.0
    %409 = vmatprep.subr.mxu0 0.0
    %410 = vmatpush1.msra.mxu0 0.0
    %411 = vmatprep.subr.mxu0 0.0
    %412 = vmatpush1.msra.mxu0 0.0
    %413 = vmatprep.subr.mxu0 0.0
    %414 = vmatpush1.msra.mxu0 0.0
    %415 = vmatprep.subr.mxu0 0.0
    %416 = vmatpush1.msra.mxu0 0.0
    %417 = vmatprep.subr.mxu0 0.0
    %418 = vmatpush1.msra.mxu0 0.0
    %419 = vmatprep.subr.mxu0 0.0
    %420 = vmatpush1.msra.mxu0 0.0
    %421 = vmatprep.subr.mxu0 0.0
    %422 = vmatpush1.msra.mxu0 0.0
    %423 = vmatprep.mubr.f32.mxu0 0.0
    %v424 = vand.u32 %v87, 4294901760
    %425 = vmatmul.mubr.f32.gmra.mrb[0].mxu0 %v424
    %v426 = vpop.f32.mrb[0].mxu0
    %v427 = vadd.f32 %v206, %v426
    %v428 = vpop.f32.mrb[0].mxu0
    %429 = vmatprep.mubr.f32.mxu0 0.0
    %v430 = vand.u32 %v88, 4294901760
    %431 = vmatmul.mubr.f32.gmra.mrb[0].mxu0 %v430
    %v432 = vpop.f32.mrb[0].mxu0
    %v433 = vadd.f32 %v216, %v432
    %v434 = vpop.f32.mrb[0].mxu0
    %435 = vmatprep.mubr.f32.mxu0 0.0
    %v436 = vand.u32 %v89, 4294901760
    %437 = vmatmul.mubr.f32.gmra.mrb[0].mxu0 %v436
    %v438 = vpop.f32.mrb[0].mxu0
    %v439 = vadd.f32 %v226, %v438
    %v440 = vpop.f32.mrb[0].mxu0
    %441 = vmatprep.mubr.f32.mxu0 0.0
    %v442 = vand.u32 %v90, 4294901760
    %443 = vmatmul.mubr.f32.gmra.mrb[0].mxu0 %v442
    %v444 = vpop.f32.mrb[0].mxu0
    %v445 = vadd.f32 %v236, %v444
    %v446 = vpop.f32.mrb[0].mxu0
    %447 = vmatprep.mubr.f32.mxu0 0.0
    %v448 = vand.u32 %v91, 4294901760
    %449 = vmatmul.mubr.f32.gmra.mrb[0].mxu0 %v448
    %v450 = vpop.f32.mrb[0].mxu0
    %v451 = vadd.f32 %v246, %v450
    %v452 = vpop.f32.mrb[0].mxu0
    %453 = vmatprep.mubr.f32.mxu0 0.0
    %v454 = vand.u32 %v92, 4294901760
    %455 = vmatmul.mubr.f32.gmra.mrb[0].mxu0 %v454
    %v456 = vpop.f32.mrb[0].mxu0
    %v457 = vadd.f32 %v256, %v456
    %v458 = vpop.f32.mrb[0].mxu0
    %459 = vmatprep.mubr.f32.mxu0 0.0
    %v460 = vand.u32 %v93, 4294901760
    %461 = vmatmul.mubr.f32.gmra.mrb[0].mxu0 %v460
    %v462 = vpop.f32.mrb[0].mxu0
    %v463 = vadd.f32 %v266, %v462
    %v464 = vpop.f32.mrb[0].mxu0
    %465 = vmatprep.mubr.f32.mxu0 0.0
    %v466 = vand.u32 %v94, 4294901760
    %467 = vmatmul.mubr.f32.gmra.mrb[0].mxu0 %v466
    %v468 = vpop.f32.mrb[0].mxu0
    %v469 = vadd.f32 %v276, %v468
    %v470 = vpop.f32.mrb[0].mxu0
    %471 = vdwg.mxu0
    %472 = vmatprep.subr.mxu0 0.0
    %v473 = vand.u32 %v95, 4294901760
    %v474 = vsub.f32 %v95, %v473
    %475 = vmatpush1.msra.mxu0 %v474
    %476 = vmatprep.subr.mxu0 0.0
    %v477 = vand.u32 %v96, 4294901760
    %v478 = vsub.f32 %v96, %v477
    %479 = vmatpush1.msra.mxu0 %v478
    %480 = vmatprep.subr.mxu0 0.0
    %v481 = vand.u32 %v97, 4294901760
    %v482 = vsub.f32 %v97, %v481
    %483 = vmatpush1.msra.mxu0 %v482
    %484 = vmatprep.subr.mxu0 0.0
    %v485 = vand.u32 %v98, 4294901760
    %v486 = vsub.f32 %v98, %v485
    %487 = vmatpush1.msra.mxu0 %v486
    %488 = vmatprep.subr.mxu0 0.0
    %v489 = vand.u32 %v99, 4294901760
    %v490 = vsub.f32 %v99, %v489
    %491 = vmatpush1.msra.mxu0 %v490
    %492 = vmatprep.subr.mxu0 0.0
    %v493 = vand.u32 %v100, 4294901760
    %v494 = vsub.f32 %v100, %v493
    %495 = vmatpush1.msra.mxu0 %v494
    %496 = vmatprep.subr.mxu0 0.0
    %v497 = vand.u32 %v101, 4294901760
    %v498 = vsub.f32 %v101, %v497
    %499 = vmatpush1.msra.mxu0 %v498
    %500 = vmatprep.subr.mxu0 0.0
    %v501 = vand.u32 %v102, 4294901760
    %v502 = vsub.f32 %v102, %v501
    %503 = vmatpush1.msra.mxu0 %v502
    %504 = vmatprep.subr.mxu0 0.0
    %v505 = vand.u32 %v103, 4294901760
    %v506 = vsub.f32 %v103, %v505
    %507 = vmatpush1.msra.mxu0 %v506
    %508 = vmatprep.subr.mxu0 0.0
    %v509 = vand.u32 %v104, 4294901760
    %v510 = vsub.f32 %v104, %v509
    %511 = vmatpush1.msra.mxu0 %v510
    %512 = vmatprep.subr.mxu0 0.0
    %v513 = vand.u32 %v105, 4294901760
    %v514 = vsub.f32 %v105, %v513
    %515 = vmatpush1.msra.mxu0 %v514
    %516 = vmatprep.subr.mxu0 0.0
    %v517 = vand.u32 %v106, 4294901760
    %v518 = vsub.f32 %v106, %v517
    %519 = vmatpush1.msra.mxu0 %v518
    %520 = vmatprep.subr.mxu0 0.0
    %v521 = vand.u32 %v107, 4294901760
    %v522 = vsub.f32 %v107, %v521
    %523 = vmatpush1.msra.mxu0 %v522
    %524 = vmatprep.subr.mxu0 0.0
    %v525 = vand.u32 %v108, 4294901760
    %v526 = vsub.f32 %v108, %v525
    %527 = vmatpush1.msra.mxu0 %v526
    %528 = vmatprep.subr.mxu0 0.0
    %v529 = vand.u32 %v109, 4294901760
    %v530 = vsub.f32 %v109, %v529
    %531 = vmatpush1.msra.mxu0 %v530
    %532 = vmatprep.subr.mxu0 0.0
    %v533 = vand.u32 %v110, 4294901760
    %v534 = vsub.f32 %v110, %v533
    %535 = vmatpush1.msra.mxu0 %v534
    %536 = vmatprep.subr.mxu0 0.0
    %537 = vmatpush1.msra.mxu0 0.0
    %538 = vmatprep.subr.mxu0 0.0
    %539 = vmatpush1.msra.mxu0 0.0
    %540 = vmatprep.subr.mxu0 0.0
    %541 = vmatpush1.msra.mxu0 0.0
    %542 = vmatprep.subr.mxu0 0.0
    %543 = vmatpush1.msra.mxu0 0.0
    %544 = vmatprep.subr.mxu0 0.0
    %545 = vmatpush1.msra.mxu0 0.0
    %546 = vmatprep.subr.mxu0 0.0
    %547 = vmatpush1.msra.mxu0 0.0
    %548 = vmatprep.subr.mxu0 0.0
    %549 = vmatpush1.msra.mxu0 0.0
    %550 = vmatprep.subr.mxu0 0.0
    %551 = vmatpush1.msra.mxu0 0.0
    %552 = vmatprep.subr.mxu0 0.0
    %553 = vmatpush1.msra.mxu0 0.0
    %554 = vmatprep.subr.mxu0 0.0
    %555 = vmatpush1.msra.mxu0 0.0
    %556 = vmatprep.subr.mxu0 0.0
    %557 = vmatpush1.msra.mxu0 0.0
    %558 = vmatprep.subr.mxu0 0.0
    %559 = vmatpush1.msra.mxu0 0.0
    %560 = vmatprep.subr.mxu0 0.0
    %561 = vmatpush1.msra.mxu0 0.0
    %562 = vmatprep.subr.mxu0 0.0
    %563 = vmatpush1.msra.mxu0 0.0
    %564 = vmatprep.subr.mxu0 0.0
    %565 = vmatpush1.msra.mxu0 0.0
    %566 = vmatprep.subr.mxu0 0.0
    %567 = vmatpush1.msra.mxu0 0.0
    %568 = vmatprep.mubr.f32.mxu0 0.0
    %v569 = vand.u32 %v87, 4294901760
    %v570 = vsub.f32 %v87, %v569
    %571 = vmatmul.mubr.f32.gmra.mrb[0].mxu0 %v570
    %v572 = vpop.f32.mrb[0].mxu0
    %v573 = vadd.f32 %v427, %v572
    %v574 = vpop.f32.mrb[0].mxu0
    %575 = vmatprep.mubr.f32.mxu0 0.0
    %v576 = vand.u32 %v88, 4294901760
    %v577 = vsub.f32 %v88, %v576
    %578 = vmatmul.mubr.f32.gmra.mrb[0].mxu0 %v577
    %v579 = vpop.f32.mrb[0].mxu0
    %v580 = vadd.f32 %v433, %v579
    %v581 = vpop.f32.mrb[0].mxu0
    %582 = vmatprep.mubr.f32.mxu0 0.0
    %v583 = vand.u32 %v89, 4294901760
    %v584 = vsub.f32 %v89, %v583
    %585 = vmatmul.mubr.f32.gmra.mrb[0].mxu0 %v584
    %v586 = vpop.f32.mrb[0].mxu0
    %v587 = vadd.f32 %v439, %v586
    %v588 = vpop.f32.mrb[0].mxu0
    %589 = vmatprep.mubr.f32.mxu0 0.0
    %v590 = vand.u32 %v90, 4294901760
    %v591 = vsub.f32 %v90, %v590
    %592 = vmatmul.mubr.f32.gmra.mrb[0].mxu0 %v591
    %v593 = vpop.f32.mrb[0].mxu0
    %v594 = vadd.f32 %v445, %v593
    %v595 = vpop.f32.mrb[0].mxu0
    %596 = vmatprep.mubr.f32.mxu0 0.0
    %v597 = vand.u32 %v91, 4294901760
    %v598 = vsub.f32 %v91, %v597
    %599 = vmatmul.mubr.f32.gmra.mrb[0].mxu0 %v598
    %v600 = vpop.f32.mrb[0].mxu0
    %v601 = vadd.f32 %v451, %v600
    %v602 = vpop.f32.mrb[0].mxu0
    %603 = vmatprep.mubr.f32.mxu0 0.0
    %v604 = vand.u32 %v92, 4294901760
    %v605 = vsub.f32 %v92, %v604
    %606 = vmatmul.mubr.f32.gmra.mrb[0].mxu0 %v605
    %v607 = vpop.f32.mrb[0].mxu0
    %v608 = vadd.f32 %v457, %v607
    %v609 = vpop.f32.mrb[0].mxu0
    %610 = vmatprep.mubr.f32.mxu0 0.0
    %v611 = vand.u32 %v93, 4294901760
    %v612 = vsub.f32 %v93, %v611
    %613 = vmatmul.mubr.f32.gmra.mrb[0].mxu0 %v612
    %v614 = vpop.f32.mrb[0].mxu0
    %v615 = vadd.f32 %v463, %v614
    %v616 = vpop.f32.mrb[0].mxu0
    %617 = vmatprep.mubr.f32.mxu0 0.0
    %v618 = vand.u32 %v94, 4294901760
    %v619 = vsub.f32 %v94, %v618
    %620 = vmatmul.mubr.f32.gmra.mrb[0].mxu0 %v619
    %v621 = vpop.f32.mrb[0].mxu0
    %v622 = vadd.f32 %v469, %v621
    %v623 = vpop.f32.mrb[0].mxu0
    %624 = vdwg.mxu0
    %625 = vmatprep.subr.mxu0 0.0
    %v626 = vand.u32 %v95, 4294901760
    %627 = vmatpush1.msra.mxu0 %v626
    %628 = vmatprep.subr.mxu0 0.0
    %v629 = vand.u32 %v96, 4294901760
    %630 = vmatpush1.msra.mxu0 %v629
    %631 = vmatprep.subr.mxu0 0.0
    %v632 = vand.u32 %v97, 4294901760
    %633 = vmatpush1.msra.mxu0 %v632
    %634 = vmatprep.subr.mxu0 0.0
    %v635 = vand.u32 %v98, 4294901760
    %636 = vmatpush1.msra.mxu0 %v635
    %637 = vmatprep.subr.mxu0 0.0
    %v638 = vand.u32 %v99, 4294901760
    %639 = vmatpush1.msra.mxu0 %v638
    %640 = vmatprep.subr.mxu0 0.0
    %v641 = vand.u32 %v100, 4294901760
    %642 = vmatpush1.msra.mxu0 %v641
    %643 = vmatprep.subr.mxu0 0.0
    %v644 = vand.u32 %v101, 4294901760
    %645 = vmatpush1.msra.mxu0 %v644
    %646 = vmatprep.subr.mxu0 0.0
    %v647 = vand.u32 %v102, 4294901760
    %648 = vmatpush1.msra.mxu0 %v647
    %649 = vmatprep.subr.mxu0 0.0
    %v650 = vand.u32 %v103, 4294901760
    %651 = vmatpush1.msra.mxu0 %v650
    %652 = vmatprep.subr.mxu0 0.0
    %v653 = vand.u32 %v104, 4294901760
    %654 = vmatpush1.msra.mxu0 %v653
    %655 = vmatprep.subr.mxu0 0.0
    %v656 = vand.u32 %v105, 4294901760
    %657 = vmatpush1.msra.mxu0 %v656
    %658 = vmatprep.subr.mxu0 0.0
    %v659 = vand.u32 %v106, 4294901760
    %660 = vmatpush1.msra.mxu0 %v659
    %661 = vmatprep.subr.mxu0 0.0
    %v662 = vand.u32 %v107, 4294901760
    %663 = vmatpush1.msra.mxu0 %v662
    %664 = vmatprep.subr.mxu0 0.0
    %v665 = vand.u32 %v108, 4294901760
    %666 = vmatpush1.msra.mxu0 %v665
    %667 = vmatprep.subr.mxu0 0.0
    %v668 = vand.u32 %v109, 4294901760
    %669 = vmatpush1.msra.mxu0 %v668
    %670 = vmatprep.subr.mxu0 0.0
    %v671 = vand.u32 %v110, 4294901760
    %672 = vmatpush1.msra.mxu0 %v671
    %673 = vmatprep.subr.mxu0 0.0
    %674 = vmatpush1.msra.mxu0 0.0
    %675 = vmatprep.subr.mxu0 0.0
    %676 = vmatpush1.msra.mxu0 0.0
    %677 = vmatprep.subr.mxu0 0.0
    %678 = vmatpush1.msra.mxu0 0.0
    %679 = vmatprep.subr.mxu0 0.0
    %680 = vmatpush1.msra.mxu0 0.0
    %681 = vmatprep.subr.mxu0 0.0
    %682 = vmatpush1.msra.mxu0 0.0
    %683 = vmatprep.subr.mxu0 0.0
    %684 = vmatpush1.msra.mxu0 0.0
    %685 = vmatprep.subr.mxu0 0.0
    %686 = vmatpush1.msra.mxu0 0.0
    %687 = vmatprep.subr.mxu0 0.0
    %688 = vmatpush1.msra.mxu0 0.0
    %689 = vmatprep.subr.mxu0 0.0
    %690 = vmatpush1.msra.mxu0 0.0
    %691 = vmatprep.subr.mxu0 0.0
    %692 = vmatpush1.msra.mxu0 0.0
    %693 = vmatprep.subr.mxu0 0.0
    %694 = vmatpush1.msra.mxu0 0.0
    %695 = vmatprep.subr.mxu0 0.0
    %696 = vmatpush1.msra.mxu0 0.0
    %697 = vmatprep.subr.mxu0 0.0
    %698 = vmatpush1.msra.mxu0 0.0
    %699 = vmatprep.subr.mxu0 0.0
    %700 = vmatpush1.msra.mxu0 0.0
    %701 = vmatprep.subr.mxu0 0.0
    %702 = vmatpush1.msra.mxu0 0.0
    %703 = vmatprep.subr.mxu0 0.0
    %704 = vmatpush1.msra.mxu0 0.0
    %705 = vmatprep.mubr.f32.mxu0 0.0
    %v706 = vand.u32 %v87, 4294901760
    %v707 = vsub.f32 %v87, %v706
    %v708 = vand.u32 %v707, 4294901760
    %709 = vmatmul.mubr.f32.gmra.mrb[0].mxu0 %v708
    %v710 = vpop.f32.mrb[0].mxu0
    %v711 = vadd.f32 %v573, %v710
    %v712 = vpop.f32.mrb[0].mxu0
    %713 = vmatprep.mubr.f32.mxu0 0.0
    %v714 = vand.u32 %v88, 4294901760
    %v715 = vsub.f32 %v88, %v714
    %v716 = vand.u32 %v715, 4294901760
    %717 = vmatmul.mubr.f32.gmra.mrb[0].mxu0 %v716
    %v718 = vpop.f32.mrb[0].mxu0
    %v719 = vadd.f32 %v580, %v718
    %v720 = vpop.f32.mrb[0].mxu0
    %721 = vmatprep.mubr.f32.mxu0 0.0
    %v722 = vand.u32 %v89, 4294901760
    %v723 = vsub.f32 %v89, %v722
    %v724 = vand.u32 %v723, 4294901760
    %725 = vmatmul.mubr.f32.gmra.mrb[0].mxu0 %v724
    %v726 = vpop.f32.mrb[0].mxu0
    %v727 = vadd.f32 %v587, %v726
    %v728 = vpop.f32.mrb[0].mxu0
    %729 = vmatprep.mubr.f32.mxu0 0.0
    %v730 = vand.u32 %v90, 4294901760
    %v731 = vsub.f32 %v90, %v730
    %v732 = vand.u32 %v731, 4294901760
    %733 = vmatmul.mubr.f32.gmra.mrb[0].mxu0 %v732
    %v734 = vpop.f32.mrb[0].mxu0
    %v735 = vadd.f32 %v594, %v734
    %v736 = vpop.f32.mrb[0].mxu0
    %737 = vmatprep.mubr.f32.mxu0 0.0
    %v738 = vand.u32 %v91, 4294901760
    %v739 = vsub.f32 %v91, %v738
    %v740 = vand.u32 %v739, 4294901760
    %741 = vmatmul.mubr.f32.gmra.mrb[0].mxu0 %v740
    %v742 = vpop.f32.mrb[0].mxu0
    %v743 = vadd.f32 %v601, %v742
    %v744 = vpop.f32.mrb[0].mxu0
    %745 = vmatprep.mubr.f32.mxu0 0.0
    %v746 = vand.u32 %v92, 4294901760
    %v747 = vsub.f32 %v92, %v746
    %v748 = vand.u32 %v747, 4294901760
    %749 = vmatmul.mubr.f32.gmra.mrb[0].mxu0 %v748
    %v750 = vpop.f32.mrb[0].mxu0
    %v751 = vadd.f32 %v608, %v750
    %v752 = vpop.f32.mrb[0].mxu0
    %753 = vmatprep.mubr.f32.mxu0 0.0
    %v754 = vand.u32 %v93, 4294901760
    %v755 = vsub.f32 %v93, %v754
    %v756 = vand.u32 %v755, 4294901760
    %757 = vmatmul.mubr.f32.gmra.mrb[0].mxu0 %v756
    %v758 = vpop.f32.mrb[0].mxu0
    %v759 = vadd.f32 %v615, %v758
    %v760 = vpop.f32.mrb[0].mxu0
    %761 = vmatprep.mubr.f32.mxu0 0.0
    %v762 = vand.u32 %v94, 4294901760
    %v763 = vsub.f32 %v94, %v762
    %v764 = vand.u32 %v763, 4294901760
    %765 = vmatmul.mubr.f32.gmra.mrb[0].mxu0 %v764
    %v766 = vpop.f32.mrb[0].mxu0
    %v767 = vadd.f32 %v622, %v766
    %v768 = vpop.f32.mrb[0].mxu0
    %769 = vdwg.mxu0
    %770 = vmatprep.subr.mxu0 0.0
    %v771 = vand.u32 %v95, 4294901760
    %v772 = vsub.f32 %v95, %v771
    %v773 = vand.u32 %v772, 4294901760
    %774 = vmatpush1.msra.mxu0 %v773
    %775 = vmatprep.subr.mxu0 0.0
    %v776 = vand.u32 %v96, 4294901760
    %v777 = vsub.f32 %v96, %v776
    %v778 = vand.u32 %v777, 4294901760
    %779 = vmatpush1.msra.mxu0 %v778
    %780 = vmatprep.subr.mxu0 0.0
    %v781 = vand.u32 %v97, 4294901760
    %v782 = vsub.f32 %v97, %v781
    %v783 = vand.u32 %v782, 4294901760
    %784 = vmatpush1.msra.mxu0 %v783
    %785 = vmatprep.subr.mxu0 0.0
    %v786 = vand.u32 %v98, 4294901760
    %v787 = vsub.f32 %v98, %v786
    %v788 = vand.u32 %v787, 4294901760
    %789 = vmatpush1.msra.mxu0 %v788
    %790 = vmatprep.subr.mxu0 0.0
    %v791 = vand.u32 %v99, 4294901760
    %v792 = vsub.f32 %v99, %v791
    %v793 = vand.u32 %v792, 4294901760
    %794 = vmatpush1.msra.mxu0 %v793
    %795 = vmatprep.subr.mxu0 0.0
    %v796 = vand.u32 %v100, 4294901760
    %v797 = vsub.f32 %v100, %v796
    %v798 = vand.u32 %v797, 4294901760
    %799 = vmatpush1.msra.mxu0 %v798
    %800 = vmatprep.subr.mxu0 0.0
    %v801 = vand.u32 %v101, 4294901760
    %v802 = vsub.f32 %v101, %v801
    %v803 = vand.u32 %v802, 4294901760
    %804 = vmatpush1.msra.mxu0 %v803
    %805 = vmatprep.subr.mxu0 0.0
    %v806 = vand.u32 %v102, 4294901760
    %v807 = vsub.f32 %v102, %v806
    %v808 = vand.u32 %v807, 4294901760
    %809 = vmatpush1.msra.mxu0 %v808
    %810 = vmatprep.subr.mxu0 0.0
    %v811 = vand.u32 %v103, 4294901760
    %v812 = vsub.f32 %v103, %v811
    %v813 = vand.u32 %v812, 4294901760
    %814 = vmatpush1.msra.mxu0 %v813
    %815 = vmatprep.subr.mxu0 0.0
    %v816 = vand.u32 %v104, 4294901760
    %v817 = vsub.f32 %v104, %v816
    %v818 = vand.u32 %v817, 4294901760
    %819 = vmatpush1.msra.mxu0 %v818
    %820 = vmatprep.subr.mxu0 0.0
    %v821 = vand.u32 %v105, 4294901760
    %v822 = vsub.f32 %v105, %v821
    %v823 = vand.u32 %v822, 4294901760
    %824 = vmatpush1.msra.mxu0 %v823
    %825 = vmatprep.subr.mxu0 0.0
    %v826 = vand.u32 %v106, 4294901760
    %v827 = vsub.f32 %v106, %v826
    %v828 = vand.u32 %v827, 4294901760
    %829 = vmatpush1.msra.mxu0 %v828
    %830 = vmatprep.subr.mxu0 0.0
    %v831 = vand.u32 %v107, 4294901760
    %v832 = vsub.f32 %v107, %v831
    %v833 = vand.u32 %v832, 4294901760
    %834 = vmatpush1.msra.mxu0 %v833
    %835 = vmatprep.subr.mxu0 0.0
    %v836 = vand.u32 %v108, 4294901760
    %v837 = vsub.f32 %v108, %v836
    %v838 = vand.u32 %v837, 4294901760
    %839 = vmatpush1.msra.mxu0 %v838
    %840 = vmatprep.subr.mxu0 0.0
    %v841 = vand.u32 %v109, 4294901760
    %v842 = vsub.f32 %v109, %v841
    %v843 = vand.u32 %v842, 4294901760
    %844 = vmatpush1.msra.mxu0 %v843
    %845 = vmatprep.subr.mxu0 0.0
    %v846 = vand.u32 %v110, 4294901760
    %v847 = vsub.f32 %v110, %v846
    %v848 = vand.u32 %v847, 4294901760
    %849 = vmatpush1.msra.mxu0 %v848
    %850 = vmatprep.subr.mxu0 0.0
    %851 = vmatpush1.msra.mxu0 0.0
    %852 = vmatprep.subr.mxu0 0.0
    %853 = vmatpush1.msra.mxu0 0.0
    %854 = vmatprep.subr.mxu0 0.0
    %855 = vmatpush1.msra.mxu0 0.0
    %856 = vmatprep.subr.mxu0 0.0
    %857 = vmatpush1.msra.mxu0 0.0
    %858 = vmatprep.subr.mxu0 0.0
    %859 = vmatpush1.msra.mxu0 0.0
    %860 = vmatprep.subr.mxu0 0.0
    %861 = vmatpush1.msra.mxu0 0.0
    %862 = vmatprep.subr.mxu0 0.0
    %863 = vmatpush1.msra.mxu0 0.0
    %864 = vmatprep.subr.mxu0 0.0
    %865 = vmatpush1.msra.mxu0 0.0
    %866 = vmatprep.subr.mxu0 0.0
    %867 = vmatpush1.msra.mxu0 0.0
    %868 = vmatprep.subr.mxu0 0.0
    %869 = vmatpush1.msra.mxu0 0.0
    %870 = vmatprep.subr.mxu0 0.0
    %871 = vmatpush1.msra.mxu0 0.0
    %872 = vmatprep.subr.mxu0 0.0
    %873 = vmatpush1.msra.mxu0 0.0
    %874 = vmatprep.subr.mxu0 0.0
    %875 = vmatpush1.msra.mxu0 0.0
    %876 = vmatprep.subr.mxu0 0.0
    %877 = vmatpush1.msra.mxu0 0.0
    %878 = vmatprep.subr.mxu0 0.0
    %879 = vmatpush1.msra.mxu0 0.0
    %880 = vmatprep.subr.mxu0 0.0
    %881 = vmatpush1.msra.mxu0 0.0
    %882 = vmatprep.mubr.f32.mxu0 0.0
    %v883 = vand.u32 %v87, 4294901760
    %884 = vmatmul.mubr.f32.gmra.mrb[0].mxu0 %v883
    %v885 = vpop.f32.mrb[0].mxu0
    %v886 = vadd.f32 %v711, %v885
    %v887 = vpop.f32.mrb[0].mxu0
    %888 = vmatprep.mubr.f32.mxu0 0.0
    %v889 = vand.u32 %v88, 4294901760
    %890 = vmatmul.mubr.f32.gmra.mrb[0].mxu0 %v889
    %v891 = vpop.f32.mrb[0].mxu0
    %v892 = vadd.f32 %v719, %v891
    %v893 = vpop.f32.mrb[0].mxu0
    %894 = vmatprep.mubr.f32.mxu0 0.0
    %v895 = vand.u32 %v89, 4294901760
    %896 = vmatmul.mubr.f32.gmra.mrb[0].mxu0 %v895
    %v897 = vpop.f32.mrb[0].mxu0
    %v898 = vadd.f32 %v727, %v897
    %v899 = vpop.f32.mrb[0].mxu0
    %900 = vmatprep.mubr.f32.mxu0 0.0
    %v901 = vand.u32 %v90, 4294901760
    %902 = vmatmul.mubr.f32.gmra.mrb[0].mxu0 %v901
    %v903 = vpop.f32.mrb[0].mxu0
    %v904 = vadd.f32 %v735, %v903
    %v905 = vpop.f32.mrb[0].mxu0
    %906 = vmatprep.mubr.f32.mxu0 0.0
    %v907 = vand.u32 %v91, 4294901760
    %908 = vmatmul.mubr.f32.gmra.mrb[0].mxu0 %v907
    %v909 = vpop.f32.mrb[0].mxu0
    %v910 = vadd.f32 %v743, %v909
    %v911 = vpop.f32.mrb[0].mxu0
    %912 = vmatprep.mubr.f32.mxu0 0.0
    %v913 = vand.u32 %v92, 4294901760
    %914 = vmatmul.mubr.f32.gmra.mrb[0].mxu0 %v913
    %v915 = vpop.f32.mrb[0].mxu0
    %v916 = vadd.f32 %v751, %v915
    %v917 = vpop.f32.mrb[0].mxu0
    %918 = vmatprep.mubr.f32.mxu0 0.0
    %v919 = vand.u32 %v93, 4294901760
    %920 = vmatmul.mubr.f32.gmra.mrb[0].mxu0 %v919
    %v921 = vpop.f32.mrb[0].mxu0
    %v922 = vadd.f32 %v759, %v921
    %v923 = vpop.f32.mrb[0].mxu0
    %924 = vmatprep.mubr.f32.mxu0 0.0
    %v925 = vand.u32 %v94, 4294901760
    %926 = vmatmul.mubr.f32.gmra.mrb[0].mxu0 %v925
    %v927 = vpop.f32.mrb[0].mxu0
    %v928 = vadd.f32 %v767, %v927
    %v929 = vpop.f32.mrb[0].mxu0
    %930 = vdwg.mxu0
    %931 = vmatprep.subr.mxu0 0.0
    %v932 = vand.u32 %v95, 4294901760
    %933 = vmatpush1.msra.mxu0 %v932
    %934 = vmatprep.subr.mxu0 0.0
    %v935 = vand.u32 %v96, 4294901760
    %936 = vmatpush1.msra.mxu0 %v935
    %937 = vmatprep.subr.mxu0 0.0
    %v938 = vand.u32 %v97, 4294901760
    %939 = vmatpush1.msra.mxu0 %v938
    %940 = vmatprep.subr.mxu0 0.0
    %v941 = vand.u32 %v98, 4294901760
    %942 = vmatpush1.msra.mxu0 %v941
    %943 = vmatprep.subr.mxu0 0.0
    %v944 = vand.u32 %v99, 4294901760
    %945 = vmatpush1.msra.mxu0 %v944
    %946 = vmatprep.subr.mxu0 0.0
    %v947 = vand.u32 %v100, 4294901760
    %948 = vmatpush1.msra.mxu0 %v947
    %949 = vmatprep.subr.mxu0 0.0
    %v950 = vand.u32 %v101, 4294901760
    %951 = vmatpush1.msra.mxu0 %v950
    %952 = vmatprep.subr.mxu0 0.0
    %v953 = vand.u32 %v102, 4294901760
    %954 = vmatpush1.msra.mxu0 %v953
    %955 = vmatprep.subr.mxu0 0.0
    %v956 = vand.u32 %v103, 4294901760
    %957 = vmatpush1.msra.mxu0 %v956
    %958 = vmatprep.subr.mxu0 0.0
    %v959 = vand.u32 %v104, 4294901760
    %960 = vmatpush1.msra.mxu0 %v959
    %961 = vmatprep.subr.mxu0 0.0
    %v962 = vand.u32 %v105, 4294901760
    %963 = vmatpush1.msra.mxu0 %v962
    %964 = vmatprep.subr.mxu0 0.0
    %v965 = vand.u32 %v106, 4294901760
    %966 = vmatpush1.msra.mxu0 %v965
    %967 = vmatprep.subr.mxu0 0.0
    %v968 = vand.u32 %v107, 4294901760
    %969 = vmatpush1.msra.mxu0 %v968
    %970 = vmatprep.subr.mxu0 0.0
    %v971 = vand.u32 %v108, 4294901760
    %972 = vmatpush1.msra.mxu0 %v971
    %973 = vmatprep.subr.mxu0 0.0
    %v974 = vand.u32 %v109, 4294901760
    %975 = vmatpush1.msra.mxu0 %v974
    %976 = vmatprep.subr.mxu0 0.0
    %v977 = vand.u32 %v110, 4294901760
    %978 = vmatpush1.msra.mxu0 %v977
    %979 = vmatprep.subr.mxu0 0.0
    %980 = vmatpush1.msra.mxu0 0.0
    %981 = vmatprep.subr.mxu0 0.0
    %982 = vmatpush1.msra.mxu0 0.0
    %983 = vmatprep.subr.mxu0 0.0
    %984 = vmatpush1.msra.mxu0 0.0
    %985 = vmatprep.subr.mxu0 0.0
    %986 = vmatpush1.msra.mxu0 0.0
    %987 = vmatprep.subr.mxu0 0.0
    %988 = vmatpush1.msra.mxu0 0.0
    %989 = vmatprep.subr.mxu0 0.0
    %990 = vmatpush1.msra.mxu0 0.0
    %991 = vmatprep.subr.mxu0 0.0
    %992 = vmatpush1.msra.mxu0 0.0
    %993 = vmatprep.subr.mxu0 0.0
    %994 = vmatpush1.msra.mxu0 0.0
    %995 = vmatprep.subr.mxu0 0.0
    %996 = vmatpush1.msra.mxu0 0.0
    %997 = vmatprep.subr.mxu0 0.0
    %998 = vmatpush1.msra.mxu0 0.0
    %999 = vmatprep.subr.mxu0 0.0
    %1000 = vmatpush1.msra.mxu0 0.0
    %1001 = vmatprep.subr.mxu0 0.0
    %1002 = vmatpush1.msra.mxu0 0.0
    %1003 = vmatprep.subr.mxu0 0.0
    %1004 = vmatpush1.msra.mxu0 0.0
    %1005 = vmatprep.subr.mxu0 0.0
    %1006 = vmatpush1.msra.mxu0 0.0
    %1007 = vmatprep.subr.mxu0 0.0
    %1008 = vmatpush1.msra.mxu0 0.0
    %1009 = vmatprep.subr.mxu0 0.0
    %1010 = vmatpush1.msra.mxu0 0.0
    %1011 = vmatprep.mubr.f32.mxu0 0.0
    %v1012 = vand.u32 %v87, 4294901760
    %1013 = vmatmul.mubr.f32.gmra.mrb[0].mxu0 %v1012
    %v1014 = vpop.f32.mrb[0].mxu0
    %v1015 = vadd.f32 %v886, %v1014
    %v1016 = vpop.f32.mrb[0].mxu0
    %1017 = vmatprep.mubr.f32.mxu0 0.0
    %v1018 = vand.u32 %v88, 4294901760
    %1019 = vmatmul.mubr.f32.gmra.mrb[0].mxu0 %v1018
    %v1020 = vpop.f32.mrb[0].mxu0
    %v1021 = vadd.f32 %v892, %v1020
    %v1022 = vpop.f32.mrb[0].mxu0
    %1023 = vmatprep.mubr.f32.mxu0 0.0
    %v1024 = vand.u32 %v89, 4294901760
    %1025 = vmatmul.mubr.f32.gmra.mrb[0].mxu0 %v1024
    %v1026 = vpop.f32.mrb[0].mxu0
    %v1027 = vadd.f32 %v898, %v1026
    %v1028 = vpop.f32.mrb[0].mxu0
    %1029 = vmatprep.mubr.f32.mxu0 0.0
    %v1030 = vand.u32 %v90, 4294901760
    %1031 = vmatmul.mubr.f32.gmra.mrb[0].mxu0 %v1030
    %v1032 = vpop.f32.mrb[0].mxu0
    %v1033 = vadd.f32 %v904, %v1032
    %v1034 = vpop.f32.mrb[0].mxu0
    %1035 = vmatprep.mubr.f32.mxu0 0.0
    %v1036 = vand.u32 %v91, 4294901760
    %1037 = vmatmul.mubr.f32.gmra.mrb[0].mxu0 %v1036
    %v1038 = vpop.f32.mrb[0].mxu0
    %v1039 = vadd.f32 %v910, %v1038
    %v1040 = vpop.f32.mrb[0].mxu0
    %1041 = vmatprep.mubr.f32.mxu0 0.0
    %v1042 = vand.u32 %v92, 4294901760
    %1043 = vmatmul.mubr.f32.gmra.mrb[0].mxu0 %v1042
    %v1044 = vpop.f32.mrb[0].mxu0
    %v1045 = vadd.f32 %v916, %v1044
    %v1046 = vpop.f32.mrb[0].mxu0
    %1047 = vmatprep.mubr.f32.mxu0 0.0
    %v1048 = vand.u32 %v93, 4294901760
    %1049 = vmatmul.mubr.f32.gmra.mrb[0].mxu0 %v1048
    %v1050 = vpop.f32.mrb[0].mxu0
    %v1051 = vadd.f32 %v922, %v1050
    %v1052 = vpop.f32.mrb[0].mxu0
    %1053 = vmatprep.mubr.f32.mxu0 0.0
    %v1054 = vand.u32 %v94, 4294901760
    %1055 = vmatmul.mubr.f32.gmra.mrb[0].mxu0 %v1054
    %v1056 = vpop.f32.mrb[0].mxu0
    %v1057 = vadd.f32 %v928, %v1056
    %v1058 = vpop.f32.mrb[0].mxu0
    %1059 = vdwg.mxu0
    %1060 = vst [vmem:[#allocation2] sm:$0xff] %v1015
    %1061 = vst [vmem:[#allocation2 + $0x8] sm:$0xff] %v1021
    %1062 = vst [vmem:[#allocation2 + $0x10] sm:$0xff] %v1027
    %1063 = vst [vmem:[#allocation2 + $0x18] sm:$0xff] %v1033
    %1064 = vst [vmem:[#allocation2 + $0x20] sm:$0xff] %v1039
    %1065 = vst [vmem:[#allocation2 + $0x28] sm:$0xff] %v1045
    %1066 = vst [vmem:[#allocation2 + $0x30] sm:$0xff] %v1051
    %1067 = vst [vmem:[#allocation2 + $0x38] sm:$0xff] %v1057
    %v1068 = vld [vmem:[#allocation9] sm:$0xff]
    %v1069 = vld [vmem:[#allocation9 + $0x8] sm:$0xff]
    %v1070 = vld [vmem:[#allocation9 + $0x10] sm:$0xff]
    %v1071 = vld [vmem:[#allocation9 + $0x18] sm:$0xff]
    %v1072 = vld [vmem:[#allocation9 + $0x20] sm:$0xff]
    %v1073 = vld [vmem:[#allocation9 + $0x28] sm:$0xff]
    %v1074 = vld [vmem:[#allocation9 + $0x30] sm:$0xff]
    %v1075 = vld [vmem:[#allocation9 + $0x38] sm:$0xff]
    %v1076 = vld [vmem:[#allocation9 + $0x40] sm:$0xff]
    %v1077 = vld [vmem:[#allocation9 + $0x48] sm:$0xff]
    %v1078 = vld [vmem:[#allocation9 + $0x50] sm:$0xff]
    %v1079 = vld [vmem:[#allocation9 + $0x58] sm:$0xff]
    %v1080 = vld [vmem:[#allocation9 + $0x60] sm:$0xff]
    %v1081 = vld [vmem:[#allocation9 + $0x68] sm:$0xff]
    %v1082 = vld [vmem:[#allocation9 + $0x70] sm:$0xff]
    %v1083 = vld [vmem:[#allocation9 + $0x78] sm:$0xff]
    %v1084 = vld [vmem:[#allocation2] sm:$0xff]
    %1085 = vmatprep.subr.mxu0 0.0
    %v1086 = vand.u32 %v1068, 4294901760
    %1087 = vmatpush1.msra.mxu0 %v1086
    %1088 = vmatprep.subr.mxu0 0.0
    %v1089 = vand.u32 %v1069, 4294901760
    %1090 = vmatpush1.msra.mxu0 %v1089
    %1091 = vmatprep.subr.mxu0 0.0
    %v1092 = vand.u32 %v1070, 4294901760
    %1093 = vmatpush1.msra.mxu0 %v1092
    %1094 = vmatprep.subr.mxu0 0.0
    %v1095 = vand.u32 %v1071, 4294901760
    %1096 = vmatpush1.msra.mxu0 %v1095
    %1097 = vmatprep.subr.mxu0 0.0
    %v1098 = vand.u32 %v1072, 4294901760
    %1099 = vmatpush1.msra.mxu0 %v1098
    %1100 = vmatprep.subr.mxu0 0.0
    %v1101 = vand.u32 %v1073, 4294901760
    %1102 = vmatpush1.msra.mxu0 %v1101
    %1103 = vmatprep.subr.mxu0 0.0
    %v1104 = vand.u32 %v1074, 4294901760
    %1105 = vmatpush1.msra.mxu0 %v1104
    %1106 = vmatprep.subr.mxu0 0.0
    %v1107 = vand.u32 %v1075, 4294901760
    %1108 = vmatpush1.msra.mxu0 %v1107
    %1109 = vmatprep.subr.mxu0 0.0
    %v1110 = vand.u32 %v1076, 4294901760
    %1111 = vmatpush1.msra.mxu0 %v1110
    %1112 = vmatprep.subr.mxu0 0.0
    %v1113 = vand.u32 %v1077, 4294901760
    %1114 = vmatpush1.msra.mxu0 %v1113
    %1115 = vmatprep.subr.mxu0 0.0
    %v1116 = vand.u32 %v1078, 4294901760
    %1117 = vmatpush1.msra.mxu0 %v1116
    %1118 = vmatprep.subr.mxu0 0.0
    %v1119 = vand.u32 %v1079, 4294901760
    %1120 = vmatpush1.msra.mxu0 %v1119
    %1121 = vmatprep.subr.mxu0 0.0
    %v1122 = vand.u32 %v1080, 4294901760
    %1123 = vmatpush1.msra.mxu0 %v1122
    %1124 = vmatprep.subr.mxu0 0.0
    %v1125 = vand.u32 %v1081, 4294901760
    %1126 = vmatpush1.msra.mxu0 %v1125
    %1127 = vmatprep.subr.mxu0 0.0
    %v1128 = vand.u32 %v1082, 4294901760
    %1129 = vmatpush1.msra.mxu0 %v1128
    %1130 = vmatprep.subr.mxu0 0.0
    %v1131 = vand.u32 %v1083, 4294901760
    %1132 = vmatpush1.msra.mxu0 %v1131
    %1133 = vmatprep.subr.mxu0 0.0
    %1134 = vmatpush1.msra.mxu0 0.0
    %1135 = vmatprep.subr.mxu0 0.0
    %1136 = vmatpush1.msra.mxu0 0.0
    %1137 = vmatprep.subr.mxu0 0.0
    %1138 = vmatpush1.msra.mxu0 0.0
    %1139 = vmatprep.subr.mxu0 0.0
    %1140 = vmatpush1.msra.mxu0 0.0
    %1141 = vmatprep.subr.mxu0 0.0
    %1142 = vmatpush1.msra.mxu0 0.0
    %1143 = vmatprep.subr.mxu0 0.0
    %1144 = vmatpush1.msra.mxu0 0.0
    %1145 = vmatprep.subr.mxu0 0.0
    %1146 = vmatpush1.msra.mxu0 0.0
    %1147 = vmatprep.subr.mxu0 0.0
    %1148 = vmatpush1.msra.mxu0 0.0
    %1149 = vmatprep.subr.mxu0 0.0
    %1150 = vmatpush1.msra.mxu0 0.0
    %1151 = vmatprep.subr.mxu0 0.0
    %1152 = vmatpush1.msra.mxu0 0.0
    %1153 = vmatprep.subr.mxu0 0.0
    %1154 = vmatpush1.msra.mxu0 0.0
    %1155 = vmatprep.subr.mxu0 0.0
    %1156 = vmatpush1.msra.mxu0 0.0
    %1157 = vmatprep.subr.mxu0 0.0
    %1158 = vmatpush1.msra.mxu0 0.0
    %1159 = vmatprep.subr.mxu0 0.0
    %1160 = vmatpush1.msra.mxu0 0.0
    %1161 = vmatprep.subr.mxu0 0.0
    %1162 = vmatpush1.msra.mxu0 0.0
    %1163 = vmatprep.subr.mxu0 0.0
    %1164 = vmatpush1.msra.mxu0 0.0
    %1165 = vmatprep.mubr.f32.mxu0 0.0
    %1166 = vmatmul.mubr.f32.gmra.mrb[0].mxu0 0.0
    %v1167 = vpop.f32.mrb[0].mxu0
    %v1168 = vadd.f32 0.0, %v1167
    %v1169 = vpop.f32.mrb[0].mxu0
    %1170 = vdwg.mxu0
    %1171 = vmatprep.subr.mxu0 0.0
    %v1172 = vand.u32 %v1068, 4294901760
    %v1173 = vsub.f32 %v1068, %v1172
    %v1174 = vand.u32 %v1173, 4294901760
    %v1175 = vsub.f32 %v1173, %v1174
    %v1176 = vand.u32 %v1175, 4294901760
    %1177 = vmatpush1.msra.mxu0 %v1176
    %1178 = vmatprep.subr.mxu0 0.0
    %v1179 = vand.u32 %v1069, 4294901760
    %v1180 = vsub.f32 %v1069, %v1179
    %v1181 = vand.u32 %v1180, 4294901760
    %v1182 = vsub.f32 %v1180, %v1181
    %v1183 = vand.u32 %v1182, 4294901760
    %1184 = vmatpush1.msra.mxu0 %v1183
    %1185 = vmatprep.subr.mxu0 0.0
    %v1186 = vand.u32 %v1070, 4294901760
    %v1187 = vsub.f32 %v1070, %v1186
    %v1188 = vand.u32 %v1187, 4294901760
    %v1189 = vsub.f32 %v1187, %v1188
    %v1190 = vand.u32 %v1189, 4294901760
    %1191 = vmatpush1.msra.mxu0 %v1190
    %1192 = vmatprep.subr.mxu0 0.0
    %v1193 = vand.u32 %v1071, 4294901760
    %v1194 = vsub.f32 %v1071, %v1193
    %v1195 = vand.u32 %v1194, 4294901760
    %v1196 = vsub.f32 %v1194, %v1195
    %v1197 = vand.u32 %v1196, 4294901760
    %1198 = vmatpush1.msra.mxu0 %v1197
    %1199 = vmatprep.subr.mxu0 0.0
    %v1200 = vand.u32 %v1072, 4294901760
    %v1201 = vsub.f32 %v1072, %v1200
    %v1202 = vand.u32 %v1201, 4294901760
    %v1203 = vsub.f32 %v1201, %v1202
    %v1204 = vand.u32 %v1203, 4294901760
    %1205 = vmatpush1.msra.mxu0 %v1204
    %1206 = vmatprep.subr.mxu0 0.0
    %v1207 = vand.u32 %v1073, 4294901760
    %v1208 = vsub.f32 %v1073, %v1207
    %v1209 = vand.u32 %v1208, 4294901760
    %v1210 = vsub.f32 %v1208, %v1209
    %v1211 = vand.u32 %v1210, 4294901760
    %1212 = vmatpush1.msra.mxu0 %v1211
    %1213 = vmatprep.subr.mxu0 0.0
    %v1214 = vand.u32 %v1074, 4294901760
    %v1215 = vsub.f32 %v1074, %v1214
    %v1216 = vand.u32 %v1215, 4294901760
    %v1217 = vsub.f32 %v1215, %v1216
    %v1218 = vand.u32 %v1217, 4294901760
    %1219 = vmatpush1.msra.mxu0 %v1218
    %1220 = vmatprep.subr.mxu0 0.0
    %v1221 = vand.u32 %v1075, 4294901760
    %v1222 = vsub.f32 %v1075, %v1221
    %v1223 = vand.u32 %v1222, 4294901760
    %v1224 = vsub.f32 %v1222, %v1223
    %v1225 = vand.u32 %v1224, 4294901760
    %1226 = vmatpush1.msra.mxu0 %v1225
    %1227 = vmatprep.subr.mxu0 0.0
    %v1228 = vand.u32 %v1076, 4294901760
    %v1229 = vsub.f32 %v1076, %v1228
    %v1230 = vand.u32 %v1229, 4294901760
    %v1231 = vsub.f32 %v1229, %v1230
    %v1232 = vand.u32 %v1231, 4294901760
    %1233 = vmatpush1.msra.mxu0 %v1232
    %1234 = vmatprep.subr.mxu0 0.0
    %v1235 = vand.u32 %v1077, 4294901760
    %v1236 = vsub.f32 %v1077, %v1235
    %v1237 = vand.u32 %v1236, 4294901760
    %v1238 = vsub.f32 %v1236, %v1237
    %v1239 = vand.u32 %v1238, 4294901760
    %1240 = vmatpush1.msra.mxu0 %v1239
    %1241 = vmatprep.subr.mxu0 0.0
    %v1242 = vand.u32 %v1078, 4294901760
    %v1243 = vsub.f32 %v1078, %v1242
    %v1244 = vand.u32 %v1243, 4294901760
    %v1245 = vsub.f32 %v1243, %v1244
    %v1246 = vand.u32 %v1245, 4294901760
    %1247 = vmatpush1.msra.mxu0 %v1246
    %1248 = vmatprep.subr.mxu0 0.0
    %v1249 = vand.u32 %v1079, 4294901760
    %v1250 = vsub.f32 %v1079, %v1249
    %v1251 = vand.u32 %v1250, 4294901760
    %v1252 = vsub.f32 %v1250, %v1251
    %v1253 = vand.u32 %v1252, 4294901760
    %1254 = vmatpush1.msra.mxu0 %v1253
    %1255 = vmatprep.subr.mxu0 0.0
    %v1256 = vand.u32 %v1080, 4294901760
    %v1257 = vsub.f32 %v1080, %v1256
    %v1258 = vand.u32 %v1257, 4294901760
    %v1259 = vsub.f32 %v1257, %v1258
    %v1260 = vand.u32 %v1259, 4294901760
    %1261 = vmatpush1.msra.mxu0 %v1260
    %1262 = vmatprep.subr.mxu0 0.0
    %v1263 = vand.u32 %v1081, 4294901760
    %v1264 = vsub.f32 %v1081, %v1263
    %v1265 = vand.u32 %v1264, 4294901760
    %v1266 = vsub.f32 %v1264, %v1265
    %v1267 = vand.u32 %v1266, 4294901760
    %1268 = vmatpush1.msra.mxu0 %v1267
    %1269 = vmatprep.subr.mxu0 0.0
    %v1270 = vand.u32 %v1082, 4294901760
    %v1271 = vsub.f32 %v1082, %v1270
    %v1272 = vand.u32 %v1271, 4294901760
    %v1273 = vsub.f32 %v1271, %v1272
    %v1274 = vand.u32 %v1273, 4294901760
    %1275 = vmatpush1.msra.mxu0 %v1274
    %1276 = vmatprep.subr.mxu0 0.0
    %v1277 = vand.u32 %v1083, 4294901760
    %v1278 = vsub.f32 %v1083, %v1277
    %v1279 = vand.u32 %v1278, 4294901760
    %v1280 = vsub.f32 %v1278, %v1279
    %v1281 = vand.u32 %v1280, 4294901760
    %1282 = vmatpush1.msra.mxu0 %v1281
    %1283 = vmatprep.subr.mxu0 0.0
    %1284 = vmatpush1.msra.mxu0 0.0
    %1285 = vmatprep.subr.mxu0 0.0
    %1286 = vmatpush1.msra.mxu0 0.0
    %1287 = vmatprep.subr.mxu0 0.0
    %1288 = vmatpush1.msra.mxu0 0.0
    %1289 = vmatprep.subr.mxu0 0.0
    %1290 = vmatpush1.msra.mxu0 0.0
    %1291 = vmatprep.subr.mxu0 0.0
    %1292 = vmatpush1.msra.mxu0 0.0
    %1293 = vmatprep.subr.mxu0 0.0
    %1294 = vmatpush1.msra.mxu0 0.0
    %1295 = vmatprep.subr.mxu0 0.0
    %1296 = vmatpush1.msra.mxu0 0.0
    %1297 = vmatprep.subr.mxu0 0.0
    %1298 = vmatpush1.msra.mxu0 0.0
    %1299 = vmatprep.subr.mxu0 0.0
    %1300 = vmatpush1.msra.mxu0 0.0
    %1301 = vmatprep.subr.mxu0 0.0
    %1302 = vmatpush1.msra.mxu0 0.0
    %1303 = vmatprep.subr.mxu0 0.0
    %1304 = vmatpush1.msra.mxu0 0.0
    %1305 = vmatprep.subr.mxu0 0.0
    %1306 = vmatpush1.msra.mxu0 0.0
    %1307 = vmatprep.subr.mxu0 0.0
    %1308 = vmatpush1.msra.mxu0 0.0
    %1309 = vmatprep.subr.mxu0 0.0
    %1310 = vmatpush1.msra.mxu0 0.0
    %1311 = vmatprep.subr.mxu0 0.0
    %1312 = vmatpush1.msra.mxu0 0.0
    %1313 = vmatprep.subr.mxu0 0.0
    %1314 = vmatpush1.msra.mxu0 0.0
    %1315 = vmatprep.mubr.f32.mxu0 0.0
    %1316 = vmatmul.mubr.f32.gmra.mrb[0].mxu0 0.0
    %v1317 = vpop.f32.mrb[0].mxu0
    %v1318 = vadd.f32 %v1168, %v1317
    %v1319 = vpop.f32.mrb[0].mxu0
    %1320 = vdwg.mxu0
    %1321 = vmatprep.subr.mxu0 0.0
    %v1322 = vand.u32 %v1068, 4294901760
    %v1323 = vsub.f32 %v1068, %v1322
    %1324 = vmatpush1.msra.mxu0 %v1323
    %1325 = vmatprep.subr.mxu0 0.0
    %v1326 = vand.u32 %v1069, 4294901760
    %v1327 = vsub.f32 %v1069, %v1326
    %1328 = vmatpush1.msra.mxu0 %v1327
    %1329 = vmatprep.subr.mxu0 0.0
    %v1330 = vand.u32 %v1070, 4294901760
    %v1331 = vsub.f32 %v1070, %v1330
    %1332 = vmatpush1.msra.mxu0 %v1331
    %1333 = vmatprep.subr.mxu0 0.0
    %v1334 = vand.u32 %v1071, 4294901760
    %v1335 = vsub.f32 %v1071, %v1334
    %1336 = vmatpush1.msra.mxu0 %v1335
    %1337 = vmatprep.subr.mxu0 0.0
    %v1338 = vand.u32 %v1072, 4294901760
    %v1339 = vsub.f32 %v1072, %v1338
    %1340 = vmatpush1.msra.mxu0 %v1339
    %1341 = vmatprep.subr.mxu0 0.0
    %v1342 = vand.u32 %v1073, 4294901760
    %v1343 = vsub.f32 %v1073, %v1342
    %1344 = vmatpush1.msra.mxu0 %v1343
    %1345 = vmatprep.subr.mxu0 0.0
    %v1346 = vand.u32 %v1074, 4294901760
    %v1347 = vsub.f32 %v1074, %v1346
    %1348 = vmatpush1.msra.mxu0 %v1347
    %1349 = vmatprep.subr.mxu0 0.0
    %v1350 = vand.u32 %v1075, 4294901760
    %v1351 = vsub.f32 %v1075, %v1350
    %1352 = vmatpush1.msra.mxu0 %v1351
    %1353 = vmatprep.subr.mxu0 0.0
    %v1354 = vand.u32 %v1076, 4294901760
    %v1355 = vsub.f32 %v1076, %v1354
    %1356 = vmatpush1.msra.mxu0 %v1355
    %1357 = vmatprep.subr.mxu0 0.0
    %v1358 = vand.u32 %v1077, 4294901760
    %v1359 = vsub.f32 %v1077, %v1358
    %1360 = vmatpush1.msra.mxu0 %v1359
    %1361 = vmatprep.subr.mxu0 0.0
    %v1362 = vand.u32 %v1078, 4294901760
    %v1363 = vsub.f32 %v1078, %v1362
    %1364 = vmatpush1.msra.mxu0 %v1363
    %1365 = vmatprep.subr.mxu0 0.0
    %v1366 = vand.u32 %v1079, 4294901760
    %v1367 = vsub.f32 %v1079, %v1366
    %1368 = vmatpush1.msra.mxu0 %v1367
    %1369 = vmatprep.subr.mxu0 0.0
    %v1370 = vand.u32 %v1080, 4294901760
    %v1371 = vsub.f32 %v1080, %v1370
    %1372 = vmatpush1.msra.mxu0 %v1371
    %1373 = vmatprep.subr.mxu0 0.0
    %v1374 = vand.u32 %v1081, 4294901760
    %v1375 = vsub.f32 %v1081, %v1374
    %1376 = vmatpush1.msra.mxu0 %v1375
    %1377 = vmatprep.subr.mxu0 0.0
    %v1378 = vand.u32 %v1082, 4294901760
    %v1379 = vsub.f32 %v1082, %v1378
    %1380 = vmatpush1.msra.mxu0 %v1379
    %1381 = vmatprep.subr.mxu0 0.0
    %v1382 = vand.u32 %v1083, 4294901760
    %v1383 = vsub.f32 %v1083, %v1382
    %1384 = vmatpush1.msra.mxu0 %v1383
    %1385 = vmatprep.subr.mxu0 0.0
    %1386 = vmatpush1.msra.mxu0 0.0
    %1387 = vmatprep.subr.mxu0 0.0
    %1388 = vmatpush1.msra.mxu0 0.0
    %1389 = vmatprep.subr.mxu0 0.0
    %1390 = vmatpush1.msra.mxu0 0.0
    %1391 = vmatprep.subr.mxu0 0.0
    %1392 = vmatpush1.msra.mxu0 0.0
    %1393 = vmatprep.subr.mxu0 0.0
    %1394 = vmatpush1.msra.mxu0 0.0
    %1395 = vmatprep.subr.mxu0 0.0
    %1396 = vmatpush1.msra.mxu0 0.0
    %1397 = vmatprep.subr.mxu0 0.0
    %1398 = vmatpush1.msra.mxu0 0.0
    %1399 = vmatprep.subr.mxu0 0.0
    %1400 = vmatpush1.msra.mxu0 0.0
    %1401 = vmatprep.subr.mxu0 0.0
    %1402 = vmatpush1.msra.mxu0 0.0
    %1403 = vmatprep.subr.mxu0 0.0
    %1404 = vmatpush1.msra.mxu0 0.0
    %1405 = vmatprep.subr.mxu0 0.0
    %1406 = vmatpush1.msra.mxu0 0.0
    %1407 = vmatprep.subr.mxu0 0.0
    %1408 = vmatpush1.msra.mxu0 0.0
    %1409 = vmatprep.subr.mxu0 0.0
    %1410 = vmatpush1.msra.mxu0 0.0
    %1411 = vmatprep.subr.mxu0 0.0
    %1412 = vmatpush1.msra.mxu0 0.0
    %1413 = vmatprep.subr.mxu0 0.0
    %1414 = vmatpush1.msra.mxu0 0.0
    %1415 = vmatprep.subr.mxu0 0.0
    %1416 = vmatpush1.msra.mxu0 0.0
    %1417 = vmatprep.mubr.f32.mxu0 0.0
    %1418 = vmatmul.mubr.f32.gmra.mrb[0].mxu0 0.0
    %v1419 = vpop.f32.mrb[0].mxu0
    %v1420 = vadd.f32 %v1318, %v1419
    %v1421 = vpop.f32.mrb[0].mxu0
    %1422 = vdwg.mxu0
    %1423 = vmatprep.subr.mxu0 0.0
    %v1424 = vand.u32 %v1068, 4294901760
    %1425 = vmatpush1.msra.mxu0 %v1424
    %1426 = vmatprep.subr.mxu0 0.0
    %v1427 = vand.u32 %v1069, 4294901760
    %1428 = vmatpush1.msra.mxu0 %v1427
    %1429 = vmatprep.subr.mxu0 0.0
    %v1430 = vand.u32 %v1070, 4294901760
    %1431 = vmatpush1.msra.mxu0 %v1430
    %1432 = vmatprep.subr.mxu0 0.0
    %v1433 = vand.u32 %v1071, 4294901760
    %1434 = vmatpush1.msra.mxu0 %v1433
    %1435 = vmatprep.subr.mxu0 0.0
    %v1436 = vand.u32 %v1072, 4294901760
    %1437 = vmatpush1.msra.mxu0 %v1436
    %1438 = vmatprep.subr.mxu0 0.0
    %v1439 = vand.u32 %v1073, 4294901760
    %1440 = vmatpush1.msra.mxu0 %v1439
    %1441 = vmatprep.subr.mxu0 0.0
    %v1442 = vand.u32 %v1074, 4294901760
    %1443 = vmatpush1.msra.mxu0 %v1442
    %1444 = vmatprep.subr.mxu0 0.0
    %v1445 = vand.u32 %v1075, 4294901760
    %1446 = vmatpush1.msra.mxu0 %v1445
    %1447 = vmatprep.subr.mxu0 0.0
    %v1448 = vand.u32 %v1076, 4294901760
    %1449 = vmatpush1.msra.mxu0 %v1448
    %1450 = vmatprep.subr.mxu0 0.0
    %v1451 = vand.u32 %v1077, 4294901760
    %1452 = vmatpush1.msra.mxu0 %v1451
    %1453 = vmatprep.subr.mxu0 0.0
    %v1454 = vand.u32 %v1078, 4294901760
    %1455 = vmatpush1.msra.mxu0 %v1454
    %1456 = vmatprep.subr.mxu0 0.0
    %v1457 = vand.u32 %v1079, 4294901760
    %1458 = vmatpush1.msra.mxu0 %v1457
    %1459 = vmatprep.subr.mxu0 0.0
    %v1460 = vand.u32 %v1080, 4294901760
    %1461 = vmatpush1.msra.mxu0 %v1460
    %1462 = vmatprep.subr.mxu0 0.0
    %v1463 = vand.u32 %v1081, 4294901760
    %1464 = vmatpush1.msra.mxu0 %v1463
    %1465 = vmatprep.subr.mxu0 0.0
    %v1466 = vand.u32 %v1082, 4294901760
    %1467 = vmatpush1.msra.mxu0 %v1466
    %1468 = vmatprep.subr.mxu0 0.0
    %v1469 = vand.u32 %v1083, 4294901760
    %1470 = vmatpush1.msra.mxu0 %v1469
    %1471 = vmatprep.subr.mxu0 0.0
    %1472 = vmatpush1.msra.mxu0 0.0
    %1473 = vmatprep.subr.mxu0 0.0
    %1474 = vmatpush1.msra.mxu0 0.0
    %1475 = vmatprep.subr.mxu0 0.0
    %1476 = vmatpush1.msra.mxu0 0.0
    %1477 = vmatprep.subr.mxu0 0.0
    %1478 = vmatpush1.msra.mxu0 0.0
    %1479 = vmatprep.subr.mxu0 0.0
    %1480 = vmatpush1.msra.mxu0 0.0
    %1481 = vmatprep.subr.mxu0 0.0
    %1482 = vmatpush1.msra.mxu0 0.0
    %1483 = vmatprep.subr.mxu0 0.0
    %1484 = vmatpush1.msra.mxu0 0.0
    %1485 = vmatprep.subr.mxu0 0.0
    %1486 = vmatpush1.msra.mxu0 0.0
    %1487 = vmatprep.subr.mxu0 0.0
    %1488 = vmatpush1.msra.mxu0 0.0
    %1489 = vmatprep.subr.mxu0 0.0
    %1490 = vmatpush1.msra.mxu0 0.0
    %1491 = vmatprep.subr.mxu0 0.0
    %1492 = vmatpush1.msra.mxu0 0.0
    %1493 = vmatprep.subr.mxu0 0.0
    %1494 = vmatpush1.msra.mxu0 0.0
    %1495 = vmatprep.subr.mxu0 0.0
    %1496 = vmatpush1.msra.mxu0 0.0
    %1497 = vmatprep.subr.mxu0 0.0
    %1498 = vmatpush1.msra.mxu0 0.0
    %1499 = vmatprep.subr.mxu0 0.0
    %1500 = vmatpush1.msra.mxu0 0.0
    %1501 = vmatprep.subr.mxu0 0.0
    %1502 = vmatpush1.msra.mxu0 0.0
    %1503 = vmatprep.mubr.f32.mxu0 0.0
    %1504 = vmatmul.mubr.f32.gmra.mrb[0].mxu0 0.0
    %v1505 = vpop.f32.mrb[0].mxu0
    %v1506 = vadd.f32 %v1420, %v1505
    %v1507 = vpop.f32.mrb[0].mxu0
    %1508 = vdwg.mxu0
    %1509 = vmatprep.subr.mxu0 0.0
    %v1510 = vand.u32 %v1068, 4294901760
    %v1511 = vsub.f32 %v1068, %v1510
    %v1512 = vand.u32 %v1511, 4294901760
    %1513 = vmatpush1.msra.mxu0 %v1512
    %1514 = vmatprep.subr.mxu0 0.0
    %v1515 = vand.u32 %v1069, 4294901760
    %v1516 = vsub.f32 %v1069, %v1515
    %v1517 = vand.u32 %v1516, 4294901760
    %1518 = vmatpush1.msra.mxu0 %v1517
    %1519 = vmatprep.subr.mxu0 0.0
    %v1520 = vand.u32 %v1070, 4294901760
    %v1521 = vsub.f32 %v1070, %v1520
    %v1522 = vand.u32 %v1521, 4294901760
    %1523 = vmatpush1.msra.mxu0 %v1522
    %1524 = vmatprep.subr.mxu0 0.0
    %v1525 = vand.u32 %v1071, 4294901760
    %v1526 = vsub.f32 %v1071, %v1525
    %v1527 = vand.u32 %v1526, 4294901760
    %1528 = vmatpush1.msra.mxu0 %v1527
    %1529 = vmatprep.subr.mxu0 0.0
    %v1530 = vand.u32 %v1072, 4294901760
    %v1531 = vsub.f32 %v1072, %v1530
    %v1532 = vand.u32 %v1531, 4294901760
    %1533 = vmatpush1.msra.mxu0 %v1532
    %1534 = vmatprep.subr.mxu0 0.0
    %v1535 = vand.u32 %v1073, 4294901760
    %v1536 = vsub.f32 %v1073, %v1535
    %v1537 = vand.u32 %v1536, 4294901760
    %1538 = vmatpush1.msra.mxu0 %v1537
    %1539 = vmatprep.subr.mxu0 0.0
    %v1540 = vand.u32 %v1074, 4294901760
    %v1541 = vsub.f32 %v1074, %v1540
    %v1542 = vand.u32 %v1541, 4294901760
    %1543 = vmatpush1.msra.mxu0 %v1542
    %1544 = vmatprep.subr.mxu0 0.0
    %v1545 = vand.u32 %v1075, 4294901760
    %v1546 = vsub.f32 %v1075, %v1545
    %v1547 = vand.u32 %v1546, 4294901760
    %1548 = vmatpush1.msra.mxu0 %v1547
    %1549 = vmatprep.subr.mxu0 0.0
    %v1550 = vand.u32 %v1076, 4294901760
    %v1551 = vsub.f32 %v1076, %v1550
    %v1552 = vand.u32 %v1551, 4294901760
    %1553 = vmatpush1.msra.mxu0 %v1552
    %1554 = vmatprep.subr.mxu0 0.0
    %v1555 = vand.u32 %v1077, 4294901760
    %v1556 = vsub.f32 %v1077, %v1555
    %v1557 = vand.u32 %v1556, 4294901760
    %1558 = vmatpush1.msra.mxu0 %v1557
    %1559 = vmatprep.subr.mxu0 0.0
    %v1560 = vand.u32 %v1078, 4294901760
    %v1561 = vsub.f32 %v1078, %v1560
    %v1562 = vand.u32 %v1561, 4294901760
    %1563 = vmatpush1.msra.mxu0 %v1562
    %1564 = vmatprep.subr.mxu0 0.0
    %v1565 = vand.u32 %v1079, 4294901760
    %v1566 = vsub.f32 %v1079, %v1565
    %v1567 = vand.u32 %v1566, 4294901760
    %1568 = vmatpush1.msra.mxu0 %v1567
    %1569 = vmatprep.subr.mxu0 0.0
    %v1570 = vand.u32 %v1080, 4294901760
    %v1571 = vsub.f32 %v1080, %v1570
    %v1572 = vand.u32 %v1571, 4294901760
    %1573 = vmatpush1.msra.mxu0 %v1572
    %1574 = vmatprep.subr.mxu0 0.0
    %v1575 = vand.u32 %v1081, 4294901760
    %v1576 = vsub.f32 %v1081, %v1575
    %v1577 = vand.u32 %v1576, 4294901760
    %1578 = vmatpush1.msra.mxu0 %v1577
    %1579 = vmatprep.subr.mxu0 0.0
    %v1580 = vand.u32 %v1082, 4294901760
    %v1581 = vsub.f32 %v1082, %v1580
    %v1582 = vand.u32 %v1581, 4294901760
    %1583 = vmatpush1.msra.mxu0 %v1582
    %1584 = vmatprep.subr.mxu0 0.0
    %v1585 = vand.u32 %v1083, 4294901760
    %v1586 = vsub.f32 %v1083, %v1585
    %v1587 = vand.u32 %v1586, 4294901760
    %1588 = vmatpush1.msra.mxu0 %v1587
    %1589 = vmatprep.subr.mxu0 0.0
    %1590 = vmatpush1.msra.mxu0 0.0
    %1591 = vmatprep.subr.mxu0 0.0
    %1592 = vmatpush1.msra.mxu0 0.0
    %1593 = vmatprep.subr.mxu0 0.0
    %1594 = vmatpush1.msra.mxu0 0.0
    %1595 = vmatprep.subr.mxu0 0.0
    %1596 = vmatpush1.msra.mxu0 0.0
    %1597 = vmatprep.subr.mxu0 0.0
    %1598 = vmatpush1.msra.mxu0 0.0
    %1599 = vmatprep.subr.mxu0 0.0
    %1600 = vmatpush1.msra.mxu0 0.0
    %1601 = vmatprep.subr.mxu0 0.0
    %1602 = vmatpush1.msra.mxu0 0.0
    %1603 = vmatprep.subr.mxu0 0.0
    %1604 = vmatpush1.msra.mxu0 0.0
    %1605 = vmatprep.subr.mxu0 0.0
    %1606 = vmatpush1.msra.mxu0 0.0
    %1607 = vmatprep.subr.mxu0 0.0
    %1608 = vmatpush1.msra.mxu0 0.0
    %1609 = vmatprep.subr.mxu0 0.0
    %1610 = vmatpush1.msra.mxu0 0.0
    %1611 = vmatprep.subr.mxu0 0.0
    %1612 = vmatpush1.msra.mxu0 0.0
    %1613 = vmatprep.subr.mxu0 0.0
    %1614 = vmatpush1.msra.mxu0 0.0
    %1615 = vmatprep.subr.mxu0 0.0
    %1616 = vmatpush1.msra.mxu0 0.0
    %1617 = vmatprep.subr.mxu0 0.0
    %1618 = vmatpush1.msra.mxu0 0.0
    %1619 = vmatprep.subr.mxu0 0.0
    %1620 = vmatpush1.msra.mxu0 0.0
    %1621 = vmatprep.mubr.f32.mxu0 0.0
    %1622 = vmatmul.mubr.f32.gmra.mrb[0].mxu0 0.0
    %v1623 = vpop.f32.mrb[0].mxu0
    %v1624 = vadd.f32 %v1506, %v1623
    %v1625 = vpop.f32.mrb[0].mxu0
    %1626 = vdwg.mxu0
    %1627 = vmatprep.subr.mxu0 0.0
    %v1628 = vand.u32 %v1068, 4294901760
    %1629 = vmatpush1.msra.mxu0 %v1628
    %1630 = vmatprep.subr.mxu0 0.0
    %v1631 = vand.u32 %v1069, 4294901760
    %1632 = vmatpush1.msra.mxu0 %v1631
    %1633 = vmatprep.subr.mxu0 0.0
    %v1634 = vand.u32 %v1070, 4294901760
    %1635 = vmatpush1.msra.mxu0 %v1634
    %1636 = vmatprep.subr.mxu0 0.0
    %v1637 = vand.u32 %v1071, 4294901760
    %1638 = vmatpush1.msra.mxu0 %v1637
    %1639 = vmatprep.subr.mxu0 0.0
    %v1640 = vand.u32 %v1072, 4294901760
    %1641 = vmatpush1.msra.mxu0 %v1640
    %1642 = vmatprep.subr.mxu0 0.0
    %v1643 = vand.u32 %v1073, 4294901760
    %1644 = vmatpush1.msra.mxu0 %v1643
    %1645 = vmatprep.subr.mxu0 0.0
    %v1646 = vand.u32 %v1074, 4294901760
    %1647 = vmatpush1.msra.mxu0 %v1646
    %1648 = vmatprep.subr.mxu0 0.0
    %v1649 = vand.u32 %v1075, 4294901760
    %1650 = vmatpush1.msra.mxu0 %v1649
    %1651 = vmatprep.subr.mxu0 0.0
    %v1652 = vand.u32 %v1076, 4294901760
    %1653 = vmatpush1.msra.mxu0 %v1652
    %1654 = vmatprep.subr.mxu0 0.0
    %v1655 = vand.u32 %v1077, 4294901760
    %1656 = vmatpush1.msra.mxu0 %v1655
    %1657 = vmatprep.subr.mxu0 0.0
    %v1658 = vand.u32 %v1078, 4294901760
    %1659 = vmatpush1.msra.mxu0 %v1658
    %1660 = vmatprep.subr.mxu0 0.0
    %v1661 = vand.u32 %v1079, 4294901760
    %1662 = vmatpush1.msra.mxu0 %v1661
    %1663 = vmatprep.subr.mxu0 0.0
    %v1664 = vand.u32 %v1080, 4294901760
    %1665 = vmatpush1.msra.mxu0 %v1664
    %1666 = vmatprep.subr.mxu0 0.0
    %v1667 = vand.u32 %v1081, 4294901760
    %1668 = vmatpush1.msra.mxu0 %v1667
    %1669 = vmatprep.subr.mxu0 0.0
    %v1670 = vand.u32 %v1082, 4294901760
    %1671 = vmatpush1.msra.mxu0 %v1670
    %1672 = vmatprep.subr.mxu0 0.0
    %v1673 = vand.u32 %v1083, 4294901760
    %1674 = vmatpush1.msra.mxu0 %v1673
    %1675 = vmatprep.subr.mxu0 0.0
    %1676 = vmatpush1.msra.mxu0 0.0
    %1677 = vmatprep.subr.mxu0 0.0
    %1678 = vmatpush1.msra.mxu0 0.0
    %1679 = vmatprep.subr.mxu0 0.0
    %1680 = vmatpush1.msra.mxu0 0.0
    %1681 = vmatprep.subr.mxu0 0.0
    %1682 = vmatpush1.msra.mxu0 0.0
    %1683 = vmatprep.subr.mxu0 0.0
    %1684 = vmatpush1.msra.mxu0 0.0
    %1685 = vmatprep.subr.mxu0 0.0
    %1686 = vmatpush1.msra.mxu0 0.0
    %1687 = vmatprep.subr.mxu0 0.0
    %1688 = vmatpush1.msra.mxu0 0.0
    %1689 = vmatprep.subr.mxu0 0.0
    %1690 = vmatpush1.msra.mxu0 0.0
    %1691 = vmatprep.subr.mxu0 0.0
    %1692 = vmatpush1.msra.mxu0 0.0
    %1693 = vmatprep.subr.mxu0 0.0
    %1694 = vmatpush1.msra.mxu0 0.0
    %1695 = vmatprep.subr.mxu0 0.0
    %1696 = vmatpush1.msra.mxu0 0.0
    %1697 = vmatprep.subr.mxu0 0.0
    %1698 = vmatpush1.msra.mxu0 0.0
    %1699 = vmatprep.subr.mxu0 0.0
    %1700 = vmatpush1.msra.mxu0 0.0
    %1701 = vmatprep.subr.mxu0 0.0
    %1702 = vmatpush1.msra.mxu0 0.0
    %1703 = vmatprep.subr.mxu0 0.0
    %1704 = vmatpush1.msra.mxu0 0.0
    %1705 = vmatprep.subr.mxu0 0.0
    %1706 = vmatpush1.msra.mxu0 0.0
    %1707 = vmatprep.mubr.f32.mxu0 0.0
    %1708 = vmatmul.mubr.f32.gmra.mrb[0].mxu0 0.0
    %v1709 = vpop.f32.mrb[0].mxu0
    %v1710 = vadd.f32 %v1624, %v1709
    %v1711 = vpop.f32.mrb[0].mxu0
    %1712 = vdwg.mxu0
    %v1713 = vadd.f32 %v1084, %v1710
    %v1714 = vtanh.pop %v1713
    %1715 = vst [vmem:[#allocation2] sm:$0xff] %v1714
    %s1716 = scalar_lea.vmem [#allocation2], 8
    %v1717 = vld [vmem:[%s1716] sm:$0xff]
    %1718 = vmatprep.subr.mxu0 0.0
    %v1719 = vand.u32 %v1068, 4294901760
    %1720 = vmatpush1.msra.mxu0 %v1719
    %1721 = vmatprep.subr.mxu0 0.0
    %v1722 = vand.u32 %v1069, 4294901760
    %1723 = vmatpush1.msra.mxu0 %v1722
    %1724 = vmatprep.subr.mxu0 0.0
    %v1725 = vand.u32 %v1070, 4294901760
    %1726 = vmatpush1.msra.mxu0 %v1725
    %1727 = vmatprep.subr.mxu0 0.0
    %v1728 = vand.u32 %v1071, 4294901760
    %1729 = vmatpush1.msra.mxu0 %v1728
    %1730 = vmatprep.subr.mxu0 0.0
    %v1731 = vand.u32 %v1072, 4294901760
    %1732 = vmatpush1.msra.mxu0 %v1731
    %1733 = vmatprep.subr.mxu0 0.0
    %v1734 = vand.u32 %v1073, 4294901760
    %1735 = vmatpush1.msra.mxu0 %v1734
    %1736 = vmatprep.subr.mxu0 0.0
    %v1737 = vand.u32 %v1074, 4294901760
    %1738 = vmatpush1.msra.mxu0 %v1737
    %1739 = vmatprep.subr.mxu0 0.0
    %v1740 = vand.u32 %v1075, 4294901760
    %1741 = vmatpush1.msra.mxu0 %v1740
    %1742 = vmatprep.subr.mxu0 0.0
    %v1743 = vand.u32 %v1076, 4294901760
    %1744 = vmatpush1.msra.mxu0 %v1743
    %1745 = vmatprep.subr.mxu0 0.0
    %v1746 = vand.u32 %v1077, 4294901760
    %1747 = vmatpush1.msra.mxu0 %v1746
    %1748 = vmatprep.subr.mxu0 0.0
    %v1749 = vand.u32 %v1078, 4294901760
    %1750 = vmatpush1.msra.mxu0 %v1749
    %1751 = vmatprep.subr.mxu0 0.0
    %v1752 = vand.u32 %v1079, 4294901760
    %1753 = vmatpush1.msra.mxu0 %v1752
    %1754 = vmatprep.subr.mxu0 0.0
    %v1755 = vand.u32 %v1080, 4294901760
    %1756 = vmatpush1.msra.mxu0 %v1755
    %1757 = vmatprep.subr.mxu0 0.0
    %v1758 = vand.u32 %v1081, 4294901760
    %1759 = vmatpush1.msra.mxu0 %v1758
    %1760 = vmatprep.subr.mxu0 0.0
    %v1761 = vand.u32 %v1082, 4294901760
    %1762 = vmatpush1.msra.mxu0 %v1761
    %1763 = vmatprep.subr.mxu0 0.0
    %v1764 = vand.u32 %v1083, 4294901760
    %1765 = vmatpush1.msra.mxu0 %v1764
    %1766 = vmatprep.subr.mxu0 0.0
    %1767 = vmatpush1.msra.mxu0 0.0
    %1768 = vmatprep.subr.mxu0 0.0
    %1769 = vmatpush1.msra.mxu0 0.0
    %1770 = vmatprep.subr.mxu0 0.0
    %1771 = vmatpush1.msra.mxu0 0.0
    %1772 = vmatprep.subr.mxu0 0.0
    %1773 = vmatpush1.msra.mxu0 0.0
    %1774 = vmatprep.subr.mxu0 0.0
    %1775 = vmatpush1.msra.mxu0 0.0
    %1776 = vmatprep.subr.mxu0 0.0
    %1777 = vmatpush1.msra.mxu0 0.0
    %1778 = vmatprep.subr.mxu0 0.0
    %1779 = vmatpush1.msra.mxu0 0.0
    %1780 = vmatprep.subr.mxu0 0.0
    %1781 = vmatpush1.msra.mxu0 0.0
    %1782 = vmatprep.subr.mxu0 0.0
    %1783 = vmatpush1.msra.mxu0 0.0
    %1784 = vmatprep.subr.mxu0 0.0
    %1785 = vmatpush1.msra.mxu0 0.0
    %1786 = vmatprep.subr.mxu0 0.0
    %1787 = vmatpush1.msra.mxu0 0.0
    %1788 = vmatprep.subr.mxu0 0.0
    %1789 = vmatpush1.msra.mxu0 0.0
    %1790 = vmatprep.subr.mxu0 0.0
    %1791 = vmatpush1.msra.mxu0 0.0
    %1792 = vmatprep.subr.mxu0 0.0
    %1793 = vmatpush1.msra.mxu0 0.0
    %1794 = vmatprep.subr.mxu0 0.0
    %1795 = vmatpush1.msra.mxu0 0.0
    %1796 = vmatprep.subr.mxu0 0.0
    %1797 = vmatpush1.msra.mxu0 0.0
    %1798 = vmatprep.mubr.f32.mxu0 0.0
    %v1799 = vand.u32 %v1714, 4294901760
    %v1800 = vsub.f32 %v1714, %v1799
    %v1801 = vand.u32 %v1800, 4294901760
    %v1802 = vsub.f32 %v1800, %v1801
    %v1803 = vand.u32 %v1802, 4294901760
    %1804 = vmatmul.mubr.f32.gmra.mrb[0].mxu0 %v1803
    %v1805 = vpop.f32.mrb[0].mxu0
    %v1806 = vadd.f32 0.0, %v1805
    %v1807 = vpop.f32.mrb[0].mxu0
    %1808 = vdwg.mxu0
    %1809 = vmatprep.subr.mxu0 0.0
    %v1810 = vand.u32 %v1068, 4294901760
    %v1811 = vsub.f32 %v1068, %v1810
    %v1812 = vand.u32 %v1811, 4294901760
    %v1813 = vsub.f32 %v1811, %v1812
    %v1814 = vand.u32 %v1813, 4294901760
    %1815 = vmatpush1.msra.mxu0 %v1814
    %1816 = vmatprep.subr.mxu0 0.0
    %v1817 = vand.u32 %v1069, 4294901760
    %v1818 = vsub.f32 %v1069, %v1817
    %v1819 = vand.u32 %v1818, 4294901760
    %v1820 = vsub.f32 %v1818, %v1819
    %v1821 = vand.u32 %v1820, 4294901760
    %1822 = vmatpush1.msra.mxu0 %v1821
    %1823 = vmatprep.subr.mxu0 0.0
    %v1824 = vand.u32 %v1070, 4294901760
    %v1825 = vsub.f32 %v1070, %v1824
    %v1826 = vand.u32 %v1825, 4294901760
    %v1827 = vsub.f32 %v1825, %v1826
    %v1828 = vand.u32 %v1827, 4294901760
    %1829 = vmatpush1.msra.mxu0 %v1828
    %1830 = vmatprep.subr.mxu0 0.0
    %v1831 = vand.u32 %v1071, 4294901760
    %v1832 = vsub.f32 %v1071, %v1831
    %v1833 = vand.u32 %v1832, 4294901760
    %v1834 = vsub.f32 %v1832, %v1833
    %v1835 = vand.u32 %v1834, 4294901760
    %1836 = vmatpush1.msra.mxu0 %v1835
    %1837 = vmatprep.subr.mxu0 0.0
    %v1838 = vand.u32 %v1072, 4294901760
    %v1839 = vsub.f32 %v1072, %v1838
    %v1840 = vand.u32 %v1839, 4294901760
    %v1841 = vsub.f32 %v1839, %v1840
    %v1842 = vand.u32 %v1841, 4294901760
    %1843 = vmatpush1.msra.mxu0 %v1842
    %1844 = vmatprep.subr.mxu0 0.0
    %v1845 = vand.u32 %v1073, 4294901760
    %v1846 = vsub.f32 %v1073, %v1845
    %v1847 = vand.u32 %v1846, 4294901760
    %v1848 = vsub.f32 %v1846, %v1847
    %v1849 = vand.u32 %v1848, 4294901760
    %1850 = vmatpush1.msra.mxu0 %v1849
    %1851 = vmatprep.subr.mxu0 0.0
    %v1852 = vand.u32 %v1074, 4294901760
    %v1853 = vsub.f32 %v1074, %v1852
    %v1854 = vand.u32 %v1853, 4294901760
    %v1855 = vsub.f32 %v1853, %v1854
    %v1856 = vand.u32 %v1855, 4294901760
    %1857 = vmatpush1.msra.mxu0 %v1856
    %1858 = vmatprep.subr.mxu0 0.0
    %v1859 = vand.u32 %v1075, 4294901760
    %v1860 = vsub.f32 %v1075, %v1859
    %v1861 = vand.u32 %v1860, 4294901760
    %v1862 = vsub.f32 %v1860, %v1861
    %v1863 = vand.u32 %v1862, 4294901760
    %1864 = vmatpush1.msra.mxu0 %v1863
    %1865 = vmatprep.subr.mxu0 0.0
    %v1866 = vand.u32 %v1076, 4294901760
    %v1867 = vsub.f32 %v1076, %v1866
    %v1868 = vand.u32 %v1867, 4294901760
    %v1869 = vsub.f32 %v1867, %v1868
    %v1870 = vand.u32 %v1869, 4294901760
    %1871 = vmatpush1.msra.mxu0 %v1870
    %1872 = vmatprep.subr.mxu0 0.0
    %v1873 = vand.u32 %v1077, 4294901760
    %v1874 = vsub.f32 %v1077, %v1873
    %v1875 = vand.u32 %v1874, 4294901760
    %v1876 = vsub.f32 %v1874, %v1875
    %v1877 = vand.u32 %v1876, 4294901760
    %1878 = vmatpush1.msra.mxu0 %v1877
    %1879 = vmatprep.subr.mxu0 0.0
    %v1880 = vand.u32 %v1078, 4294901760
    %v1881 = vsub.f32 %v1078, %v1880
    %v1882 = vand.u32 %v1881, 4294901760
    %v1883 = vsub.f32 %v1881, %v1882
    %v1884 = vand.u32 %v1883, 4294901760
    %1885 = vmatpush1.msra.mxu0 %v1884
    %1886 = vmatprep.subr.mxu0 0.0
    %v1887 = vand.u32 %v1079, 4294901760
    %v1888 = vsub.f32 %v1079, %v1887
    %v1889 = vand.u32 %v1888, 4294901760
    %v1890 = vsub.f32 %v1888, %v1889
    %v1891 = vand.u32 %v1890, 4294901760
    %1892 = vmatpush1.msra.mxu0 %v1891
    %1893 = vmatprep.subr.mxu0 0.0
    %v1894 = vand.u32 %v1080, 4294901760
    %v1895 = vsub.f32 %v1080, %v1894
    %v1896 = vand.u32 %v1895, 4294901760
    %v1897 = vsub.f32 %v1895, %v1896
    %v1898 = vand.u32 %v1897, 4294901760
    %1899 = vmatpush1.msra.mxu0 %v1898
    %1900 = vmatprep.subr.mxu0 0.0
    %v1901 = vand.u32 %v1081, 4294901760
    %v1902 = vsub.f32 %v1081, %v1901
    %v1903 = vand.u32 %v1902, 4294901760
    %v1904 = vsub.f32 %v1902, %v1903
    %v1905 = vand.u32 %v1904, 4294901760
    %1906 = vmatpush1.msra.mxu0 %v1905
    %1907 = vmatprep.subr.mxu0 0.0
    %v1908 = vand.u32 %v1082, 4294901760
    %v1909 = vsub.f32 %v1082, %v1908
    %v1910 = vand.u32 %v1909, 4294901760
    %v1911 = vsub.f32 %v1909, %v1910
    %v1912 = vand.u32 %v1911, 4294901760
    %1913 = vmatpush1.msra.mxu0 %v1912
    %1914 = vmatprep.subr.mxu0 0.0
    %v1915 = vand.u32 %v1083, 4294901760
    %v1916 = vsub.f32 %v1083, %v1915
    %v1917 = vand.u32 %v1916, 4294901760
    %v1918 = vsub.f32 %v1916, %v1917
    %v1919 = vand.u32 %v1918, 4294901760
    %1920 = vmatpush1.msra.mxu0 %v1919
    %1921 = vmatprep.subr.mxu0 0.0
    %1922 = vmatpush1.msra.mxu0 0.0
    %1923 = vmatprep.subr.mxu0 0.0
    %1924 = vmatpush1.msra.mxu0 0.0
    %1925 = vmatprep.subr.mxu0 0.0
    %1926 = vmatpush1.msra.mxu0 0.0
    %1927 = vmatprep.subr.mxu0 0.0
    %1928 = vmatpush1.msra.mxu0 0.0
    %1929 = vmatprep.subr.mxu0 0.0
    %1930 = vmatpush1.msra.mxu0 0.0
    %1931 = vmatprep.subr.mxu0 0.0
    %1932 = vmatpush1.msra.mxu0 0.0
    %1933 = vmatprep.subr.mxu0 0.0
    %1934 = vmatpush1.msra.mxu0 0.0
    %1935 = vmatprep.subr.mxu0 0.0
    %1936 = vmatpush1.msra.mxu0 0.0
    %1937 = vmatprep.subr.mxu0 0.0
    %1938 = vmatpush1.msra.mxu0 0.0
    %1939 = vmatprep.subr.mxu0 0.0
    %1940 = vmatpush1.msra.mxu0 0.0
    %1941 = vmatprep.subr.mxu0 0.0
    %1942 = vmatpush1.msra.mxu0 0.0
    %1943 = vmatprep.subr.mxu0 0.0
    %1944 = vmatpush1.msra.mxu0 0.0
    %1945 = vmatprep.subr.mxu0 0.0
    %1946 = vmatpush1.msra.mxu0 0.0
    %1947 = vmatprep.subr.mxu0 0.0
    %1948 = vmatpush1.msra.mxu0 0.0
    %1949 = vmatprep.subr.mxu0 0.0
    %1950 = vmatpush1.msra.mxu0 0.0
    %1951 = vmatprep.subr.mxu0 0.0
    %1952 = vmatpush1.msra.mxu0 0.0
    %1953 = vmatprep.mubr.f32.mxu0 0.0
    %v1954 = vand.u32 %v1714, 4294901760
    %1955 = vmatmul.mubr.f32.gmra.mrb[0].mxu0 %v1954
    %v1956 = vpop.f32.mrb[0].mxu0
    %v1957 = vadd.f32 %v1806, %v1956
    %v1958 = vpop.f32.mrb[0].mxu0
    %1959 = vdwg.mxu0
    %1960 = vmatprep.subr.mxu0 0.0
    %v1961 = vand.u32 %v1068, 4294901760
    %v1962 = vsub.f32 %v1068, %v1961
    %1963 = vmatpush1.msra.mxu0 %v1962
    %1964 = vmatprep.subr.mxu0 0.0
    %v1965 = vand.u32 %v1069, 4294901760
    %v1966 = vsub.f32 %v1069, %v1965
    %1967 = vmatpush1.msra.mxu0 %v1966
    %1968 = vmatprep.subr.mxu0 0.0
    %v1969 = vand.u32 %v1070, 4294901760
    %v1970 = vsub.f32 %v1070, %v1969
    %1971 = vmatpush1.msra.mxu0 %v1970
    %1972 = vmatprep.subr.mxu0 0.0
    %v1973 = vand.u32 %v1071, 4294901760
    %v1974 = vsub.f32 %v1071, %v1973
    %1975 = vmatpush1.msra.mxu0 %v1974
    %1976 = vmatprep.subr.mxu0 0.0
    %v1977 = vand.u32 %v1072, 4294901760
    %v1978 = vsub.f32 %v1072, %v1977
    %1979 = vmatpush1.msra.mxu0 %v1978
    %1980 = vmatprep.subr.mxu0 0.0
    %v1981 = vand.u32 %v1073, 4294901760
    %v1982 = vsub.f32 %v1073, %v1981
    %1983 = vmatpush1.msra.mxu0 %v1982
    %1984 = vmatprep.subr.mxu0 0.0
    %v1985 = vand.u32 %v1074, 4294901760
    %v1986 = vsub.f32 %v1074, %v1985
    %1987 = vmatpush1.msra.mxu0 %v1986
    %1988 = vmatprep.subr.mxu0 0.0
    %v1989 = vand.u32 %v1075, 4294901760
    %v1990 = vsub.f32 %v1075, %v1989
    %1991 = vmatpush1.msra.mxu0 %v1990
    %1992 = vmatprep.subr.mxu0 0.0
    %v1993 = vand.u32 %v1076, 4294901760
    %v1994 = vsub.f32 %v1076, %v1993
    %1995 = vmatpush1.msra.mxu0 %v1994
    %1996 = vmatprep.subr.mxu0 0.0
    %v1997 = vand.u32 %v1077, 4294901760
    %v1998 = vsub.f32 %v1077, %v1997
    %1999 = vmatpush1.msra.mxu0 %v1998
    %2000 = vmatprep.subr.mxu0 0.0
    %v2001 = vand.u32 %v1078, 4294901760
    %v2002 = vsub.f32 %v1078, %v2001
    %2003 = vmatpush1.msra.mxu0 %v2002
    %2004 = vmatprep.subr.mxu0 0.0
    %v2005 = vand.u32 %v1079, 4294901760
    %v2006 = vsub.f32 %v1079, %v2005
    %2007 = vmatpush1.msra.mxu0 %v2006
    %2008 = vmatprep.subr.mxu0 0.0
    %v2009 = vand.u32 %v1080, 4294901760
    %v2010 = vsub.f32 %v1080, %v2009
    %2011 = vmatpush1.msra.mxu0 %v2010
    %2012 = vmatprep.subr.mxu0 0.0
    %v2013 = vand.u32 %v1081, 4294901760
    %v2014 = vsub.f32 %v1081, %v2013
    %2015 = vmatpush1.msra.mxu0 %v2014
    %2016 = vmatprep.subr.mxu0 0.0
    %v2017 = vand.u32 %v1082, 4294901760
    %v2018 = vsub.f32 %v1082, %v2017
    %2019 = vmatpush1.msra.mxu0 %v2018
    %2020 = vmatprep.subr.mxu0 0.0
    %v2021 = vand.u32 %v1083, 4294901760
    %v2022 = vsub.f32 %v1083, %v2021
    %2023 = vmatpush1.msra.mxu0 %v2022
    %2024 = vmatprep.subr.mxu0 0.0
    %2025 = vmatpush1.msra.mxu0 0.0
    %2026 = vmatprep.subr.mxu0 0.0
    %2027 = vmatpush1.msra.mxu0 0.0
    %2028 = vmatprep.subr.mxu0 0.0
    %2029 = vmatpush1.msra.mxu0 0.0
    %2030 = vmatprep.subr.mxu0 0.0
    %2031 = vmatpush1.msra.mxu0 0.0
    %2032 = vmatprep.subr.mxu0 0.0
    %2033 = vmatpush1.msra.mxu0 0.0
    %2034 = vmatprep.subr.mxu0 0.0
    %2035 = vmatpush1.msra.mxu0 0.0
    %2036 = vmatprep.subr.mxu0 0.0
    %2037 = vmatpush1.msra.mxu0 0.0
    %2038 = vmatprep.subr.mxu0 0.0
    %2039 = vmatpush1.msra.mxu0 0.0
    %2040 = vmatprep.subr.mxu0 0.0
    %2041 = vmatpush1.msra.mxu0 0.0
    %2042 = vmatprep.subr.mxu0 0.0
    %2043 = vmatpush1.msra.mxu0 0.0
    %2044 = vmatprep.subr.mxu0 0.0
    %2045 = vmatpush1.msra.mxu0 0.0
    %2046 = vmatprep.subr.mxu0 0.0
    %2047 = vmatpush1.msra.mxu0 0.0
    %2048 = vmatprep.subr.mxu0 0.0
    %2049 = vmatpush1.msra.mxu0 0.0
    %2050 = vmatprep.subr.mxu0 0.0
    %2051 = vmatpush1.msra.mxu0 0.0
    %2052 = vmatprep.subr.mxu0 0.0
    %2053 = vmatpush1.msra.mxu0 0.0
    %2054 = vmatprep.subr.mxu0 0.0
    %2055 = vmatpush1.msra.mxu0 0.0
    %2056 = vmatprep.mubr.f32.mxu0 0.0
    %v2057 = vand.u32 %v1714, 4294901760
    %v2058 = vsub.f32 %v1714, %v2057
    %2059 = vmatmul.mubr.f32.gmra.mrb[0].mxu0 %v2058
    %v2060 = vpop.f32.mrb[0].mxu0
    %v2061 = vadd.f32 %v1957, %v2060
    %v2062 = vpop.f32.mrb[0].mxu0
    %2063 = vdwg.mxu0
    %2064 = vmatprep.subr.mxu0 0.0
    %v2065 = vand.u32 %v1068, 4294901760
    %2066 = vmatpush1.msra.mxu0 %v2065
    %2067 = vmatprep.subr.mxu0 0.0
    %v2068 = vand.u32 %v1069, 4294901760
    %2069 = vmatpush1.msra.mxu0 %v2068
    %2070 = vmatprep.subr.mxu0 0.0
    %v2071 = vand.u32 %v1070, 4294901760
    %2072 = vmatpush1.msra.mxu0 %v2071
    %2073 = vmatprep.subr.mxu0 0.0
    %v2074 = vand.u32 %v1071, 4294901760
    %2075 = vmatpush1.msra.mxu0 %v2074
    %2076 = vmatprep.subr.mxu0 0.0
    %v2077 = vand.u32 %v1072, 4294901760
    %2078 = vmatpush1.msra.mxu0 %v2077
    %2079 = vmatprep.subr.mxu0 0.0
    %v2080 = vand.u32 %v1073, 4294901760
    %2081 = vmatpush1.msra.mxu0 %v2080
    %2082 = vmatprep.subr.mxu0 0.0
    %v2083 = vand.u32 %v1074, 4294901760
    %2084 = vmatpush1.msra.mxu0 %v2083
    %2085 = vmatprep.subr.mxu0 0.0
    %v2086 = vand.u32 %v1075, 4294901760
    %2087 = vmatpush1.msra.mxu0 %v2086
    %2088 = vmatprep.subr.mxu0 0.0
    %v2089 = vand.u32 %v1076, 4294901760
    %2090 = vmatpush1.msra.mxu0 %v2089
    %2091 = vmatprep.subr.mxu0 0.0
    %v2092 = vand.u32 %v1077, 4294901760
    %2093 = vmatpush1.msra.mxu0 %v2092
    %2094 = vmatprep.subr.mxu0 0.0
    %v2095 = vand.u32 %v1078, 4294901760
    %2096 = vmatpush1.msra.mxu0 %v2095
    %2097 = vmatprep.subr.mxu0 0.0
    %v2098 = vand.u32 %v1079, 4294901760
    %2099 = vmatpush1.msra.mxu0 %v2098
    %2100 = vmatprep.subr.mxu0 0.0
    %v2101 = vand.u32 %v1080, 4294901760
    %2102 = vmatpush1.msra.mxu0 %v2101
    %2103 = vmatprep.subr.mxu0 0.0
    %v2104 = vand.u32 %v1081, 4294901760
    %2105 = vmatpush1.msra.mxu0 %v2104
    %2106 = vmatprep.subr.mxu0 0.0
    %v2107 = vand.u32 %v1082, 4294901760
    %2108 = vmatpush1.msra.mxu0 %v2107
    %2109 = vmatprep.subr.mxu0 0.0
    %v2110 = vand.u32 %v1083, 4294901760
    %2111 = vmatpush1.msra.mxu0 %v2110
    %2112 = vmatprep.subr.mxu0 0.0
    %2113 = vmatpush1.msra.mxu0 0.0
    %2114 = vmatprep.subr.mxu0 0.0
    %2115 = vmatpush1.msra.mxu0 0.0
    %2116 = vmatprep.subr.mxu0 0.0
    %2117 = vmatpush1.msra.mxu0 0.0
    %2118 = vmatprep.subr.mxu0 0.0
    %2119 = vmatpush1.msra.mxu0 0.0
    %2120 = vmatprep.subr.mxu0 0.0
    %2121 = vmatpush1.msra.mxu0 0.0
    %2122 = vmatprep.subr.mxu0 0.0
    %2123 = vmatpush1.msra.mxu0 0.0
    %2124 = vmatprep.subr.mxu0 0.0
    %2125 = vmatpush1.msra.mxu0 0.0
    %2126 = vmatprep.subr.mxu0 0.0
    %2127 = vmatpush1.msra.mxu0 0.0
    %2128 = vmatprep.subr.mxu0 0.0
    %2129 = vmatpush1.msra.mxu0 0.0
    %2130 = vmatprep.subr.mxu0 0.0
    %2131 = vmatpush1.msra.mxu0 0.0
    %2132 = vmatprep.subr.mxu0 0.0
    %2133 = vmatpush1.msra.mxu0 0.0
    %2134 = vmatprep.subr.mxu0 0.0
    %2135 = vmatpush1.msra.mxu0 0.0
    %2136 = vmatprep.subr.mxu0 0.0
    %2137 = vmatpush1.msra.mxu0 0.0
    %2138 = vmatprep.subr.mxu0 0.0
    %2139 = vmatpush1.msra.mxu0 0.0
    %2140 = vmatprep.subr.mxu0 0.0
    %2141 = vmatpush1.msra.mxu0 0.0
    %2142 = vmatprep.subr.mxu0 0.0
    %2143 = vmatpush1.msra.mxu0 0.0
    %2144 = vmatprep.mubr.f32.mxu0 0.0
    %v2145 = vand.u32 %v1714, 4294901760
    %v2146 = vsub.f32 %v1714, %v2145
    %v2147 = vand.u32 %v2146, 4294901760
    %2148 = vmatmul.mubr.f32.gmra.mrb[0].mxu0 %v2147
    %v2149 = vpop.f32.mrb[0].mxu0
    %v2150 = vadd.f32 %v2061, %v2149
    %v2151 = vpop.f32.mrb[0].mxu0
    %2152 = vdwg.mxu0
    %2153 = vmatprep.subr.mxu0 0.0
    %v2154 = vand.u32 %v1068, 4294901760
    %v2155 = vsub.f32 %v1068, %v2154
    %v2156 = vand.u32 %v2155, 4294901760
    %2157 = vmatpush1.msra.mxu0 %v2156
    %2158 = vmatprep.subr.mxu0 0.0
    %v2159 = vand.u32 %v1069, 4294901760
    %v2160 = vsub.f32 %v1069, %v2159
    %v2161 = vand.u32 %v2160, 4294901760
    %2162 = vmatpush1.msra.mxu0 %v2161
    %2163 = vmatprep.subr.mxu0 0.0
    %v2164 = vand.u32 %v1070, 4294901760
    %v2165 = vsub.f32 %v1070, %v2164
    %v2166 = vand.u32 %v2165, 4294901760
    %2167 = vmatpush1.msra.mxu0 %v2166
    %2168 = vmatprep.subr.mxu0 0.0
    %v2169 = vand.u32 %v1071, 4294901760
    %v2170 = vsub.f32 %v1071, %v2169
    %v2171 = vand.u32 %v2170, 4294901760
    %2172 = vmatpush1.msra.mxu0 %v2171
    %2173 = vmatprep.subr.mxu0 0.0
    %v2174 = vand.u32 %v1072, 4294901760
    %v2175 = vsub.f32 %v1072, %v2174
    %v2176 = vand.u32 %v2175, 4294901760
    %2177 = vmatpush1.msra.mxu0 %v2176
    %2178 = vmatprep.subr.mxu0 0.0
    %v2179 = vand.u32 %v1073, 4294901760
    %v2180 = vsub.f32 %v1073, %v2179
    %v2181 = vand.u32 %v2180, 4294901760
    %2182 = vmatpush1.msra.mxu0 %v2181
    %2183 = vmatprep.subr.mxu0 0.0
    %v2184 = vand.u32 %v1074, 4294901760
    %v2185 = vsub.f32 %v1074, %v2184
    %v2186 = vand.u32 %v2185, 4294901760
    %2187 = vmatpush1.msra.mxu0 %v2186
    %2188 = vmatprep.subr.mxu0 0.0
    %v2189 = vand.u32 %v1075, 4294901760
    %v2190 = vsub.f32 %v1075, %v2189
    %v2191 = vand.u32 %v2190, 4294901760
    %2192 = vmatpush1.msra.mxu0 %v2191
    %2193 = vmatprep.subr.mxu0 0.0
    %v2194 = vand.u32 %v1076, 4294901760
    %v2195 = vsub.f32 %v1076, %v2194
    %v2196 = vand.u32 %v2195, 4294901760
    %2197 = vmatpush1.msra.mxu0 %v2196
    %2198 = vmatprep.subr.mxu0 0.0
    %v2199 = vand.u32 %v1077, 4294901760
    %v2200 = vsub.f32 %v1077, %v2199
    %v2201 = vand.u32 %v2200, 4294901760
    %2202 = vmatpush1.msra.mxu0 %v2201
    %2203 = vmatprep.subr.mxu0 0.0
    %v2204 = vand.u32 %v1078, 4294901760
    %v2205 = vsub.f32 %v1078, %v2204
    %v2206 = vand.u32 %v2205, 4294901760
    %2207 = vmatpush1.msra.mxu0 %v2206
    %2208 = vmatprep.subr.mxu0 0.0
    %v2209 = vand.u32 %v1079, 4294901760
    %v2210 = vsub.f32 %v1079, %v2209
    %v2211 = vand.u32 %v2210, 4294901760
    %2212 = vmatpush1.msra.mxu0 %v2211
    %2213 = vmatprep.subr.mxu0 0.0
    %v2214 = vand.u32 %v1080, 4294901760
    %v2215 = vsub.f32 %v1080, %v2214
    %v2216 = vand.u32 %v2215, 4294901760
    %2217 = vmatpush1.msra.mxu0 %v2216
    %2218 = vmatprep.subr.mxu0 0.0
    %v2219 = vand.u32 %v1081, 4294901760
    %v2220 = vsub.f32 %v1081, %v2219
    %v2221 = vand.u32 %v2220, 4294901760
    %2222 = vmatpush1.msra.mxu0 %v2221
    %2223 = vmatprep.subr.mxu0 0.0
    %v2224 = vand.u32 %v1082, 4294901760
    %v2225 = vsub.f32 %v1082, %v2224
    %v2226 = vand.u32 %v2225, 4294901760
    %2227 = vmatpush1.msra.mxu0 %v2226
    %2228 = vmatprep.subr.mxu0 0.0
    %v2229 = vand.u32 %v1083, 4294901760
    %v2230 = vsub.f32 %v1083, %v2229
    %v2231 = vand.u32 %v2230, 4294901760
    %2232 = vmatpush1.msra.mxu0 %v2231
    %2233 = vmatprep.subr.mxu0 0.0
    %2234 = vmatpush1.msra.mxu0 0.0
    %2235 = vmatprep.subr.mxu0 0.0
    %2236 = vmatpush1.msra.mxu0 0.0
    %2237 = vmatprep.subr.mxu0 0.0
    %2238 = vmatpush1.msra.mxu0 0.0
    %2239 = vmatprep.subr.mxu0 0.0
    %2240 = vmatpush1.msra.mxu0 0.0
    %2241 = vmatprep.subr.mxu0 0.0
    %2242 = vmatpush1.msra.mxu0 0.0
    %2243 = vmatprep.subr.mxu0 0.0
    %2244 = vmatpush1.msra.mxu0 0.0
    %2245 = vmatprep.subr.mxu0 0.0
    %2246 = vmatpush1.msra.mxu0 0.0
    %2247 = vmatprep.subr.mxu0 0.0
    %2248 = vmatpush1.msra.mxu0 0.0
    %2249 = vmatprep.subr.mxu0 0.0
    %2250 = vmatpush1.msra.mxu0 0.0
    %2251 = vmatprep.subr.mxu0 0.0
    %2252 = vmatpush1.msra.mxu0 0.0
    %2253 = vmatprep.subr.mxu0 0.0
    %2254 = vmatpush1.msra.mxu0 0.0
    %2255 = vmatprep.subr.mxu0 0.0
    %2256 = vmatpush1.msra.mxu0 0.0
    %2257 = vmatprep.subr.mxu0 0.0
    %2258 = vmatpush1.msra.mxu0 0.0
    %2259 = vmatprep.subr.mxu0 0.0
    %2260 = vmatpush1.msra.mxu0 0.0
    %2261 = vmatprep.subr.mxu0 0.0
    %2262 = vmatpush1.msra.mxu0 0.0
    %2263 = vmatprep.subr.mxu0 0.0
    %2264 = vmatpush1.msra.mxu0 0.0
    %2265 = vmatprep.mubr.f32.mxu0 0.0
    %v2266 = vand.u32 %v1714, 4294901760
    %2267 = vmatmul.mubr.f32.gmra.mrb[0].mxu0 %v2266
    %v2268 = vpop.f32.mrb[0].mxu0
    %v2269 = vadd.f32 %v2150, %v2268
    %v2270 = vpop.f32.mrb[0].mxu0
    %2271 = vdwg.mxu0
    %2272 = vmatprep.subr.mxu0 0.0
    %v2273 = vand.u32 %v1068, 4294901760
    %2274 = vmatpush1.msra.mxu0 %v2273
    %2275 = vmatprep.subr.mxu0 0.0
    %v2276 = vand.u32 %v1069, 4294901760
    %2277 = vmatpush1.msra.mxu0 %v2276
    %2278 = vmatprep.subr.mxu0 0.0
    %v2279 = vand.u32 %v1070, 4294901760
    %2280 = vmatpush1.msra.mxu0 %v2279
    %2281 = vmatprep.subr.mxu0 0.0
    %v2282 = vand.u32 %v1071, 4294901760
    %2283 = vmatpush1.msra.mxu0 %v2282
    %2284 = vmatprep.subr.mxu0 0.0
    %v2285 = vand.u32 %v1072, 4294901760
    %2286 = vmatpush1.msra.mxu0 %v2285
    %2287 = vmatprep.subr.mxu0 0.0
    %v2288 = vand.u32 %v1073, 4294901760
    %2289 = vmatpush1.msra.mxu0 %v2288
    %2290 = vmatprep.subr.mxu0 0.0
    %v2291 = vand.u32 %v1074, 4294901760
    %2292 = vmatpush1.msra.mxu0 %v2291
    %2293 = vmatprep.subr.mxu0 0.0
    %v2294 = vand.u32 %v1075, 4294901760
    %2295 = vmatpush1.msra.mxu0 %v2294
    %2296 = vmatprep.subr.mxu0 0.0
    %v2297 = vand.u32 %v1076, 4294901760
    %2298 = vmatpush1.msra.mxu0 %v2297
    %2299 = vmatprep.subr.mxu0 0.0
    %v2300 = vand.u32 %v1077, 4294901760
    %2301 = vmatpush1.msra.mxu0 %v2300
    %2302 = vmatprep.subr.mxu0 0.0
    %v2303 = vand.u32 %v1078, 4294901760
    %2304 = vmatpush1.msra.mxu0 %v2303
    %2305 = vmatprep.subr.mxu0 0.0
    %v2306 = vand.u32 %v1079, 4294901760
    %2307 = vmatpush1.msra.mxu0 %v2306
    %2308 = vmatprep.subr.mxu0 0.0
    %v2309 = vand.u32 %v1080, 4294901760
    %2310 = vmatpush1.msra.mxu0 %v2309
    %2311 = vmatprep.subr.mxu0 0.0
    %v2312 = vand.u32 %v1081, 4294901760
    %2313 = vmatpush1.msra.mxu0 %v2312
    %2314 = vmatprep.subr.mxu0 0.0
    %v2315 = vand.u32 %v1082, 4294901760
    %2316 = vmatpush1.msra.mxu0 %v2315
    %2317 = vmatprep.subr.mxu0 0.0
    %v2318 = vand.u32 %v1083, 4294901760
    %2319 = vmatpush1.msra.mxu0 %v2318
    %2320 = vmatprep.subr.mxu0 0.0
    %2321 = vmatpush1.msra.mxu0 0.0
    %2322 = vmatprep.subr.mxu0 0.0
    %2323 = vmatpush1.msra.mxu0 0.0
    %2324 = vmatprep.subr.mxu0 0.0
    %2325 = vmatpush1.msra.mxu0 0.0
    %2326 = vmatprep.subr.mxu0 0.0
    %2327 = vmatpush1.msra.mxu0 0.0
    %2328 = vmatprep.subr.mxu0 0.0
    %2329 = vmatpush1.msra.mxu0 0.0
    %2330 = vmatprep.subr.mxu0 0.0
    %2331 = vmatpush1.msra.mxu0 0.0
    %2332 = vmatprep.subr.mxu0 0.0
    %2333 = vmatpush1.msra.mxu0 0.0
    %2334 = vmatprep.subr.mxu0 0.0
    %2335 = vmatpush1.msra.mxu0 0.0
    %2336 = vmatprep.subr.mxu0 0.0
    %2337 = vmatpush1.msra.mxu0 0.0
    %2338 = vmatprep.subr.mxu0 0.0
    %2339 = vmatpush1.msra.mxu0 0.0
    %2340 = vmatprep.subr.mxu0 0.0
    %2341 = vmatpush1.msra.mxu0 0.0
    %2342 = vmatprep.subr.mxu0 0.0
    %2343 = vmatpush1.msra.mxu0 0.0
    %2344 = vmatprep.subr.mxu0 0.0
    %2345 = vmatpush1.msra.mxu0 0.0
    %2346 = vmatprep.subr.mxu0 0.0
    %2347 = vmatpush1.msra.mxu0 0.0
    %2348 = vmatprep.subr.mxu0 0.0
    %2349 = vmatpush1.msra.mxu0 0.0
    %2350 = vmatprep.subr.mxu0 0.0
    %2351 = vmatpush1.msra.mxu0 0.0
    %2352 = vmatprep.mubr.f32.mxu0 0.0
    %v2353 = vand.u32 %v1714, 4294901760
    %2354 = vmatmul.mubr.f32.gmra.mrb[0].mxu0 %v2353
    %v2355 = vpop.f32.mrb[0].mxu0
    %v2356 = vadd.f32 %v2269, %v2355
    %v2357 = vpop.f32.mrb[0].mxu0
    %2358 = vdwg.mxu0
    %v2359 = vadd.f32 %v1717, %v2356
    %v2360 = vtanh.pop %v2359
    %2361 = vst [vmem:[%s1716] sm:$0xff] %v2360
    %s2362 = scalar_lea.vmem [#allocation2], 16
    %v2363 = vld [vmem:[%s2362] sm:$0xff]
    %2364 = vmatprep.subr.mxu0 0.0
    %v2365 = vand.u32 %v1068, 4294901760
    %2366 = vmatpush1.msra.mxu0 %v2365
    %2367 = vmatprep.subr.mxu0 0.0
    %v2368 = vand.u32 %v1069, 4294901760
    %2369 = vmatpush1.msra.mxu0 %v2368
    %2370 = vmatprep.subr.mxu0 0.0
    %v2371 = vand.u32 %v1070, 4294901760
    %2372 = vmatpush1.msra.mxu0 %v2371
    %2373 = vmatprep.subr.mxu0 0.0
    %v2374 = vand.u32 %v1071, 4294901760
    %2375 = vmatpush1.msra.mxu0 %v2374
    %2376 = vmatprep.subr.mxu0 0.0
    %v2377 = vand.u32 %v1072, 4294901760
    %2378 = vmatpush1.msra.mxu0 %v2377
    %2379 = vmatprep.subr.mxu0 0.0
    %v2380 = vand.u32 %v1073, 4294901760
    %2381 = vmatpush1.msra.mxu0 %v2380
    %2382 = vmatprep.subr.mxu0 0.0
    %v2383 = vand.u32 %v1074, 4294901760
    %2384 = vmatpush1.msra.mxu0 %v2383
    %2385 = vmatprep.subr.mxu0 0.0
    %v2386 = vand.u32 %v1075, 4294901760
    %2387 = vmatpush1.msra.mxu0 %v2386
    %2388 = vmatprep.subr.mxu0 0.0
    %v2389 = vand.u32 %v1076, 4294901760
    %2390 = vmatpush1.msra.mxu0 %v2389
    %2391 = vmatprep.subr.mxu0 0.0
    %v2392 = vand.u32 %v1077, 4294901760
    %2393 = vmatpush1.msra.mxu0 %v2392
    %2394 = vmatprep.subr.mxu0 0.0
    %v2395 = vand.u32 %v1078, 4294901760
    %2396 = vmatpush1.msra.mxu0 %v2395
    %2397 = vmatprep.subr.mxu0 0.0
    %v2398 = vand.u32 %v1079, 4294901760
    %2399 = vmatpush1.msra.mxu0 %v2398
    %2400 = vmatprep.subr.mxu0 0.0
    %v2401 = vand.u32 %v1080, 4294901760
    %2402 = vmatpush1.msra.mxu0 %v2401
    %2403 = vmatprep.subr.mxu0 0.0
    %v2404 = vand.u32 %v1081, 4294901760
    %2405 = vmatpush1.msra.mxu0 %v2404
    %2406 = vmatprep.subr.mxu0 0.0
    %v2407 = vand.u32 %v1082, 4294901760
    %2408 = vmatpush1.msra.mxu0 %v2407
    %2409 = vmatprep.subr.mxu0 0.0
    %v2410 = vand.u32 %v1083, 4294901760
    %2411 = vmatpush1.msra.mxu0 %v2410
    %2412 = vmatprep.subr.mxu0 0.0
    %2413 = vmatpush1.msra.mxu0 0.0
    %2414 = vmatprep.subr.mxu0 0.0
    %2415 = vmatpush1.msra.mxu0 0.0
    %2416 = vmatprep.subr.mxu0 0.0
    %2417 = vmatpush1.msra.mxu0 0.0
    %2418 = vmatprep.subr.mxu0 0.0
    %2419 = vmatpush1.msra.mxu0 0.0
    %2420 = vmatprep.subr.mxu0 0.0
    %2421 = vmatpush1.msra.mxu0 0.0
    %2422 = vmatprep.subr.mxu0 0.0
    %2423 = vmatpush1.msra.mxu0 0.0
    %2424 = vmatprep.subr.mxu0 0.0
    %2425 = vmatpush1.msra.mxu0 0.0
    %2426 = vmatprep.subr.mxu0 0.0
    %2427 = vmatpush1.msra.mxu0 0.0
    %2428 = vmatprep.subr.mxu0 0.0
    %2429 = vmatpush1.msra.mxu0 0.0
    %2430 = vmatprep.subr.mxu0 0.0
    %2431 = vmatpush1.msra.mxu0 0.0
    %2432 = vmatprep.subr.mxu0 0.0
    %2433 = vmatpush1.msra.mxu0 0.0
    %2434 = vmatprep.subr.mxu0 0.0
    %2435 = vmatpush1.msra.mxu0 0.0
    %2436 = vmatprep.subr.mxu0 0.0
    %2437 = vmatpush1.msra.mxu0 0.0
    %2438 = vmatprep.subr.mxu0 0.0
    %2439 = vmatpush1.msra.mxu0 0.0
    %2440 = vmatprep.subr.mxu0 0.0
    %2441 = vmatpush1.msra.mxu0 0.0
    %2442 = vmatprep.subr.mxu0 0.0
    %2443 = vmatpush1.msra.mxu0 0.0
    %2444 = vmatprep.mubr.f32.mxu0 0.0
    %v2445 = vand.u32 %v2360, 4294901760
    %v2446 = vsub.f32 %v2360, %v2445
    %v2447 = vand.u32 %v2446, 4294901760
    %v2448 = vsub.f32 %v2446, %v2447
    %v2449 = vand.u32 %v2448, 4294901760
    %2450 = vmatmul.mubr.f32.gmra.mrb[0].mxu0 %v2449
    %v2451 = vpop.f32.mrb[0].mxu0
    %v2452 = vadd.f32 0.0, %v2451
    %v2453 = vpop.f32.mrb[0].mxu0
    %2454 = vdwg.mxu0
    %2455 = vmatprep.subr.mxu0 0.0
    %v2456 = vand.u32 %v1068, 4294901760
    %v2457 = vsub.f32 %v1068, %v2456
    %v2458 = vand.u32 %v2457, 4294901760
    %v2459 = vsub.f32 %v2457, %v2458
    %v2460 = vand.u32 %v2459, 4294901760
    %2461 = vmatpush1.msra.mxu0 %v2460
    %2462 = vmatprep.subr.mxu0 0.0
    %v2463 = vand.u32 %v1069, 4294901760
    %v2464 = vsub.f32 %v1069, %v2463
    %v2465 = vand.u32 %v2464, 4294901760
    %v2466 = vsub.f32 %v2464, %v2465
    %v2467 = vand.u32 %v2466, 4294901760
    %2468 = vmatpush1.msra.mxu0 %v2467
    %2469 = vmatprep.subr.mxu0 0.0
    %v2470 = vand.u32 %v1070, 4294901760
    %v2471 = vsub.f32 %v1070, %v2470
    %v2472 = vand.u32 %v2471, 4294901760
    %v2473 = vsub.f32 %v2471, %v2472
    %v2474 = vand.u32 %v2473, 4294901760
    %2475 = vmatpush1.msra.mxu0 %v2474
    %2476 = vmatprep.subr.mxu0 0.0
    %v2477 = vand.u32 %v1071, 4294901760
    %v2478 = vsub.f32 %v1071, %v2477
    %v2479 = vand.u32 %v2478, 4294901760
    %v2480 = vsub.f32 %v2478, %v2479
    %v2481 = vand.u32 %v2480, 4294901760
    %2482 = vmatpush1.msra.mxu0 %v2481
    %2483 = vmatprep.subr.mxu0 0.0
    %v2484 = vand.u32 %v1072, 4294901760
    %v2485 = vsub.f32 %v1072, %v2484
    %v2486 = vand.u32 %v2485, 4294901760
    %v2487 = vsub.f32 %v2485, %v2486
    %v2488 = vand.u32 %v2487, 4294901760
    %2489 = vmatpush1.msra.mxu0 %v2488
    %2490 = vmatprep.subr.mxu0 0.0
    %v2491 = vand.u32 %v1073, 4294901760
    %v2492 = vsub.f32 %v1073, %v2491
    %v2493 = vand.u32 %v2492, 4294901760
    %v2494 = vsub.f32 %v2492, %v2493
    %v2495 = vand.u32 %v2494, 4294901760
    %2496 = vmatpush1.msra.mxu0 %v2495
    %2497 = vmatprep.subr.mxu0 0.0
    %v2498 = vand.u32 %v1074, 4294901760
    %v2499 = vsub.f32 %v1074, %v2498
    %v2500 = vand.u32 %v2499, 4294901760
    %v2501 = vsub.f32 %v2499, %v2500
    %v2502 = vand.u32 %v2501, 4294901760
    %2503 = vmatpush1.msra.mxu0 %v2502
    %2504 = vmatprep.subr.mxu0 0.0
    %v2505 = vand.u32 %v1075, 4294901760
    %v2506 = vsub.f32 %v1075, %v2505
    %v2507 = vand.u32 %v2506, 4294901760
    %v2508 = vsub.f32 %v2506, %v2507
    %v2509 = vand.u32 %v2508, 4294901760
    %2510 = vmatpush1.msra.mxu0 %v2509
    %2511 = vmatprep.subr.mxu0 0.0
    %v2512 = vand.u32 %v1076, 4294901760
    %v2513 = vsub.f32 %v1076, %v2512
    %v2514 = vand.u32 %v2513, 4294901760
    %v2515 = vsub.f32 %v2513, %v2514
    %v2516 = vand.u32 %v2515, 4294901760
    %2517 = vmatpush1.msra.mxu0 %v2516
    %2518 = vmatprep.subr.mxu0 0.0
    %v2519 = vand.u32 %v1077, 4294901760
    %v2520 = vsub.f32 %v1077, %v2519
    %v2521 = vand.u32 %v2520, 4294901760
    %v2522 = vsub.f32 %v2520, %v2521
    %v2523 = vand.u32 %v2522, 4294901760
    %2524 = vmatpush1.msra.mxu0 %v2523
    %2525 = vmatprep.subr.mxu0 0.0
    %v2526 = vand.u32 %v1078, 4294901760
    %v2527 = vsub.f32 %v1078, %v2526
    %v2528 = vand.u32 %v2527, 4294901760
    %v2529 = vsub.f32 %v2527, %v2528
    %v2530 = vand.u32 %v2529, 4294901760
    %2531 = vmatpush1.msra.mxu0 %v2530
    %2532 = vmatprep.subr.mxu0 0.0
    %v2533 = vand.u32 %v1079, 4294901760
    %v2534 = vsub.f32 %v1079, %v2533
    %v2535 = vand.u32 %v2534, 4294901760
    %v2536 = vsub.f32 %v2534, %v2535
    %v2537 = vand.u32 %v2536, 4294901760
    %2538 = vmatpush1.msra.mxu0 %v2537
    %2539 = vmatprep.subr.mxu0 0.0
    %v2540 = vand.u32 %v1080, 4294901760
    %v2541 = vsub.f32 %v1080, %v2540
    %v2542 = vand.u32 %v2541, 4294901760
    %v2543 = vsub.f32 %v2541, %v2542
    %v2544 = vand.u32 %v2543, 4294901760
    %2545 = vmatpush1.msra.mxu0 %v2544
    %2546 = vmatprep.subr.mxu0 0.0
    %v2547 = vand.u32 %v1081, 4294901760
    %v2548 = vsub.f32 %v1081, %v2547
    %v2549 = vand.u32 %v2548, 4294901760
    %v2550 = vsub.f32 %v2548, %v2549
    %v2551 = vand.u32 %v2550, 4294901760
    %2552 = vmatpush1.msra.mxu0 %v2551
    %2553 = vmatprep.subr.mxu0 0.0
    %v2554 = vand.u32 %v1082, 4294901760
    %v2555 = vsub.f32 %v1082, %v2554
    %v2556 = vand.u32 %v2555, 4294901760
    %v2557 = vsub.f32 %v2555, %v2556
    %v2558 = vand.u32 %v2557, 4294901760
    %2559 = vmatpush1.msra.mxu0 %v2558
    %2560 = vmatprep.subr.mxu0 0.0
    %v2561 = vand.u32 %v1083, 4294901760
    %v2562 = vsub.f32 %v1083, %v2561
    %v2563 = vand.u32 %v2562, 4294901760
    %v2564 = vsub.f32 %v2562, %v2563
    %v2565 = vand.u32 %v2564, 4294901760
    %2566 = vmatpush1.msra.mxu0 %v2565
    %2567 = vmatprep.subr.mxu0 0.0
    %2568 = vmatpush1.msra.mxu0 0.0
    %2569 = vmatprep.subr.mxu0 0.0
    %2570 = vmatpush1.msra.mxu0 0.0
    %2571 = vmatprep.subr.mxu0 0.0
    %2572 = vmatpush1.msra.mxu0 0.0
    %2573 = vmatprep.subr.mxu0 0.0
    %2574 = vmatpush1.msra.mxu0 0.0
    %2575 = vmatprep.subr.mxu0 0.0
    %2576 = vmatpush1.msra.mxu0 0.0
    %2577 = vmatprep.subr.mxu0 0.0
    %2578 = vmatpush1.msra.mxu0 0.0
    %2579 = vmatprep.subr.mxu0 0.0
    %2580 = vmatpush1.msra.mxu0 0.0
    %2581 = vmatprep.subr.mxu0 0.0
    %2582 = vmatpush1.msra.mxu0 0.0
    %2583 = vmatprep.subr.mxu0 0.0
    %2584 = vmatpush1.msra.mxu0 0.0
    %2585 = vmatprep.subr.mxu0 0.0
    %2586 = vmatpush1.msra.mxu0 0.0
    %2587 = vmatprep.subr.mxu0 0.0
    %2588 = vmatpush1.msra.mxu0 0.0
    %2589 = vmatprep.subr.mxu0 0.0
    %2590 = vmatpush1.msra.mxu0 0.0
    %2591 = vmatprep.subr.mxu0 0.0
    %2592 = vmatpush1.msra.mxu0 0.0
    %2593 = vmatprep.subr.mxu0 0.0
    %2594 = vmatpush1.msra.mxu0 0.0
    %2595 = vmatprep.subr.mxu0 0.0
    %2596 = vmatpush1.msra.mxu0 0.0
    %2597 = vmatprep.subr.mxu0 0.0
    %2598 = vmatpush1.msra.mxu0 0.0
    %2599 = vmatprep.mubr.f32.mxu0 0.0
    %v2600 = vand.u32 %v2360, 4294901760
    %2601 = vmatmul.mubr.f32.gmra.mrb[0].mxu0 %v2600
    %v2602 = vpop.f32.mrb[0].mxu0
    %v2603 = vadd.f32 %v2452, %v2602
    %v2604 = vpop.f32.mrb[0].mxu0
    %2605 = vdwg.mxu0
    %2606 = vmatprep.subr.mxu0 0.0
    %v2607 = vand.u32 %v1068, 4294901760
    %v2608 = vsub.f32 %v1068, %v2607
    %2609 = vmatpush1.msra.mxu0 %v2608
    %2610 = vmatprep.subr.mxu0 0.0
    %v2611 = vand.u32 %v1069, 4294901760
    %v2612 = vsub.f32 %v1069, %v2611
    %2613 = vmatpush1.msra.mxu0 %v2612
    %2614 = vmatprep.subr.mxu0 0.0
    %v2615 = vand.u32 %v1070, 4294901760
    %v2616 = vsub.f32 %v1070, %v2615
    %2617 = vmatpush1.msra.mxu0 %v2616
    %2618 = vmatprep.subr.mxu0 0.0
    %v2619 = vand.u32 %v1071, 4294901760
    %v2620 = vsub.f32 %v1071, %v2619
    %2621 = vmatpush1.msra.mxu0 %v2620
    %2622 = vmatprep.subr.mxu0 0.0
    %v2623 = vand.u32 %v1072, 4294901760
    %v2624 = vsub.f32 %v1072, %v2623
    %2625 = vmatpush1.msra.mxu0 %v2624
    %2626 = vmatprep.subr.mxu0 0.0
    %v2627 = vand.u32 %v1073, 4294901760
    %v2628 = vsub.f32 %v1073, %v2627
    %2629 = vmatpush1.msra.mxu0 %v2628
    %2630 = vmatprep.subr.mxu0 0.0
    %v2631 = vand.u32 %v1074, 4294901760
    %v2632 = vsub.f32 %v1074, %v2631
    %2633 = vmatpush1.msra.mxu0 %v2632
    %2634 = vmatprep.subr.mxu0 0.0
    %v2635 = vand.u32 %v1075, 4294901760
    %v2636 = vsub.f32 %v1075, %v2635
    %2637 = vmatpush1.msra.mxu0 %v2636
    %2638 = vmatprep.subr.mxu0 0.0
    %v2639 = vand.u32 %v1076, 4294901760
    %v2640 = vsub.f32 %v1076, %v2639
    %2641 = vmatpush1.msra.mxu0 %v2640
    %2642 = vmatprep.subr.mxu0 0.0
    %v2643 = vand.u32 %v1077, 4294901760
    %v2644 = vsub.f32 %v1077, %v2643
    %2645 = vmatpush1.msra.mxu0 %v2644
    %2646 = vmatprep.subr.mxu0 0.0
    %v2647 = vand.u32 %v1078, 4294901760
    %v2648 = vsub.f32 %v1078, %v2647
    %2649 = vmatpush1.msra.mxu0 %v2648
    %2650 = vmatprep.subr.mxu0 0.0
    %v2651 = vand.u32 %v1079, 4294901760
    %v2652 = vsub.f32 %v1079, %v2651
    %2653 = vmatpush1.msra.mxu0 %v2652
    %2654 = vmatprep.subr.mxu0 0.0
    %v2655 = vand.u32 %v1080, 4294901760
    %v2656 = vsub.f32 %v1080, %v2655
    %2657 = vmatpush1.msra.mxu0 %v2656
    %2658 = vmatprep.subr.mxu0 0.0
    %v2659 = vand.u32 %v1081, 4294901760
    %v2660 = vsub.f32 %v1081, %v2659
    %2661 = vmatpush1.msra.mxu0 %v2660
    %2662 = vmatprep.subr.mxu0 0.0
    %v2663 = vand.u32 %v1082, 4294901760
    %v2664 = vsub.f32 %v1082, %v2663
    %2665 = vmatpush1.msra.mxu0 %v2664
    %2666 = vmatprep.subr.mxu0 0.0
    %v2667 = vand.u32 %v1083, 4294901760
    %v2668 = vsub.f32 %v1083, %v2667
    %2669 = vmatpush1.msra.mxu0 %v2668
    %2670 = vmatprep.subr.mxu0 0.0
    %2671 = vmatpush1.msra.mxu0 0.0
    %2672 = vmatprep.subr.mxu0 0.0
    %2673 = vmatpush1.msra.mxu0 0.0
    %2674 = vmatprep.subr.mxu0 0.0
    %2675 = vmatpush1.msra.mxu0 0.0
    %2676 = vmatprep.subr.mxu0 0.0
    %2677 = vmatpush1.msra.mxu0 0.0
    %2678 = vmatprep.subr.mxu0 0.0
    %2679 = vmatpush1.msra.mxu0 0.0
    %2680 = vmatprep.subr.mxu0 0.0
    %2681 = vmatpush1.msra.mxu0 0.0
    %2682 = vmatprep.subr.mxu0 0.0
    %2683 = vmatpush1.msra.mxu0 0.0
    %2684 = vmatprep.subr.mxu0 0.0
    %2685 = vmatpush1.msra.mxu0 0.0
    %2686 = vmatprep.subr.mxu0 0.0
    %2687 = vmatpush1.msra.mxu0 0.0
    %2688 = vmatprep.subr.mxu0 0.0
    %2689 = vmatpush1.msra.mxu0 0.0
    %2690 = vmatprep.subr.mxu0 0.0
    %2691 = vmatpush1.msra.mxu0 0.0
    %2692 = vmatprep.subr.mxu0 0.0
    %2693 = vmatpush1.msra.mxu0 0.0
    %2694 = vmatprep.subr.mxu0 0.0
    %2695 = vmatpush1.msra.mxu0 0.0
    %2696 = vmatprep.subr.mxu0 0.0
    %2697 = vmatpush1.msra.mxu0 0.0
    %2698 = vmatprep.subr.mxu0 0.0
    %2699 = vmatpush1.msra.mxu0 0.0
    %2700 = vmatprep.subr.mxu0 0.0
    %2701 = vmatpush1.msra.mxu0 0.0
    %2702 = vmatprep.mubr.f32.mxu0 0.0
    %v2703 = vand.u32 %v2360, 4294901760
    %v2704 = vsub.f32 %v2360, %v2703
    %2705 = vmatmul.mubr.f32.gmra.mrb[0].mxu0 %v2704
    %v2706 = vpop.f32.mrb[0].mxu0
    %v2707 = vadd.f32 %v2603, %v2706
    %v2708 = vpop.f32.mrb[0].mxu0
    %2709 = vdwg.mxu0
    %2710 = vmatprep.subr.mxu0 0.0
    %v2711 = vand.u32 %v1068, 4294901760
    %2712 = vmatpush1.msra.mxu0 %v2711
    %2713 = vmatprep.subr.mxu0 0.0
    %v2714 = vand.u32 %v1069, 4294901760
    %2715 = vmatpush1.msra.mxu0 %v2714
    %2716 = vmatprep.subr.mxu0 0.0
    %v2717 = vand.u32 %v1070, 4294901760
    %2718 = vmatpush1.msra.mxu0 %v2717
    %2719 = vmatprep.subr.mxu0 0.0
    %v2720 = vand.u32 %v1071, 4294901760
    %2721 = vmatpush1.msra.mxu0 %v2720
    %2722 = vmatprep.subr.mxu0 0.0
    %v2723 = vand.u32 %v1072, 4294901760
    %2724 = vmatpush1.msra.mxu0 %v2723
    %2725 = vmatprep.subr.mxu0 0.0
    %v2726 = vand.u32 %v1073, 4294901760
    %2727 = vmatpush1.msra.mxu0 %v2726
    %2728 = vmatprep.subr.mxu0 0.0
    %v2729 = vand.u32 %v1074, 4294901760
    %2730 = vmatpush1.msra.mxu0 %v2729
    %2731 = vmatprep.subr.mxu0 0.0
    %v2732 = vand.u32 %v1075, 4294901760
    %2733 = vmatpush1.msra.mxu0 %v2732
    %2734 = vmatprep.subr.mxu0 0.0
    %v2735 = vand.u32 %v1076, 4294901760
    %2736 = vmatpush1.msra.mxu0 %v2735
    %2737 = vmatprep.subr.mxu0 0.0
    %v2738 = vand.u32 %v1077, 4294901760
    %2739 = vmatpush1.msra.mxu0 %v2738
    %2740 = vmatprep.subr.mxu0 0.0
    %v2741 = vand.u32 %v1078, 4294901760
    %2742 = vmatpush1.msra.mxu0 %v2741
    %2743 = vmatprep.subr.mxu0 0.0
    %v2744 = vand.u32 %v1079, 4294901760
    %2745 = vmatpush1.msra.mxu0 %v2744
    %2746 = vmatprep.subr.mxu0 0.0
    %v2747 = vand.u32 %v1080, 4294901760
    %2748 = vmatpush1.msra.mxu0 %v2747
    %2749 = vmatprep.subr.mxu0 0.0
    %v2750 = vand.u32 %v1081, 4294901760
    %2751 = vmatpush1.msra.mxu0 %v2750
    %2752 = vmatprep.subr.mxu0 0.0
    %v2753 = vand.u32 %v1082, 4294901760
    %2754 = vmatpush1.msra.mxu0 %v2753
    %2755 = vmatprep.subr.mxu0 0.0
    %v2756 = vand.u32 %v1083, 4294901760
    %2757 = vmatpush1.msra.mxu0 %v2756
    %2758 = vmatprep.subr.mxu0 0.0
    %2759 = vmatpush1.msra.mxu0 0.0
    %2760 = vmatprep.subr.mxu0 0.0
    %2761 = vmatpush1.msra.mxu0 0.0
    %2762 = vmatprep.subr.mxu0 0.0
    %2763 = vmatpush1.msra.mxu0 0.0
    %2764 = vmatprep.subr.mxu0 0.0
    %2765 = vmatpush1.msra.mxu0 0.0
    %2766 = vmatprep.subr.mxu0 0.0
    %2767 = vmatpush1.msra.mxu0 0.0
    %2768 = vmatprep.subr.mxu0 0.0
    %2769 = vmatpush1.msra.mxu0 0.0
    %2770 = vmatprep.subr.mxu0 0.0
    %2771 = vmatpush1.msra.mxu0 0.0
    %2772 = vmatprep.subr.mxu0 0.0
    %2773 = vmatpush1.msra.mxu0 0.0
    %2774 = vmatprep.subr.mxu0 0.0
    %2775 = vmatpush1.msra.mxu0 0.0
    %2776 = vmatprep.subr.mxu0 0.0
    %2777 = vmatpush1.msra.mxu0 0.0
    %2778 = vmatprep.subr.mxu0 0.0
    %2779 = vmatpush1.msra.mxu0 0.0
    %2780 = vmatprep.subr.mxu0 0.0
    %2781 = vmatpush1.msra.mxu0 0.0
    %2782 = vmatprep.subr.mxu0 0.0
    %2783 = vmatpush1.msra.mxu0 0.0
    %2784 = vmatprep.subr.mxu0 0.0
    %2785 = vmatpush1.msra.mxu0 0.0
    %2786 = vmatprep.subr.mxu0 0.0
    %2787 = vmatpush1.msra.mxu0 0.0
    %2788 = vmatprep.subr.mxu0 0.0
    %2789 = vmatpush1.msra.mxu0 0.0
    %2790 = vmatprep.mubr.f32.mxu0 0.0
    %v2791 = vand.u32 %v2360, 4294901760
    %v2792 = vsub.f32 %v2360, %v2791
    %v2793 = vand.u32 %v2792, 4294901760
    %2794 = vmatmul.mubr.f32.gmra.mrb[0].mxu0 %v2793
    %v2795 = vpop.f32.mrb[0].mxu0
    %v2796 = vadd.f32 %v2707, %v2795
    %v2797 = vpop.f32.mrb[0].mxu0
    %2798 = vdwg.mxu0
    %2799 = vmatprep.subr.mxu0 0.0
    %v2800 = vand.u32 %v1068, 4294901760
    %v2801 = vsub.f32 %v1068, %v2800
    %v2802 = vand.u32 %v2801, 4294901760
    %2803 = vmatpush1.msra.mxu0 %v2802
    %2804 = vmatprep.subr.mxu0 0.0
    %v2805 = vand.u32 %v1069, 4294901760
    %v2806 = vsub.f32 %v1069, %v2805
    %v2807 = vand.u32 %v2806, 4294901760
    %2808 = vmatpush1.msra.mxu0 %v2807
    %2809 = vmatprep.subr.mxu0 0.0
    %v2810 = vand.u32 %v1070, 4294901760
    %v2811 = vsub.f32 %v1070, %v2810
    %v2812 = vand.u32 %v2811, 4294901760
    %2813 = vmatpush1.msra.mxu0 %v2812
    %2814 = vmatprep.subr.mxu0 0.0
    %v2815 = vand.u32 %v1071, 4294901760
    %v2816 = vsub.f32 %v1071, %v2815
    %v2817 = vand.u32 %v2816, 4294901760
    %2818 = vmatpush1.msra.mxu0 %v2817
    %2819 = vmatprep.subr.mxu0 0.0
    %v2820 = vand.u32 %v1072, 4294901760
    %v2821 = vsub.f32 %v1072, %v2820
    %v2822 = vand.u32 %v2821, 4294901760
    %2823 = vmatpush1.msra.mxu0 %v2822
    %2824 = vmatprep.subr.mxu0 0.0
    %v2825 = vand.u32 %v1073, 4294901760
    %v2826 = vsub.f32 %v1073, %v2825
    %v2827 = vand.u32 %v2826, 4294901760
    %2828 = vmatpush1.msra.mxu0 %v2827
    %2829 = vmatprep.subr.mxu0 0.0
    %v2830 = vand.u32 %v1074, 4294901760
    %v2831 = vsub.f32 %v1074, %v2830
    %v2832 = vand.u32 %v2831, 4294901760
    %2833 = vmatpush1.msra.mxu0 %v2832
    %2834 = vmatprep.subr.mxu0 0.0
    %v2835 = vand.u32 %v1075, 4294901760
    %v2836 = vsub.f32 %v1075, %v2835
    %v2837 = vand.u32 %v2836, 4294901760
    %2838 = vmatpush1.msra.mxu0 %v2837
    %2839 = vmatprep.subr.mxu0 0.0
    %v2840 = vand.u32 %v1076, 4294901760
    %v2841 = vsub.f32 %v1076, %v2840
    %v2842 = vand.u32 %v2841, 4294901760
    %2843 = vmatpush1.msra.mxu0 %v2842
    %2844 = vmatprep.subr.mxu0 0.0
    %v2845 = vand.u32 %v1077, 4294901760
    %v2846 = vsub.f32 %v1077, %v2845
    %v2847 = vand.u32 %v2846, 4294901760
    %2848 = vmatpush1.msra.mxu0 %v2847
    %2849 = vmatprep.subr.mxu0 0.0
    %v2850 = vand.u32 %v1078, 4294901760
    %v2851 = vsub.f32 %v1078, %v2850
    %v2852 = vand.u32 %v2851, 4294901760
    %2853 = vmatpush1.msra.mxu0 %v2852
    %2854 = vmatprep.subr.mxu0 0.0
    %v2855 = vand.u32 %v1079, 4294901760
    %v2856 = vsub.f32 %v1079, %v2855
    %v2857 = vand.u32 %v2856, 4294901760
    %2858 = vmatpush1.msra.mxu0 %v2857
    %2859 = vmatprep.subr.mxu0 0.0
    %v2860 = vand.u32 %v1080, 4294901760
    %v2861 = vsub.f32 %v1080, %v2860
    %v2862 = vand.u32 %v2861, 4294901760
    %2863 = vmatpush1.msra.mxu0 %v2862
    %2864 = vmatprep.subr.mxu0 0.0
    %v2865 = vand.u32 %v1081, 4294901760
    %v2866 = vsub.f32 %v1081, %v2865
    %v2867 = vand.u32 %v2866, 4294901760
    %2868 = vmatpush1.msra.mxu0 %v2867
    %2869 = vmatprep.subr.mxu0 0.0
    %v2870 = vand.u32 %v1082, 4294901760
    %v2871 = vsub.f32 %v1082, %v2870
    %v2872 = vand.u32 %v2871, 4294901760
    %2873 = vmatpush1.msra.mxu0 %v2872
    %2874 = vmatprep.subr.mxu0 0.0
    %v2875 = vand.u32 %v1083, 4294901760
    %v2876 = vsub.f32 %v1083, %v2875
    %v2877 = vand.u32 %v2876, 4294901760
    %2878 = vmatpush1.msra.mxu0 %v2877
    %2879 = vmatprep.subr.mxu0 0.0
    %2880 = vmatpush1.msra.mxu0 0.0
    %2881 = vmatprep.subr.mxu0 0.0
    %2882 = vmatpush1.msra.mxu0 0.0
    %2883 = vmatprep.subr.mxu0 0.0
    %2884 = vmatpush1.msra.mxu0 0.0
    %2885 = vmatprep.subr.mxu0 0.0
    %2886 = vmatpush1.msra.mxu0 0.0
    %2887 = vmatprep.subr.mxu0 0.0
    %2888 = vmatpush1.msra.mxu0 0.0
    %2889 = vmatprep.subr.mxu0 0.0
    %2890 = vmatpush1.msra.mxu0 0.0
    %2891 = vmatprep.subr.mxu0 0.0
    %2892 = vmatpush1.msra.mxu0 0.0
    %2893 = vmatprep.subr.mxu0 0.0
    %2894 = vmatpush1.msra.mxu0 0.0
    %2895 = vmatprep.subr.mxu0 0.0
    %2896 = vmatpush1.msra.mxu0 0.0
    %2897 = vmatprep.subr.mxu0 0.0
    %2898 = vmatpush1.msra.mxu0 0.0
    %2899 = vmatprep.subr.mxu0 0.0
    %2900 = vmatpush1.msra.mxu0 0.0
    %2901 = vmatprep.subr.mxu0 0.0
    %2902 = vmatpush1.msra.mxu0 0.0
    %2903 = vmatprep.subr.mxu0 0.0
    %2904 = vmatpush1.msra.mxu0 0.0
    %2905 = vmatprep.subr.mxu0 0.0
    %2906 = vmatpush1.msra.mxu0 0.0
    %2907 = vmatprep.subr.mxu0 0.0
    %2908 = vmatpush1.msra.mxu0 0.0
    %2909 = vmatprep.subr.mxu0 0.0
    %2910 = vmatpush1.msra.mxu0 0.0
    %2911 = vmatprep.mubr.f32.mxu0 0.0
    %v2912 = vand.u32 %v2360, 4294901760
    %2913 = vmatmul.mubr.f32.gmra.mrb[0].mxu0 %v2912
    %v2914 = vpop.f32.mrb[0].mxu0
    %v2915 = vadd.f32 %v2796, %v2914
    %v2916 = vpop.f32.mrb[0].mxu0
    %2917 = vdwg.mxu0
    %2918 = vmatprep.subr.mxu0 0.0
    %v2919 = vand.u32 %v1068, 4294901760
    %2920 = vmatpush1.msra.mxu0 %v2919
    %2921 = vmatprep.subr.mxu0 0.0
    %v2922 = vand.u32 %v1069, 4294901760
    %2923 = vmatpush1.msra.mxu0 %v2922
    %2924 = vmatprep.subr.mxu0 0.0
    %v2925 = vand.u32 %v1070, 4294901760
    %2926 = vmatpush1.msra.mxu0 %v2925
    %2927 = vmatprep.subr.mxu0 0.0
    %v2928 = vand.u32 %v1071, 4294901760
    %2929 = vmatpush1.msra.mxu0 %v2928
    %2930 = vmatprep.subr.mxu0 0.0
    %v2931 = vand.u32 %v1072, 4294901760
    %2932 = vmatpush1.msra.mxu0 %v2931
    %2933 = vmatprep.subr.mxu0 0.0
    %v2934 = vand.u32 %v1073, 4294901760
    %2935 = vmatpush1.msra.mxu0 %v2934
    %2936 = vmatprep.subr.mxu0 0.0
    %v2937 = vand.u32 %v1074, 4294901760
    %2938 = vmatpush1.msra.mxu0 %v2937
    %2939 = vmatprep.subr.mxu0 0.0
    %v2940 = vand.u32 %v1075, 4294901760
    %2941 = vmatpush1.msra.mxu0 %v2940
    %2942 = vmatprep.subr.mxu0 0.0
    %v2943 = vand.u32 %v1076, 4294901760
    %2944 = vmatpush1.msra.mxu0 %v2943
    %2945 = vmatprep.subr.mxu0 0.0
    %v2946 = vand.u32 %v1077, 4294901760
    %2947 = vmatpush1.msra.mxu0 %v2946
    %2948 = vmatprep.subr.mxu0 0.0
    %v2949 = vand.u32 %v1078, 4294901760
    %2950 = vmatpush1.msra.mxu0 %v2949
    %2951 = vmatprep.subr.mxu0 0.0
    %v2952 = vand.u32 %v1079, 4294901760
    %2953 = vmatpush1.msra.mxu0 %v2952
    %2954 = vmatprep.subr.mxu0 0.0
    %v2955 = vand.u32 %v1080, 4294901760
    %2956 = vmatpush1.msra.mxu0 %v2955
    %2957 = vmatprep.subr.mxu0 0.0
    %v2958 = vand.u32 %v1081, 4294901760
    %2959 = vmatpush1.msra.mxu0 %v2958
    %2960 = vmatprep.subr.mxu0 0.0
    %v2961 = vand.u32 %v1082, 4294901760
    %2962 = vmatpush1.msra.mxu0 %v2961
    %2963 = vmatprep.subr.mxu0 0.0
    %v2964 = vand.u32 %v1083, 4294901760
    %2965 = vmatpush1.msra.mxu0 %v2964
    %2966 = vmatprep.subr.mxu0 0.0
    %2967 = vmatpush1.msra.mxu0 0.0
    %2968 = vmatprep.subr.mxu0 0.0
    %2969 = vmatpush1.msra.mxu0 0.0
    %2970 = vmatprep.subr.mxu0 0.0
    %2971 = vmatpush1.msra.mxu0 0.0
    %2972 = vmatprep.subr.mxu0 0.0
    %2973 = vmatpush1.msra.mxu0 0.0
    %2974 = vmatprep.subr.mxu0 0.0
    %2975 = vmatpush1.msra.mxu0 0.0
    %2976 = vmatprep.subr.mxu0 0.0
    %2977 = vmatpush1.msra.mxu0 0.0
    %2978 = vmatprep.subr.mxu0 0.0
    %2979 = vmatpush1.msra.mxu0 0.0
    %2980 = vmatprep.subr.mxu0 0.0
    %2981 = vmatpush1.msra.mxu0 0.0
    %2982 = vmatprep.subr.mxu0 0.0
    %2983 = vmatpush1.msra.mxu0 0.0
    %2984 = vmatprep.subr.mxu0 0.0
    %2985 = vmatpush1.msra.mxu0 0.0
    %2986 = vmatprep.subr.mxu0 0.0
    %2987 = vmatpush1.msra.mxu0 0.0
    %2988 = vmatprep.subr.mxu0 0.0
    %2989 = vmatpush1.msra.mxu0 0.0
    %2990 = vmatprep.subr.mxu0 0.0
    %2991 = vmatpush1.msra.mxu0 0.0
    %2992 = vmatprep.subr.mxu0 0.0
    %2993 = vmatpush1.msra.mxu0 0.0
    %2994 = vmatprep.subr.mxu0 0.0
    %2995 = vmatpush1.msra.mxu0 0.0
    %2996 = vmatprep.subr.mxu0 0.0
    %2997 = vmatpush1.msra.mxu0 0.0
    %2998 = vmatprep.mubr.f32.mxu0 0.0
    %v2999 = vand.u32 %v2360, 4294901760
    %3000 = vmatmul.mubr.f32.gmra.mrb[0].mxu0 %v2999
    %v3001 = vpop.f32.mrb[0].mxu0
    %v3002 = vadd.f32 %v2915, %v3001
    %v3003 = vpop.f32.mrb[0].mxu0
    %3004 = vdwg.mxu0
    %v3005 = vadd.f32 %v2363, %v3002
    %v3006 = vtanh.pop %v3005
    %3007 = vst [vmem:[%s2362] sm:$0xff] %v3006
    %s3008 = scalar_lea.vmem [#allocation2], 24
    %v3009 = vld [vmem:[%s3008] sm:$0xff]
    %3010 = vmatprep.subr.mxu0 0.0
    %v3011 = vand.u32 %v1068, 4294901760
    %3012 = vmatpush1.msra.mxu0 %v3011
    %3013 = vmatprep.subr.mxu0 0.0
    %v3014 = vand.u32 %v1069, 4294901760
    %3015 = vmatpush1.msra.mxu0 %v3014
    %3016 = vmatprep.subr.mxu0 0.0
    %v3017 = vand.u32 %v1070, 4294901760
    %3018 = vmatpush1.msra.mxu0 %v3017
    %3019 = vmatprep.subr.mxu0 0.0
    %v3020 = vand.u32 %v1071, 4294901760
    %3021 = vmatpush1.msra.mxu0 %v3020
    %3022 = vmatprep.subr.mxu0 0.0
    %v3023 = vand.u32 %v1072, 4294901760
    %3024 = vmatpush1.msra.mxu0 %v3023
    %3025 = vmatprep.subr.mxu0 0.0
    %v3026 = vand.u32 %v1073, 4294901760
    %3027 = vmatpush1.msra.mxu0 %v3026
    %3028 = vmatprep.subr.mxu0 0.0
    %v3029 = vand.u32 %v1074, 4294901760
    %3030 = vmatpush1.msra.mxu0 %v3029
    %3031 = vmatprep.subr.mxu0 0.0
    %v3032 = vand.u32 %v1075, 4294901760
    %3033 = vmatpush1.msra.mxu0 %v3032
    %3034 = vmatprep.subr.mxu0 0.0
    %v3035 = vand.u32 %v1076, 4294901760
    %3036 = vmatpush1.msra.mxu0 %v3035
    %3037 = vmatprep.subr.mxu0 0.0
    %v3038 = vand.u32 %v1077, 4294901760
    %3039 = vmatpush1.msra.mxu0 %v3038
    %3040 = vmatprep.subr.mxu0 0.0
    %v3041 = vand.u32 %v1078, 4294901760
    %3042 = vmatpush1.msra.mxu0 %v3041
    %3043 = vmatprep.subr.mxu0 0.0
    %v3044 = vand.u32 %v1079, 4294901760
    %3045 = vmatpush1.msra.mxu0 %v3044
    %3046 = vmatprep.subr.mxu0 0.0
    %v3047 = vand.u32 %v1080, 4294901760
    %3048 = vmatpush1.msra.mxu0 %v3047
    %3049 = vmatprep.subr.mxu0 0.0
    %v3050 = vand.u32 %v1081, 4294901760
    %3051 = vmatpush1.msra.mxu0 %v3050
    %3052 = vmatprep.subr.mxu0 0.0
    %v3053 = vand.u32 %v1082, 4294901760
    %3054 = vmatpush1.msra.mxu0 %v3053
    %3055 = vmatprep.subr.mxu0 0.0
    %v3056 = vand.u32 %v1083, 4294901760
    %3057 = vmatpush1.msra.mxu0 %v3056
    %3058 = vmatprep.subr.mxu0 0.0
    %3059 = vmatpush1.msra.mxu0 0.0
    %3060 = vmatprep.subr.mxu0 0.0
    %3061 = vmatpush1.msra.mxu0 0.0
    %3062 = vmatprep.subr.mxu0 0.0
    %3063 = vmatpush1.msra.mxu0 0.0
    %3064 = vmatprep.subr.mxu0 0.0
    %3065 = vmatpush1.msra.mxu0 0.0
    %3066 = vmatprep.subr.mxu0 0.0
    %3067 = vmatpush1.msra.mxu0 0.0
    %3068 = vmatprep.subr.mxu0 0.0
    %3069 = vmatpush1.msra.mxu0 0.0
    %3070 = vmatprep.subr.mxu0 0.0
    %3071 = vmatpush1.msra.mxu0 0.0
    %3072 = vmatprep.subr.mxu0 0.0
    %3073 = vmatpush1.msra.mxu0 0.0
    %3074 = vmatprep.subr.mxu0 0.0
    %3075 = vmatpush1.msra.mxu0 0.0
    %3076 = vmatprep.subr.mxu0 0.0
    %3077 = vmatpush1.msra.mxu0 0.0
    %3078 = vmatprep.subr.mxu0 0.0
    %3079 = vmatpush1.msra.mxu0 0.0
    %3080 = vmatprep.subr.mxu0 0.0
    %3081 = vmatpush1.msra.mxu0 0.0
    %3082 = vmatprep.subr.mxu0 0.0
    %3083 = vmatpush1.msra.mxu0 0.0
    %3084 = vmatprep.subr.mxu0 0.0
    %3085 = vmatpush1.msra.mxu0 0.0
    %3086 = vmatprep.subr.mxu0 0.0
    %3087 = vmatpush1.msra.mxu0 0.0
    %3088 = vmatprep.subr.mxu0 0.0
    %3089 = vmatpush1.msra.mxu0 0.0
    %3090 = vmatprep.mubr.f32.mxu0 0.0
    %v3091 = vand.u32 %v3006, 4294901760
    %v3092 = vsub.f32 %v3006, %v3091
    %v3093 = vand.u32 %v3092, 4294901760
    %v3094 = vsub.f32 %v3092, %v3093
    %v3095 = vand.u32 %v3094, 4294901760
    %3096 = vmatmul.mubr.f32.gmra.mrb[0].mxu0 %v3095
    %v3097 = vpop.f32.mrb[0].mxu0
    %v3098 = vadd.f32 0.0, %v3097
    %v3099 = vpop.f32.mrb[0].mxu0
    %3100 = vdwg.mxu0
    %3101 = vmatprep.subr.mxu0 0.0
    %v3102 = vand.u32 %v1068, 4294901760
    %v3103 = vsub.f32 %v1068, %v3102
    %v3104 = vand.u32 %v3103, 4294901760
    %v3105 = vsub.f32 %v3103, %v3104
    %v3106 = vand.u32 %v3105, 4294901760
    %3107 = vmatpush1.msra.mxu0 %v3106
    %3108 = vmatprep.subr.mxu0 0.0
    %v3109 = vand.u32 %v1069, 4294901760
    %v3110 = vsub.f32 %v1069, %v3109
    %v3111 = vand.u32 %v3110, 4294901760
    %v3112 = vsub.f32 %v3110, %v3111
    %v3113 = vand.u32 %v3112, 4294901760
    %3114 = vmatpush1.msra.mxu0 %v3113
    %3115 = vmatprep.subr.mxu0 0.0
    %v3116 = vand.u32 %v1070, 4294901760
    %v3117 = vsub.f32 %v1070, %v3116
    %v3118 = vand.u32 %v3117, 4294901760
    %v3119 = vsub.f32 %v3117, %v3118
    %v3120 = vand.u32 %v3119, 4294901760
    %3121 = vmatpush1.msra.mxu0 %v3120
    %3122 = vmatprep.subr.mxu0 0.0
    %v3123 = vand.u32 %v1071, 4294901760
    %v3124 = vsub.f32 %v1071, %v3123
    %v3125 = vand.u32 %v3124, 4294901760
    %v3126 = vsub.f32 %v3124, %v3125
    %v3127 = vand.u32 %v3126, 4294901760
    %3128 = vmatpush1.msra.mxu0 %v3127
    %3129 = vmatprep.subr.mxu0 0.0
    %v3130 = vand.u32 %v1072, 4294901760
    %v3131 = vsub.f32 %v1072, %v3130
    %v3132 = vand.u32 %v3131, 4294901760
    %v3133 = vsub.f32 %v3131, %v3132
    %v3134 = vand.u32 %v3133, 4294901760
    %3135 = vmatpush1.msra.mxu0 %v3134
    %3136 = vmatprep.subr.mxu0 0.0
    %v3137 = vand.u32 %v1073, 4294901760
    %v3138 = vsub.f32 %v1073, %v3137
    %v3139 = vand.u32 %v3138, 4294901760
    %v3140 = vsub.f32 %v3138, %v3139
    %v3141 = vand.u32 %v3140, 4294901760
    %3142 = vmatpush1.msra.mxu0 %v3141
    %3143 = vmatprep.subr.mxu0 0.0
    %v3144 = vand.u32 %v1074, 4294901760
    %v3145 = vsub.f32 %v1074, %v3144
    %v3146 = vand.u32 %v3145, 4294901760
    %v3147 = vsub.f32 %v3145, %v3146
    %v3148 = vand.u32 %v3147, 4294901760
    %3149 = vmatpush1.msra.mxu0 %v3148
    %3150 = vmatprep.subr.mxu0 0.0
    %v3151 = vand.u32 %v1075, 4294901760
    %v3152 = vsub.f32 %v1075, %v3151
    %v3153 = vand.u32 %v3152, 4294901760
    %v3154 = vsub.f32 %v3152, %v3153
    %v3155 = vand.u32 %v3154, 4294901760
    %3156 = vmatpush1.msra.mxu0 %v3155
    %3157 = vmatprep.subr.mxu0 0.0
    %v3158 = vand.u32 %v1076, 4294901760
    %v3159 = vsub.f32 %v1076, %v3158
    %v3160 = vand.u32 %v3159, 4294901760
    %v3161 = vsub.f32 %v3159, %v3160
    %v3162 = vand.u32 %v3161, 4294901760
    %3163 = vmatpush1.msra.mxu0 %v3162
    %3164 = vmatprep.subr.mxu0 0.0
    %v3165 = vand.u32 %v1077, 4294901760
    %v3166 = vsub.f32 %v1077, %v3165
    %v3167 = vand.u32 %v3166, 4294901760
    %v3168 = vsub.f32 %v3166, %v3167
    %v3169 = vand.u32 %v3168, 4294901760
    %3170 = vmatpush1.msra.mxu0 %v3169
    %3171 = vmatprep.subr.mxu0 0.0
    %v3172 = vand.u32 %v1078, 4294901760
    %v3173 = vsub.f32 %v1078, %v3172
    %v3174 = vand.u32 %v3173, 4294901760
    %v3175 = vsub.f32 %v3173, %v3174
    %v3176 = vand.u32 %v3175, 4294901760
    %3177 = vmatpush1.msra.mxu0 %v3176
    %3178 = vmatprep.subr.mxu0 0.0
    %v3179 = vand.u32 %v1079, 4294901760
    %v3180 = vsub.f32 %v1079, %v3179
    %v3181 = vand.u32 %v3180, 4294901760
    %v3182 = vsub.f32 %v3180, %v3181
    %v3183 = vand.u32 %v3182, 4294901760
    %3184 = vmatpush1.msra.mxu0 %v3183
    %3185 = vmatprep.subr.mxu0 0.0
    %v3186 = vand.u32 %v1080, 4294901760
    %v3187 = vsub.f32 %v1080, %v3186
    %v3188 = vand.u32 %v3187, 4294901760
    %v3189 = vsub.f32 %v3187, %v3188
    %v3190 = vand.u32 %v3189, 4294901760
    %3191 = vmatpush1.msra.mxu0 %v3190
    %3192 = vmatprep.subr.mxu0 0.0
    %v3193 = vand.u32 %v1081, 4294901760
    %v3194 = vsub.f32 %v1081, %v3193
    %v3195 = vand.u32 %v3194, 4294901760
    %v3196 = vsub.f32 %v3194, %v3195
    %v3197 = vand.u32 %v3196, 4294901760
    %3198 = vmatpush1.msra.mxu0 %v3197
    %3199 = vmatprep.subr.mxu0 0.0
    %v3200 = vand.u32 %v1082, 4294901760
    %v3201 = vsub.f32 %v1082, %v3200
    %v3202 = vand.u32 %v3201, 4294901760
    %v3203 = vsub.f32 %v3201, %v3202
    %v3204 = vand.u32 %v3203, 4294901760
    %3205 = vmatpush1.msra.mxu0 %v3204
    %3206 = vmatprep.subr.mxu0 0.0
    %v3207 = vand.u32 %v1083, 4294901760
    %v3208 = vsub.f32 %v1083, %v3207
    %v3209 = vand.u32 %v3208, 4294901760
    %v3210 = vsub.f32 %v3208, %v3209
    %v3211 = vand.u32 %v3210, 4294901760
    %3212 = vmatpush1.msra.mxu0 %v3211
    %3213 = vmatprep.subr.mxu0 0.0
    %3214 = vmatpush1.msra.mxu0 0.0
    %3215 = vmatprep.subr.mxu0 0.0
    %3216 = vmatpush1.msra.mxu0 0.0
    %3217 = vmatprep.subr.mxu0 0.0
    %3218 = vmatpush1.msra.mxu0 0.0
    %3219 = vmatprep.subr.mxu0 0.0
    %3220 = vmatpush1.msra.mxu0 0.0
    %3221 = vmatprep.subr.mxu0 0.0
    %3222 = vmatpush1.msra.mxu0 0.0
    %3223 = vmatprep.subr.mxu0 0.0
    %3224 = vmatpush1.msra.mxu0 0.0
    %3225 = vmatprep.subr.mxu0 0.0
    %3226 = vmatpush1.msra.mxu0 0.0
    %3227 = vmatprep.subr.mxu0 0.0
    %3228 = vmatpush1.msra.mxu0 0.0
    %3229 = vmatprep.subr.mxu0 0.0
    %3230 = vmatpush1.msra.mxu0 0.0
    %3231 = vmatprep.subr.mxu0 0.0
    %3232 = vmatpush1.msra.mxu0 0.0
    %3233 = vmatprep.subr.mxu0 0.0
    %3234 = vmatpush1.msra.mxu0 0.0
    %3235 = vmatprep.subr.mxu0 0.0
    %3236 = vmatpush1.msra.mxu0 0.0
    %3237 = vmatprep.subr.mxu0 0.0
    %3238 = vmatpush1.msra.mxu0 0.0
    %3239 = vmatprep.subr.mxu0 0.0
    %3240 = vmatpush1.msra.mxu0 0.0
    %3241 = vmatprep.subr.mxu0 0.0
    %3242 = vmatpush1.msra.mxu0 0.0
    %3243 = vmatprep.subr.mxu0 0.0
    %3244 = vmatpush1.msra.mxu0 0.0
    %3245 = vmatprep.mubr.f32.mxu0 0.0
    %v3246 = vand.u32 %v3006, 4294901760
    %3247 = vmatmul.mubr.f32.gmra.mrb[0].mxu0 %v3246
    %v3248 = vpop.f32.mrb[0].mxu0
    %v3249 = vadd.f32 %v3098, %v3248
    %v3250 = vpop.f32.mrb[0].mxu0
    %3251 = vdwg.mxu0
    %3252 = vmatprep.subr.mxu0 0.0
    %v3253 = vand.u32 %v1068, 4294901760
    %v3254 = vsub.f32 %v1068, %v3253
    %3255 = vmatpush1.msra.mxu0 %v3254
    %3256 = vmatprep.subr.mxu0 0.0
    %v3257 = vand.u32 %v1069, 4294901760
    %v3258 = vsub.f32 %v1069, %v3257
    %3259 = vmatpush1.msra.mxu0 %v3258
    %3260 = vmatprep.subr.mxu0 0.0
    %v3261 = vand.u32 %v1070, 4294901760
    %v3262 = vsub.f32 %v1070, %v3261
    %3263 = vmatpush1.msra.mxu0 %v3262
    %3264 = vmatprep.subr.mxu0 0.0
    %v3265 = vand.u32 %v1071, 4294901760
    %v3266 = vsub.f32 %v1071, %v3265
    %3267 = vmatpush1.msra.mxu0 %v3266
    %3268 = vmatprep.subr.mxu0 0.0
    %v3269 = vand.u32 %v1072, 4294901760
    %v3270 = vsub.f32 %v1072, %v3269
    %3271 = vmatpush1.msra.mxu0 %v3270
    %3272 = vmatprep.subr.mxu0 0.0
    %v3273 = vand.u32 %v1073, 4294901760
    %v3274 = vsub.f32 %v1073, %v3273
    %3275 = vmatpush1.msra.mxu0 %v3274
    %3276 = vmatprep.subr.mxu0 0.0
    %v3277 = vand.u32 %v1074, 4294901760
    %v3278 = vsub.f32 %v1074, %v3277
    %3279 = vmatpush1.msra.mxu0 %v3278
    %3280 = vmatprep.subr.mxu0 0.0
    %v3281 = vand.u32 %v1075, 4294901760
    %v3282 = vsub.f32 %v1075, %v3281
    %3283 = vmatpush1.msra.mxu0 %v3282
    %3284 = vmatprep.subr.mxu0 0.0
    %v3285 = vand.u32 %v1076, 4294901760
    %v3286 = vsub.f32 %v1076, %v3285
    %3287 = vmatpush1.msra.mxu0 %v3286
    %3288 = vmatprep.subr.mxu0 0.0
    %v3289 = vand.u32 %v1077, 4294901760
    %v3290 = vsub.f32 %v1077, %v3289
    %3291 = vmatpush1.msra.mxu0 %v3290
    %3292 = vmatprep.subr.mxu0 0.0
    %v3293 = vand.u32 %v1078, 4294901760
    %v3294 = vsub.f32 %v1078, %v3293
    %3295 = vmatpush1.msra.mxu0 %v3294
    %3296 = vmatprep.subr.mxu0 0.0
    %v3297 = vand.u32 %v1079, 4294901760
    %v3298 = vsub.f32 %v1079, %v3297
    %3299 = vmatpush1.msra.mxu0 %v3298
    %3300 = vmatprep.subr.mxu0 0.0
    %v3301 = vand.u32 %v1080, 4294901760
    %v3302 = vsub.f32 %v1080, %v3301
    %3303 = vmatpush1.msra.mxu0 %v3302
    %3304 = vmatprep.subr.mxu0 0.0
    %v3305 = vand.u32 %v1081, 4294901760
    %v3306 = vsub.f32 %v1081, %v3305
    %3307 = vmatpush1.msra.mxu0 %v3306
    %3308 = vmatprep.subr.mxu0 0.0
    %v3309 = vand.u32 %v1082, 4294901760
    %v3310 = vsub.f32 %v1082, %v3309
    %3311 = vmatpush1.msra.mxu0 %v3310
    %3312 = vmatprep.subr.mxu0 0.0
    %v3313 = vand.u32 %v1083, 4294901760
    %v3314 = vsub.f32 %v1083, %v3313
    %3315 = vmatpush1.msra.mxu0 %v3314
    %3316 = vmatprep.subr.mxu0 0.0
    %3317 = vmatpush1.msra.mxu0 0.0
    %3318 = vmatprep.subr.mxu0 0.0
    %3319 = vmatpush1.msra.mxu0 0.0
    %3320 = vmatprep.subr.mxu0 0.0
    %3321 = vmatpush1.msra.mxu0 0.0
    %3322 = vmatprep.subr.mxu0 0.0
    %3323 = vmatpush1.msra.mxu0 0.0
    %3324 = vmatprep.subr.mxu0 0.0
    %3325 = vmatpush1.msra.mxu0 0.0
    %3326 = vmatprep.subr.mxu0 0.0
    %3327 = vmatpush1.msra.mxu0 0.0
    %3328 = vmatprep.subr.mxu0 0.0
    %3329 = vmatpush1.msra.mxu0 0.0
    %3330 = vmatprep.subr.mxu0 0.0
    %3331 = vmatpush1.msra.mxu0 0.0
    %3332 = vmatprep.subr.mxu0 0.0
    %3333 = vmatpush1.msra.mxu0 0.0
    %3334 = vmatprep.subr.mxu0 0.0
    %3335 = vmatpush1.msra.mxu0 0.0
    %3336 = vmatprep.subr.mxu0 0.0
    %3337 = vmatpush1.msra.mxu0 0.0
    %3338 = vmatprep.subr.mxu0 0.0
    %3339 = vmatpush1.msra.mxu0 0.0
    %3340 = vmatprep.subr.mxu0 0.0
    %3341 = vmatpush1.msra.mxu0 0.0
    %3342 = vmatprep.subr.mxu0 0.0
    %3343 = vmatpush1.msra.mxu0 0.0
    %3344 = vmatprep.subr.mxu0 0.0
    %3345 = vmatpush1.msra.mxu0 0.0
    %3346 = vmatprep.subr.mxu0 0.0
    %3347 = vmatpush1.msra.mxu0 0.0
    %3348 = vmatprep.mubr.f32.mxu0 0.0
    %v3349 = vand.u32 %v3006, 4294901760
    %v3350 = vsub.f32 %v3006, %v3349
    %3351 = vmatmul.mubr.f32.gmra.mrb[0].mxu0 %v3350
    %v3352 = vpop.f32.mrb[0].mxu0
    %v3353 = vadd.f32 %v3249, %v3352
    %v3354 = vpop.f32.mrb[0].mxu0
    %3355 = vdwg.mxu0
    %3356 = vmatprep.subr.mxu0 0.0
    %v3357 = vand.u32 %v1068, 4294901760
    %3358 = vmatpush1.msra.mxu0 %v3357
    %3359 = vmatprep.subr.mxu0 0.0
    %v3360 = vand.u32 %v1069, 4294901760
    %3361 = vmatpush1.msra.mxu0 %v3360
    %3362 = vmatprep.subr.mxu0 0.0
    %v3363 = vand.u32 %v1070, 4294901760
    %3364 = vmatpush1.msra.mxu0 %v3363
    %3365 = vmatprep.subr.mxu0 0.0
    %v3366 = vand.u32 %v1071, 4294901760
    %3367 = vmatpush1.msra.mxu0 %v3366
    %3368 = vmatprep.subr.mxu0 0.0
    %v3369 = vand.u32 %v1072, 4294901760
    %3370 = vmatpush1.msra.mxu0 %v3369
    %3371 = vmatprep.subr.mxu0 0.0
    %v3372 = vand.u32 %v1073, 4294901760
    %3373 = vmatpush1.msra.mxu0 %v3372
    %3374 = vmatprep.subr.mxu0 0.0
    %v3375 = vand.u32 %v1074, 4294901760
    %3376 = vmatpush1.msra.mxu0 %v3375
    %3377 = vmatprep.subr.mxu0 0.0
    %v3378 = vand.u32 %v1075, 4294901760
    %3379 = vmatpush1.msra.mxu0 %v3378
    %3380 = vmatprep.subr.mxu0 0.0
    %v3381 = vand.u32 %v1076, 4294901760
    %3382 = vmatpush1.msra.mxu0 %v3381
    %3383 = vmatprep.subr.mxu0 0.0
    %v3384 = vand.u32 %v1077, 4294901760
    %3385 = vmatpush1.msra.mxu0 %v3384
    %3386 = vmatprep.subr.mxu0 0.0
    %v3387 = vand.u32 %v1078, 4294901760
    %3388 = vmatpush1.msra.mxu0 %v3387
    %3389 = vmatprep.subr.mxu0 0.0
    %v3390 = vand.u32 %v1079, 4294901760
    %3391 = vmatpush1.msra.mxu0 %v3390
    %3392 = vmatprep.subr.mxu0 0.0
    %v3393 = vand.u32 %v1080, 4294901760
    %3394 = vmatpush1.msra.mxu0 %v3393
    %3395 = vmatprep.subr.mxu0 0.0
    %v3396 = vand.u32 %v1081, 4294901760
    %3397 = vmatpush1.msra.mxu0 %v3396
    %3398 = vmatprep.subr.mxu0 0.0
    %v3399 = vand.u32 %v1082, 4294901760
    %3400 = vmatpush1.msra.mxu0 %v3399
    %3401 = vmatprep.subr.mxu0 0.0
    %v3402 = vand.u32 %v1083, 4294901760
    %3403 = vmatpush1.msra.mxu0 %v3402
    %3404 = vmatprep.subr.mxu0 0.0
    %3405 = vmatpush1.msra.mxu0 0.0
    %3406 = vmatprep.subr.mxu0 0.0
    %3407 = vmatpush1.msra.mxu0 0.0
    %3408 = vmatprep.subr.mxu0 0.0
    %3409 = vmatpush1.msra.mxu0 0.0
    %3410 = vmatprep.subr.mxu0 0.0
    %3411 = vmatpush1.msra.mxu0 0.0
    %3412 = vmatprep.subr.mxu0 0.0
    %3413 = vmatpush1.msra.mxu0 0.0
    %3414 = vmatprep.subr.mxu0 0.0
    %3415 = vmatpush1.msra.mxu0 0.0
    %3416 = vmatprep.subr.mxu0 0.0
    %3417 = vmatpush1.msra.mxu0 0.0
    %3418 = vmatprep.subr.mxu0 0.0
    %3419 = vmatpush1.msra.mxu0 0.0
    %3420 = vmatprep.subr.mxu0 0.0
    %3421 = vmatpush1.msra.mxu0 0.0
    %3422 = vmatprep.subr.mxu0 0.0
    %3423 = vmatpush1.msra.mxu0 0.0
    %3424 = vmatprep.subr.mxu0 0.0
    %3425 = vmatpush1.msra.mxu0 0.0
    %3426 = vmatprep.subr.mxu0 0.0
    %3427 = vmatpush1.msra.mxu0 0.0
    %3428 = vmatprep.subr.mxu0 0.0
    %3429 = vmatpush1.msra.mxu0 0.0
    %3430 = vmatprep.subr.mxu0 0.0
    %3431 = vmatpush1.msra.mxu0 0.0
    %3432 = vmatprep.subr.mxu0 0.0
    %3433 = vmatpush1.msra.mxu0 0.0
    %3434 = vmatprep.subr.mxu0 0.0
    %3435 = vmatpush1.msra.mxu0 0.0
    %3436 = vmatprep.mubr.f32.mxu0 0.0
    %v3437 = vand.u32 %v3006, 4294901760
    %v3438 = vsub.f32 %v3006, %v3437
    %v3439 = vand.u32 %v3438, 4294901760
    %3440 = vmatmul.mubr.f32.gmra.mrb[0].mxu0 %v3439
    %v3441 = vpop.f32.mrb[0].mxu0
    %v3442 = vadd.f32 %v3353, %v3441
    %v3443 = vpop.f32.mrb[0].mxu0
    %3444 = vdwg.mxu0
    %3445 = vmatprep.subr.mxu0 0.0
    %v3446 = vand.u32 %v1068, 4294901760
    %v3447 = vsub.f32 %v1068, %v3446
    %v3448 = vand.u32 %v3447, 4294901760
    %3449 = vmatpush1.msra.mxu0 %v3448
    %3450 = vmatprep.subr.mxu0 0.0
    %v3451 = vand.u32 %v1069, 4294901760
    %v3452 = vsub.f32 %v1069, %v3451
    %v3453 = vand.u32 %v3452, 4294901760
    %3454 = vmatpush1.msra.mxu0 %v3453
    %3455 = vmatprep.subr.mxu0 0.0
    %v3456 = vand.u32 %v1070, 4294901760
    %v3457 = vsub.f32 %v1070, %v3456
    %v3458 = vand.u32 %v3457, 4294901760
    %3459 = vmatpush1.msra.mxu0 %v3458
    %3460 = vmatprep.subr.mxu0 0.0
    %v3461 = vand.u32 %v1071, 4294901760
    %v3462 = vsub.f32 %v1071, %v3461
    %v3463 = vand.u32 %v3462, 4294901760
    %3464 = vmatpush1.msra.mxu0 %v3463
    %3465 = vmatprep.subr.mxu0 0.0
    %v3466 = vand.u32 %v1072, 4294901760
    %v3467 = vsub.f32 %v1072, %v3466
    %v3468 = vand.u32 %v3467, 4294901760
    %3469 = vmatpush1.msra.mxu0 %v3468
    %3470 = vmatprep.subr.mxu0 0.0
    %v3471 = vand.u32 %v1073, 4294901760
    %v3472 = vsub.f32 %v1073, %v3471
    %v3473 = vand.u32 %v3472, 4294901760
    %3474 = vmatpush1.msra.mxu0 %v3473
    %3475 = vmatprep.subr.mxu0 0.0
    %v3476 = vand.u32 %v1074, 4294901760
    %v3477 = vsub.f32 %v1074, %v3476
    %v3478 = vand.u32 %v3477, 4294901760
    %3479 = vmatpush1.msra.mxu0 %v3478
    %3480 = vmatprep.subr.mxu0 0.0
    %v3481 = vand.u32 %v1075, 4294901760
    %v3482 = vsub.f32 %v1075, %v3481
    %v3483 = vand.u32 %v3482, 4294901760
    %3484 = vmatpush1.msra.mxu0 %v3483
    %3485 = vmatprep.subr.mxu0 0.0
    %v3486 = vand.u32 %v1076, 4294901760
    %v3487 = vsub.f32 %v1076, %v3486
    %v3488 = vand.u32 %v3487, 4294901760
    %3489 = vmatpush1.msra.mxu0 %v3488
    %3490 = vmatprep.subr.mxu0 0.0
    %v3491 = vand.u32 %v1077, 4294901760
    %v3492 = vsub.f32 %v1077, %v3491
    %v3493 = vand.u32 %v3492, 4294901760
    %3494 = vmatpush1.msra.mxu0 %v3493
    %3495 = vmatprep.subr.mxu0 0.0
    %v3496 = vand.u32 %v1078, 4294901760
    %v3497 = vsub.f32 %v1078, %v3496
    %v3498 = vand.u32 %v3497, 4294901760
    %3499 = vmatpush1.msra.mxu0 %v3498
    %3500 = vmatprep.subr.mxu0 0.0
    %v3501 = vand.u32 %v1079, 4294901760
    %v3502 = vsub.f32 %v1079, %v3501
    %v3503 = vand.u32 %v3502, 4294901760
    %3504 = vmatpush1.msra.mxu0 %v3503
    %3505 = vmatprep.subr.mxu0 0.0
    %v3506 = vand.u32 %v1080, 4294901760
    %v3507 = vsub.f32 %v1080, %v3506
    %v3508 = vand.u32 %v3507, 4294901760
    %3509 = vmatpush1.msra.mxu0 %v3508
    %3510 = vmatprep.subr.mxu0 0.0
    %v3511 = vand.u32 %v1081, 4294901760
    %v3512 = vsub.f32 %v1081, %v3511
    %v3513 = vand.u32 %v3512, 4294901760
    %3514 = vmatpush1.msra.mxu0 %v3513
    %3515 = vmatprep.subr.mxu0 0.0
    %v3516 = vand.u32 %v1082, 4294901760
    %v3517 = vsub.f32 %v1082, %v3516
    %v3518 = vand.u32 %v3517, 4294901760
    %3519 = vmatpush1.msra.mxu0 %v3518
    %3520 = vmatprep.subr.mxu0 0.0
    %v3521 = vand.u32 %v1083, 4294901760
    %v3522 = vsub.f32 %v1083, %v3521
    %v3523 = vand.u32 %v3522, 4294901760
    %3524 = vmatpush1.msra.mxu0 %v3523
    %3525 = vmatprep.subr.mxu0 0.0
    %3526 = vmatpush1.msra.mxu0 0.0
    %3527 = vmatprep.subr.mxu0 0.0
    %3528 = vmatpush1.msra.mxu0 0.0
    %3529 = vmatprep.subr.mxu0 0.0
    %3530 = vmatpush1.msra.mxu0 0.0
    %3531 = vmatprep.subr.mxu0 0.0
    %3532 = vmatpush1.msra.mxu0 0.0
    %3533 = vmatprep.subr.mxu0 0.0
    %3534 = vmatpush1.msra.mxu0 0.0
    %3535 = vmatprep.subr.mxu0 0.0
    %3536 = vmatpush1.msra.mxu0 0.0
    %3537 = vmatprep.subr.mxu0 0.0
    %3538 = vmatpush1.msra.mxu0 0.0
    %3539 = vmatprep.subr.mxu0 0.0
    %3540 = vmatpush1.msra.mxu0 0.0
    %3541 = vmatprep.subr.mxu0 0.0
    %3542 = vmatpush1.msra.mxu0 0.0
    %3543 = vmatprep.subr.mxu0 0.0
    %3544 = vmatpush1.msra.mxu0 0.0
    %3545 = vmatprep.subr.mxu0 0.0
    %3546 = vmatpush1.msra.mxu0 0.0
    %3547 = vmatprep.subr.mxu0 0.0
    %3548 = vmatpush1.msra.mxu0 0.0
    %3549 = vmatprep.subr.mxu0 0.0
    %3550 = vmatpush1.msra.mxu0 0.0
    %3551 = vmatprep.subr.mxu0 0.0
    %3552 = vmatpush1.msra.mxu0 0.0
    %3553 = vmatprep.subr.mxu0 0.0
    %3554 = vmatpush1.msra.mxu0 0.0
    %3555 = vmatprep.subr.mxu0 0.0
    %3556 = vmatpush1.msra.mxu0 0.0
    %3557 = vmatprep.mubr.f32.mxu0 0.0
    %v3558 = vand.u32 %v3006, 4294901760
    %3559 = vmatmul.mubr.f32.gmra.mrb[0].mxu0 %v3558
    %v3560 = vpop.f32.mrb[0].mxu0
    %v3561 = vadd.f32 %v3442, %v3560
    %v3562 = vpop.f32.mrb[0].mxu0
    %3563 = vdwg.mxu0
    %3564 = vmatprep.subr.mxu0 0.0
    %v3565 = vand.u32 %v1068, 4294901760
    %3566 = vmatpush1.msra.mxu0 %v3565
    %3567 = vmatprep.subr.mxu0 0.0
    %v3568 = vand.u32 %v1069, 4294901760
    %3569 = vmatpush1.msra.mxu0 %v3568
    %3570 = vmatprep.subr.mxu0 0.0
    %v3571 = vand.u32 %v1070, 4294901760
    %3572 = vmatpush1.msra.mxu0 %v3571
    %3573 = vmatprep.subr.mxu0 0.0
    %v3574 = vand.u32 %v1071, 4294901760
    %3575 = vmatpush1.msra.mxu0 %v3574
    %3576 = vmatprep.subr.mxu0 0.0
    %v3577 = vand.u32 %v1072, 4294901760
    %3578 = vmatpush1.msra.mxu0 %v3577
    %3579 = vmatprep.subr.mxu0 0.0
    %v3580 = vand.u32 %v1073, 4294901760
    %3581 = vmatpush1.msra.mxu0 %v3580
    %3582 = vmatprep.subr.mxu0 0.0
    %v3583 = vand.u32 %v1074, 4294901760
    %3584 = vmatpush1.msra.mxu0 %v3583
    %3585 = vmatprep.subr.mxu0 0.0
    %v3586 = vand.u32 %v1075, 4294901760
    %3587 = vmatpush1.msra.mxu0 %v3586
    %3588 = vmatprep.subr.mxu0 0.0
    %v3589 = vand.u32 %v1076, 4294901760
    %3590 = vmatpush1.msra.mxu0 %v3589
    %3591 = vmatprep.subr.mxu0 0.0
    %v3592 = vand.u32 %v1077, 4294901760
    %3593 = vmatpush1.msra.mxu0 %v3592
    %3594 = vmatprep.subr.mxu0 0.0
    %v3595 = vand.u32 %v1078, 4294901760
    %3596 = vmatpush1.msra.mxu0 %v3595
    %3597 = vmatprep.subr.mxu0 0.0
    %v3598 = vand.u32 %v1079, 4294901760
    %3599 = vmatpush1.msra.mxu0 %v3598
    %3600 = vmatprep.subr.mxu0 0.0
    %v3601 = vand.u32 %v1080, 4294901760
    %3602 = vmatpush1.msra.mxu0 %v3601
    %3603 = vmatprep.subr.mxu0 0.0
    %v3604 = vand.u32 %v1081, 4294901760
    %3605 = vmatpush1.msra.mxu0 %v3604
    %3606 = vmatprep.subr.mxu0 0.0
    %v3607 = vand.u32 %v1082, 4294901760
    %3608 = vmatpush1.msra.mxu0 %v3607
    %3609 = vmatprep.subr.mxu0 0.0
    %v3610 = vand.u32 %v1083, 4294901760
    %3611 = vmatpush1.msra.mxu0 %v3610
    %3612 = vmatprep.subr.mxu0 0.0
    %3613 = vmatpush1.msra.mxu0 0.0
    %3614 = vmatprep.subr.mxu0 0.0
    %3615 = vmatpush1.msra.mxu0 0.0
    %3616 = vmatprep.subr.mxu0 0.0
    %3617 = vmatpush1.msra.mxu0 0.0
    %3618 = vmatprep.subr.mxu0 0.0
    %3619 = vmatpush1.msra.mxu0 0.0
    %3620 = vmatprep.subr.mxu0 0.0
    %3621 = vmatpush1.msra.mxu0 0.0
    %3622 = vmatprep.subr.mxu0 0.0
    %3623 = vmatpush1.msra.mxu0 0.0
    %3624 = vmatprep.subr.mxu0 0.0
    %3625 = vmatpush1.msra.mxu0 0.0
    %3626 = vmatprep.subr.mxu0 0.0
    %3627 = vmatpush1.msra.mxu0 0.0
    %3628 = vmatprep.subr.mxu0 0.0
    %3629 = vmatpush1.msra.mxu0 0.0
    %3630 = vmatprep.subr.mxu0 0.0
    %3631 = vmatpush1.msra.mxu0 0.0
    %3632 = vmatprep.subr.mxu0 0.0
    %3633 = vmatpush1.msra.mxu0 0.0
    %3634 = vmatprep.subr.mxu0 0.0
    %3635 = vmatpush1.msra.mxu0 0.0
    %3636 = vmatprep.subr.mxu0 0.0
    %3637 = vmatpush1.msra.mxu0 0.0
    %3638 = vmatprep.subr.mxu0 0.0
    %3639 = vmatpush1.msra.mxu0 0.0
    %3640 = vmatprep.subr.mxu0 0.0
    %3641 = vmatpush1.msra.mxu0 0.0
    %3642 = vmatprep.subr.mxu0 0.0
    %3643 = vmatpush1.msra.mxu0 0.0
    %3644 = vmatprep.mubr.f32.mxu0 0.0
    %v3645 = vand.u32 %v3006, 4294901760
    %3646 = vmatmul.mubr.f32.gmra.mrb[0].mxu0 %v3645
    %v3647 = vpop.f32.mrb[0].mxu0
    %v3648 = vadd.f32 %v3561, %v3647
    %v3649 = vpop.f32.mrb[0].mxu0
    %3650 = vdwg.mxu0
    %v3651 = vadd.f32 %v3009, %v3648
    %v3652 = vtanh.pop %v3651
    %3653 = vst [vmem:[%s3008] sm:$0xff] %v3652
    %s3654 = scalar_lea.vmem [#allocation2], 32
    %v3655 = vld [vmem:[%s3654] sm:$0xff]
    %3656 = vmatprep.subr.mxu0 0.0
    %v3657 = vand.u32 %v1068, 4294901760
    %3658 = vmatpush1.msra.mxu0 %v3657
    %3659 = vmatprep.subr.mxu0 0.0
    %v3660 = vand.u32 %v1069, 4294901760
    %3661 = vmatpush1.msra.mxu0 %v3660
    %3662 = vmatprep.subr.mxu0 0.0
    %v3663 = vand.u32 %v1070, 4294901760
    %3664 = vmatpush1.msra.mxu0 %v3663
    %3665 = vmatprep.subr.mxu0 0.0
    %v3666 = vand.u32 %v1071, 4294901760
    %3667 = vmatpush1.msra.mxu0 %v3666
    %3668 = vmatprep.subr.mxu0 0.0
    %v3669 = vand.u32 %v1072, 4294901760
    %3670 = vmatpush1.msra.mxu0 %v3669
    %3671 = vmatprep.subr.mxu0 0.0
    %v3672 = vand.u32 %v1073, 4294901760
    %3673 = vmatpush1.msra.mxu0 %v3672
    %3674 = vmatprep.subr.mxu0 0.0
    %v3675 = vand.u32 %v1074, 4294901760
    %3676 = vmatpush1.msra.mxu0 %v3675
    %3677 = vmatprep.subr.mxu0 0.0
    %v3678 = vand.u32 %v1075, 4294901760
    %3679 = vmatpush1.msra.mxu0 %v3678
    %3680 = vmatprep.subr.mxu0 0.0
    %v3681 = vand.u32 %v1076, 4294901760
    %3682 = vmatpush1.msra.mxu0 %v3681
    %3683 = vmatprep.subr.mxu0 0.0
    %v3684 = vand.u32 %v1077, 4294901760
    %3685 = vmatpush1.msra.mxu0 %v3684
    %3686 = vmatprep.subr.mxu0 0.0
    %v3687 = vand.u32 %v1078, 4294901760
    %3688 = vmatpush1.msra.mxu0 %v3687
    %3689 = vmatprep.subr.mxu0 0.0
    %v3690 = vand.u32 %v1079, 4294901760
    %3691 = vmatpush1.msra.mxu0 %v3690
    %3692 = vmatprep.subr.mxu0 0.0
    %v3693 = vand.u32 %v1080, 4294901760
    %3694 = vmatpush1.msra.mxu0 %v3693
    %3695 = vmatprep.subr.mxu0 0.0
    %v3696 = vand.u32 %v1081, 4294901760
    %3697 = vmatpush1.msra.mxu0 %v3696
    %3698 = vmatprep.subr.mxu0 0.0
    %v3699 = vand.u32 %v1082, 4294901760
    %3700 = vmatpush1.msra.mxu0 %v3699
    %3701 = vmatprep.subr.mxu0 0.0
    %v3702 = vand.u32 %v1083, 4294901760
    %3703 = vmatpush1.msra.mxu0 %v3702
    %3704 = vmatprep.subr.mxu0 0.0
    %3705 = vmatpush1.msra.mxu0 0.0
    %3706 = vmatprep.subr.mxu0 0.0
    %3707 = vmatpush1.msra.mxu0 0.0
    %3708 = vmatprep.subr.mxu0 0.0
    %3709 = vmatpush1.msra.mxu0 0.0
    %3710 = vmatprep.subr.mxu0 0.0
    %3711 = vmatpush1.msra.mxu0 0.0
    %3712 = vmatprep.subr.mxu0 0.0
    %3713 = vmatpush1.msra.mxu0 0.0
    %3714 = vmatprep.subr.mxu0 0.0
    %3715 = vmatpush1.msra.mxu0 0.0
    %3716 = vmatprep.subr.mxu0 0.0
    %3717 = vmatpush1.msra.mxu0 0.0
    %3718 = vmatprep.subr.mxu0 0.0
    %3719 = vmatpush1.msra.mxu0 0.0
    %3720 = vmatprep.subr.mxu0 0.0
    %3721 = vmatpush1.msra.mxu0 0.0
    %3722 = vmatprep.subr.mxu0 0.0
    %3723 = vmatpush1.msra.mxu0 0.0
    %3724 = vmatprep.subr.mxu0 0.0
    %3725 = vmatpush1.msra.mxu0 0.0
    %3726 = vmatprep.subr.mxu0 0.0
    %3727 = vmatpush1.msra.mxu0 0.0
    %3728 = vmatprep.subr.mxu0 0.0
    %3729 = vmatpush1.msra.mxu0 0.0
    %3730 = vmatprep.subr.mxu0 0.0
    %3731 = vmatpush1.msra.mxu0 0.0
    %3732 = vmatprep.subr.mxu0 0.0
    %3733 = vmatpush1.msra.mxu0 0.0
    %3734 = vmatprep.subr.mxu0 0.0
    %3735 = vmatpush1.msra.mxu0 0.0
    %3736 = vmatprep.mubr.f32.mxu0 0.0
    %v3737 = vand.u32 %v3652, 4294901760
    %v3738 = vsub.f32 %v3652, %v3737
    %v3739 = vand.u32 %v3738, 4294901760
    %v3740 = vsub.f32 %v3738, %v3739
    %v3741 = vand.u32 %v3740, 4294901760
    %3742 = vmatmul.mubr.f32.gmra.mrb[0].mxu0 %v3741
    %v3743 = vpop.f32.mrb[0].mxu0
    %v3744 = vadd.f32 0.0, %v3743
    %v3745 = vpop.f32.mrb[0].mxu0
    %3746 = vdwg.mxu0
    %3747 = vmatprep.subr.mxu0 0.0
    %v3748 = vand.u32 %v1068, 4294901760
    %v3749 = vsub.f32 %v1068, %v3748
    %v3750 = vand.u32 %v3749, 4294901760
    %v3751 = vsub.f32 %v3749, %v3750
    %v3752 = vand.u32 %v3751, 4294901760
    %3753 = vmatpush1.msra.mxu0 %v3752
    %3754 = vmatprep.subr.mxu0 0.0
    %v3755 = vand.u32 %v1069, 4294901760
    %v3756 = vsub.f32 %v1069, %v3755
    %v3757 = vand.u32 %v3756, 4294901760
    %v3758 = vsub.f32 %v3756, %v3757
    %v3759 = vand.u32 %v3758, 4294901760
    %3760 = vmatpush1.msra.mxu0 %v3759
    %3761 = vmatprep.subr.mxu0 0.0
    %v3762 = vand.u32 %v1070, 4294901760
    %v3763 = vsub.f32 %v1070, %v3762
    %v3764 = vand.u32 %v3763, 4294901760
    %v3765 = vsub.f32 %v3763, %v3764
    %v3766 = vand.u32 %v3765, 4294901760
    %3767 = vmatpush1.msra.mxu0 %v3766
    %3768 = vmatprep.subr.mxu0 0.0
    %v3769 = vand.u32 %v1071, 4294901760
    %v3770 = vsub.f32 %v1071, %v3769
    %v3771 = vand.u32 %v3770, 4294901760
    %v3772 = vsub.f32 %v3770, %v3771
    %v3773 = vand.u32 %v3772, 4294901760
    %3774 = vmatpush1.msra.mxu0 %v3773
    %3775 = vmatprep.subr.mxu0 0.0
    %v3776 = vand.u32 %v1072, 4294901760
    %v3777 = vsub.f32 %v1072, %v3776
    %v3778 = vand.u32 %v3777, 4294901760
    %v3779 = vsub.f32 %v3777, %v3778
    %v3780 = vand.u32 %v3779, 4294901760
    %3781 = vmatpush1.msra.mxu0 %v3780
    %3782 = vmatprep.subr.mxu0 0.0
    %v3783 = vand.u32 %v1073, 4294901760
    %v3784 = vsub.f32 %v1073, %v3783
    %v3785 = vand.u32 %v3784, 4294901760
    %v3786 = vsub.f32 %v3784, %v3785
    %v3787 = vand.u32 %v3786, 4294901760
    %3788 = vmatpush1.msra.mxu0 %v3787
    %3789 = vmatprep.subr.mxu0 0.0
    %v3790 = vand.u32 %v1074, 4294901760
    %v3791 = vsub.f32 %v1074, %v3790
    %v3792 = vand.u32 %v3791, 4294901760
    %v3793 = vsub.f32 %v3791, %v3792
    %v3794 = vand.u32 %v3793, 4294901760
    %3795 = vmatpush1.msra.mxu0 %v3794
    %3796 = vmatprep.subr.mxu0 0.0
    %v3797 = vand.u32 %v1075, 4294901760
    %v3798 = vsub.f32 %v1075, %v3797
    %v3799 = vand.u32 %v3798, 4294901760
    %v3800 = vsub.f32 %v3798, %v3799
    %v3801 = vand.u32 %v3800, 4294901760
    %3802 = vmatpush1.msra.mxu0 %v3801
    %3803 = vmatprep.subr.mxu0 0.0
    %v3804 = vand.u32 %v1076, 4294901760
    %v3805 = vsub.f32 %v1076, %v3804
    %v3806 = vand.u32 %v3805, 4294901760
    %v3807 = vsub.f32 %v3805, %v3806
    %v3808 = vand.u32 %v3807, 4294901760
    %3809 = vmatpush1.msra.mxu0 %v3808
    %3810 = vmatprep.subr.mxu0 0.0
    %v3811 = vand.u32 %v1077, 4294901760
    %v3812 = vsub.f32 %v1077, %v3811
    %v3813 = vand.u32 %v3812, 4294901760
    %v3814 = vsub.f32 %v3812, %v3813
    %v3815 = vand.u32 %v3814, 4294901760
    %3816 = vmatpush1.msra.mxu0 %v3815
    %3817 = vmatprep.subr.mxu0 0.0
    %v3818 = vand.u32 %v1078, 4294901760
    %v3819 = vsub.f32 %v1078, %v3818
    %v3820 = vand.u32 %v3819, 4294901760
    %v3821 = vsub.f32 %v3819, %v3820
    %v3822 = vand.u32 %v3821, 4294901760
    %3823 = vmatpush1.msra.mxu0 %v3822
    %3824 = vmatprep.subr.mxu0 0.0
    %v3825 = vand.u32 %v1079, 4294901760
    %v3826 = vsub.f32 %v1079, %v3825
    %v3827 = vand.u32 %v3826, 4294901760
    %v3828 = vsub.f32 %v3826, %v3827
    %v3829 = vand.u32 %v3828, 4294901760
    %3830 = vmatpush1.msra.mxu0 %v3829
    %3831 = vmatprep.subr.mxu0 0.0
    %v3832 = vand.u32 %v1080, 4294901760
    %v3833 = vsub.f32 %v1080, %v3832
    %v3834 = vand.u32 %v3833, 4294901760
    %v3835 = vsub.f32 %v3833, %v3834
    %v3836 = vand.u32 %v3835, 4294901760
    %3837 = vmatpush1.msra.mxu0 %v3836
    %3838 = vmatprep.subr.mxu0 0.0
    %v3839 = vand.u32 %v1081, 4294901760
    %v3840 = vsub.f32 %v1081, %v3839
    %v3841 = vand.u32 %v3840, 4294901760
    %v3842 = vsub.f32 %v3840, %v3841
    %v3843 = vand.u32 %v3842, 4294901760
    %3844 = vmatpush1.msra.mxu0 %v3843
    %3845 = vmatprep.subr.mxu0 0.0
    %v3846 = vand.u32 %v1082, 4294901760
    %v3847 = vsub.f32 %v1082, %v3846
    %v3848 = vand.u32 %v3847, 4294901760
    %v3849 = vsub.f32 %v3847, %v3848
    %v3850 = vand.u32 %v3849, 4294901760
    %3851 = vmatpush1.msra.mxu0 %v3850
    %3852 = vmatprep.subr.mxu0 0.0
    %v3853 = vand.u32 %v1083, 4294901760
    %v3854 = vsub.f32 %v1083, %v3853
    %v3855 = vand.u32 %v3854, 4294901760
    %v3856 = vsub.f32 %v3854, %v3855
    %v3857 = vand.u32 %v3856, 4294901760
    %3858 = vmatpush1.msra.mxu0 %v3857
    %3859 = vmatprep.subr.mxu0 0.0
    %3860 = vmatpush1.msra.mxu0 0.0
    %3861 = vmatprep.subr.mxu0 0.0
    %3862 = vmatpush1.msra.mxu0 0.0
    %3863 = vmatprep.subr.mxu0 0.0
    %3864 = vmatpush1.msra.mxu0 0.0
    %3865 = vmatprep.subr.mxu0 0.0
    %3866 = vmatpush1.msra.mxu0 0.0
    %3867 = vmatprep.subr.mxu0 0.0
    %3868 = vmatpush1.msra.mxu0 0.0
    %3869 = vmatprep.subr.mxu0 0.0
    %3870 = vmatpush1.msra.mxu0 0.0
    %3871 = vmatprep.subr.mxu0 0.0
    %3872 = vmatpush1.msra.mxu0 0.0
    %3873 = vmatprep.subr.mxu0 0.0
    %3874 = vmatpush1.msra.mxu0 0.0
    %3875 = vmatprep.subr.mxu0 0.0
    %3876 = vmatpush1.msra.mxu0 0.0
    %3877 = vmatprep.subr.mxu0 0.0
    %3878 = vmatpush1.msra.mxu0 0.0
    %3879 = vmatprep.subr.mxu0 0.0
    %3880 = vmatpush1.msra.mxu0 0.0
    %3881 = vmatprep.subr.mxu0 0.0
    %3882 = vmatpush1.msra.mxu0 0.0
    %3883 = vmatprep.subr.mxu0 0.0
    %3884 = vmatpush1.msra.mxu0 0.0
    %3885 = vmatprep.subr.mxu0 0.0
    %3886 = vmatpush1.msra.mxu0 0.0
    %3887 = vmatprep.subr.mxu0 0.0
    %3888 = vmatpush1.msra.mxu0 0.0
    %3889 = vmatprep.subr.mxu0 0.0
    %3890 = vmatpush1.msra.mxu0 0.0
    %3891 = vmatprep.mubr.f32.mxu0 0.0
    %v3892 = vand.u32 %v3652, 4294901760
    %3893 = vmatmul.mubr.f32.gmra.mrb[0].mxu0 %v3892
    %v3894 = vpop.f32.mrb[0].mxu0
    %v3895 = vadd.f32 %v3744, %v3894
    %v3896 = vpop.f32.mrb[0].mxu0
    %3897 = vdwg.mxu0
    %3898 = vmatprep.subr.mxu0 0.0
    %v3899 = vand.u32 %v1068, 4294901760
    %v3900 = vsub.f32 %v1068, %v3899
    %3901 = vmatpush1.msra.mxu0 %v3900
    %3902 = vmatprep.subr.mxu0 0.0
    %v3903 = vand.u32 %v1069, 4294901760
    %v3904 = vsub.f32 %v1069, %v3903
    %3905 = vmatpush1.msra.mxu0 %v3904
    %3906 = vmatprep.subr.mxu0 0.0
    %v3907 = vand.u32 %v1070, 4294901760
    %v3908 = vsub.f32 %v1070, %v3907
    %3909 = vmatpush1.msra.mxu0 %v3908
    %3910 = vmatprep.subr.mxu0 0.0
    %v3911 = vand.u32 %v1071, 4294901760
    %v3912 = vsub.f32 %v1071, %v3911
    %3913 = vmatpush1.msra.mxu0 %v3912
    %3914 = vmatprep.subr.mxu0 0.0
    %v3915 = vand.u32 %v1072, 4294901760
    %v3916 = vsub.f32 %v1072, %v3915
    %3917 = vmatpush1.msra.mxu0 %v3916
    %3918 = vmatprep.subr.mxu0 0.0
    %v3919 = vand.u32 %v1073, 4294901760
    %v3920 = vsub.f32 %v1073, %v3919
    %3921 = vmatpush1.msra.mxu0 %v3920
    %3922 = vmatprep.subr.mxu0 0.0
    %v3923 = vand.u32 %v1074, 4294901760
    %v3924 = vsub.f32 %v1074, %v3923
    %3925 = vmatpush1.msra.mxu0 %v3924
    %3926 = vmatprep.subr.mxu0 0.0
    %v3927 = vand.u32 %v1075, 4294901760
    %v3928 = vsub.f32 %v1075, %v3927
    %3929 = vmatpush1.msra.mxu0 %v3928
    %3930 = vmatprep.subr.mxu0 0.0
    %v3931 = vand.u32 %v1076, 4294901760
    %v3932 = vsub.f32 %v1076, %v3931
    %3933 = vmatpush1.msra.mxu0 %v3932
    %3934 = vmatprep.subr.mxu0 0.0
    %v3935 = vand.u32 %v1077, 4294901760
    %v3936 = vsub.f32 %v1077, %v3935
    %3937 = vmatpush1.msra.mxu0 %v3936
    %3938 = vmatprep.subr.mxu0 0.0
    %v3939 = vand.u32 %v1078, 4294901760
    %v3940 = vsub.f32 %v1078, %v3939
    %3941 = vmatpush1.msra.mxu0 %v3940
    %3942 = vmatprep.subr.mxu0 0.0
    %v3943 = vand.u32 %v1079, 4294901760
    %v3944 = vsub.f32 %v1079, %v3943
    %3945 = vmatpush1.msra.mxu0 %v3944
    %3946 = vmatprep.subr.mxu0 0.0
    %v3947 = vand.u32 %v1080, 4294901760
    %v3948 = vsub.f32 %v1080, %v3947
    %3949 = vmatpush1.msra.mxu0 %v3948
    %3950 = vmatprep.subr.mxu0 0.0
    %v3951 = vand.u32 %v1081, 4294901760
    %v3952 = vsub.f32 %v1081, %v3951
    %3953 = vmatpush1.msra.mxu0 %v3952
    %3954 = vmatprep.subr.mxu0 0.0
    %v3955 = vand.u32 %v1082, 4294901760
    %v3956 = vsub.f32 %v1082, %v3955
    %3957 = vmatpush1.msra.mxu0 %v3956
    %3958 = vmatprep.subr.mxu0 0.0
    %v3959 = vand.u32 %v1083, 4294901760
    %v3960 = vsub.f32 %v1083, %v3959
    %3961 = vmatpush1.msra.mxu0 %v3960
    %3962 = vmatprep.subr.mxu0 0.0
    %3963 = vmatpush1.msra.mxu0 0.0
    %3964 = vmatprep.subr.mxu0 0.0
    %3965 = vmatpush1.msra.mxu0 0.0
    %3966 = vmatprep.subr.mxu0 0.0
    %3967 = vmatpush1.msra.mxu0 0.0
    %3968 = vmatprep.subr.mxu0 0.0
    %3969 = vmatpush1.msra.mxu0 0.0
    %3970 = vmatprep.subr.mxu0 0.0
    %3971 = vmatpush1.msra.mxu0 0.0
    %3972 = vmatprep.subr.mxu0 0.0
    %3973 = vmatpush1.msra.mxu0 0.0
    %3974 = vmatprep.subr.mxu0 0.0
    %3975 = vmatpush1.msra.mxu0 0.0
    %3976 = vmatprep.subr.mxu0 0.0
    %3977 = vmatpush1.msra.mxu0 0.0
    %3978 = vmatprep.subr.mxu0 0.0
    %3979 = vmatpush1.msra.mxu0 0.0
    %3980 = vmatprep.subr.mxu0 0.0
    %3981 = vmatpush1.msra.mxu0 0.0
    %3982 = vmatprep.subr.mxu0 0.0
    %3983 = vmatpush1.msra.mxu0 0.0
    %3984 = vmatprep.subr.mxu0 0.0
    %3985 = vmatpush1.msra.mxu0 0.0
    %3986 = vmatprep.subr.mxu0 0.0
    %3987 = vmatpush1.msra.mxu0 0.0
    %3988 = vmatprep.subr.mxu0 0.0
    %3989 = vmatpush1.msra.mxu0 0.0
    %3990 = vmatprep.subr.mxu0 0.0
    %3991 = vmatpush1.msra.mxu0 0.0
    %3992 = vmatprep.subr.mxu0 0.0
    %3993 = vmatpush1.msra.mxu0 0.0
    %3994 = vmatprep.mubr.f32.mxu0 0.0
    %v3995 = vand.u32 %v3652, 4294901760
    %v3996 = vsub.f32 %v3652, %v3995
    %3997 = vmatmul.mubr.f32.gmra.mrb[0].mxu0 %v3996
    %v3998 = vpop.f32.mrb[0].mxu0
    %v3999 = vadd.f32 %v3895, %v3998
    %v4000 = vpop.f32.mrb[0].mxu0
    %4001 = vdwg.mxu0
    %4002 = vmatprep.subr.mxu0 0.0
    %v4003 = vand.u32 %v1068, 4294901760
    %4004 = vmatpush1.msra.mxu0 %v4003
    %4005 = vmatprep.subr.mxu0 0.0
    %v4006 = vand.u32 %v1069, 4294901760
    %4007 = vmatpush1.msra.mxu0 %v4006
    %4008 = vmatprep.subr.mxu0 0.0
    %v4009 = vand.u32 %v1070, 4294901760
    %4010 = vmatpush1.msra.mxu0 %v4009
    %4011 = vmatprep.subr.mxu0 0.0
    %v4012 = vand.u32 %v1071, 4294901760
    %4013 = vmatpush1.msra.mxu0 %v4012
    %4014 = vmatprep.subr.mxu0 0.0
    %v4015 = vand.u32 %v1072, 4294901760
    %4016 = vmatpush1.msra.mxu0 %v4015
    %4017 = vmatprep.subr.mxu0 0.0
    %v4018 = vand.u32 %v1073, 4294901760
    %4019 = vmatpush1.msra.mxu0 %v4018
    %4020 = vmatprep.subr.mxu0 0.0
    %v4021 = vand.u32 %v1074, 4294901760
    %4022 = vmatpush1.msra.mxu0 %v4021
    %4023 = vmatprep.subr.mxu0 0.0
    %v4024 = vand.u32 %v1075, 4294901760
    %4025 = vmatpush1.msra.mxu0 %v4024
    %4026 = vmatprep.subr.mxu0 0.0
    %v4027 = vand.u32 %v1076, 4294901760
    %4028 = vmatpush1.msra.mxu0 %v4027
    %4029 = vmatprep.subr.mxu0 0.0
    %v4030 = vand.u32 %v1077, 4294901760
    %4031 = vmatpush1.msra.mxu0 %v4030
    %4032 = vmatprep.subr.mxu0 0.0
    %v4033 = vand.u32 %v1078, 4294901760
    %4034 = vmatpush1.msra.mxu0 %v4033
    %4035 = vmatprep.subr.mxu0 0.0
    %v4036 = vand.u32 %v1079, 4294901760
    %4037 = vmatpush1.msra.mxu0 %v4036
    %4038 = vmatprep.subr.mxu0 0.0
    %v4039 = vand.u32 %v1080, 4294901760
    %4040 = vmatpush1.msra.mxu0 %v4039
    %4041 = vmatprep.subr.mxu0 0.0
    %v4042 = vand.u32 %v1081, 4294901760
    %4043 = vmatpush1.msra.mxu0 %v4042
    %4044 = vmatprep.subr.mxu0 0.0
    %v4045 = vand.u32 %v1082, 4294901760
    %4046 = vmatpush1.msra.mxu0 %v4045
    %4047 = vmatprep.subr.mxu0 0.0
    %v4048 = vand.u32 %v1083, 4294901760
    %4049 = vmatpush1.msra.mxu0 %v4048
    %4050 = vmatprep.subr.mxu0 0.0
    %4051 = vmatpush1.msra.mxu0 0.0
    %4052 = vmatprep.subr.mxu0 0.0
    %4053 = vmatpush1.msra.mxu0 0.0
    %4054 = vmatprep.subr.mxu0 0.0
    %4055 = vmatpush1.msra.mxu0 0.0
    %4056 = vmatprep.subr.mxu0 0.0
    %4057 = vmatpush1.msra.mxu0 0.0
    %4058 = vmatprep.subr.mxu0 0.0
    %4059 = vmatpush1.msra.mxu0 0.0
    %4060 = vmatprep.subr.mxu0 0.0
    %4061 = vmatpush1.msra.mxu0 0.0
    %4062 = vmatprep.subr.mxu0 0.0
    %4063 = vmatpush1.msra.mxu0 0.0
    %4064 = vmatprep.subr.mxu0 0.0
    %4065 = vmatpush1.msra.mxu0 0.0
    %4066 = vmatprep.subr.mxu0 0.0
    %4067 = vmatpush1.msra.mxu0 0.0
    %4068 = vmatprep.subr.mxu0 0.0
    %4069 = vmatpush1.msra.mxu0 0.0
    %4070 = vmatprep.subr.mxu0 0.0
    %4071 = vmatpush1.msra.mxu0 0.0
    %4072 = vmatprep.subr.mxu0 0.0
    %4073 = vmatpush1.msra.mxu0 0.0
    %4074 = vmatprep.subr.mxu0 0.0
    %4075 = vmatpush1.msra.mxu0 0.0
    %4076 = vmatprep.subr.mxu0 0.0
    %4077 = vmatpush1.msra.mxu0 0.0
    %4078 = vmatprep.subr.mxu0 0.0
    %4079 = vmatpush1.msra.mxu0 0.0
    %4080 = vmatprep.subr.mxu0 0.0
    %4081 = vmatpush1.msra.mxu0 0.0
    %4082 = vmatprep.mubr.f32.mxu0 0.0
    %v4083 = vand.u32 %v3652, 4294901760
    %v4084 = vsub.f32 %v3652, %v4083
    %v4085 = vand.u32 %v4084, 4294901760
    %4086 = vmatmul.mubr.f32.gmra.mrb[0].mxu0 %v4085
    %v4087 = vpop.f32.mrb[0].mxu0
    %v4088 = vadd.f32 %v3999, %v4087
    %v4089 = vpop.f32.mrb[0].mxu0
    %4090 = vdwg.mxu0
    %4091 = vmatprep.subr.mxu0 0.0
    %v4092 = vand.u32 %v1068, 4294901760
    %v4093 = vsub.f32 %v1068, %v4092
    %v4094 = vand.u32 %v4093, 4294901760
    %4095 = vmatpush1.msra.mxu0 %v4094
    %4096 = vmatprep.subr.mxu0 0.0
    %v4097 = vand.u32 %v1069, 4294901760
    %v4098 = vsub.f32 %v1069, %v4097
    %v4099 = vand.u32 %v4098, 4294901760
    %4100 = vmatpush1.msra.mxu0 %v4099
    %4101 = vmatprep.subr.mxu0 0.0
    %v4102 = vand.u32 %v1070, 4294901760
    %v4103 = vsub.f32 %v1070, %v4102
    %v4104 = vand.u32 %v4103, 4294901760
    %4105 = vmatpush1.msra.mxu0 %v4104
    %4106 = vmatprep.subr.mxu0 0.0
    %v4107 = vand.u32 %v1071, 4294901760
    %v4108 = vsub.f32 %v1071, %v4107
    %v4109 = vand.u32 %v4108, 4294901760
    %4110 = vmatpush1.msra.mxu0 %v4109
    %4111 = vmatprep.subr.mxu0 0.0
    %v4112 = vand.u32 %v1072, 4294901760
    %v4113 = vsub.f32 %v1072, %v4112
    %v4114 = vand.u32 %v4113, 4294901760
    %4115 = vmatpush1.msra.mxu0 %v4114
    %4116 = vmatprep.subr.mxu0 0.0
    %v4117 = vand.u32 %v1073, 4294901760
    %v4118 = vsub.f32 %v1073, %v4117
    %v4119 = vand.u32 %v4118, 4294901760
    %4120 = vmatpush1.msra.mxu0 %v4119
    %4121 = vmatprep.subr.mxu0 0.0
    %v4122 = vand.u32 %v1074, 4294901760
    %v4123 = vsub.f32 %v1074, %v4122
    %v4124 = vand.u32 %v4123, 4294901760
    %4125 = vmatpush1.msra.mxu0 %v4124
    %4126 = vmatprep.subr.mxu0 0.0
    %v4127 = vand.u32 %v1075, 4294901760
    %v4128 = vsub.f32 %v1075, %v4127
    %v4129 = vand.u32 %v4128, 4294901760
    %4130 = vmatpush1.msra.mxu0 %v4129
    %4131 = vmatprep.subr.mxu0 0.0
    %v4132 = vand.u32 %v1076, 4294901760
    %v4133 = vsub.f32 %v1076, %v4132
    %v4134 = vand.u32 %v4133, 4294901760
    %4135 = vmatpush1.msra.mxu0 %v4134
    %4136 = vmatprep.subr.mxu0 0.0
    %v4137 = vand.u32 %v1077, 4294901760
    %v4138 = vsub.f32 %v1077, %v4137
    %v4139 = vand.u32 %v4138, 4294901760
    %4140 = vmatpush1.msra.mxu0 %v4139
    %4141 = vmatprep.subr.mxu0 0.0
    %v4142 = vand.u32 %v1078, 4294901760
    %v4143 = vsub.f32 %v1078, %v4142
    %v4144 = vand.u32 %v4143, 4294901760
    %4145 = vmatpush1.msra.mxu0 %v4144
    %4146 = vmatprep.subr.mxu0 0.0
    %v4147 = vand.u32 %v1079, 4294901760
    %v4148 = vsub.f32 %v1079, %v4147
    %v4149 = vand.u32 %v4148, 4294901760
    %4150 = vmatpush1.msra.mxu0 %v4149
    %4151 = vmatprep.subr.mxu0 0.0
    %v4152 = vand.u32 %v1080, 4294901760
    %v4153 = vsub.f32 %v1080, %v4152
    %v4154 = vand.u32 %v4153, 4294901760
    %4155 = vmatpush1.msra.mxu0 %v4154
    %4156 = vmatprep.subr.mxu0 0.0
    %v4157 = vand.u32 %v1081, 4294901760
    %v4158 = vsub.f32 %v1081, %v4157
    %v4159 = vand.u32 %v4158, 4294901760
    %4160 = vmatpush1.msra.mxu0 %v4159
    %4161 = vmatprep.subr.mxu0 0.0
    %v4162 = vand.u32 %v1082, 4294901760
    %v4163 = vsub.f32 %v1082, %v4162
    %v4164 = vand.u32 %v4163, 4294901760
    %4165 = vmatpush1.msra.mxu0 %v4164
    %4166 = vmatprep.subr.mxu0 0.0
    %v4167 = vand.u32 %v1083, 4294901760
    %v4168 = vsub.f32 %v1083, %v4167
    %v4169 = vand.u32 %v4168, 4294901760
    %4170 = vmatpush1.msra.mxu0 %v4169
    %4171 = vmatprep.subr.mxu0 0.0
    %4172 = vmatpush1.msra.mxu0 0.0
    %4173 = vmatprep.subr.mxu0 0.0
    %4174 = vmatpush1.msra.mxu0 0.0
    %4175 = vmatprep.subr.mxu0 0.0
    %4176 = vmatpush1.msra.mxu0 0.0
    %4177 = vmatprep.subr.mxu0 0.0
    %4178 = vmatpush1.msra.mxu0 0.0
    %4179 = vmatprep.subr.mxu0 0.0
    %4180 = vmatpush1.msra.mxu0 0.0
    %4181 = vmatprep.subr.mxu0 0.0
    %4182 = vmatpush1.msra.mxu0 0.0
    %4183 = vmatprep.subr.mxu0 0.0
    %4184 = vmatpush1.msra.mxu0 0.0
    %4185 = vmatprep.subr.mxu0 0.0
    %4186 = vmatpush1.msra.mxu0 0.0
    %4187 = vmatprep.subr.mxu0 0.0
    %4188 = vmatpush1.msra.mxu0 0.0
    %4189 = vmatprep.subr.mxu0 0.0
    %4190 = vmatpush1.msra.mxu0 0.0
    %4191 = vmatprep.subr.mxu0 0.0
    %4192 = vmatpush1.msra.mxu0 0.0
    %4193 = vmatprep.subr.mxu0 0.0
    %4194 = vmatpush1.msra.mxu0 0.0
    %4195 = vmatprep.subr.mxu0 0.0
    %4196 = vmatpush1.msra.mxu0 0.0
    %4197 = vmatprep.subr.mxu0 0.0
    %4198 = vmatpush1.msra.mxu0 0.0
    %4199 = vmatprep.subr.mxu0 0.0
    %4200 = vmatpush1.msra.mxu0 0.0
    %4201 = vmatprep.subr.mxu0 0.0
    %4202 = vmatpush1.msra.mxu0 0.0
    %4203 = vmatprep.mubr.f32.mxu0 0.0
    %v4204 = vand.u32 %v3652, 4294901760
    %4205 = vmatmul.mubr.f32.gmra.mrb[0].mxu0 %v4204
    %v4206 = vpop.f32.mrb[0].mxu0
    %v4207 = vadd.f32 %v4088, %v4206
    %v4208 = vpop.f32.mrb[0].mxu0
    %4209 = vdwg.mxu0
    %4210 = vmatprep.subr.mxu0 0.0
    %v4211 = vand.u32 %v1068, 4294901760
    %4212 = vmatpush1.msra.mxu0 %v4211
    %4213 = vmatprep.subr.mxu0 0.0
    %v4214 = vand.u32 %v1069, 4294901760
    %4215 = vmatpush1.msra.mxu0 %v4214
    %4216 = vmatprep.subr.mxu0 0.0
    %v4217 = vand.u32 %v1070, 4294901760
    %4218 = vmatpush1.msra.mxu0 %v4217
    %4219 = vmatprep.subr.mxu0 0.0
    %v4220 = vand.u32 %v1071, 4294901760
    %4221 = vmatpush1.msra.mxu0 %v4220
    %4222 = vmatprep.subr.mxu0 0.0
    %v4223 = vand.u32 %v1072, 4294901760
    %4224 = vmatpush1.msra.mxu0 %v4223
    %4225 = vmatprep.subr.mxu0 0.0
    %v4226 = vand.u32 %v1073, 4294901760
    %4227 = vmatpush1.msra.mxu0 %v4226
    %4228 = vmatprep.subr.mxu0 0.0
    %v4229 = vand.u32 %v1074, 4294901760
    %4230 = vmatpush1.msra.mxu0 %v4229
    %4231 = vmatprep.subr.mxu0 0.0
    %v4232 = vand.u32 %v1075, 4294901760
    %4233 = vmatpush1.msra.mxu0 %v4232
    %4234 = vmatprep.subr.mxu0 0.0
    %v4235 = vand.u32 %v1076, 4294901760
    %4236 = vmatpush1.msra.mxu0 %v4235
    %4237 = vmatprep.subr.mxu0 0.0
    %v4238 = vand.u32 %v1077, 4294901760
    %4239 = vmatpush1.msra.mxu0 %v4238
    %4240 = vmatprep.subr.mxu0 0.0
    %v4241 = vand.u32 %v1078, 4294901760
    %4242 = vmatpush1.msra.mxu0 %v4241
    %4243 = vmatprep.subr.mxu0 0.0
    %v4244 = vand.u32 %v1079, 4294901760
    %4245 = vmatpush1.msra.mxu0 %v4244
    %4246 = vmatprep.subr.mxu0 0.0
    %v4247 = vand.u32 %v1080, 4294901760
    %4248 = vmatpush1.msra.mxu0 %v4247
    %4249 = vmatprep.subr.mxu0 0.0
    %v4250 = vand.u32 %v1081, 4294901760
    %4251 = vmatpush1.msra.mxu0 %v4250
    %4252 = vmatprep.subr.mxu0 0.0
    %v4253 = vand.u32 %v1082, 4294901760
    %4254 = vmatpush1.msra.mxu0 %v4253
    %4255 = vmatprep.subr.mxu0 0.0
    %v4256 = vand.u32 %v1083, 4294901760
    %4257 = vmatpush1.msra.mxu0 %v4256
    %4258 = vmatprep.subr.mxu0 0.0
    %4259 = vmatpush1.msra.mxu0 0.0
    %4260 = vmatprep.subr.mxu0 0.0
    %4261 = vmatpush1.msra.mxu0 0.0
    %4262 = vmatprep.subr.mxu0 0.0
    %4263 = vmatpush1.msra.mxu0 0.0
    %4264 = vmatprep.subr.mxu0 0.0
    %4265 = vmatpush1.msra.mxu0 0.0
    %4266 = vmatprep.subr.mxu0 0.0
    %4267 = vmatpush1.msra.mxu0 0.0
    %4268 = vmatprep.subr.mxu0 0.0
    %4269 = vmatpush1.msra.mxu0 0.0
    %4270 = vmatprep.subr.mxu0 0.0
    %4271 = vmatpush1.msra.mxu0 0.0
    %4272 = vmatprep.subr.mxu0 0.0
    %4273 = vmatpush1.msra.mxu0 0.0
    %4274 = vmatprep.subr.mxu0 0.0
    %4275 = vmatpush1.msra.mxu0 0.0
    %4276 = vmatprep.subr.mxu0 0.0
    %4277 = vmatpush1.msra.mxu0 0.0
    %4278 = vmatprep.subr.mxu0 0.0
    %4279 = vmatpush1.msra.mxu0 0.0
    %4280 = vmatprep.subr.mxu0 0.0
    %4281 = vmatpush1.msra.mxu0 0.0
    %4282 = vmatprep.subr.mxu0 0.0
    %4283 = vmatpush1.msra.mxu0 0.0
    %4284 = vmatprep.subr.mxu0 0.0
    %4285 = vmatpush1.msra.mxu0 0.0
    %4286 = vmatprep.subr.mxu0 0.0
    %4287 = vmatpush1.msra.mxu0 0.0
    %4288 = vmatprep.subr.mxu0 0.0
    %4289 = vmatpush1.msra.mxu0 0.0
    %4290 = vmatprep.mubr.f32.mxu0 0.0
    %v4291 = vand.u32 %v3652, 4294901760
    %4292 = vmatmul.mubr.f32.gmra.mrb[0].mxu0 %v4291
    %v4293 = vpop.f32.mrb[0].mxu0
    %v4294 = vadd.f32 %v4207, %v4293
    %v4295 = vpop.f32.mrb[0].mxu0
    %4296 = vdwg.mxu0
    %v4297 = vadd.f32 %v3655, %v4294
    %v4298 = vtanh.pop %v4297
    %4299 = vst [vmem:[%s3654] sm:$0xff] %v4298
    %s4300 = scalar_lea.vmem [#allocation2], 40
    %v4301 = vld [vmem:[%s4300] sm:$0xff]
    %4302 = vmatprep.subr.mxu0 0.0
    %v4303 = vand.u32 %v1068, 4294901760
    %4304 = vmatpush1.msra.mxu0 %v4303
    %4305 = vmatprep.subr.mxu0 0.0
    %v4306 = vand.u32 %v1069, 4294901760
    %4307 = vmatpush1.msra.mxu0 %v4306
    %4308 = vmatprep.subr.mxu0 0.0
    %v4309 = vand.u32 %v1070, 4294901760
    %4310 = vmatpush1.msra.mxu0 %v4309
    %4311 = vmatprep.subr.mxu0 0.0
    %v4312 = vand.u32 %v1071, 4294901760
    %4313 = vmatpush1.msra.mxu0 %v4312
    %4314 = vmatprep.subr.mxu0 0.0
    %v4315 = vand.u32 %v1072, 4294901760
    %4316 = vmatpush1.msra.mxu0 %v4315
    %4317 = vmatprep.subr.mxu0 0.0
    %v4318 = vand.u32 %v1073, 4294901760
    %4319 = vmatpush1.msra.mxu0 %v4318
    %4320 = vmatprep.subr.mxu0 0.0
    %v4321 = vand.u32 %v1074, 4294901760
    %4322 = vmatpush1.msra.mxu0 %v4321
    %4323 = vmatprep.subr.mxu0 0.0
    %v4324 = vand.u32 %v1075, 4294901760
    %4325 = vmatpush1.msra.mxu0 %v4324
    %4326 = vmatprep.subr.mxu0 0.0
    %v4327 = vand.u32 %v1076, 4294901760
    %4328 = vmatpush1.msra.mxu0 %v4327
    %4329 = vmatprep.subr.mxu0 0.0
    %v4330 = vand.u32 %v1077, 4294901760
    %4331 = vmatpush1.msra.mxu0 %v4330
    %4332 = vmatprep.subr.mxu0 0.0
    %v4333 = vand.u32 %v1078, 4294901760
    %4334 = vmatpush1.msra.mxu0 %v4333
    %4335 = vmatprep.subr.mxu0 0.0
    %v4336 = vand.u32 %v1079, 4294901760
    %4337 = vmatpush1.msra.mxu0 %v4336
    %4338 = vmatprep.subr.mxu0 0.0
    %v4339 = vand.u32 %v1080, 4294901760
    %4340 = vmatpush1.msra.mxu0 %v4339
    %4341 = vmatprep.subr.mxu0 0.0
    %v4342 = vand.u32 %v1081, 4294901760
    %4343 = vmatpush1.msra.mxu0 %v4342
    %4344 = vmatprep.subr.mxu0 0.0
    %v4345 = vand.u32 %v1082, 4294901760
    %4346 = vmatpush1.msra.mxu0 %v4345
    %4347 = vmatprep.subr.mxu0 0.0
    %v4348 = vand.u32 %v1083, 4294901760
    %4349 = vmatpush1.msra.mxu0 %v4348
    %4350 = vmatprep.subr.mxu0 0.0
    %4351 = vmatpush1.msra.mxu0 0.0
    %4352 = vmatprep.subr.mxu0 0.0
    %4353 = vmatpush1.msra.mxu0 0.0
    %4354 = vmatprep.subr.mxu0 0.0
    %4355 = vmatpush1.msra.mxu0 0.0
    %4356 = vmatprep.subr.mxu0 0.0
    %4357 = vmatpush1.msra.mxu0 0.0
    %4358 = vmatprep.subr.mxu0 0.0
    %4359 = vmatpush1.msra.mxu0 0.0
    %4360 = vmatprep.subr.mxu0 0.0
    %4361 = vmatpush1.msra.mxu0 0.0
    %4362 = vmatprep.subr.mxu0 0.0
    %4363 = vmatpush1.msra.mxu0 0.0
    %4364 = vmatprep.subr.mxu0 0.0
    %4365 = vmatpush1.msra.mxu0 0.0
    %4366 = vmatprep.subr.mxu0 0.0
    %4367 = vmatpush1.msra.mxu0 0.0
    %4368 = vmatprep.subr.mxu0 0.0
    %4369 = vmatpush1.msra.mxu0 0.0
    %4370 = vmatprep.subr.mxu0 0.0
    %4371 = vmatpush1.msra.mxu0 0.0
    %4372 = vmatprep.subr.mxu0 0.0
    %4373 = vmatpush1.msra.mxu0 0.0
    %4374 = vmatprep.subr.mxu0 0.0
    %4375 = vmatpush1.msra.mxu0 0.0
    %4376 = vmatprep.subr.mxu0 0.0
    %4377 = vmatpush1.msra.mxu0 0.0
    %4378 = vmatprep.subr.mxu0 0.0
    %4379 = vmatpush1.msra.mxu0 0.0
    %4380 = vmatprep.subr.mxu0 0.0
    %4381 = vmatpush1.msra.mxu0 0.0
    %4382 = vmatprep.mubr.f32.mxu0 0.0
    %v4383 = vand.u32 %v4298, 4294901760
    %v4384 = vsub.f32 %v4298, %v4383
    %v4385 = vand.u32 %v4384, 4294901760
    %v4386 = vsub.f32 %v4384, %v4385
    %v4387 = vand.u32 %v4386, 4294901760
    %4388 = vmatmul.mubr.f32.gmra.mrb[0].mxu0 %v4387
    %v4389 = vpop.f32.mrb[0].mxu0
    %v4390 = vadd.f32 0.0, %v4389
    %v4391 = vpop.f32.mrb[0].mxu0
    %4392 = vdwg.mxu0
    %4393 = vmatprep.subr.mxu0 0.0
    %v4394 = vand.u32 %v1068, 4294901760
    %v4395 = vsub.f32 %v1068, %v4394
    %v4396 = vand.u32 %v4395, 4294901760
    %v4397 = vsub.f32 %v4395, %v4396
    %v4398 = vand.u32 %v4397, 4294901760
    %4399 = vmatpush1.msra.mxu0 %v4398
    %4400 = vmatprep.subr.mxu0 0.0
    %v4401 = vand.u32 %v1069, 4294901760
    %v4402 = vsub.f32 %v1069, %v4401
    %v4403 = vand.u32 %v4402, 4294901760
    %v4404 = vsub.f32 %v4402, %v4403
    %v4405 = vand.u32 %v4404, 4294901760
    %4406 = vmatpush1.msra.mxu0 %v4405
    %4407 = vmatprep.subr.mxu0 0.0
    %v4408 = vand.u32 %v1070, 4294901760
    %v4409 = vsub.f32 %v1070, %v4408
    %v4410 = vand.u32 %v4409, 4294901760
    %v4411 = vsub.f32 %v4409, %v4410
    %v4412 = vand.u32 %v4411, 4294901760
    %4413 = vmatpush1.msra.mxu0 %v4412
    %4414 = vmatprep.subr.mxu0 0.0
    %v4415 = vand.u32 %v1071, 4294901760
    %v4416 = vsub.f32 %v1071, %v4415
    %v4417 = vand.u32 %v4416, 4294901760
    %v4418 = vsub.f32 %v4416, %v4417
    %v4419 = vand.u32 %v4418, 4294901760
    %4420 = vmatpush1.msra.mxu0 %v4419
    %4421 = vmatprep.subr.mxu0 0.0
    %v4422 = vand.u32 %v1072, 4294901760
    %v4423 = vsub.f32 %v1072, %v4422
    %v4424 = vand.u32 %v4423, 4294901760
    %v4425 = vsub.f32 %v4423, %v4424
    %v4426 = vand.u32 %v4425, 4294901760
    %4427 = vmatpush1.msra.mxu0 %v4426
    %4428 = vmatprep.subr.mxu0 0.0
    %v4429 = vand.u32 %v1073, 4294901760
    %v4430 = vsub.f32 %v1073, %v4429
    %v4431 = vand.u32 %v4430, 4294901760
    %v4432 = vsub.f32 %v4430, %v4431
    %v4433 = vand.u32 %v4432, 4294901760
    %4434 = vmatpush1.msra.mxu0 %v4433
    %4435 = vmatprep.subr.mxu0 0.0
    %v4436 = vand.u32 %v1074, 4294901760
    %v4437 = vsub.f32 %v1074, %v4436
    %v4438 = vand.u32 %v4437, 4294901760
    %v4439 = vsub.f32 %v4437, %v4438
    %v4440 = vand.u32 %v4439, 4294901760
    %4441 = vmatpush1.msra.mxu0 %v4440
    %4442 = vmatprep.subr.mxu0 0.0
    %v4443 = vand.u32 %v1075, 4294901760
    %v4444 = vsub.f32 %v1075, %v4443
    %v4445 = vand.u32 %v4444, 4294901760
    %v4446 = vsub.f32 %v4444, %v4445
    %v4447 = vand.u32 %v4446, 4294901760
    %4448 = vmatpush1.msra.mxu0 %v4447
    %4449 = vmatprep.subr.mxu0 0.0
    %v4450 = vand.u32 %v1076, 4294901760
    %v4451 = vsub.f32 %v1076, %v4450
    %v4452 = vand.u32 %v4451, 4294901760
    %v4453 = vsub.f32 %v4451, %v4452
    %v4454 = vand.u32 %v4453, 4294901760
    %4455 = vmatpush1.msra.mxu0 %v4454
    %4456 = vmatprep.subr.mxu0 0.0
    %v4457 = vand.u32 %v1077, 4294901760
    %v4458 = vsub.f32 %v1077, %v4457
    %v4459 = vand.u32 %v4458, 4294901760
    %v4460 = vsub.f32 %v4458, %v4459
    %v4461 = vand.u32 %v4460, 4294901760
    %4462 = vmatpush1.msra.mxu0 %v4461
    %4463 = vmatprep.subr.mxu0 0.0
    %v4464 = vand.u32 %v1078, 4294901760
    %v4465 = vsub.f32 %v1078, %v4464
    %v4466 = vand.u32 %v4465, 4294901760
    %v4467 = vsub.f32 %v4465, %v4466
    %v4468 = vand.u32 %v4467, 4294901760
    %4469 = vmatpush1.msra.mxu0 %v4468
    %4470 = vmatprep.subr.mxu0 0.0
    %v4471 = vand.u32 %v1079, 4294901760
    %v4472 = vsub.f32 %v1079, %v4471
    %v4473 = vand.u32 %v4472, 4294901760
    %v4474 = vsub.f32 %v4472, %v4473
    %v4475 = vand.u32 %v4474, 4294901760
    %4476 = vmatpush1.msra.mxu0 %v4475
    %4477 = vmatprep.subr.mxu0 0.0
    %v4478 = vand.u32 %v1080, 4294901760
    %v4479 = vsub.f32 %v1080, %v4478
    %v4480 = vand.u32 %v4479, 4294901760
    %v4481 = vsub.f32 %v4479, %v4480
    %v4482 = vand.u32 %v4481, 4294901760
    %4483 = vmatpush1.msra.mxu0 %v4482
    %4484 = vmatprep.subr.mxu0 0.0
    %v4485 = vand.u32 %v1081, 4294901760
    %v4486 = vsub.f32 %v1081, %v4485
    %v4487 = vand.u32 %v4486, 4294901760
    %v4488 = vsub.f32 %v4486, %v4487
    %v4489 = vand.u32 %v4488, 4294901760
    %4490 = vmatpush1.msra.mxu0 %v4489
    %4491 = vmatprep.subr.mxu0 0.0
    %v4492 = vand.u32 %v1082, 4294901760
    %v4493 = vsub.f32 %v1082, %v4492
    %v4494 = vand.u32 %v4493, 4294901760
    %v4495 = vsub.f32 %v4493, %v4494
    %v4496 = vand.u32 %v4495, 4294901760
    %4497 = vmatpush1.msra.mxu0 %v4496
    %4498 = vmatprep.subr.mxu0 0.0
    %v4499 = vand.u32 %v1083, 4294901760
    %v4500 = vsub.f32 %v1083, %v4499
    %v4501 = vand.u32 %v4500, 4294901760
    %v4502 = vsub.f32 %v4500, %v4501
    %v4503 = vand.u32 %v4502, 4294901760
    %4504 = vmatpush1.msra.mxu0 %v4503
    %4505 = vmatprep.subr.mxu0 0.0
    %4506 = vmatpush1.msra.mxu0 0.0
    %4507 = vmatprep.subr.mxu0 0.0
    %4508 = vmatpush1.msra.mxu0 0.0
    %4509 = vmatprep.subr.mxu0 0.0
    %4510 = vmatpush1.msra.mxu0 0.0
    %4511 = vmatprep.subr.mxu0 0.0
    %4512 = vmatpush1.msra.mxu0 0.0
    %4513 = vmatprep.subr.mxu0 0.0
    %4514 = vmatpush1.msra.mxu0 0.0
    %4515 = vmatprep.subr.mxu0 0.0
    %4516 = vmatpush1.msra.mxu0 0.0
    %4517 = vmatprep.subr.mxu0 0.0
    %4518 = vmatpush1.msra.mxu0 0.0
    %4519 = vmatprep.subr.mxu0 0.0
    %4520 = vmatpush1.msra.mxu0 0.0
    %4521 = vmatprep.subr.mxu0 0.0
    %4522 = vmatpush1.msra.mxu0 0.0
    %4523 = vmatprep.subr.mxu0 0.0
    %4524 = vmatpush1.msra.mxu0 0.0
    %4525 = vmatprep.subr.mxu0 0.0
    %4526 = vmatpush1.msra.mxu0 0.0
    %4527 = vmatprep.subr.mxu0 0.0
    %4528 = vmatpush1.msra.mxu0 0.0
    %4529 = vmatprep.subr.mxu0 0.0
    %4530 = vmatpush1.msra.mxu0 0.0
    %4531 = vmatprep.subr.mxu0 0.0
    %4532 = vmatpush1.msra.mxu0 0.0
    %4533 = vmatprep.subr.mxu0 0.0
    %4534 = vmatpush1.msra.mxu0 0.0
    %4535 = vmatprep.subr.mxu0 0.0
    %4536 = vmatpush1.msra.mxu0 0.0
    %4537 = vmatprep.mubr.f32.mxu0 0.0
    %v4538 = vand.u32 %v4298, 4294901760
    %4539 = vmatmul.mubr.f32.gmra.mrb[0].mxu0 %v4538
    %v4540 = vpop.f32.mrb[0].mxu0
    %v4541 = vadd.f32 %v4390, %v4540
    %v4542 = vpop.f32.mrb[0].mxu0
    %4543 = vdwg.mxu0
    %4544 = vmatprep.subr.mxu0 0.0
    %v4545 = vand.u32 %v1068, 4294901760
    %v4546 = vsub.f32 %v1068, %v4545
    %4547 = vmatpush1.msra.mxu0 %v4546
    %4548 = vmatprep.subr.mxu0 0.0
    %v4549 = vand.u32 %v1069, 4294901760
    %v4550 = vsub.f32 %v1069, %v4549
    %4551 = vmatpush1.msra.mxu0 %v4550
    %4552 = vmatprep.subr.mxu0 0.0
    %v4553 = vand.u32 %v1070, 4294901760
    %v4554 = vsub.f32 %v1070, %v4553
    %4555 = vmatpush1.msra.mxu0 %v4554
    %4556 = vmatprep.subr.mxu0 0.0
    %v4557 = vand.u32 %v1071, 4294901760
    %v4558 = vsub.f32 %v1071, %v4557
    %4559 = vmatpush1.msra.mxu0 %v4558
    %4560 = vmatprep.subr.mxu0 0.0
    %v4561 = vand.u32 %v1072, 4294901760
    %v4562 = vsub.f32 %v1072, %v4561
    %4563 = vmatpush1.msra.mxu0 %v4562
    %4564 = vmatprep.subr.mxu0 0.0
    %v4565 = vand.u32 %v1073, 4294901760
    %v4566 = vsub.f32 %v1073, %v4565
    %4567 = vmatpush1.msra.mxu0 %v4566
    %4568 = vmatprep.subr.mxu0 0.0
    %v4569 = vand.u32 %v1074, 4294901760
    %v4570 = vsub.f32 %v1074, %v4569
    %4571 = vmatpush1.msra.mxu0 %v4570
    %4572 = vmatprep.subr.mxu0 0.0
    %v4573 = vand.u32 %v1075, 4294901760
    %v4574 = vsub.f32 %v1075, %v4573
    %4575 = vmatpush1.msra.mxu0 %v4574
    %4576 = vmatprep.subr.mxu0 0.0
    %v4577 = vand.u32 %v1076, 4294901760
    %v4578 = vsub.f32 %v1076, %v4577
    %4579 = vmatpush1.msra.mxu0 %v4578
    %4580 = vmatprep.subr.mxu0 0.0
    %v4581 = vand.u32 %v1077, 4294901760
    %v4582 = vsub.f32 %v1077, %v4581
    %4583 = vmatpush1.msra.mxu0 %v4582
    %4584 = vmatprep.subr.mxu0 0.0
    %v4585 = vand.u32 %v1078, 4294901760
    %v4586 = vsub.f32 %v1078, %v4585
    %4587 = vmatpush1.msra.mxu0 %v4586
    %4588 = vmatprep.subr.mxu0 0.0
    %v4589 = vand.u32 %v1079, 4294901760
    %v4590 = vsub.f32 %v1079, %v4589
    %4591 = vmatpush1.msra.mxu0 %v4590
    %4592 = vmatprep.subr.mxu0 0.0
    %v4593 = vand.u32 %v1080, 4294901760
    %v4594 = vsub.f32 %v1080, %v4593
    %4595 = vmatpush1.msra.mxu0 %v4594
    %4596 = vmatprep.subr.mxu0 0.0
    %v4597 = vand.u32 %v1081, 4294901760
    %v4598 = vsub.f32 %v1081, %v4597
    %4599 = vmatpush1.msra.mxu0 %v4598
    %4600 = vmatprep.subr.mxu0 0.0
    %v4601 = vand.u32 %v1082, 4294901760
    %v4602 = vsub.f32 %v1082, %v4601
    %4603 = vmatpush1.msra.mxu0 %v4602
    %4604 = vmatprep.subr.mxu0 0.0
    %v4605 = vand.u32 %v1083, 4294901760
    %v4606 = vsub.f32 %v1083, %v4605
    %4607 = vmatpush1.msra.mxu0 %v4606
    %4608 = vmatprep.subr.mxu0 0.0
    %4609 = vmatpush1.msra.mxu0 0.0
    %4610 = vmatprep.subr.mxu0 0.0
    %4611 = vmatpush1.msra.mxu0 0.0
    %4612 = vmatprep.subr.mxu0 0.0
    %4613 = vmatpush1.msra.mxu0 0.0
    %4614 = vmatprep.subr.mxu0 0.0
    %4615 = vmatpush1.msra.mxu0 0.0
    %4616 = vmatprep.subr.mxu0 0.0
    %4617 = vmatpush1.msra.mxu0 0.0
    %4618 = vmatprep.subr.mxu0 0.0
    %4619 = vmatpush1.msra.mxu0 0.0
    %4620 = vmatprep.subr.mxu0 0.0
    %4621 = vmatpush1.msra.mxu0 0.0
    %4622 = vmatprep.subr.mxu0 0.0
    %4623 = vmatpush1.msra.mxu0 0.0
    %4624 = vmatprep.subr.mxu0 0.0
    %4625 = vmatpush1.msra.mxu0 0.0
    %4626 = vmatprep.subr.mxu0 0.0
    %4627 = vmatpush1.msra.mxu0 0.0
    %4628 = vmatprep.subr.mxu0 0.0
    %4629 = vmatpush1.msra.mxu0 0.0
    %4630 = vmatprep.subr.mxu0 0.0
    %4631 = vmatpush1.msra.mxu0 0.0
    %4632 = vmatprep.subr.mxu0 0.0
    %4633 = vmatpush1.msra.mxu0 0.0
    %4634 = vmatprep.subr.mxu0 0.0
    %4635 = vmatpush1.msra.mxu0 0.0
    %4636 = vmatprep.subr.mxu0 0.0
    %4637 = vmatpush1.msra.mxu0 0.0
    %4638 = vmatprep.subr.mxu0 0.0
    %4639 = vmatpush1.msra.mxu0 0.0
    %4640 = vmatprep.mubr.f32.mxu0 0.0
    %v4641 = vand.u32 %v4298, 4294901760
    %v4642 = vsub.f32 %v4298, %v4641
    %4643 = vmatmul.mubr.f32.gmra.mrb[0].mxu0 %v4642
    %v4644 = vpop.f32.mrb[0].mxu0
    %v4645 = vadd.f32 %v4541, %v4644
    %v4646 = vpop.f32.mrb[0].mxu0
    %4647 = vdwg.mxu0
    %4648 = vmatprep.subr.mxu0 0.0
    %v4649 = vand.u32 %v1068, 4294901760
    %4650 = vmatpush1.msra.mxu0 %v4649
    %4651 = vmatprep.subr.mxu0 0.0
    %v4652 = vand.u32 %v1069, 4294901760
    %4653 = vmatpush1.msra.mxu0 %v4652
    %4654 = vmatprep.subr.mxu0 0.0
    %v4655 = vand.u32 %v1070, 4294901760
    %4656 = vmatpush1.msra.mxu0 %v4655
    %4657 = vmatprep.subr.mxu0 0.0
    %v4658 = vand.u32 %v1071, 4294901760
    %4659 = vmatpush1.msra.mxu0 %v4658
    %4660 = vmatprep.subr.mxu0 0.0
    %v4661 = vand.u32 %v1072, 4294901760
    %4662 = vmatpush1.msra.mxu0 %v4661
    %4663 = vmatprep.subr.mxu0 0.0
    %v4664 = vand.u32 %v1073, 4294901760
    %4665 = vmatpush1.msra.mxu0 %v4664
    %4666 = vmatprep.subr.mxu0 0.0
    %v4667 = vand.u32 %v1074, 4294901760
    %4668 = vmatpush1.msra.mxu0 %v4667
    %4669 = vmatprep.subr.mxu0 0.0
    %v4670 = vand.u32 %v1075, 4294901760
    %4671 = vmatpush1.msra.mxu0 %v4670
    %4672 = vmatprep.subr.mxu0 0.0
    %v4673 = vand.u32 %v1076, 4294901760
    %4674 = vmatpush1.msra.mxu0 %v4673
    %4675 = vmatprep.subr.mxu0 0.0
    %v4676 = vand.u32 %v1077, 4294901760
    %4677 = vmatpush1.msra.mxu0 %v4676
    %4678 = vmatprep.subr.mxu0 0.0
    %v4679 = vand.u32 %v1078, 4294901760
    %4680 = vmatpush1.msra.mxu0 %v4679
    %4681 = vmatprep.subr.mxu0 0.0
    %v4682 = vand.u32 %v1079, 4294901760
    %4683 = vmatpush1.msra.mxu0 %v4682
    %4684 = vmatprep.subr.mxu0 0.0
    %v4685 = vand.u32 %v1080, 4294901760
    %4686 = vmatpush1.msra.mxu0 %v4685
    %4687 = vmatprep.subr.mxu0 0.0
    %v4688 = vand.u32 %v1081, 4294901760
    %4689 = vmatpush1.msra.mxu0 %v4688
    %4690 = vmatprep.subr.mxu0 0.0
    %v4691 = vand.u32 %v1082, 4294901760
    %4692 = vmatpush1.msra.mxu0 %v4691
    %4693 = vmatprep.subr.mxu0 0.0
    %v4694 = vand.u32 %v1083, 4294901760
    %4695 = vmatpush1.msra.mxu0 %v4694
    %4696 = vmatprep.subr.mxu0 0.0
    %4697 = vmatpush1.msra.mxu0 0.0
    %4698 = vmatprep.subr.mxu0 0.0
    %4699 = vmatpush1.msra.mxu0 0.0
    %4700 = vmatprep.subr.mxu0 0.0
    %4701 = vmatpush1.msra.mxu0 0.0
    %4702 = vmatprep.subr.mxu0 0.0
    %4703 = vmatpush1.msra.mxu0 0.0
    %4704 = vmatprep.subr.mxu0 0.0
    %4705 = vmatpush1.msra.mxu0 0.0
    %4706 = vmatprep.subr.mxu0 0.0
    %4707 = vmatpush1.msra.mxu0 0.0
    %4708 = vmatprep.subr.mxu0 0.0
    %4709 = vmatpush1.msra.mxu0 0.0
    %4710 = vmatprep.subr.mxu0 0.0
    %4711 = vmatpush1.msra.mxu0 0.0
    %4712 = vmatprep.subr.mxu0 0.0
    %4713 = vmatpush1.msra.mxu0 0.0
    %4714 = vmatprep.subr.mxu0 0.0
    %4715 = vmatpush1.msra.mxu0 0.0
    %4716 = vmatprep.subr.mxu0 0.0
    %4717 = vmatpush1.msra.mxu0 0.0
    %4718 = vmatprep.subr.mxu0 0.0
    %4719 = vmatpush1.msra.mxu0 0.0
    %4720 = vmatprep.subr.mxu0 0.0
    %4721 = vmatpush1.msra.mxu0 0.0
    %4722 = vmatprep.subr.mxu0 0.0
    %4723 = vmatpush1.msra.mxu0 0.0
    %4724 = vmatprep.subr.mxu0 0.0
    %4725 = vmatpush1.msra.mxu0 0.0
    %4726 = vmatprep.subr.mxu0 0.0
    %4727 = vmatpush1.msra.mxu0 0.0
    %4728 = vmatprep.mubr.f32.mxu0 0.0
    %v4729 = vand.u32 %v4298, 4294901760
    %v4730 = vsub.f32 %v4298, %v4729
    %v4731 = vand.u32 %v4730, 4294901760
    %4732 = vmatmul.mubr.f32.gmra.mrb[0].mxu0 %v4731
    %v4733 = vpop.f32.mrb[0].mxu0
    %v4734 = vadd.f32 %v4645, %v4733
    %v4735 = vpop.f32.mrb[0].mxu0
    %4736 = vdwg.mxu0
    %4737 = vmatprep.subr.mxu0 0.0
    %v4738 = vand.u32 %v1068, 4294901760
    %v4739 = vsub.f32 %v1068, %v4738
    %v4740 = vand.u32 %v4739, 4294901760
    %4741 = vmatpush1.msra.mxu0 %v4740
    %4742 = vmatprep.subr.mxu0 0.0
    %v4743 = vand.u32 %v1069, 4294901760
    %v4744 = vsub.f32 %v1069, %v4743
    %v4745 = vand.u32 %v4744, 4294901760
    %4746 = vmatpush1.msra.mxu0 %v4745
    %4747 = vmatprep.subr.mxu0 0.0
    %v4748 = vand.u32 %v1070, 4294901760
    %v4749 = vsub.f32 %v1070, %v4748
    %v4750 = vand.u32 %v4749, 4294901760
    %4751 = vmatpush1.msra.mxu0 %v4750
    %4752 = vmatprep.subr.mxu0 0.0
    %v4753 = vand.u32 %v1071, 4294901760
    %v4754 = vsub.f32 %v1071, %v4753
    %v4755 = vand.u32 %v4754, 4294901760
    %4756 = vmatpush1.msra.mxu0 %v4755
    %4757 = vmatprep.subr.mxu0 0.0
    %v4758 = vand.u32 %v1072, 4294901760
    %v4759 = vsub.f32 %v1072, %v4758
    %v4760 = vand.u32 %v4759, 4294901760
    %4761 = vmatpush1.msra.mxu0 %v4760
    %4762 = vmatprep.subr.mxu0 0.0
    %v4763 = vand.u32 %v1073, 4294901760
    %v4764 = vsub.f32 %v1073, %v4763
    %v4765 = vand.u32 %v4764, 4294901760
    %4766 = vmatpush1.msra.mxu0 %v4765
    %4767 = vmatprep.subr.mxu0 0.0
    %v4768 = vand.u32 %v1074, 4294901760
    %v4769 = vsub.f32 %v1074, %v4768
    %v4770 = vand.u32 %v4769, 4294901760
    %4771 = vmatpush1.msra.mxu0 %v4770
    %4772 = vmatprep.subr.mxu0 0.0
    %v4773 = vand.u32 %v1075, 4294901760
    %v4774 = vsub.f32 %v1075, %v4773
    %v4775 = vand.u32 %v4774, 4294901760
    %4776 = vmatpush1.msra.mxu0 %v4775
    %4777 = vmatprep.subr.mxu0 0.0
    %v4778 = vand.u32 %v1076, 4294901760
    %v4779 = vsub.f32 %v1076, %v4778
    %v4780 = vand.u32 %v4779, 4294901760
    %4781 = vmatpush1.msra.mxu0 %v4780
    %4782 = vmatprep.subr.mxu0 0.0
    %v4783 = vand.u32 %v1077, 4294901760
    %v4784 = vsub.f32 %v1077, %v4783
    %v4785 = vand.u32 %v4784, 4294901760
    %4786 = vmatpush1.msra.mxu0 %v4785
    %4787 = vmatprep.subr.mxu0 0.0
    %v4788 = vand.u32 %v1078, 4294901760
    %v4789 = vsub.f32 %v1078, %v4788
    %v4790 = vand.u32 %v4789, 4294901760
    %4791 = vmatpush1.msra.mxu0 %v4790
    %4792 = vmatprep.subr.mxu0 0.0
    %v4793 = vand.u32 %v1079, 4294901760
    %v4794 = vsub.f32 %v1079, %v4793
    %v4795 = vand.u32 %v4794, 4294901760
    %4796 = vmatpush1.msra.mxu0 %v4795
    %4797 = vmatprep.subr.mxu0 0.0
    %v4798 = vand.u32 %v1080, 4294901760
    %v4799 = vsub.f32 %v1080, %v4798
    %v4800 = vand.u32 %v4799, 4294901760
    %4801 = vmatpush1.msra.mxu0 %v4800
    %4802 = vmatprep.subr.mxu0 0.0
    %v4803 = vand.u32 %v1081, 4294901760
    %v4804 = vsub.f32 %v1081, %v4803
    %v4805 = vand.u32 %v4804, 4294901760
    %4806 = vmatpush1.msra.mxu0 %v4805
    %4807 = vmatprep.subr.mxu0 0.0
    %v4808 = vand.u32 %v1082, 4294901760
    %v4809 = vsub.f32 %v1082, %v4808
    %v4810 = vand.u32 %v4809, 4294901760
    %4811 = vmatpush1.msra.mxu0 %v4810
    %4812 = vmatprep.subr.mxu0 0.0
    %v4813 = vand.u32 %v1083, 4294901760
    %v4814 = vsub.f32 %v1083, %v4813
    %v4815 = vand.u32 %v4814, 4294901760
    %4816 = vmatpush1.msra.mxu0 %v4815
    %4817 = vmatprep.subr.mxu0 0.0
    %4818 = vmatpush1.msra.mxu0 0.0
    %4819 = vmatprep.subr.mxu0 0.0
    %4820 = vmatpush1.msra.mxu0 0.0
    %4821 = vmatprep.subr.mxu0 0.0
    %4822 = vmatpush1.msra.mxu0 0.0
    %4823 = vmatprep.subr.mxu0 0.0
    %4824 = vmatpush1.msra.mxu0 0.0
    %4825 = vmatprep.subr.mxu0 0.0
    %4826 = vmatpush1.msra.mxu0 0.0
    %4827 = vmatprep.subr.mxu0 0.0
    %4828 = vmatpush1.msra.mxu0 0.0
    %4829 = vmatprep.subr.mxu0 0.0
    %4830 = vmatpush1.msra.mxu0 0.0
    %4831 = vmatprep.subr.mxu0 0.0
    %4832 = vmatpush1.msra.mxu0 0.0
    %4833 = vmatprep.subr.mxu0 0.0
    %4834 = vmatpush1.msra.mxu0 0.0
    %4835 = vmatprep.subr.mxu0 0.0
    %4836 = vmatpush1.msra.mxu0 0.0
    %4837 = vmatprep.subr.mxu0 0.0
    %4838 = vmatpush1.msra.mxu0 0.0
    %4839 = vmatprep.subr.mxu0 0.0
    %4840 = vmatpush1.msra.mxu0 0.0
    %4841 = vmatprep.subr.mxu0 0.0
    %4842 = vmatpush1.msra.mxu0 0.0
    %4843 = vmatprep.subr.mxu0 0.0
    %4844 = vmatpush1.msra.mxu0 0.0
    %4845 = vmatprep.subr.mxu0 0.0
    %4846 = vmatpush1.msra.mxu0 0.0
    %4847 = vmatprep.subr.mxu0 0.0
    %4848 = vmatpush1.msra.mxu0 0.0
    %4849 = vmatprep.mubr.f32.mxu0 0.0
    %v4850 = vand.u32 %v4298, 4294901760
    %4851 = vmatmul.mubr.f32.gmra.mrb[0].mxu0 %v4850
    %v4852 = vpop.f32.mrb[0].mxu0
    %v4853 = vadd.f32 %v4734, %v4852
    %v4854 = vpop.f32.mrb[0].mxu0
    %4855 = vdwg.mxu0
    %4856 = vmatprep.subr.mxu0 0.0
    %v4857 = vand.u32 %v1068, 4294901760
    %4858 = vmatpush1.msra.mxu0 %v4857
    %4859 = vmatprep.subr.mxu0 0.0
    %v4860 = vand.u32 %v1069, 4294901760
    %4861 = vmatpush1.msra.mxu0 %v4860
    %4862 = vmatprep.subr.mxu0 0.0
    %v4863 = vand.u32 %v1070, 4294901760
    %4864 = vmatpush1.msra.mxu0 %v4863
    %4865 = vmatprep.subr.mxu0 0.0
    %v4866 = vand.u32 %v1071, 4294901760
    %4867 = vmatpush1.msra.mxu0 %v4866
    %4868 = vmatprep.subr.mxu0 0.0
    %v4869 = vand.u32 %v1072, 4294901760
    %4870 = vmatpush1.msra.mxu0 %v4869
    %4871 = vmatprep.subr.mxu0 0.0
    %v4872 = vand.u32 %v1073, 4294901760
    %4873 = vmatpush1.msra.mxu0 %v4872
    %4874 = vmatprep.subr.mxu0 0.0
    %v4875 = vand.u32 %v1074, 4294901760
    %4876 = vmatpush1.msra.mxu0 %v4875
    %4877 = vmatprep.subr.mxu0 0.0
    %v4878 = vand.u32 %v1075, 4294901760
    %4879 = vmatpush1.msra.mxu0 %v4878
    %4880 = vmatprep.subr.mxu0 0.0
    %v4881 = vand.u32 %v1076, 4294901760
    %4882 = vmatpush1.msra.mxu0 %v4881
    %4883 = vmatprep.subr.mxu0 0.0
    %v4884 = vand.u32 %v1077, 4294901760
    %4885 = vmatpush1.msra.mxu0 %v4884
    %4886 = vmatprep.subr.mxu0 0.0
    %v4887 = vand.u32 %v1078, 4294901760
    %4888 = vmatpush1.msra.mxu0 %v4887
    %4889 = vmatprep.subr.mxu0 0.0
    %v4890 = vand.u32 %v1079, 4294901760
    %4891 = vmatpush1.msra.mxu0 %v4890
    %4892 = vmatprep.subr.mxu0 0.0
    %v4893 = vand.u32 %v1080, 4294901760
    %4894 = vmatpush1.msra.mxu0 %v4893
    %4895 = vmatprep.subr.mxu0 0.0
    %v4896 = vand.u32 %v1081, 4294901760
    %4897 = vmatpush1.msra.mxu0 %v4896
    %4898 = vmatprep.subr.mxu0 0.0
    %v4899 = vand.u32 %v1082, 4294901760
    %4900 = vmatpush1.msra.mxu0 %v4899
    %4901 = vmatprep.subr.mxu0 0.0
    %v4902 = vand.u32 %v1083, 4294901760
    %4903 = vmatpush1.msra.mxu0 %v4902
    %4904 = vmatprep.subr.mxu0 0.0
    %4905 = vmatpush1.msra.mxu0 0.0
    %4906 = vmatprep.subr.mxu0 0.0
    %4907 = vmatpush1.msra.mxu0 0.0
    %4908 = vmatprep.subr.mxu0 0.0
    %4909 = vmatpush1.msra.mxu0 0.0
    %4910 = vmatprep.subr.mxu0 0.0
    %4911 = vmatpush1.msra.mxu0 0.0
    %4912 = vmatprep.subr.mxu0 0.0
    %4913 = vmatpush1.msra.mxu0 0.0
    %4914 = vmatprep.subr.mxu0 0.0
    %4915 = vmatpush1.msra.mxu0 0.0
    %4916 = vmatprep.subr.mxu0 0.0
    %4917 = vmatpush1.msra.mxu0 0.0
    %4918 = vmatprep.subr.mxu0 0.0
    %4919 = vmatpush1.msra.mxu0 0.0
    %4920 = vmatprep.subr.mxu0 0.0
    %4921 = vmatpush1.msra.mxu0 0.0
    %4922 = vmatprep.subr.mxu0 0.0
    %4923 = vmatpush1.msra.mxu0 0.0
    %4924 = vmatprep.subr.mxu0 0.0
    %4925 = vmatpush1.msra.mxu0 0.0
    %4926 = vmatprep.subr.mxu0 0.0
    %4927 = vmatpush1.msra.mxu0 0.0
    %4928 = vmatprep.subr.mxu0 0.0
    %4929 = vmatpush1.msra.mxu0 0.0
    %4930 = vmatprep.subr.mxu0 0.0
    %4931 = vmatpush1.msra.mxu0 0.0
    %4932 = vmatprep.subr.mxu0 0.0
    %4933 = vmatpush1.msra.mxu0 0.0
    %4934 = vmatprep.subr.mxu0 0.0
    %4935 = vmatpush1.msra.mxu0 0.0
    %4936 = vmatprep.mubr.f32.mxu0 0.0
    %v4937 = vand.u32 %v4298, 4294901760
    %4938 = vmatmul.mubr.f32.gmra.mrb[0].mxu0 %v4937
    %v4939 = vpop.f32.mrb[0].mxu0
    %v4940 = vadd.f32 %v4853, %v4939
    %v4941 = vpop.f32.mrb[0].mxu0
    %4942 = vdwg.mxu0
    %v4943 = vadd.f32 %v4301, %v4940
    %v4944 = vtanh.pop %v4943
    %4945 = vst [vmem:[%s4300] sm:$0xff] %v4944
    %s4946 = scalar_lea.vmem [#allocation2], 48
    %v4947 = vld [vmem:[%s4946] sm:$0xff]
    %4948 = vmatprep.subr.mxu0 0.0
    %v4949 = vand.u32 %v1068, 4294901760
    %4950 = vmatpush1.msra.mxu0 %v4949
    %4951 = vmatprep.subr.mxu0 0.0
    %v4952 = vand.u32 %v1069, 4294901760
    %4953 = vmatpush1.msra.mxu0 %v4952
    %4954 = vmatprep.subr.mxu0 0.0
    %v4955 = vand.u32 %v1070, 4294901760
    %4956 = vmatpush1.msra.mxu0 %v4955
    %4957 = vmatprep.subr.mxu0 0.0
    %v4958 = vand.u32 %v1071, 4294901760
    %4959 = vmatpush1.msra.mxu0 %v4958
    %4960 = vmatprep.subr.mxu0 0.0
    %v4961 = vand.u32 %v1072, 4294901760
    %4962 = vmatpush1.msra.mxu0 %v4961
    %4963 = vmatprep.subr.mxu0 0.0
    %v4964 = vand.u32 %v1073, 4294901760
    %4965 = vmatpush1.msra.mxu0 %v4964
    %4966 = vmatprep.subr.mxu0 0.0
    %v4967 = vand.u32 %v1074, 4294901760
    %4968 = vmatpush1.msra.mxu0 %v4967
    %4969 = vmatprep.subr.mxu0 0.0
    %v4970 = vand.u32 %v1075, 4294901760
    %4971 = vmatpush1.msra.mxu0 %v4970
    %4972 = vmatprep.subr.mxu0 0.0
    %v4973 = vand.u32 %v1076, 4294901760
    %4974 = vmatpush1.msra.mxu0 %v4973
    %4975 = vmatprep.subr.mxu0 0.0
    %v4976 = vand.u32 %v1077, 4294901760
    %4977 = vmatpush1.msra.mxu0 %v4976
    %4978 = vmatprep.subr.mxu0 0.0
    %v4979 = vand.u32 %v1078, 4294901760
    %4980 = vmatpush1.msra.mxu0 %v4979
    %4981 = vmatprep.subr.mxu0 0.0
    %v4982 = vand.u32 %v1079, 4294901760
    %4983 = vmatpush1.msra.mxu0 %v4982
    %4984 = vmatprep.subr.mxu0 0.0
    %v4985 = vand.u32 %v1080, 4294901760
    %4986 = vmatpush1.msra.mxu0 %v4985
    %4987 = vmatprep.subr.mxu0 0.0
    %v4988 = vand.u32 %v1081, 4294901760
    %4989 = vmatpush1.msra.mxu0 %v4988
    %4990 = vmatprep.subr.mxu0 0.0
    %v4991 = vand.u32 %v1082, 4294901760
    %4992 = vmatpush1.msra.mxu0 %v4991
    %4993 = vmatprep.subr.mxu0 0.0
    %v4994 = vand.u32 %v1083, 4294901760
    %4995 = vmatpush1.msra.mxu0 %v4994
    %4996 = vmatprep.subr.mxu0 0.0
    %4997 = vmatpush1.msra.mxu0 0.0
    %4998 = vmatprep.subr.mxu0 0.0
    %4999 = vmatpush1.msra.mxu0 0.0
    %5000 = vmatprep.subr.mxu0 0.0
    %5001 = vmatpush1.msra.mxu0 0.0
    %5002 = vmatprep.subr.mxu0 0.0
    %5003 = vmatpush1.msra.mxu0 0.0
    %5004 = vmatprep.subr.mxu0 0.0
    %5005 = vmatpush1.msra.mxu0 0.0
    %5006 = vmatprep.subr.mxu0 0.0
    %5007 = vmatpush1.msra.mxu0 0.0
    %5008 = vmatprep.subr.mxu0 0.0
    %5009 = vmatpush1.msra.mxu0 0.0
    %5010 = vmatprep.subr.mxu0 0.0
    %5011 = vmatpush1.msra.mxu0 0.0
    %5012 = vmatprep.subr.mxu0 0.0
    %5013 = vmatpush1.msra.mxu0 0.0
    %5014 = vmatprep.subr.mxu0 0.0
    %5015 = vmatpush1.msra.mxu0 0.0
    %5016 = vmatprep.subr.mxu0 0.0
    %5017 = vmatpush1.msra.mxu0 0.0
    %5018 = vmatprep.subr.mxu0 0.0
    %5019 = vmatpush1.msra.mxu0 0.0
    %5020 = vmatprep.subr.mxu0 0.0
    %5021 = vmatpush1.msra.mxu0 0.0
    %5022 = vmatprep.subr.mxu0 0.0
    %5023 = vmatpush1.msra.mxu0 0.0
    %5024 = vmatprep.subr.mxu0 0.0
    %5025 = vmatpush1.msra.mxu0 0.0
    %5026 = vmatprep.subr.mxu0 0.0
    %5027 = vmatpush1.msra.mxu0 0.0
    %5028 = vmatprep.mubr.f32.mxu0 0.0
    %v5029 = vand.u32 %v4944, 4294901760
    %v5030 = vsub.f32 %v4944, %v5029
    %v5031 = vand.u32 %v5030, 4294901760
    %v5032 = vsub.f32 %v5030, %v5031
    %v5033 = vand.u32 %v5032, 4294901760
    %5034 = vmatmul.mubr.f32.gmra.mrb[0].mxu0 %v5033
    %v5035 = vpop.f32.mrb[0].mxu0
    %v5036 = vadd.f32 0.0, %v5035
    %v5037 = vpop.f32.mrb[0].mxu0
    %5038 = vdwg.mxu0
    %5039 = vmatprep.subr.mxu0 0.0
    %v5040 = vand.u32 %v1068, 4294901760
    %v5041 = vsub.f32 %v1068, %v5040
    %v5042 = vand.u32 %v5041, 4294901760
    %v5043 = vsub.f32 %v5041, %v5042
    %v5044 = vand.u32 %v5043, 4294901760
    %5045 = vmatpush1.msra.mxu0 %v5044
    %5046 = vmatprep.subr.mxu0 0.0
    %v5047 = vand.u32 %v1069, 4294901760
    %v5048 = vsub.f32 %v1069, %v5047
    %v5049 = vand.u32 %v5048, 4294901760
    %v5050 = vsub.f32 %v5048, %v5049
    %v5051 = vand.u32 %v5050, 4294901760
    %5052 = vmatpush1.msra.mxu0 %v5051
    %5053 = vmatprep.subr.mxu0 0.0
    %v5054 = vand.u32 %v1070, 4294901760
    %v5055 = vsub.f32 %v1070, %v5054
    %v5056 = vand.u32 %v5055, 4294901760
    %v5057 = vsub.f32 %v5055, %v5056
    %v5058 = vand.u32 %v5057, 4294901760
    %5059 = vmatpush1.msra.mxu0 %v5058
    %5060 = vmatprep.subr.mxu0 0.0
    %v5061 = vand.u32 %v1071, 4294901760
    %v5062 = vsub.f32 %v1071, %v5061
    %v5063 = vand.u32 %v5062, 4294901760
    %v5064 = vsub.f32 %v5062, %v5063
    %v5065 = vand.u32 %v5064, 4294901760
    %5066 = vmatpush1.msra.mxu0 %v5065
    %5067 = vmatprep.subr.mxu0 0.0
    %v5068 = vand.u32 %v1072, 4294901760
    %v5069 = vsub.f32 %v1072, %v5068
    %v5070 = vand.u32 %v5069, 4294901760
    %v5071 = vsub.f32 %v5069, %v5070
    %v5072 = vand.u32 %v5071, 4294901760
    %5073 = vmatpush1.msra.mxu0 %v5072
    %5074 = vmatprep.subr.mxu0 0.0
    %v5075 = vand.u32 %v1073, 4294901760
    %v5076 = vsub.f32 %v1073, %v5075
    %v5077 = vand.u32 %v5076, 4294901760
    %v5078 = vsub.f32 %v5076, %v5077
    %v5079 = vand.u32 %v5078, 4294901760
    %5080 = vmatpush1.msra.mxu0 %v5079
    %5081 = vmatprep.subr.mxu0 0.0
    %v5082 = vand.u32 %v1074, 4294901760
    %v5083 = vsub.f32 %v1074, %v5082
    %v5084 = vand.u32 %v5083, 4294901760
    %v5085 = vsub.f32 %v5083, %v5084
    %v5086 = vand.u32 %v5085, 4294901760
    %5087 = vmatpush1.msra.mxu0 %v5086
    %5088 = vmatprep.subr.mxu0 0.0
    %v5089 = vand.u32 %v1075, 4294901760
    %v5090 = vsub.f32 %v1075, %v5089
    %v5091 = vand.u32 %v5090, 4294901760
    %v5092 = vsub.f32 %v5090, %v5091
    %v5093 = vand.u32 %v5092, 4294901760
    %5094 = vmatpush1.msra.mxu0 %v5093
    %5095 = vmatprep.subr.mxu0 0.0
    %v5096 = vand.u32 %v1076, 4294901760
    %v5097 = vsub.f32 %v1076, %v5096
    %v5098 = vand.u32 %v5097, 4294901760
    %v5099 = vsub.f32 %v5097, %v5098
    %v5100 = vand.u32 %v5099, 4294901760
    %5101 = vmatpush1.msra.mxu0 %v5100
    %5102 = vmatprep.subr.mxu0 0.0
    %v5103 = vand.u32 %v1077, 4294901760
    %v5104 = vsub.f32 %v1077, %v5103
    %v5105 = vand.u32 %v5104, 4294901760
    %v5106 = vsub.f32 %v5104, %v5105
    %v5107 = vand.u32 %v5106, 4294901760
    %5108 = vmatpush1.msra.mxu0 %v5107
    %5109 = vmatprep.subr.mxu0 0.0
    %v5110 = vand.u32 %v1078, 4294901760
    %v5111 = vsub.f32 %v1078, %v5110
    %v5112 = vand.u32 %v5111, 4294901760
    %v5113 = vsub.f32 %v5111, %v5112
    %v5114 = vand.u32 %v5113, 4294901760
    %5115 = vmatpush1.msra.mxu0 %v5114
    %5116 = vmatprep.subr.mxu0 0.0
    %v5117 = vand.u32 %v1079, 4294901760
    %v5118 = vsub.f32 %v1079, %v5117
    %v5119 = vand.u32 %v5118, 4294901760
    %v5120 = vsub.f32 %v5118, %v5119
    %v5121 = vand.u32 %v5120, 4294901760
    %5122 = vmatpush1.msra.mxu0 %v5121
    %5123 = vmatprep.subr.mxu0 0.0
    %v5124 = vand.u32 %v1080, 4294901760
    %v5125 = vsub.f32 %v1080, %v5124
    %v5126 = vand.u32 %v5125, 4294901760
    %v5127 = vsub.f32 %v5125, %v5126
    %v5128 = vand.u32 %v5127, 4294901760
    %5129 = vmatpush1.msra.mxu0 %v5128
    %5130 = vmatprep.subr.mxu0 0.0
    %v5131 = vand.u32 %v1081, 4294901760
    %v5132 = vsub.f32 %v1081, %v5131
    %v5133 = vand.u32 %v5132, 4294901760
    %v5134 = vsub.f32 %v5132, %v5133
    %v5135 = vand.u32 %v5134, 4294901760
    %5136 = vmatpush1.msra.mxu0 %v5135
    %5137 = vmatprep.subr.mxu0 0.0
    %v5138 = vand.u32 %v1082, 4294901760
    %v5139 = vsub.f32 %v1082, %v5138
    %v5140 = vand.u32 %v5139, 4294901760
    %v5141 = vsub.f32 %v5139, %v5140
    %v5142 = vand.u32 %v5141, 4294901760
    %5143 = vmatpush1.msra.mxu0 %v5142
    %5144 = vmatprep.subr.mxu0 0.0
    %v5145 = vand.u32 %v1083, 4294901760
    %v5146 = vsub.f32 %v1083, %v5145
    %v5147 = vand.u32 %v5146, 4294901760
    %v5148 = vsub.f32 %v5146, %v5147
    %v5149 = vand.u32 %v5148, 4294901760
    %5150 = vmatpush1.msra.mxu0 %v5149
    %5151 = vmatprep.subr.mxu0 0.0
    %5152 = vmatpush1.msra.mxu0 0.0
    %5153 = vmatprep.subr.mxu0 0.0
    %5154 = vmatpush1.msra.mxu0 0.0
    %5155 = vmatprep.subr.mxu0 0.0
    %5156 = vmatpush1.msra.mxu0 0.0
    %5157 = vmatprep.subr.mxu0 0.0
    %5158 = vmatpush1.msra.mxu0 0.0
    %5159 = vmatprep.subr.mxu0 0.0
    %5160 = vmatpush1.msra.mxu0 0.0
    %5161 = vmatprep.subr.mxu0 0.0
    %5162 = vmatpush1.msra.mxu0 0.0
    %5163 = vmatprep.subr.mxu0 0.0
    %5164 = vmatpush1.msra.mxu0 0.0
    %5165 = vmatprep.subr.mxu0 0.0
    %5166 = vmatpush1.msra.mxu0 0.0
    %5167 = vmatprep.subr.mxu0 0.0
    %5168 = vmatpush1.msra.mxu0 0.0
    %5169 = vmatprep.subr.mxu0 0.0
    %5170 = vmatpush1.msra.mxu0 0.0
    %5171 = vmatprep.subr.mxu0 0.0
    %5172 = vmatpush1.msra.mxu0 0.0
    %5173 = vmatprep.subr.mxu0 0.0
    %5174 = vmatpush1.msra.mxu0 0.0
    %5175 = vmatprep.subr.mxu0 0.0
    %5176 = vmatpush1.msra.mxu0 0.0
    %5177 = vmatprep.subr.mxu0 0.0
    %5178 = vmatpush1.msra.mxu0 0.0
    %5179 = vmatprep.subr.mxu0 0.0
    %5180 = vmatpush1.msra.mxu0 0.0
    %5181 = vmatprep.subr.mxu0 0.0
    %5182 = vmatpush1.msra.mxu0 0.0
    %5183 = vmatprep.mubr.f32.mxu0 0.0
    %v5184 = vand.u32 %v4944, 4294901760
    %5185 = vmatmul.mubr.f32.gmra.mrb[0].mxu0 %v5184
    %v5186 = vpop.f32.mrb[0].mxu0
    %v5187 = vadd.f32 %v5036, %v5186
    %v5188 = vpop.f32.mrb[0].mxu0
    %5189 = vdwg.mxu0
    %5190 = vmatprep.subr.mxu0 0.0
    %v5191 = vand.u32 %v1068, 4294901760
    %v5192 = vsub.f32 %v1068, %v5191
    %5193 = vmatpush1.msra.mxu0 %v5192
    %5194 = vmatprep.subr.mxu0 0.0
    %v5195 = vand.u32 %v1069, 4294901760
    %v5196 = vsub.f32 %v1069, %v5195
    %5197 = vmatpush1.msra.mxu0 %v5196
    %5198 = vmatprep.subr.mxu0 0.0
    %v5199 = vand.u32 %v1070, 4294901760
    %v5200 = vsub.f32 %v1070, %v5199
    %5201 = vmatpush1.msra.mxu0 %v5200
    %5202 = vmatprep.subr.mxu0 0.0
    %v5203 = vand.u32 %v1071, 4294901760
    %v5204 = vsub.f32 %v1071, %v5203
    %5205 = vmatpush1.msra.mxu0 %v5204
    %5206 = vmatprep.subr.mxu0 0.0
    %v5207 = vand.u32 %v1072, 4294901760
    %v5208 = vsub.f32 %v1072, %v5207
    %5209 = vmatpush1.msra.mxu0 %v5208
    %5210 = vmatprep.subr.mxu0 0.0
    %v5211 = vand.u32 %v1073, 4294901760
    %v5212 = vsub.f32 %v1073, %v5211
    %5213 = vmatpush1.msra.mxu0 %v5212
    %5214 = vmatprep.subr.mxu0 0.0
    %v5215 = vand.u32 %v1074, 4294901760
    %v5216 = vsub.f32 %v1074, %v5215
    %5217 = vmatpush1.msra.mxu0 %v5216
    %5218 = vmatprep.subr.mxu0 0.0
    %v5219 = vand.u32 %v1075, 4294901760
    %v5220 = vsub.f32 %v1075, %v5219
    %5221 = vmatpush1.msra.mxu0 %v5220
    %5222 = vmatprep.subr.mxu0 0.0
    %v5223 = vand.u32 %v1076, 4294901760
    %v5224 = vsub.f32 %v1076, %v5223
    %5225 = vmatpush1.msra.mxu0 %v5224
    %5226 = vmatprep.subr.mxu0 0.0
    %v5227 = vand.u32 %v1077, 4294901760
    %v5228 = vsub.f32 %v1077, %v5227
    %5229 = vmatpush1.msra.mxu0 %v5228
    %5230 = vmatprep.subr.mxu0 0.0
    %v5231 = vand.u32 %v1078, 4294901760
    %v5232 = vsub.f32 %v1078, %v5231
    %5233 = vmatpush1.msra.mxu0 %v5232
    %5234 = vmatprep.subr.mxu0 0.0
    %v5235 = vand.u32 %v1079, 4294901760
    %v5236 = vsub.f32 %v1079, %v5235
    %5237 = vmatpush1.msra.mxu0 %v5236
    %5238 = vmatprep.subr.mxu0 0.0
    %v5239 = vand.u32 %v1080, 4294901760
    %v5240 = vsub.f32 %v1080, %v5239
    %5241 = vmatpush1.msra.mxu0 %v5240
    %5242 = vmatprep.subr.mxu0 0.0
    %v5243 = vand.u32 %v1081, 4294901760
    %v5244 = vsub.f32 %v1081, %v5243
    %5245 = vmatpush1.msra.mxu0 %v5244
    %5246 = vmatprep.subr.mxu0 0.0
    %v5247 = vand.u32 %v1082, 4294901760
    %v5248 = vsub.f32 %v1082, %v5247
    %5249 = vmatpush1.msra.mxu0 %v5248
    %5250 = vmatprep.subr.mxu0 0.0
    %v5251 = vand.u32 %v1083, 4294901760
    %v5252 = vsub.f32 %v1083, %v5251
    %5253 = vmatpush1.msra.mxu0 %v5252
    %5254 = vmatprep.subr.mxu0 0.0
    %5255 = vmatpush1.msra.mxu0 0.0
    %5256 = vmatprep.subr.mxu0 0.0
    %5257 = vmatpush1.msra.mxu0 0.0
    %5258 = vmatprep.subr.mxu0 0.0
    %5259 = vmatpush1.msra.mxu0 0.0
    %5260 = vmatprep.subr.mxu0 0.0
    %5261 = vmatpush1.msra.mxu0 0.0
    %5262 = vmatprep.subr.mxu0 0.0
    %5263 = vmatpush1.msra.mxu0 0.0
    %5264 = vmatprep.subr.mxu0 0.0
    %5265 = vmatpush1.msra.mxu0 0.0
    %5266 = vmatprep.subr.mxu0 0.0
    %5267 = vmatpush1.msra.mxu0 0.0
    %5268 = vmatprep.subr.mxu0 0.0
    %5269 = vmatpush1.msra.mxu0 0.0
    %5270 = vmatprep.subr.mxu0 0.0
    %5271 = vmatpush1.msra.mxu0 0.0
    %5272 = vmatprep.subr.mxu0 0.0
    %5273 = vmatpush1.msra.mxu0 0.0
    %5274 = vmatprep.subr.mxu0 0.0
    %5275 = vmatpush1.msra.mxu0 0.0
    %5276 = vmatprep.subr.mxu0 0.0
    %5277 = vmatpush1.msra.mxu0 0.0
    %5278 = vmatprep.subr.mxu0 0.0
    %5279 = vmatpush1.msra.mxu0 0.0
    %5280 = vmatprep.subr.mxu0 0.0
    %5281 = vmatpush1.msra.mxu0 0.0
    %5282 = vmatprep.subr.mxu0 0.0
    %5283 = vmatpush1.msra.mxu0 0.0
    %5284 = vmatprep.subr.mxu0 0.0
    %5285 = vmatpush1.msra.mxu0 0.0
    %5286 = vmatprep.mubr.f32.mxu0 0.0
    %v5287 = vand.u32 %v4944, 4294901760
    %v5288 = vsub.f32 %v4944, %v5287
    %5289 = vmatmul.mubr.f32.gmra.mrb[0].mxu0 %v5288
    %v5290 = vpop.f32.mrb[0].mxu0
    %v5291 = vadd.f32 %v5187, %v5290
    %v5292 = vpop.f32.mrb[0].mxu0
    %5293 = vdwg.mxu0
    %5294 = vmatprep.subr.mxu0 0.0
    %v5295 = vand.u32 %v1068, 4294901760
    %5296 = vmatpush1.msra.mxu0 %v5295
    %5297 = vmatprep.subr.mxu0 0.0
    %v5298 = vand.u32 %v1069, 4294901760
    %5299 = vmatpush1.msra.mxu0 %v5298
    %5300 = vmatprep.subr.mxu0 0.0
    %v5301 = vand.u32 %v1070, 4294901760
    %5302 = vmatpush1.msra.mxu0 %v5301
    %5303 = vmatprep.subr.mxu0 0.0
    %v5304 = vand.u32 %v1071, 4294901760
    %5305 = vmatpush1.msra.mxu0 %v5304
    %5306 = vmatprep.subr.mxu0 0.0
    %v5307 = vand.u32 %v1072, 4294901760
    %5308 = vmatpush1.msra.mxu0 %v5307
    %5309 = vmatprep.subr.mxu0 0.0
    %v5310 = vand.u32 %v1073, 4294901760
    %5311 = vmatpush1.msra.mxu0 %v5310
    %5312 = vmatprep.subr.mxu0 0.0
    %v5313 = vand.u32 %v1074, 4294901760
    %5314 = vmatpush1.msra.mxu0 %v5313
    %5315 = vmatprep.subr.mxu0 0.0
    %v5316 = vand.u32 %v1075, 4294901760
    %5317 = vmatpush1.msra.mxu0 %v5316
    %5318 = vmatprep.subr.mxu0 0.0
    %v5319 = vand.u32 %v1076, 4294901760
    %5320 = vmatpush1.msra.mxu0 %v5319
    %5321 = vmatprep.subr.mxu0 0.0
    %v5322 = vand.u32 %v1077, 4294901760
    %5323 = vmatpush1.msra.mxu0 %v5322
    %5324 = vmatprep.subr.mxu0 0.0
    %v5325 = vand.u32 %v1078, 4294901760
    %5326 = vmatpush1.msra.mxu0 %v5325
    %5327 = vmatprep.subr.mxu0 0.0
    %v5328 = vand.u32 %v1079, 4294901760
    %5329 = vmatpush1.msra.mxu0 %v5328
    %5330 = vmatprep.subr.mxu0 0.0
    %v5331 = vand.u32 %v1080, 4294901760
    %5332 = vmatpush1.msra.mxu0 %v5331
    %5333 = vmatprep.subr.mxu0 0.0
    %v5334 = vand.u32 %v1081, 4294901760
    %5335 = vmatpush1.msra.mxu0 %v5334
    %5336 = vmatprep.subr.mxu0 0.0
    %v5337 = vand.u32 %v1082, 4294901760
    %5338 = vmatpush1.msra.mxu0 %v5337
    %5339 = vmatprep.subr.mxu0 0.0
    %v5340 = vand.u32 %v1083, 4294901760
    %5341 = vmatpush1.msra.mxu0 %v5340
    %5342 = vmatprep.subr.mxu0 0.0
    %5343 = vmatpush1.msra.mxu0 0.0
    %5344 = vmatprep.subr.mxu0 0.0
    %5345 = vmatpush1.msra.mxu0 0.0
    %5346 = vmatprep.subr.mxu0 0.0
    %5347 = vmatpush1.msra.mxu0 0.0
    %5348 = vmatprep.subr.mxu0 0.0
    %5349 = vmatpush1.msra.mxu0 0.0
    %5350 = vmatprep.subr.mxu0 0.0
    %5351 = vmatpush1.msra.mxu0 0.0
    %5352 = vmatprep.subr.mxu0 0.0
    %5353 = vmatpush1.msra.mxu0 0.0
    %5354 = vmatprep.subr.mxu0 0.0
    %5355 = vmatpush1.msra.mxu0 0.0
    %5356 = vmatprep.subr.mxu0 0.0
    %5357 = vmatpush1.msra.mxu0 0.0
    %5358 = vmatprep.subr.mxu0 0.0
    %5359 = vmatpush1.msra.mxu0 0.0
    %5360 = vmatprep.subr.mxu0 0.0
    %5361 = vmatpush1.msra.mxu0 0.0
    %5362 = vmatprep.subr.mxu0 0.0
    %5363 = vmatpush1.msra.mxu0 0.0
    %5364 = vmatprep.subr.mxu0 0.0
    %5365 = vmatpush1.msra.mxu0 0.0
    %5366 = vmatprep.subr.mxu0 0.0
    %5367 = vmatpush1.msra.mxu0 0.0
    %5368 = vmatprep.subr.mxu0 0.0
    %5369 = vmatpush1.msra.mxu0 0.0
    %5370 = vmatprep.subr.mxu0 0.0
    %5371 = vmatpush1.msra.mxu0 0.0
    %5372 = vmatprep.subr.mxu0 0.0
    %5373 = vmatpush1.msra.mxu0 0.0
    %5374 = vmatprep.mubr.f32.mxu0 0.0
    %v5375 = vand.u32 %v4944, 4294901760
    %v5376 = vsub.f32 %v4944, %v5375
    %v5377 = vand.u32 %v5376, 4294901760
    %5378 = vmatmul.mubr.f32.gmra.mrb[0].mxu0 %v5377
    %v5379 = vpop.f32.mrb[0].mxu0
    %v5380 = vadd.f32 %v5291, %v5379
    %v5381 = vpop.f32.mrb[0].mxu0
    %5382 = vdwg.mxu0
    %5383 = vmatprep.subr.mxu0 0.0
    %v5384 = vand.u32 %v1068, 4294901760
    %v5385 = vsub.f32 %v1068, %v5384
    %v5386 = vand.u32 %v5385, 4294901760
    %5387 = vmatpush1.msra.mxu0 %v5386
    %5388 = vmatprep.subr.mxu0 0.0
    %v5389 = vand.u32 %v1069, 4294901760
    %v5390 = vsub.f32 %v1069, %v5389
    %v5391 = vand.u32 %v5390, 4294901760
    %5392 = vmatpush1.msra.mxu0 %v5391
    %5393 = vmatprep.subr.mxu0 0.0
    %v5394 = vand.u32 %v1070, 4294901760
    %v5395 = vsub.f32 %v1070, %v5394
    %v5396 = vand.u32 %v5395, 4294901760
    %5397 = vmatpush1.msra.mxu0 %v5396
    %5398 = vmatprep.subr.mxu0 0.0
    %v5399 = vand.u32 %v1071, 4294901760
    %v5400 = vsub.f32 %v1071, %v5399
    %v5401 = vand.u32 %v5400, 4294901760
    %5402 = vmatpush1.msra.mxu0 %v5401
    %5403 = vmatprep.subr.mxu0 0.0
    %v5404 = vand.u32 %v1072, 4294901760
    %v5405 = vsub.f32 %v1072, %v5404
    %v5406 = vand.u32 %v5405, 4294901760
    %5407 = vmatpush1.msra.mxu0 %v5406
    %5408 = vmatprep.subr.mxu0 0.0
    %v5409 = vand.u32 %v1073, 4294901760
    %v5410 = vsub.f32 %v1073, %v5409
    %v5411 = vand.u32 %v5410, 4294901760
    %5412 = vmatpush1.msra.mxu0 %v5411
    %5413 = vmatprep.subr.mxu0 0.0
    %v5414 = vand.u32 %v1074, 4294901760
    %v5415 = vsub.f32 %v1074, %v5414
    %v5416 = vand.u32 %v5415, 4294901760
    %5417 = vmatpush1.msra.mxu0 %v5416
    %5418 = vmatprep.subr.mxu0 0.0
    %v5419 = vand.u32 %v1075, 4294901760
    %v5420 = vsub.f32 %v1075, %v5419
    %v5421 = vand.u32 %v5420, 4294901760
    %5422 = vmatpush1.msra.mxu0 %v5421
    %5423 = vmatprep.subr.mxu0 0.0
    %v5424 = vand.u32 %v1076, 4294901760
    %v5425 = vsub.f32 %v1076, %v5424
    %v5426 = vand.u32 %v5425, 4294901760
    %5427 = vmatpush1.msra.mxu0 %v5426
    %5428 = vmatprep.subr.mxu0 0.0
    %v5429 = vand.u32 %v1077, 4294901760
    %v5430 = vsub.f32 %v1077, %v5429
    %v5431 = vand.u32 %v5430, 4294901760
    %5432 = vmatpush1.msra.mxu0 %v5431
    %5433 = vmatprep.subr.mxu0 0.0
    %v5434 = vand.u32 %v1078, 4294901760
    %v5435 = vsub.f32 %v1078, %v5434
    %v5436 = vand.u32 %v5435, 4294901760
    %5437 = vmatpush1.msra.mxu0 %v5436
    %5438 = vmatprep.subr.mxu0 0.0
    %v5439 = vand.u32 %v1079, 4294901760
    %v5440 = vsub.f32 %v1079, %v5439
    %v5441 = vand.u32 %v5440, 4294901760
    %5442 = vmatpush1.msra.mxu0 %v5441
    %5443 = vmatprep.subr.mxu0 0.0
    %v5444 = vand.u32 %v1080, 4294901760
    %v5445 = vsub.f32 %v1080, %v5444
    %v5446 = vand.u32 %v5445, 4294901760
    %5447 = vmatpush1.msra.mxu0 %v5446
    %5448 = vmatprep.subr.mxu0 0.0
    %v5449 = vand.u32 %v1081, 4294901760
    %v5450 = vsub.f32 %v1081, %v5449
    %v5451 = vand.u32 %v5450, 4294901760
    %5452 = vmatpush1.msra.mxu0 %v5451
    %5453 = vmatprep.subr.mxu0 0.0
    %v5454 = vand.u32 %v1082, 4294901760
    %v5455 = vsub.f32 %v1082, %v5454
    %v5456 = vand.u32 %v5455, 4294901760
    %5457 = vmatpush1.msra.mxu0 %v5456
    %5458 = vmatprep.subr.mxu0 0.0
    %v5459 = vand.u32 %v1083, 4294901760
    %v5460 = vsub.f32 %v1083, %v5459
    %v5461 = vand.u32 %v5460, 4294901760
    %5462 = vmatpush1.msra.mxu0 %v5461
    %5463 = vmatprep.subr.mxu0 0.0
    %5464 = vmatpush1.msra.mxu0 0.0
    %5465 = vmatprep.subr.mxu0 0.0
    %5466 = vmatpush1.msra.mxu0 0.0
    %5467 = vmatprep.subr.mxu0 0.0
    %5468 = vmatpush1.msra.mxu0 0.0
    %5469 = vmatprep.subr.mxu0 0.0
    %5470 = vmatpush1.msra.mxu0 0.0
    %5471 = vmatprep.subr.mxu0 0.0
    %5472 = vmatpush1.msra.mxu0 0.0
    %5473 = vmatprep.subr.mxu0 0.0
    %5474 = vmatpush1.msra.mxu0 0.0
    %5475 = vmatprep.subr.mxu0 0.0
    %5476 = vmatpush1.msra.mxu0 0.0
    %5477 = vmatprep.subr.mxu0 0.0
    %5478 = vmatpush1.msra.mxu0 0.0
    %5479 = vmatprep.subr.mxu0 0.0
    %5480 = vmatpush1.msra.mxu0 0.0
    %5481 = vmatprep.subr.mxu0 0.0
    %5482 = vmatpush1.msra.mxu0 0.0
    %5483 = vmatprep.subr.mxu0 0.0
    %5484 = vmatpush1.msra.mxu0 0.0
    %5485 = vmatprep.subr.mxu0 0.0
    %5486 = vmatpush1.msra.mxu0 0.0
    %5487 = vmatprep.subr.mxu0 0.0
    %5488 = vmatpush1.msra.mxu0 0.0
    %5489 = vmatprep.subr.mxu0 0.0
    %5490 = vmatpush1.msra.mxu0 0.0
    %5491 = vmatprep.subr.mxu0 0.0
    %5492 = vmatpush1.msra.mxu0 0.0
    %5493 = vmatprep.subr.mxu0 0.0
    %5494 = vmatpush1.msra.mxu0 0.0
    %5495 = vmatprep.mubr.f32.mxu0 0.0
    %v5496 = vand.u32 %v4944, 4294901760
    %5497 = vmatmul.mubr.f32.gmra.mrb[0].mxu0 %v5496
    %v5498 = vpop.f32.mrb[0].mxu0
    %v5499 = vadd.f32 %v5380, %v5498
    %v5500 = vpop.f32.mrb[0].mxu0
    %5501 = vdwg.mxu0
    %5502 = vmatprep.subr.mxu0 0.0
    %v5503 = vand.u32 %v1068, 4294901760
    %5504 = vmatpush1.msra.mxu0 %v5503
    %5505 = vmatprep.subr.mxu0 0.0
    %v5506 = vand.u32 %v1069, 4294901760
    %5507 = vmatpush1.msra.mxu0 %v5506
    %5508 = vmatprep.subr.mxu0 0.0
    %v5509 = vand.u32 %v1070, 4294901760
    %5510 = vmatpush1.msra.mxu0 %v5509
    %5511 = vmatprep.subr.mxu0 0.0
    %v5512 = vand.u32 %v1071, 4294901760
    %5513 = vmatpush1.msra.mxu0 %v5512
    %5514 = vmatprep.subr.mxu0 0.0
    %v5515 = vand.u32 %v1072, 4294901760
    %5516 = vmatpush1.msra.mxu0 %v5515
    %5517 = vmatprep.subr.mxu0 0.0
    %v5518 = vand.u32 %v1073, 4294901760
    %5519 = vmatpush1.msra.mxu0 %v5518
    %5520 = vmatprep.subr.mxu0 0.0
    %v5521 = vand.u32 %v1074, 4294901760
    %5522 = vmatpush1.msra.mxu0 %v5521
    %5523 = vmatprep.subr.mxu0 0.0
    %v5524 = vand.u32 %v1075, 4294901760
    %5525 = vmatpush1.msra.mxu0 %v5524
    %5526 = vmatprep.subr.mxu0 0.0
    %v5527 = vand.u32 %v1076, 4294901760
    %5528 = vmatpush1.msra.mxu0 %v5527
    %5529 = vmatprep.subr.mxu0 0.0
    %v5530 = vand.u32 %v1077, 4294901760
    %5531 = vmatpush1.msra.mxu0 %v5530
    %5532 = vmatprep.subr.mxu0 0.0
    %v5533 = vand.u32 %v1078, 4294901760
    %5534 = vmatpush1.msra.mxu0 %v5533
    %5535 = vmatprep.subr.mxu0 0.0
    %v5536 = vand.u32 %v1079, 4294901760
    %5537 = vmatpush1.msra.mxu0 %v5536
    %5538 = vmatprep.subr.mxu0 0.0
    %v5539 = vand.u32 %v1080, 4294901760
    %5540 = vmatpush1.msra.mxu0 %v5539
    %5541 = vmatprep.subr.mxu0 0.0
    %v5542 = vand.u32 %v1081, 4294901760
    %5543 = vmatpush1.msra.mxu0 %v5542
    %5544 = vmatprep.subr.mxu0 0.0
    %v5545 = vand.u32 %v1082, 4294901760
    %5546 = vmatpush1.msra.mxu0 %v5545
    %5547 = vmatprep.subr.mxu0 0.0
    %v5548 = vand.u32 %v1083, 4294901760
    %5549 = vmatpush1.msra.mxu0 %v5548
    %5550 = vmatprep.subr.mxu0 0.0
    %5551 = vmatpush1.msra.mxu0 0.0
    %5552 = vmatprep.subr.mxu0 0.0
    %5553 = vmatpush1.msra.mxu0 0.0
    %5554 = vmatprep.subr.mxu0 0.0
    %5555 = vmatpush1.msra.mxu0 0.0
    %5556 = vmatprep.subr.mxu0 0.0
    %5557 = vmatpush1.msra.mxu0 0.0
    %5558 = vmatprep.subr.mxu0 0.0
    %5559 = vmatpush1.msra.mxu0 0.0
    %5560 = vmatprep.subr.mxu0 0.0
    %5561 = vmatpush1.msra.mxu0 0.0
    %5562 = vmatprep.subr.mxu0 0.0
    %5563 = vmatpush1.msra.mxu0 0.0
    %5564 = vmatprep.subr.mxu0 0.0
    %5565 = vmatpush1.msra.mxu0 0.0
    %5566 = vmatprep.subr.mxu0 0.0
    %5567 = vmatpush1.msra.mxu0 0.0
    %5568 = vmatprep.subr.mxu0 0.0
    %5569 = vmatpush1.msra.mxu0 0.0
    %5570 = vmatprep.subr.mxu0 0.0
    %5571 = vmatpush1.msra.mxu0 0.0
    %5572 = vmatprep.subr.mxu0 0.0
    %5573 = vmatpush1.msra.mxu0 0.0
    %5574 = vmatprep.subr.mxu0 0.0
    %5575 = vmatpush1.msra.mxu0 0.0
    %5576 = vmatprep.subr.mxu0 0.0
    %5577 = vmatpush1.msra.mxu0 0.0
    %5578 = vmatprep.subr.mxu0 0.0
    %5579 = vmatpush1.msra.mxu0 0.0
    %5580 = vmatprep.subr.mxu0 0.0
    %5581 = vmatpush1.msra.mxu0 0.0
    %5582 = vmatprep.mubr.f32.mxu0 0.0
    %v5583 = vand.u32 %v4944, 4294901760
    %5584 = vmatmul.mubr.f32.gmra.mrb[0].mxu0 %v5583
    %v5585 = vpop.f32.mrb[0].mxu0
    %v5586 = vadd.f32 %v5499, %v5585
    %v5587 = vpop.f32.mrb[0].mxu0
    %5588 = vdwg.mxu0
    %v5589 = vadd.f32 %v4947, %v5586
    %v5590 = vtanh.pop %v5589
    %5591 = vst [vmem:[%s4946] sm:$0xff] %v5590
    %s5592 = scalar_lea.vmem [#allocation2], 56
    %v5593 = vld [vmem:[%s5592] sm:$0xff]
    %5594 = vmatprep.subr.mxu0 0.0
    %v5595 = vand.u32 %v1068, 4294901760
    %5596 = vmatpush1.msra.mxu0 %v5595
    %5597 = vmatprep.subr.mxu0 0.0
    %v5598 = vand.u32 %v1069, 4294901760
    %5599 = vmatpush1.msra.mxu0 %v5598
    %5600 = vmatprep.subr.mxu0 0.0
    %v5601 = vand.u32 %v1070, 4294901760
    %5602 = vmatpush1.msra.mxu0 %v5601
    %5603 = vmatprep.subr.mxu0 0.0
    %v5604 = vand.u32 %v1071, 4294901760
    %5605 = vmatpush1.msra.mxu0 %v5604
    %5606 = vmatprep.subr.mxu0 0.0
    %v5607 = vand.u32 %v1072, 4294901760
    %5608 = vmatpush1.msra.mxu0 %v5607
    %5609 = vmatprep.subr.mxu0 0.0
    %v5610 = vand.u32 %v1073, 4294901760
    %5611 = vmatpush1.msra.mxu0 %v5610
    %5612 = vmatprep.subr.mxu0 0.0
    %v5613 = vand.u32 %v1074, 4294901760
    %5614 = vmatpush1.msra.mxu0 %v5613
    %5615 = vmatprep.subr.mxu0 0.0
    %v5616 = vand.u32 %v1075, 4294901760
    %5617 = vmatpush1.msra.mxu0 %v5616
    %5618 = vmatprep.subr.mxu0 0.0
    %v5619 = vand.u32 %v1076, 4294901760
    %5620 = vmatpush1.msra.mxu0 %v5619
    %5621 = vmatprep.subr.mxu0 0.0
    %v5622 = vand.u32 %v1077, 4294901760
    %5623 = vmatpush1.msra.mxu0 %v5622
    %5624 = vmatprep.subr.mxu0 0.0
    %v5625 = vand.u32 %v1078, 4294901760
    %5626 = vmatpush1.msra.mxu0 %v5625
    %5627 = vmatprep.subr.mxu0 0.0
    %v5628 = vand.u32 %v1079, 4294901760
    %5629 = vmatpush1.msra.mxu0 %v5628
    %5630 = vmatprep.subr.mxu0 0.0
    %v5631 = vand.u32 %v1080, 4294901760
    %5632 = vmatpush1.msra.mxu0 %v5631
    %5633 = vmatprep.subr.mxu0 0.0
    %v5634 = vand.u32 %v1081, 4294901760
    %5635 = vmatpush1.msra.mxu0 %v5634
    %5636 = vmatprep.subr.mxu0 0.0
    %v5637 = vand.u32 %v1082, 4294901760
    %5638 = vmatpush1.msra.mxu0 %v5637
    %5639 = vmatprep.subr.mxu0 0.0
    %v5640 = vand.u32 %v1083, 4294901760
    %5641 = vmatpush1.msra.mxu0 %v5640
    %5642 = vmatprep.subr.mxu0 0.0
    %5643 = vmatpush1.msra.mxu0 0.0
    %5644 = vmatprep.subr.mxu0 0.0
    %5645 = vmatpush1.msra.mxu0 0.0
    %5646 = vmatprep.subr.mxu0 0.0
    %5647 = vmatpush1.msra.mxu0 0.0
    %5648 = vmatprep.subr.mxu0 0.0
    %5649 = vmatpush1.msra.mxu0 0.0
    %5650 = vmatprep.subr.mxu0 0.0
    %5651 = vmatpush1.msra.mxu0 0.0
    %5652 = vmatprep.subr.mxu0 0.0
    %5653 = vmatpush1.msra.mxu0 0.0
    %5654 = vmatprep.subr.mxu0 0.0
    %5655 = vmatpush1.msra.mxu0 0.0
    %5656 = vmatprep.subr.mxu0 0.0
    %5657 = vmatpush1.msra.mxu0 0.0
    %5658 = vmatprep.subr.mxu0 0.0
    %5659 = vmatpush1.msra.mxu0 0.0
    %5660 = vmatprep.subr.mxu0 0.0
    %5661 = vmatpush1.msra.mxu0 0.0
    %5662 = vmatprep.subr.mxu0 0.0
    %5663 = vmatpush1.msra.mxu0 0.0
    %5664 = vmatprep.subr.mxu0 0.0
    %5665 = vmatpush1.msra.mxu0 0.0
    %5666 = vmatprep.subr.mxu0 0.0
    %5667 = vmatpush1.msra.mxu0 0.0
    %5668 = vmatprep.subr.mxu0 0.0
    %5669 = vmatpush1.msra.mxu0 0.0
    %5670 = vmatprep.subr.mxu0 0.0
    %5671 = vmatpush1.msra.mxu0 0.0
    %5672 = vmatprep.subr.mxu0 0.0
    %5673 = vmatpush1.msra.mxu0 0.0
    %5674 = vmatprep.mubr.f32.mxu0 0.0
    %v5675 = vand.u32 %v5590, 4294901760
    %v5676 = vsub.f32 %v5590, %v5675
    %v5677 = vand.u32 %v5676, 4294901760
    %v5678 = vsub.f32 %v5676, %v5677
    %v5679 = vand.u32 %v5678, 4294901760
    %5680 = vmatmul.mubr.f32.gmra.mrb[0].mxu0 %v5679
    %v5681 = vpop.f32.mrb[0].mxu0
    %v5682 = vadd.f32 0.0, %v5681
    %v5683 = vpop.f32.mrb[0].mxu0
    %5684 = vdwg.mxu0
    %5685 = vmatprep.subr.mxu0 0.0
    %v5686 = vand.u32 %v1068, 4294901760
    %v5687 = vsub.f32 %v1068, %v5686
    %v5688 = vand.u32 %v5687, 4294901760
    %v5689 = vsub.f32 %v5687, %v5688
    %v5690 = vand.u32 %v5689, 4294901760
    %5691 = vmatpush1.msra.mxu0 %v5690
    %5692 = vmatprep.subr.mxu0 0.0
    %v5693 = vand.u32 %v1069, 4294901760
    %v5694 = vsub.f32 %v1069, %v5693
    %v5695 = vand.u32 %v5694, 4294901760
    %v5696 = vsub.f32 %v5694, %v5695
    %v5697 = vand.u32 %v5696, 4294901760
    %5698 = vmatpush1.msra.mxu0 %v5697
    %5699 = vmatprep.subr.mxu0 0.0
    %v5700 = vand.u32 %v1070, 4294901760
    %v5701 = vsub.f32 %v1070, %v5700
    %v5702 = vand.u32 %v5701, 4294901760
    %v5703 = vsub.f32 %v5701, %v5702
    %v5704 = vand.u32 %v5703, 4294901760
    %5705 = vmatpush1.msra.mxu0 %v5704
    %5706 = vmatprep.subr.mxu0 0.0
    %v5707 = vand.u32 %v1071, 4294901760
    %v5708 = vsub.f32 %v1071, %v5707
    %v5709 = vand.u32 %v5708, 4294901760
    %v5710 = vsub.f32 %v5708, %v5709
    %v5711 = vand.u32 %v5710, 4294901760
    %5712 = vmatpush1.msra.mxu0 %v5711
    %5713 = vmatprep.subr.mxu0 0.0
    %v5714 = vand.u32 %v1072, 4294901760
    %v5715 = vsub.f32 %v1072, %v5714
    %v5716 = vand.u32 %v5715, 4294901760
    %v5717 = vsub.f32 %v5715, %v5716
    %v5718 = vand.u32 %v5717, 4294901760
    %5719 = vmatpush1.msra.mxu0 %v5718
    %5720 = vmatprep.subr.mxu0 0.0
    %v5721 = vand.u32 %v1073, 4294901760
    %v5722 = vsub.f32 %v1073, %v5721
    %v5723 = vand.u32 %v5722, 4294901760
    %v5724 = vsub.f32 %v5722, %v5723
    %v5725 = vand.u32 %v5724, 4294901760
    %5726 = vmatpush1.msra.mxu0 %v5725
    %5727 = vmatprep.subr.mxu0 0.0
    %v5728 = vand.u32 %v1074, 4294901760
    %v5729 = vsub.f32 %v1074, %v5728
    %v5730 = vand.u32 %v5729, 4294901760
    %v5731 = vsub.f32 %v5729, %v5730
    %v5732 = vand.u32 %v5731, 4294901760
    %5733 = vmatpush1.msra.mxu0 %v5732
    %5734 = vmatprep.subr.mxu0 0.0
    %v5735 = vand.u32 %v1075, 4294901760
    %v5736 = vsub.f32 %v1075, %v5735
    %v5737 = vand.u32 %v5736, 4294901760
    %v5738 = vsub.f32 %v5736, %v5737
    %v5739 = vand.u32 %v5738, 4294901760
    %5740 = vmatpush1.msra.mxu0 %v5739
    %5741 = vmatprep.subr.mxu0 0.0
    %v5742 = vand.u32 %v1076, 4294901760
    %v5743 = vsub.f32 %v1076, %v5742
    %v5744 = vand.u32 %v5743, 4294901760
    %v5745 = vsub.f32 %v5743, %v5744
    %v5746 = vand.u32 %v5745, 4294901760
    %5747 = vmatpush1.msra.mxu0 %v5746
    %5748 = vmatprep.subr.mxu0 0.0
    %v5749 = vand.u32 %v1077, 4294901760
    %v5750 = vsub.f32 %v1077, %v5749
    %v5751 = vand.u32 %v5750, 4294901760
    %v5752 = vsub.f32 %v5750, %v5751
    %v5753 = vand.u32 %v5752, 4294901760
    %5754 = vmatpush1.msra.mxu0 %v5753
    %5755 = vmatprep.subr.mxu0 0.0
    %v5756 = vand.u32 %v1078, 4294901760
    %v5757 = vsub.f32 %v1078, %v5756
    %v5758 = vand.u32 %v5757, 4294901760
    %v5759 = vsub.f32 %v5757, %v5758
    %v5760 = vand.u32 %v5759, 4294901760
    %5761 = vmatpush1.msra.mxu0 %v5760
    %5762 = vmatprep.subr.mxu0 0.0
    %v5763 = vand.u32 %v1079, 4294901760
    %v5764 = vsub.f32 %v1079, %v5763
    %v5765 = vand.u32 %v5764, 4294901760
    %v5766 = vsub.f32 %v5764, %v5765
    %v5767 = vand.u32 %v5766, 4294901760
    %5768 = vmatpush1.msra.mxu0 %v5767
    %5769 = vmatprep.subr.mxu0 0.0
    %v5770 = vand.u32 %v1080, 4294901760
    %v5771 = vsub.f32 %v1080, %v5770
    %v5772 = vand.u32 %v5771, 4294901760
    %v5773 = vsub.f32 %v5771, %v5772
    %v5774 = vand.u32 %v5773, 4294901760
    %5775 = vmatpush1.msra.mxu0 %v5774
    %5776 = vmatprep.subr.mxu0 0.0
    %v5777 = vand.u32 %v1081, 4294901760
    %v5778 = vsub.f32 %v1081, %v5777
    %v5779 = vand.u32 %v5778, 4294901760
    %v5780 = vsub.f32 %v5778, %v5779
    %v5781 = vand.u32 %v5780, 4294901760
    %5782 = vmatpush1.msra.mxu0 %v5781
    %5783 = vmatprep.subr.mxu0 0.0
    %v5784 = vand.u32 %v1082, 4294901760
    %v5785 = vsub.f32 %v1082, %v5784
    %v5786 = vand.u32 %v5785, 4294901760
    %v5787 = vsub.f32 %v5785, %v5786
    %v5788 = vand.u32 %v5787, 4294901760
    %5789 = vmatpush1.msra.mxu0 %v5788
    %5790 = vmatprep.subr.mxu0 0.0
    %v5791 = vand.u32 %v1083, 4294901760
    %v5792 = vsub.f32 %v1083, %v5791
    %v5793 = vand.u32 %v5792, 4294901760
    %v5794 = vsub.f32 %v5792, %v5793
    %v5795 = vand.u32 %v5794, 4294901760
    %5796 = vmatpush1.msra.mxu0 %v5795
    %5797 = vmatprep.subr.mxu0 0.0
    %5798 = vmatpush1.msra.mxu0 0.0
    %5799 = vmatprep.subr.mxu0 0.0
    %5800 = vmatpush1.msra.mxu0 0.0
    %5801 = vmatprep.subr.mxu0 0.0
    %5802 = vmatpush1.msra.mxu0 0.0
    %5803 = vmatprep.subr.mxu0 0.0
    %5804 = vmatpush1.msra.mxu0 0.0
    %5805 = vmatprep.subr.mxu0 0.0
    %5806 = vmatpush1.msra.mxu0 0.0
    %5807 = vmatprep.subr.mxu0 0.0
    %5808 = vmatpush1.msra.mxu0 0.0
    %5809 = vmatprep.subr.mxu0 0.0
    %5810 = vmatpush1.msra.mxu0 0.0
    %5811 = vmatprep.subr.mxu0 0.0
    %5812 = vmatpush1.msra.mxu0 0.0
    %5813 = vmatprep.subr.mxu0 0.0
    %5814 = vmatpush1.msra.mxu0 0.0
    %5815 = vmatprep.subr.mxu0 0.0
    %5816 = vmatpush1.msra.mxu0 0.0
    %5817 = vmatprep.subr.mxu0 0.0
    %5818 = vmatpush1.msra.mxu0 0.0
    %5819 = vmatprep.subr.mxu0 0.0
    %5820 = vmatpush1.msra.mxu0 0.0
    %5821 = vmatprep.subr.mxu0 0.0
    %5822 = vmatpush1.msra.mxu0 0.0
    %5823 = vmatprep.subr.mxu0 0.0
    %5824 = vmatpush1.msra.mxu0 0.0
    %5825 = vmatprep.subr.mxu0 0.0
    %5826 = vmatpush1.msra.mxu0 0.0
    %5827 = vmatprep.subr.mxu0 0.0
    %5828 = vmatpush1.msra.mxu0 0.0
    %5829 = vmatprep.mubr.f32.mxu0 0.0
    %v5830 = vand.u32 %v5590, 4294901760
    %5831 = vmatmul.mubr.f32.gmra.mrb[0].mxu0 %v5830
    %v5832 = vpop.f32.mrb[0].mxu0
    %v5833 = vadd.f32 %v5682, %v5832
    %v5834 = vpop.f32.mrb[0].mxu0
    %5835 = vdwg.mxu0
    %5836 = vmatprep.subr.mxu0 0.0
    %v5837 = vand.u32 %v1068, 4294901760
    %v5838 = vsub.f32 %v1068, %v5837
    %5839 = vmatpush1.msra.mxu0 %v5838
    %5840 = vmatprep.subr.mxu0 0.0
    %v5841 = vand.u32 %v1069, 4294901760
    %v5842 = vsub.f32 %v1069, %v5841
    %5843 = vmatpush1.msra.mxu0 %v5842
    %5844 = vmatprep.subr.mxu0 0.0
    %v5845 = vand.u32 %v1070, 4294901760
    %v5846 = vsub.f32 %v1070, %v5845
    %5847 = vmatpush1.msra.mxu0 %v5846
    %5848 = vmatprep.subr.mxu0 0.0
    %v5849 = vand.u32 %v1071, 4294901760
    %v5850 = vsub.f32 %v1071, %v5849
    %5851 = vmatpush1.msra.mxu0 %v5850
    %5852 = vmatprep.subr.mxu0 0.0
    %v5853 = vand.u32 %v1072, 4294901760
    %v5854 = vsub.f32 %v1072, %v5853
    %5855 = vmatpush1.msra.mxu0 %v5854
    %5856 = vmatprep.subr.mxu0 0.0
    %v5857 = vand.u32 %v1073, 4294901760
    %v5858 = vsub.f32 %v1073, %v5857
    %5859 = vmatpush1.msra.mxu0 %v5858
    %5860 = vmatprep.subr.mxu0 0.0
    %v5861 = vand.u32 %v1074, 4294901760
    %v5862 = vsub.f32 %v1074, %v5861
    %5863 = vmatpush1.msra.mxu0 %v5862
    %5864 = vmatprep.subr.mxu0 0.0
    %v5865 = vand.u32 %v1075, 4294901760
    %v5866 = vsub.f32 %v1075, %v5865
    %5867 = vmatpush1.msra.mxu0 %v5866
    %5868 = vmatprep.subr.mxu0 0.0
    %v5869 = vand.u32 %v1076, 4294901760
    %v5870 = vsub.f32 %v1076, %v5869
    %5871 = vmatpush1.msra.mxu0 %v5870
    %5872 = vmatprep.subr.mxu0 0.0
    %v5873 = vand.u32 %v1077, 4294901760
    %v5874 = vsub.f32 %v1077, %v5873
    %5875 = vmatpush1.msra.mxu0 %v5874
    %5876 = vmatprep.subr.mxu0 0.0
    %v5877 = vand.u32 %v1078, 4294901760
    %v5878 = vsub.f32 %v1078, %v5877
    %5879 = vmatpush1.msra.mxu0 %v5878
    %5880 = vmatprep.subr.mxu0 0.0
    %v5881 = vand.u32 %v1079, 4294901760
    %v5882 = vsub.f32 %v1079, %v5881
    %5883 = vmatpush1.msra.mxu0 %v5882
    %5884 = vmatprep.subr.mxu0 0.0
    %v5885 = vand.u32 %v1080, 4294901760
    %v5886 = vsub.f32 %v1080, %v5885
    %5887 = vmatpush1.msra.mxu0 %v5886
    %5888 = vmatprep.subr.mxu0 0.0
    %v5889 = vand.u32 %v1081, 4294901760
    %v5890 = vsub.f32 %v1081, %v5889
    %5891 = vmatpush1.msra.mxu0 %v5890
    %5892 = vmatprep.subr.mxu0 0.0
    %v5893 = vand.u32 %v1082, 4294901760
    %v5894 = vsub.f32 %v1082, %v5893
    %5895 = vmatpush1.msra.mxu0 %v5894
    %5896 = vmatprep.subr.mxu0 0.0
    %v5897 = vand.u32 %v1083, 4294901760
    %v5898 = vsub.f32 %v1083, %v5897
    %5899 = vmatpush1.msra.mxu0 %v5898
    %5900 = vmatprep.subr.mxu0 0.0
    %5901 = vmatpush1.msra.mxu0 0.0
    %5902 = vmatprep.subr.mxu0 0.0
    %5903 = vmatpush1.msra.mxu0 0.0
    %5904 = vmatprep.subr.mxu0 0.0
    %5905 = vmatpush1.msra.mxu0 0.0
    %5906 = vmatprep.subr.mxu0 0.0
    %5907 = vmatpush1.msra.mxu0 0.0
    %5908 = vmatprep.subr.mxu0 0.0
    %5909 = vmatpush1.msra.mxu0 0.0
    %5910 = vmatprep.subr.mxu0 0.0
    %5911 = vmatpush1.msra.mxu0 0.0
    %5912 = vmatprep.subr.mxu0 0.0
    %5913 = vmatpush1.msra.mxu0 0.0
    %5914 = vmatprep.subr.mxu0 0.0
    %5915 = vmatpush1.msra.mxu0 0.0
    %5916 = vmatprep.subr.mxu0 0.0
    %5917 = vmatpush1.msra.mxu0 0.0
    %5918 = vmatprep.subr.mxu0 0.0
    %5919 = vmatpush1.msra.mxu0 0.0
    %5920 = vmatprep.subr.mxu0 0.0
    %5921 = vmatpush1.msra.mxu0 0.0
    %5922 = vmatprep.subr.mxu0 0.0
    %5923 = vmatpush1.msra.mxu0 0.0
    %5924 = vmatprep.subr.mxu0 0.0
    %5925 = vmatpush1.msra.mxu0 0.0
    %5926 = vmatprep.subr.mxu0 0.0
    %5927 = vmatpush1.msra.mxu0 0.0
    %5928 = vmatprep.subr.mxu0 0.0
    %5929 = vmatpush1.msra.mxu0 0.0
    %5930 = vmatprep.subr.mxu0 0.0
    %5931 = vmatpush1.msra.mxu0 0.0
    %5932 = vmatprep.mubr.f32.mxu0 0.0
    %v5933 = vand.u32 %v5590, 4294901760
    %v5934 = vsub.f32 %v5590, %v5933
    %5935 = vmatmul.mubr.f32.gmra.mrb[0].mxu0 %v5934
    %v5936 = vpop.f32.mrb[0].mxu0
    %v5937 = vadd.f32 %v5833, %v5936
    %v5938 = vpop.f32.mrb[0].mxu0
    %5939 = vdwg.mxu0
    %5940 = vmatprep.subr.mxu0 0.0
    %v5941 = vand.u32 %v1068, 4294901760
    %5942 = vmatpush1.msra.mxu0 %v5941
    %5943 = vmatprep.subr.mxu0 0.0
    %v5944 = vand.u32 %v1069, 4294901760
    %5945 = vmatpush1.msra.mxu0 %v5944
    %5946 = vmatprep.subr.mxu0 0.0
    %v5947 = vand.u32 %v1070, 4294901760
    %5948 = vmatpush1.msra.mxu0 %v5947
    %5949 = vmatprep.subr.mxu0 0.0
    %v5950 = vand.u32 %v1071, 4294901760
    %5951 = vmatpush1.msra.mxu0 %v5950
    %5952 = vmatprep.subr.mxu0 0.0
    %v5953 = vand.u32 %v1072, 4294901760
    %5954 = vmatpush1.msra.mxu0 %v5953
    %5955 = vmatprep.subr.mxu0 0.0
    %v5956 = vand.u32 %v1073, 4294901760
    %5957 = vmatpush1.msra.mxu0 %v5956
    %5958 = vmatprep.subr.mxu0 0.0
    %v5959 = vand.u32 %v1074, 4294901760
    %5960 = vmatpush1.msra.mxu0 %v5959
    %5961 = vmatprep.subr.mxu0 0.0
    %v5962 = vand.u32 %v1075, 4294901760
    %5963 = vmatpush1.msra.mxu0 %v5962
    %5964 = vmatprep.subr.mxu0 0.0
    %v5965 = vand.u32 %v1076, 4294901760
    %5966 = vmatpush1.msra.mxu0 %v5965
    %5967 = vmatprep.subr.mxu0 0.0
    %v5968 = vand.u32 %v1077, 4294901760
    %5969 = vmatpush1.msra.mxu0 %v5968
    %5970 = vmatprep.subr.mxu0 0.0
    %v5971 = vand.u32 %v1078, 4294901760
    %5972 = vmatpush1.msra.mxu0 %v5971
    %5973 = vmatprep.subr.mxu0 0.0
    %v5974 = vand.u32 %v1079, 4294901760
    %5975 = vmatpush1.msra.mxu0 %v5974
    %5976 = vmatprep.subr.mxu0 0.0
    %v5977 = vand.u32 %v1080, 4294901760
    %5978 = vmatpush1.msra.mxu0 %v5977
    %5979 = vmatprep.subr.mxu0 0.0
    %v5980 = vand.u32 %v1081, 4294901760
    %5981 = vmatpush1.msra.mxu0 %v5980
    %5982 = vmatprep.subr.mxu0 0.0
    %v5983 = vand.u32 %v1082, 4294901760
    %5984 = vmatpush1.msra.mxu0 %v5983
    %5985 = vmatprep.subr.mxu0 0.0
    %v5986 = vand.u32 %v1083, 4294901760
    %5987 = vmatpush1.msra.mxu0 %v5986
    %5988 = vmatprep.subr.mxu0 0.0
    %5989 = vmatpush1.msra.mxu0 0.0
    %5990 = vmatprep.subr.mxu0 0.0
    %5991 = vmatpush1.msra.mxu0 0.0
    %5992 = vmatprep.subr.mxu0 0.0
    %5993 = vmatpush1.msra.mxu0 0.0
    %5994 = vmatprep.subr.mxu0 0.0
    %5995 = vmatpush1.msra.mxu0 0.0
    %5996 = vmatprep.subr.mxu0 0.0
    %5997 = vmatpush1.msra.mxu0 0.0
    %5998 = vmatprep.subr.mxu0 0.0
    %5999 = vmatpush1.msra.mxu0 0.0
    %6000 = vmatprep.subr.mxu0 0.0
    %6001 = vmatpush1.msra.mxu0 0.0
    %6002 = vmatprep.subr.mxu0 0.0
    %6003 = vmatpush1.msra.mxu0 0.0
    %6004 = vmatprep.subr.mxu0 0.0
    %6005 = vmatpush1.msra.mxu0 0.0
    %6006 = vmatprep.subr.mxu0 0.0
    %6007 = vmatpush1.msra.mxu0 0.0
    %6008 = vmatprep.subr.mxu0 0.0
    %6009 = vmatpush1.msra.mxu0 0.0
    %6010 = vmatprep.subr.mxu0 0.0
    %6011 = vmatpush1.msra.mxu0 0.0
    %6012 = vmatprep.subr.mxu0 0.0
    %6013 = vmatpush1.msra.mxu0 0.0
    %6014 = vmatprep.subr.mxu0 0.0
    %6015 = vmatpush1.msra.mxu0 0.0
    %6016 = vmatprep.subr.mxu0 0.0
    %6017 = vmatpush1.msra.mxu0 0.0
    %6018 = vmatprep.subr.mxu0 0.0
    %6019 = vmatpush1.msra.mxu0 0.0
    %6020 = vmatprep.mubr.f32.mxu0 0.0
    %v6021 = vand.u32 %v5590, 4294901760
    %v6022 = vsub.f32 %v5590, %v6021
    %v6023 = vand.u32 %v6022, 4294901760
    %6024 = vmatmul.mubr.f32.gmra.mrb[0].mxu0 %v6023
    %v6025 = vpop.f32.mrb[0].mxu0
    %v6026 = vadd.f32 %v5937, %v6025
    %v6027 = vpop.f32.mrb[0].mxu0
    %6028 = vdwg.mxu0
    %6029 = vmatprep.subr.mxu0 0.0
    %v6030 = vand.u32 %v1068, 4294901760
    %v6031 = vsub.f32 %v1068, %v6030
    %v6032 = vand.u32 %v6031, 4294901760
    %6033 = vmatpush1.msra.mxu0 %v6032
    %6034 = vmatprep.subr.mxu0 0.0
    %v6035 = vand.u32 %v1069, 4294901760
    %v6036 = vsub.f32 %v1069, %v6035
    %v6037 = vand.u32 %v6036, 4294901760
    %6038 = vmatpush1.msra.mxu0 %v6037
    %6039 = vmatprep.subr.mxu0 0.0
    %v6040 = vand.u32 %v1070, 4294901760
    %v6041 = vsub.f32 %v1070, %v6040
    %v6042 = vand.u32 %v6041, 4294901760
    %6043 = vmatpush1.msra.mxu0 %v6042
    %6044 = vmatprep.subr.mxu0 0.0
    %v6045 = vand.u32 %v1071, 4294901760
    %v6046 = vsub.f32 %v1071, %v6045
    %v6047 = vand.u32 %v6046, 4294901760
    %6048 = vmatpush1.msra.mxu0 %v6047
    %6049 = vmatprep.subr.mxu0 0.0
    %v6050 = vand.u32 %v1072, 4294901760
    %v6051 = vsub.f32 %v1072, %v6050
    %v6052 = vand.u32 %v6051, 4294901760
    %6053 = vmatpush1.msra.mxu0 %v6052
    %6054 = vmatprep.subr.mxu0 0.0
    %v6055 = vand.u32 %v1073, 4294901760
    %v6056 = vsub.f32 %v1073, %v6055
    %v6057 = vand.u32 %v6056, 4294901760
    %6058 = vmatpush1.msra.mxu0 %v6057
    %6059 = vmatprep.subr.mxu0 0.0
    %v6060 = vand.u32 %v1074, 4294901760
    %v6061 = vsub.f32 %v1074, %v6060
    %v6062 = vand.u32 %v6061, 4294901760
    %6063 = vmatpush1.msra.mxu0 %v6062
    %6064 = vmatprep.subr.mxu0 0.0
    %v6065 = vand.u32 %v1075, 4294901760
    %v6066 = vsub.f32 %v1075, %v6065
    %v6067 = vand.u32 %v6066, 4294901760
    %6068 = vmatpush1.msra.mxu0 %v6067
    %6069 = vmatprep.subr.mxu0 0.0
    %v6070 = vand.u32 %v1076, 4294901760
    %v6071 = vsub.f32 %v1076, %v6070
    %v6072 = vand.u32 %v6071, 4294901760
    %6073 = vmatpush1.msra.mxu0 %v6072
    %6074 = vmatprep.subr.mxu0 0.0
    %v6075 = vand.u32 %v1077, 4294901760
    %v6076 = vsub.f32 %v1077, %v6075
    %v6077 = vand.u32 %v6076, 4294901760
    %6078 = vmatpush1.msra.mxu0 %v6077
    %6079 = vmatprep.subr.mxu0 0.0
    %v6080 = vand.u32 %v1078, 4294901760
    %v6081 = vsub.f32 %v1078, %v6080
    %v6082 = vand.u32 %v6081, 4294901760
    %6083 = vmatpush1.msra.mxu0 %v6082
    %6084 = vmatprep.subr.mxu0 0.0
    %v6085 = vand.u32 %v1079, 4294901760
    %v6086 = vsub.f32 %v1079, %v6085
    %v6087 = vand.u32 %v6086, 4294901760
    %6088 = vmatpush1.msra.mxu0 %v6087
    %6089 = vmatprep.subr.mxu0 0.0
    %v6090 = vand.u32 %v1080, 4294901760
    %v6091 = vsub.f32 %v1080, %v6090
    %v6092 = vand.u32 %v6091, 4294901760
    %6093 = vmatpush1.msra.mxu0 %v6092
    %6094 = vmatprep.subr.mxu0 0.0
    %v6095 = vand.u32 %v1081, 4294901760
    %v6096 = vsub.f32 %v1081, %v6095
    %v6097 = vand.u32 %v6096, 4294901760
    %6098 = vmatpush1.msra.mxu0 %v6097
    %6099 = vmatprep.subr.mxu0 0.0
    %v6100 = vand.u32 %v1082, 4294901760
    %v6101 = vsub.f32 %v1082, %v6100
    %v6102 = vand.u32 %v6101, 4294901760
    %6103 = vmatpush1.msra.mxu0 %v6102
    %6104 = vmatprep.subr.mxu0 0.0
    %v6105 = vand.u32 %v1083, 4294901760
    %v6106 = vsub.f32 %v1083, %v6105
    %v6107 = vand.u32 %v6106, 4294901760
    %6108 = vmatpush1.msra.mxu0 %v6107
    %6109 = vmatprep.subr.mxu0 0.0
    %6110 = vmatpush1.msra.mxu0 0.0
    %6111 = vmatprep.subr.mxu0 0.0
    %6112 = vmatpush1.msra.mxu0 0.0
    %6113 = vmatprep.subr.mxu0 0.0
    %6114 = vmatpush1.msra.mxu0 0.0
    %6115 = vmatprep.subr.mxu0 0.0
    %6116 = vmatpush1.msra.mxu0 0.0
    %6117 = vmatprep.subr.mxu0 0.0
    %6118 = vmatpush1.msra.mxu0 0.0
    %6119 = vmatprep.subr.mxu0 0.0
    %6120 = vmatpush1.msra.mxu0 0.0
    %6121 = vmatprep.subr.mxu0 0.0
    %6122 = vmatpush1.msra.mxu0 0.0
    %6123 = vmatprep.subr.mxu0 0.0
    %6124 = vmatpush1.msra.mxu0 0.0
    %6125 = vmatprep.subr.mxu0 0.0
    %6126 = vmatpush1.msra.mxu0 0.0
    %6127 = vmatprep.subr.mxu0 0.0
    %6128 = vmatpush1.msra.mxu0 0.0
    %6129 = vmatprep.subr.mxu0 0.0
    %6130 = vmatpush1.msra.mxu0 0.0
    %6131 = vmatprep.subr.mxu0 0.0
    %6132 = vmatpush1.msra.mxu0 0.0
    %6133 = vmatprep.subr.mxu0 0.0
    %6134 = vmatpush1.msra.mxu0 0.0
    %6135 = vmatprep.subr.mxu0 0.0
    %6136 = vmatpush1.msra.mxu0 0.0
    %6137 = vmatprep.subr.mxu0 0.0
    %6138 = vmatpush1.msra.mxu0 0.0
    %6139 = vmatprep.subr.mxu0 0.0
    %6140 = vmatpush1.msra.mxu0 0.0
    %6141 = vmatprep.mubr.f32.mxu0 0.0
    %v6142 = vand.u32 %v5590, 4294901760
    %6143 = vmatmul.mubr.f32.gmra.mrb[0].mxu0 %v6142
    %v6144 = vpop.f32.mrb[0].mxu0
    %v6145 = vadd.f32 %v6026, %v6144
    %v6146 = vpop.f32.mrb[0].mxu0
    %6147 = vdwg.mxu0
    %6148 = vmatprep.subr.mxu0 0.0
    %v6149 = vand.u32 %v1068, 4294901760
    %6150 = vmatpush1.msra.mxu0 %v6149
    %6151 = vmatprep.subr.mxu0 0.0
    %v6152 = vand.u32 %v1069, 4294901760
    %6153 = vmatpush1.msra.mxu0 %v6152
    %6154 = vmatprep.subr.mxu0 0.0
    %v6155 = vand.u32 %v1070, 4294901760
    %6156 = vmatpush1.msra.mxu0 %v6155
    %6157 = vmatprep.subr.mxu0 0.0
    %v6158 = vand.u32 %v1071, 4294901760
    %6159 = vmatpush1.msra.mxu0 %v6158
    %6160 = vmatprep.subr.mxu0 0.0
    %v6161 = vand.u32 %v1072, 4294901760
    %6162 = vmatpush1.msra.mxu0 %v6161
    %6163 = vmatprep.subr.mxu0 0.0
    %v6164 = vand.u32 %v1073, 4294901760
    %6165 = vmatpush1.msra.mxu0 %v6164
    %6166 = vmatprep.subr.mxu0 0.0
    %v6167 = vand.u32 %v1074, 4294901760
    %6168 = vmatpush1.msra.mxu0 %v6167
    %6169 = vmatprep.subr.mxu0 0.0
    %v6170 = vand.u32 %v1075, 4294901760
    %6171 = vmatpush1.msra.mxu0 %v6170
    %6172 = vmatprep.subr.mxu0 0.0
    %v6173 = vand.u32 %v1076, 4294901760
    %6174 = vmatpush1.msra.mxu0 %v6173
    %6175 = vmatprep.subr.mxu0 0.0
    %v6176 = vand.u32 %v1077, 4294901760
    %6177 = vmatpush1.msra.mxu0 %v6176
    %6178 = vmatprep.subr.mxu0 0.0
    %v6179 = vand.u32 %v1078, 4294901760
    %6180 = vmatpush1.msra.mxu0 %v6179
    %6181 = vmatprep.subr.mxu0 0.0
    %v6182 = vand.u32 %v1079, 4294901760
    %6183 = vmatpush1.msra.mxu0 %v6182
    %6184 = vmatprep.subr.mxu0 0.0
    %v6185 = vand.u32 %v1080, 4294901760
    %6186 = vmatpush1.msra.mxu0 %v6185
    %6187 = vmatprep.subr.mxu0 0.0
    %v6188 = vand.u32 %v1081, 4294901760
    %6189 = vmatpush1.msra.mxu0 %v6188
    %6190 = vmatprep.subr.mxu0 0.0
    %v6191 = vand.u32 %v1082, 4294901760
    %6192 = vmatpush1.msra.mxu0 %v6191
    %6193 = vmatprep.subr.mxu0 0.0
    %v6194 = vand.u32 %v1083, 4294901760
    %6195 = vmatpush1.msra.mxu0 %v6194
    %6196 = vmatprep.subr.mxu0 0.0
    %6197 = vmatpush1.msra.mxu0 0.0
    %6198 = vmatprep.subr.mxu0 0.0
    %6199 = vmatpush1.msra.mxu0 0.0
    %6200 = vmatprep.subr.mxu0 0.0
    %6201 = vmatpush1.msra.mxu0 0.0
    %6202 = vmatprep.subr.mxu0 0.0
    %6203 = vmatpush1.msra.mxu0 0.0
    %6204 = vmatprep.subr.mxu0 0.0
    %6205 = vmatpush1.msra.mxu0 0.0
    %6206 = vmatprep.subr.mxu0 0.0
    %6207 = vmatpush1.msra.mxu0 0.0
    %6208 = vmatprep.subr.mxu0 0.0
    %6209 = vmatpush1.msra.mxu0 0.0
    %6210 = vmatprep.subr.mxu0 0.0
    %6211 = vmatpush1.msra.mxu0 0.0
    %6212 = vmatprep.subr.mxu0 0.0
    %6213 = vmatpush1.msra.mxu0 0.0
    %6214 = vmatprep.subr.mxu0 0.0
    %6215 = vmatpush1.msra.mxu0 0.0
    %6216 = vmatprep.subr.mxu0 0.0
    %6217 = vmatpush1.msra.mxu0 0.0
    %6218 = vmatprep.subr.mxu0 0.0
    %6219 = vmatpush1.msra.mxu0 0.0
    %6220 = vmatprep.subr.mxu0 0.0
    %6221 = vmatpush1.msra.mxu0 0.0
    %6222 = vmatprep.subr.mxu0 0.0
    %6223 = vmatpush1.msra.mxu0 0.0
    %6224 = vmatprep.subr.mxu0 0.0
    %6225 = vmatpush1.msra.mxu0 0.0
    %6226 = vmatprep.subr.mxu0 0.0
    %6227 = vmatpush1.msra.mxu0 0.0
    %6228 = vmatprep.mubr.f32.mxu0 0.0
    %v6229 = vand.u32 %v5590, 4294901760
    %6230 = vmatmul.mubr.f32.gmra.mrb[0].mxu0 %v6229
    %v6231 = vpop.f32.mrb[0].mxu0
    %v6232 = vadd.f32 %v6145, %v6231
    %v6233 = vpop.f32.mrb[0].mxu0
    %6234 = vdwg.mxu0
    %v6235 = vadd.f32 %v5593, %v6232
    %v6236 = vtanh.pop %v6235
    %6237 = vst [vmem:[%s5592] sm:$0xff] %v6236
    %v6238 = vld [vmem:[#allocation2] sm:$0xff]
    %v6239 = vld [vmem:[#allocation2 + $0x8] sm:$0xff]
    %v6240 = vld [vmem:[#allocation2 + $0x10] sm:$0xff]
    %v6241 = vld [vmem:[#allocation2 + $0x18] sm:$0xff]
    %v6242 = vld [vmem:[#allocation2 + $0x20] sm:$0xff]
    %v6243 = vld [vmem:[#allocation2 + $0x28] sm:$0xff]
    %v6244 = vld [vmem:[#allocation2 + $0x30] sm:$0xff]
    %v6245 = vld [vmem:[#allocation2 + $0x38] sm:$0xff]
    %v6246 = vld [vmem:[#allocation10] sm:$0xff]
    %v6247 = vld [vmem:[#allocation10 + $0x8] sm:$0xff]
    %v6248 = vld [vmem:[#allocation10 + $0x10] sm:$0xff]
    %v6249 = vld [vmem:[#allocation10 + $0x18] sm:$0xff]
    %v6250 = vld [vmem:[#allocation10 + $0x20] sm:$0xff]
    %v6251 = vld [vmem:[#allocation10 + $0x28] sm:$0xff]
    %v6252 = vld [vmem:[#allocation10 + $0x30] sm:$0xff]
    %v6253 = vld [vmem:[#allocation10 + $0x38] sm:$0xff]
    %v6254 = vld [vmem:[#allocation10 + $0x40] sm:$0xff]
    %v6255 = vld [vmem:[#allocation10 + $0x48] sm:$0xff]
    %v6256 = vld [vmem:[#allocation10 + $0x50] sm:$0xff]
    %v6257 = vld [vmem:[#allocation10 + $0x58] sm:$0xff]
    %v6258 = vld [vmem:[#allocation10 + $0x60] sm:$0xff]
    %v6259 = vld [vmem:[#allocation10 + $0x68] sm:$0xff]
    %v6260 = vld [vmem:[#allocation10 + $0x70] sm:$0xff]
    %v6261 = vld [vmem:[#allocation10 + $0x78] sm:$0xff]
    %v6262 = vld [vmem:[%s5] sm:$0x1]
    %v6264 = vlaneseq
    %v6265 = vshrl.u32 %v6264, 7
    %v6266 = vsub.s32 0, %v6265
    %v6267 = vrot.slane %v6262, %v6266
    %6269 = vmatprep.subr.mxu0 0.0
    %v6270 = vand.u32 %v6246, 4294901760
    %6271 = vmatpush1.msra.mxu0 %v6270
    %6272 = vmatprep.subr.mxu0 0.0
    %v6273 = vand.u32 %v6247, 4294901760
    %6274 = vmatpush1.msra.mxu0 %v6273
    %6275 = vmatprep.subr.mxu0 0.0
    %v6276 = vand.u32 %v6248, 4294901760
    %6277 = vmatpush1.msra.mxu0 %v6276
    %6278 = vmatprep.subr.mxu0 0.0
    %v6279 = vand.u32 %v6249, 4294901760
    %6280 = vmatpush1.msra.mxu0 %v6279
    %6281 = vmatprep.subr.mxu0 0.0
    %v6282 = vand.u32 %v6250, 4294901760
    %6283 = vmatpush1.msra.mxu0 %v6282
    %6284 = vmatprep.subr.mxu0 0.0
    %v6285 = vand.u32 %v6251, 4294901760
    %6286 = vmatpush1.msra.mxu0 %v6285
    %6287 = vmatprep.subr.mxu0 0.0
    %v6288 = vand.u32 %v6252, 4294901760
    %6289 = vmatpush1.msra.mxu0 %v6288
    %6290 = vmatprep.subr.mxu0 0.0
    %v6291 = vand.u32 %v6253, 4294901760
    %6292 = vmatpush1.msra.mxu0 %v6291
    %6293 = vmatprep.subr.mxu0 0.0
    %v6294 = vand.u32 %v6254, 4294901760
    %6295 = vmatpush1.msra.mxu0 %v6294
    %6296 = vmatprep.subr.mxu0 0.0
    %v6297 = vand.u32 %v6255, 4294901760
    %6298 = vmatpush1.msra.mxu0 %v6297
    %6299 = vmatprep.subr.mxu0 0.0
    %v6300 = vand.u32 %v6256, 4294901760
    %6301 = vmatpush1.msra.mxu0 %v6300
    %6302 = vmatprep.subr.mxu0 0.0
    %v6303 = vand.u32 %v6257, 4294901760
    %6304 = vmatpush1.msra.mxu0 %v6303
    %6305 = vmatprep.subr.mxu0 0.0
    %v6306 = vand.u32 %v6258, 4294901760
    %6307 = vmatpush1.msra.mxu0 %v6306
    %6308 = vmatprep.subr.mxu0 0.0
    %v6309 = vand.u32 %v6259, 4294901760
    %6310 = vmatpush1.msra.mxu0 %v6309
    %6311 = vmatprep.subr.mxu0 0.0
    %v6312 = vand.u32 %v6260, 4294901760
    %6313 = vmatpush1.msra.mxu0 %v6312
    %6314 = vmatprep.subr.mxu0 0.0
    %v6315 = vand.u32 %v6261, 4294901760
    %6316 = vmatpush1.msra.mxu0 %v6315
    %6317 = vmatprep.subr.mxu0 0.0
    %6318 = vmatpush1.msra.mxu0 0.0
    %6319 = vmatprep.subr.mxu0 0.0
    %6320 = vmatpush1.msra.mxu0 0.0
    %6321 = vmatprep.subr.mxu0 0.0
    %6322 = vmatpush1.msra.mxu0 0.0
    %6323 = vmatprep.subr.mxu0 0.0
    %6324 = vmatpush1.msra.mxu0 0.0
    %6325 = vmatprep.subr.mxu0 0.0
    %6326 = vmatpush1.msra.mxu0 0.0
    %6327 = vmatprep.subr.mxu0 0.0
    %6328 = vmatpush1.msra.mxu0 0.0
    %6329 = vmatprep.subr.mxu0 0.0
    %6330 = vmatpush1.msra.mxu0 0.0
    %6331 = vmatprep.subr.mxu0 0.0
    %6332 = vmatpush1.msra.mxu0 0.0
    %6333 = vmatprep.subr.mxu0 0.0
    %6334 = vmatpush1.msra.mxu0 0.0
    %6335 = vmatprep.subr.mxu0 0.0
    %6336 = vmatpush1.msra.mxu0 0.0
    %6337 = vmatprep.subr.mxu0 0.0
    %6338 = vmatpush1.msra.mxu0 0.0
    %6339 = vmatprep.subr.mxu0 0.0
    %6340 = vmatpush1.msra.mxu0 0.0
    %6341 = vmatprep.subr.mxu0 0.0
    %6342 = vmatpush1.msra.mxu0 0.0
    %6343 = vmatprep.subr.mxu0 0.0
    %6344 = vmatpush1.msra.mxu0 0.0
    %6345 = vmatprep.subr.mxu0 0.0
    %6346 = vmatpush1.msra.mxu0 0.0
    %6347 = vmatprep.subr.mxu0 0.0
    %6348 = vmatpush1.msra.mxu0 0.0
    %6349 = vmatprep.mubr.f32.mxu0 0.0
    %v6350 = vand.u32 %v6238, 4294901760
    %v6351 = vsub.f32 %v6238, %v6350
    %v6352 = vand.u32 %v6351, 4294901760
    %v6353 = vsub.f32 %v6351, %v6352
    %v6354 = vand.u32 %v6353, 4294901760
    %6355 = vmatmul.mubr.f32.gmra.mrb[0].mxu0 %v6354
    %v6356 = vpop.f32.mrb[0].mxu0
    %v6357 = vadd.f32 %v6267, %v6356
    %v6358 = vpop.f32.mrb[0].mxu0
    %6359 = vmatprep.mubr.f32.mxu0 0.0
    %v6360 = vand.u32 %v6239, 4294901760
    %v6361 = vsub.f32 %v6239, %v6360
    %v6362 = vand.u32 %v6361, 4294901760
    %v6363 = vsub.f32 %v6361, %v6362
    %v6364 = vand.u32 %v6363, 4294901760
    %6365 = vmatmul.mubr.f32.gmra.mrb[0].mxu0 %v6364
    %v6366 = vpop.f32.mrb[0].mxu0
    %v6367 = vadd.f32 %v6267, %v6366
    %v6368 = vpop.f32.mrb[0].mxu0
    %6369 = vmatprep.mubr.f32.mxu0 0.0
    %v6370 = vand.u32 %v6240, 4294901760
    %v6371 = vsub.f32 %v6240, %v6370
    %v6372 = vand.u32 %v6371, 4294901760
    %v6373 = vsub.f32 %v6371, %v6372
    %v6374 = vand.u32 %v6373, 4294901760
    %6375 = vmatmul.mubr.f32.gmra.mrb[0].mxu0 %v6374
    %v6376 = vpop.f32.mrb[0].mxu0
    %v6377 = vadd.f32 %v6267, %v6376
    %v6378 = vpop.f32.mrb[0].mxu0
    %6379 = vmatprep.mubr.f32.mxu0 0.0
    %v6380 = vand.u32 %v6241, 4294901760
    %v6381 = vsub.f32 %v6241, %v6380
    %v6382 = vand.u32 %v6381, 4294901760
    %v6383 = vsub.f32 %v6381, %v6382
    %v6384 = vand.u32 %v6383, 4294901760
    %6385 = vmatmul.mubr.f32.gmra.mrb[0].mxu0 %v6384
    %v6386 = vpop.f32.mrb[0].mxu0
    %v6387 = vadd.f32 %v6267, %v6386
    %v6388 = vpop.f32.mrb[0].mxu0
    %6389 = vmatprep.mubr.f32.mxu0 0.0
    %v6390 = vand.u32 %v6242, 4294901760
    %v6391 = vsub.f32 %v6242, %v6390
    %v6392 = vand.u32 %v6391, 4294901760
    %v6393 = vsub.f32 %v6391, %v6392
    %v6394 = vand.u32 %v6393, 4294901760
    %6395 = vmatmul.mubr.f32.gmra.mrb[0].mxu0 %v6394
    %v6396 = vpop.f32.mrb[0].mxu0
    %v6397 = vadd.f32 %v6267, %v6396
    %v6398 = vpop.f32.mrb[0].mxu0
    %6399 = vmatprep.mubr.f32.mxu0 0.0
    %v6400 = vand.u32 %v6243, 4294901760
    %v6401 = vsub.f32 %v6243, %v6400
    %v6402 = vand.u32 %v6401, 4294901760
    %v6403 = vsub.f32 %v6401, %v6402
    %v6404 = vand.u32 %v6403, 4294901760
    %6405 = vmatmul.mubr.f32.gmra.mrb[0].mxu0 %v6404
    %v6406 = vpop.f32.mrb[0].mxu0
    %v6407 = vadd.f32 %v6267, %v6406
    %v6408 = vpop.f32.mrb[0].mxu0
    %6409 = vmatprep.mubr.f32.mxu0 0.0
    %v6410 = vand.u32 %v6244, 4294901760
    %v6411 = vsub.f32 %v6244, %v6410
    %v6412 = vand.u32 %v6411, 4294901760
    %v6413 = vsub.f32 %v6411, %v6412
    %v6414 = vand.u32 %v6413, 4294901760
    %6415 = vmatmul.mubr.f32.gmra.mrb[0].mxu0 %v6414
    %v6416 = vpop.f32.mrb[0].mxu0
    %v6417 = vadd.f32 %v6267, %v6416
    %v6418 = vpop.f32.mrb[0].mxu0
    %6419 = vmatprep.mubr.f32.mxu0 0.0
    %v6420 = vand.u32 %v6245, 4294901760
    %v6421 = vsub.f32 %v6245, %v6420
    %v6422 = vand.u32 %v6421, 4294901760
    %v6423 = vsub.f32 %v6421, %v6422
    %v6424 = vand.u32 %v6423, 4294901760
    %6425 = vmatmul.mubr.f32.gmra.mrb[0].mxu0 %v6424
    %v6426 = vpop.f32.mrb[0].mxu0
    %v6427 = vadd.f32 %v6267, %v6426
    %v6428 = vpop.f32.mrb[0].mxu0
    %6429 = vdwg.mxu0
    %6430 = vmatprep.subr.mxu0 0.0
    %v6431 = vand.u32 %v6246, 4294901760
    %v6432 = vsub.f32 %v6246, %v6431
    %v6433 = vand.u32 %v6432, 4294901760
    %v6434 = vsub.f32 %v6432, %v6433
    %v6435 = vand.u32 %v6434, 4294901760
    %6436 = vmatpush1.msra.mxu0 %v6435
    %6437 = vmatprep.subr.mxu0 0.0
    %v6438 = vand.u32 %v6247, 4294901760
    %v6439 = vsub.f32 %v6247, %v6438
    %v6440 = vand.u32 %v6439, 4294901760
    %v6441 = vsub.f32 %v6439, %v6440
    %v6442 = vand.u32 %v6441, 4294901760
    %6443 = vmatpush1.msra.mxu0 %v6442
    %6444 = vmatprep.subr.mxu0 0.0
    %v6445 = vand.u32 %v6248, 4294901760
    %v6446 = vsub.f32 %v6248, %v6445
    %v6447 = vand.u32 %v6446, 4294901760
    %v6448 = vsub.f32 %v6446, %v6447
    %v6449 = vand.u32 %v6448, 4294901760
    %6450 = vmatpush1.msra.mxu0 %v6449
    %6451 = vmatprep.subr.mxu0 0.0
    %v6452 = vand.u32 %v6249, 4294901760
    %v6453 = vsub.f32 %v6249, %v6452
    %v6454 = vand.u32 %v6453, 4294901760
    %v6455 = vsub.f32 %v6453, %v6454
    %v6456 = vand.u32 %v6455, 4294901760
    %6457 = vmatpush1.msra.mxu0 %v6456
    %6458 = vmatprep.subr.mxu0 0.0
    %v6459 = vand.u32 %v6250, 4294901760
    %v6460 = vsub.f32 %v6250, %v6459
    %v6461 = vand.u32 %v6460, 4294901760
    %v6462 = vsub.f32 %v6460, %v6461
    %v6463 = vand.u32 %v6462, 4294901760
    %6464 = vmatpush1.msra.mxu0 %v6463
    %6465 = vmatprep.subr.mxu0 0.0
    %v6466 = vand.u32 %v6251, 4294901760
    %v6467 = vsub.f32 %v6251, %v6466
    %v6468 = vand.u32 %v6467, 4294901760
    %v6469 = vsub.f32 %v6467, %v6468
    %v6470 = vand.u32 %v6469, 4294901760
    %6471 = vmatpush1.msra.mxu0 %v6470
    %6472 = vmatprep.subr.mxu0 0.0
    %v6473 = vand.u32 %v6252, 4294901760
    %v6474 = vsub.f32 %v6252, %v6473
    %v6475 = vand.u32 %v6474, 4294901760
    %v6476 = vsub.f32 %v6474, %v6475
    %v6477 = vand.u32 %v6476, 4294901760
    %6478 = vmatpush1.msra.mxu0 %v6477
    %6479 = vmatprep.subr.mxu0 0.0
    %v6480 = vand.u32 %v6253, 4294901760
    %v6481 = vsub.f32 %v6253, %v6480
    %v6482 = vand.u32 %v6481, 4294901760
    %v6483 = vsub.f32 %v6481, %v6482
    %v6484 = vand.u32 %v6483, 4294901760
    %6485 = vmatpush1.msra.mxu0 %v6484
    %6486 = vmatprep.subr.mxu0 0.0
    %v6487 = vand.u32 %v6254, 4294901760
    %v6488 = vsub.f32 %v6254, %v6487
    %v6489 = vand.u32 %v6488, 4294901760
    %v6490 = vsub.f32 %v6488, %v6489
    %v6491 = vand.u32 %v6490, 4294901760
    %6492 = vmatpush1.msra.mxu0 %v6491
    %6493 = vmatprep.subr.mxu0 0.0
    %v6494 = vand.u32 %v6255, 4294901760
    %v6495 = vsub.f32 %v6255, %v6494
    %v6496 = vand.u32 %v6495, 4294901760
    %v6497 = vsub.f32 %v6495, %v6496
    %v6498 = vand.u32 %v6497, 4294901760
    %6499 = vmatpush1.msra.mxu0 %v6498
    %6500 = vmatprep.subr.mxu0 0.0
    %v6501 = vand.u32 %v6256, 4294901760
    %v6502 = vsub.f32 %v6256, %v6501
    %v6503 = vand.u32 %v6502, 4294901760
    %v6504 = vsub.f32 %v6502, %v6503
    %v6505 = vand.u32 %v6504, 4294901760
    %6506 = vmatpush1.msra.mxu0 %v6505
    %6507 = vmatprep.subr.mxu0 0.0
    %v6508 = vand.u32 %v6257, 4294901760
    %v6509 = vsub.f32 %v6257, %v6508
    %v6510 = vand.u32 %v6509, 4294901760
    %v6511 = vsub.f32 %v6509, %v6510
    %v6512 = vand.u32 %v6511, 4294901760
    %6513 = vmatpush1.msra.mxu0 %v6512
    %6514 = vmatprep.subr.mxu0 0.0
    %v6515 = vand.u32 %v6258, 4294901760
    %v6516 = vsub.f32 %v6258, %v6515
    %v6517 = vand.u32 %v6516, 4294901760
    %v6518 = vsub.f32 %v6516, %v6517
    %v6519 = vand.u32 %v6518, 4294901760
    %6520 = vmatpush1.msra.mxu0 %v6519
    %6521 = vmatprep.subr.mxu0 0.0
    %v6522 = vand.u32 %v6259, 4294901760
    %v6523 = vsub.f32 %v6259, %v6522
    %v6524 = vand.u32 %v6523, 4294901760
    %v6525 = vsub.f32 %v6523, %v6524
    %v6526 = vand.u32 %v6525, 4294901760
    %6527 = vmatpush1.msra.mxu0 %v6526
    %6528 = vmatprep.subr.mxu0 0.0
    %v6529 = vand.u32 %v6260, 4294901760
    %v6530 = vsub.f32 %v6260, %v6529
    %v6531 = vand.u32 %v6530, 4294901760
    %v6532 = vsub.f32 %v6530, %v6531
    %v6533 = vand.u32 %v6532, 4294901760
    %6534 = vmatpush1.msra.mxu0 %v6533
    %6535 = vmatprep.subr.mxu0 0.0
    %v6536 = vand.u32 %v6261, 4294901760
    %v6537 = vsub.f32 %v6261, %v6536
    %v6538 = vand.u32 %v6537, 4294901760
    %v6539 = vsub.f32 %v6537, %v6538
    %v6540 = vand.u32 %v6539, 4294901760
    %6541 = vmatpush1.msra.mxu0 %v6540
    %6542 = vmatprep.subr.mxu0 0.0
    %6543 = vmatpush1.msra.mxu0 0.0
    %6544 = vmatprep.subr.mxu0 0.0
    %6545 = vmatpush1.msra.mxu0 0.0
    %6546 = vmatprep.subr.mxu0 0.0
    %6547 = vmatpush1.msra.mxu0 0.0
    %6548 = vmatprep.subr.mxu0 0.0
    %6549 = vmatpush1.msra.mxu0 0.0
    %6550 = vmatprep.subr.mxu0 0.0
    %6551 = vmatpush1.msra.mxu0 0.0
    %6552 = vmatprep.subr.mxu0 0.0
    %6553 = vmatpush1.msra.mxu0 0.0
    %6554 = vmatprep.subr.mxu0 0.0
    %6555 = vmatpush1.msra.mxu0 0.0
    %6556 = vmatprep.subr.mxu0 0.0
    %6557 = vmatpush1.msra.mxu0 0.0
    %6558 = vmatprep.subr.mxu0 0.0
    %6559 = vmatpush1.msra.mxu0 0.0
    %6560 = vmatprep.subr.mxu0 0.0
    %6561 = vmatpush1.msra.mxu0 0.0
    %6562 = vmatprep.subr.mxu0 0.0
    %6563 = vmatpush1.msra.mxu0 0.0
    %6564 = vmatprep.subr.mxu0 0.0
    %6565 = vmatpush1.msra.mxu0 0.0
    %6566 = vmatprep.subr.mxu0 0.0
    %6567 = vmatpush1.msra.mxu0 0.0
    %6568 = vmatprep.subr.mxu0 0.0
    %6569 = vmatpush1.msra.mxu0 0.0
    %6570 = vmatprep.subr.mxu0 0.0
    %6571 = vmatpush1.msra.mxu0 0.0
    %6572 = vmatprep.subr.mxu0 0.0
    %6573 = vmatpush1.msra.mxu0 0.0
    %6574 = vmatprep.mubr.f32.mxu0 0.0
    %v6575 = vand.u32 %v6238, 4294901760
    %6576 = vmatmul.mubr.f32.gmra.mrb[0].mxu0 %v6575
    %v6577 = vpop.f32.mrb[0].mxu0
    %v6578 = vadd.f32 %v6357, %v6577
    %v6579 = vpop.f32.mrb[0].mxu0
    %6580 = vmatprep.mubr.f32.mxu0 0.0
    %v6581 = vand.u32 %v6239, 4294901760
    %6582 = vmatmul.mubr.f32.gmra.mrb[0].mxu0 %v6581
    %v6583 = vpop.f32.mrb[0].mxu0
    %v6584 = vadd.f32 %v6367, %v6583
    %v6585 = vpop.f32.mrb[0].mxu0
    %6586 = vmatprep.mubr.f32.mxu0 0.0
    %v6587 = vand.u32 %v6240, 4294901760
    %6588 = vmatmul.mubr.f32.gmra.mrb[0].mxu0 %v6587
    %v6589 = vpop.f32.mrb[0].mxu0
    %v6590 = vadd.f32 %v6377, %v6589
    %v6591 = vpop.f32.mrb[0].mxu0
    %6592 = vmatprep.mubr.f32.mxu0 0.0
    %v6593 = vand.u32 %v6241, 4294901760
    %6594 = vmatmul.mubr.f32.gmra.mrb[0].mxu0 %v6593
    %v6595 = vpop.f32.mrb[0].mxu0
    %v6596 = vadd.f32 %v6387, %v6595
    %v6597 = vpop.f32.mrb[0].mxu0
    %6598 = vmatprep.mubr.f32.mxu0 0.0
    %v6599 = vand.u32 %v6242, 4294901760
    %6600 = vmatmul.mubr.f32.gmra.mrb[0].mxu0 %v6599
    %v6601 = vpop.f32.mrb[0].mxu0
    %v6602 = vadd.f32 %v6397, %v6601
    %v6603 = vpop.f32.mrb[0].mxu0
    %6604 = vmatprep.mubr.f32.mxu0 0.0
    %v6605 = vand.u32 %v6243, 4294901760
    %6606 = vmatmul.mubr.f32.gmra.mrb[0].mxu0 %v6605
    %v6607 = vpop.f32.mrb[0].mxu0
    %v6608 = vadd.f32 %v6407, %v6607
    %v6609 = vpop.f32.mrb[0].mxu0
    %6610 = vmatprep.mubr.f32.mxu0 0.0
    %v6611 = vand.u32 %v6244, 4294901760
    %6612 = vmatmul.mubr.f32.gmra.mrb[0].mxu0 %v6611
    %v6613 = vpop.f32.mrb[0].mxu0
    %v6614 = vadd.f32 %v6417, %v6613
    %v6615 = vpop.f32.mrb[0].mxu0
    %6616 = vmatprep.mubr.f32.mxu0 0.0
    %v6617 = vand.u32 %v6245, 4294901760
    %6618 = vmatmul.mubr.f32.gmra.mrb[0].mxu0 %v6617
    %v6619 = vpop.f32.mrb[0].mxu0
    %v6620 = vadd.f32 %v6427, %v6619
    %v6621 = vpop.f32.mrb[0].mxu0
    %6622 = vdwg.mxu0
    %6623 = vmatprep.subr.mxu0 0.0
    %v6624 = vand.u32 %v6246, 4294901760
    %v6625 = vsub.f32 %v6246, %v6624
    %6626 = vmatpush1.msra.mxu0 %v6625
    %6627 = vmatprep.subr.mxu0 0.0
    %v6628 = vand.u32 %v6247, 4294901760
    %v6629 = vsub.f32 %v6247, %v6628
    %6630 = vmatpush1.msra.mxu0 %v6629
    %6631 = vmatprep.subr.mxu0 0.0
    %v6632 = vand.u32 %v6248, 4294901760
    %v6633 = vsub.f32 %v6248, %v6632
    %6634 = vmatpush1.msra.mxu0 %v6633
    %6635 = vmatprep.subr.mxu0 0.0
    %v6636 = vand.u32 %v6249, 4294901760
    %v6637 = vsub.f32 %v6249, %v6636
    %6638 = vmatpush1.msra.mxu0 %v6637
    %6639 = vmatprep.subr.mxu0 0.0
    %v6640 = vand.u32 %v6250, 4294901760
    %v6641 = vsub.f32 %v6250, %v6640
    %6642 = vmatpush1.msra.mxu0 %v6641
    %6643 = vmatprep.subr.mxu0 0.0
    %v6644 = vand.u32 %v6251, 4294901760
    %v6645 = vsub.f32 %v6251, %v6644
    %6646 = vmatpush1.msra.mxu0 %v6645
    %6647 = vmatprep.subr.mxu0 0.0
    %v6648 = vand.u32 %v6252, 4294901760
    %v6649 = vsub.f32 %v6252, %v6648
    %6650 = vmatpush1.msra.mxu0 %v6649
    %6651 = vmatprep.subr.mxu0 0.0
    %v6652 = vand.u32 %v6253, 4294901760
    %v6653 = vsub.f32 %v6253, %v6652
    %6654 = vmatpush1.msra.mxu0 %v6653
    %6655 = vmatprep.subr.mxu0 0.0
    %v6656 = vand.u32 %v6254, 4294901760
    %v6657 = vsub.f32 %v6254, %v6656
    %6658 = vmatpush1.msra.mxu0 %v6657
    %6659 = vmatprep.subr.mxu0 0.0
    %v6660 = vand.u32 %v6255, 4294901760
    %v6661 = vsub.f32 %v6255, %v6660
    %6662 = vmatpush1.msra.mxu0 %v6661
    %6663 = vmatprep.subr.mxu0 0.0
    %v6664 = vand.u32 %v6256, 4294901760
    %v6665 = vsub.f32 %v6256, %v6664
    %6666 = vmatpush1.msra.mxu0 %v6665
    %6667 = vmatprep.subr.mxu0 0.0
    %v6668 = vand.u32 %v6257, 4294901760
    %v6669 = vsub.f32 %v6257, %v6668
    %6670 = vmatpush1.msra.mxu0 %v6669
    %6671 = vmatprep.subr.mxu0 0.0
    %v6672 = vand.u32 %v6258, 4294901760
    %v6673 = vsub.f32 %v6258, %v6672
    %6674 = vmatpush1.msra.mxu0 %v6673
    %6675 = vmatprep.subr.mxu0 0.0
    %v6676 = vand.u32 %v6259, 4294901760
    %v6677 = vsub.f32 %v6259, %v6676
    %6678 = vmatpush1.msra.mxu0 %v6677
    %6679 = vmatprep.subr.mxu0 0.0
    %v6680 = vand.u32 %v6260, 4294901760
    %v6681 = vsub.f32 %v6260, %v6680
    %6682 = vmatpush1.msra.mxu0 %v6681
    %6683 = vmatprep.subr.mxu0 0.0
    %v6684 = vand.u32 %v6261, 4294901760
    %v6685 = vsub.f32 %v6261, %v6684
    %6686 = vmatpush1.msra.mxu0 %v6685
    %6687 = vmatprep.subr.mxu0 0.0
    %6688 = vmatpush1.msra.mxu0 0.0
    %6689 = vmatprep.subr.mxu0 0.0
    %6690 = vmatpush1.msra.mxu0 0.0
    %6691 = vmatprep.subr.mxu0 0.0
    %6692 = vmatpush1.msra.mxu0 0.0
    %6693 = vmatprep.subr.mxu0 0.0
    %6694 = vmatpush1.msra.mxu0 0.0
    %6695 = vmatprep.subr.mxu0 0.0
    %6696 = vmatpush1.msra.mxu0 0.0
    %6697 = vmatprep.subr.mxu0 0.0
    %6698 = vmatpush1.msra.mxu0 0.0
    %6699 = vmatprep.subr.mxu0 0.0
    %6700 = vmatpush1.msra.mxu0 0.0
    %6701 = vmatprep.subr.mxu0 0.0
    %6702 = vmatpush1.msra.mxu0 0.0
    %6703 = vmatprep.subr.mxu0 0.0
    %6704 = vmatpush1.msra.mxu0 0.0
    %6705 = vmatprep.subr.mxu0 0.0
    %6706 = vmatpush1.msra.mxu0 0.0
    %6707 = vmatprep.subr.mxu0 0.0
    %6708 = vmatpush1.msra.mxu0 0.0
    %6709 = vmatprep.subr.mxu0 0.0
    %6710 = vmatpush1.msra.mxu0 0.0
    %6711 = vmatprep.subr.mxu0 0.0
    %6712 = vmatpush1.msra.mxu0 0.0
    %6713 = vmatprep.subr.mxu0 0.0
    %6714 = vmatpush1.msra.mxu0 0.0
    %6715 = vmatprep.subr.mxu0 0.0
    %6716 = vmatpush1.msra.mxu0 0.0
    %6717 = vmatprep.subr.mxu0 0.0
    %6718 = vmatpush1.msra.mxu0 0.0
    %6719 = vmatprep.mubr.f32.mxu0 0.0
    %v6720 = vand.u32 %v6238, 4294901760
    %v6721 = vsub.f32 %v6238, %v6720
    %6722 = vmatmul.mubr.f32.gmra.mrb[0].mxu0 %v6721
    %v6723 = vpop.f32.mrb[0].mxu0
    %v6724 = vadd.f32 %v6578, %v6723
    %v6725 = vpop.f32.mrb[0].mxu0
    %6726 = vmatprep.mubr.f32.mxu0 0.0
    %v6727 = vand.u32 %v6239, 4294901760
    %v6728 = vsub.f32 %v6239, %v6727
    %6729 = vmatmul.mubr.f32.gmra.mrb[0].mxu0 %v6728
    %v6730 = vpop.f32.mrb[0].mxu0
    %v6731 = vadd.f32 %v6584, %v6730
    %v6732 = vpop.f32.mrb[0].mxu0
    %6733 = vmatprep.mubr.f32.mxu0 0.0
    %v6734 = vand.u32 %v6240, 4294901760
    %v6735 = vsub.f32 %v6240, %v6734
    %6736 = vmatmul.mubr.f32.gmra.mrb[0].mxu0 %v6735
    %v6737 = vpop.f32.mrb[0].mxu0
    %v6738 = vadd.f32 %v6590, %v6737
    %v6739 = vpop.f32.mrb[0].mxu0
    %6740 = vmatprep.mubr.f32.mxu0 0.0
    %v6741 = vand.u32 %v6241, 4294901760
    %v6742 = vsub.f32 %v6241, %v6741
    %6743 = vmatmul.mubr.f32.gmra.mrb[0].mxu0 %v6742
    %v6744 = vpop.f32.mrb[0].mxu0
    %v6745 = vadd.f32 %v6596, %v6744
    %v6746 = vpop.f32.mrb[0].mxu0
    %6747 = vmatprep.mubr.f32.mxu0 0.0
    %v6748 = vand.u32 %v6242, 4294901760
    %v6749 = vsub.f32 %v6242, %v6748
    %6750 = vmatmul.mubr.f32.gmra.mrb[0].mxu0 %v6749
    %v6751 = vpop.f32.mrb[0].mxu0
    %v6752 = vadd.f32 %v6602, %v6751
    %v6753 = vpop.f32.mrb[0].mxu0
    %6754 = vmatprep.mubr.f32.mxu0 0.0
    %v6755 = vand.u32 %v6243, 4294901760
    %v6756 = vsub.f32 %v6243, %v6755
    %6757 = vmatmul.mubr.f32.gmra.mrb[0].mxu0 %v6756
    %v6758 = vpop.f32.mrb[0].mxu0
    %v6759 = vadd.f32 %v6608, %v6758
    %v6760 = vpop.f32.mrb[0].mxu0
    %6761 = vmatprep.mubr.f32.mxu0 0.0
    %v6762 = vand.u32 %v6244, 4294901760
    %v6763 = vsub.f32 %v6244, %v6762
    %6764 = vmatmul.mubr.f32.gmra.mrb[0].mxu0 %v6763
    %v6765 = vpop.f32.mrb[0].mxu0
    %v6766 = vadd.f32 %v6614, %v6765
    %v6767 = vpop.f32.mrb[0].mxu0
    %6768 = vmatprep.mubr.f32.mxu0 0.0
    %v6769 = vand.u32 %v6245, 4294901760
    %v6770 = vsub.f32 %v6245, %v6769
    %6771 = vmatmul.mubr.f32.gmra.mrb[0].mxu0 %v6770
    %v6772 = vpop.f32.mrb[0].mxu0
    %v6773 = vadd.f32 %v6620, %v6772
    %v6774 = vpop.f32.mrb[0].mxu0
    %6775 = vdwg.mxu0
    %6776 = vmatprep.subr.mxu0 0.0
    %v6777 = vand.u32 %v6246, 4294901760
    %6778 = vmatpush1.msra.mxu0 %v6777
    %6779 = vmatprep.subr.mxu0 0.0
    %v6780 = vand.u32 %v6247, 4294901760
    %6781 = vmatpush1.msra.mxu0 %v6780
    %6782 = vmatprep.subr.mxu0 0.0
    %v6783 = vand.u32 %v6248, 4294901760
    %6784 = vmatpush1.msra.mxu0 %v6783
    %6785 = vmatprep.subr.mxu0 0.0
    %v6786 = vand.u32 %v6249, 4294901760
    %6787 = vmatpush1.msra.mxu0 %v6786
    %6788 = vmatprep.subr.mxu0 0.0
    %v6789 = vand.u32 %v6250, 4294901760
    %6790 = vmatpush1.msra.mxu0 %v6789
    %6791 = vmatprep.subr.mxu0 0.0
    %v6792 = vand.u32 %v6251, 4294901760
    %6793 = vmatpush1.msra.mxu0 %v6792
    %6794 = vmatprep.subr.mxu0 0.0
    %v6795 = vand.u32 %v6252, 4294901760
    %6796 = vmatpush1.msra.mxu0 %v6795
    %6797 = vmatprep.subr.mxu0 0.0
    %v6798 = vand.u32 %v6253, 4294901760
    %6799 = vmatpush1.msra.mxu0 %v6798
    %6800 = vmatprep.subr.mxu0 0.0
    %v6801 = vand.u32 %v6254, 4294901760
    %6802 = vmatpush1.msra.mxu0 %v6801
    %6803 = vmatprep.subr.mxu0 0.0
    %v6804 = vand.u32 %v6255, 4294901760
    %6805 = vmatpush1.msra.mxu0 %v6804
    %6806 = vmatprep.subr.mxu0 0.0
    %v6807 = vand.u32 %v6256, 4294901760
    %6808 = vmatpush1.msra.mxu0 %v6807
    %6809 = vmatprep.subr.mxu0 0.0
    %v6810 = vand.u32 %v6257, 4294901760
    %6811 = vmatpush1.msra.mxu0 %v6810
    %6812 = vmatprep.subr.mxu0 0.0
    %v6813 = vand.u32 %v6258, 4294901760
    %6814 = vmatpush1.msra.mxu0 %v6813
    %6815 = vmatprep.subr.mxu0 0.0
    %v6816 = vand.u32 %v6259, 4294901760
    %6817 = vmatpush1.msra.mxu0 %v6816
    %6818 = vmatprep.subr.mxu0 0.0
    %v6819 = vand.u32 %v6260, 4294901760
    %6820 = vmatpush1.msra.mxu0 %v6819
    %6821 = vmatprep.subr.mxu0 0.0
    %v6822 = vand.u32 %v6261, 4294901760
    %6823 = vmatpush1.msra.mxu0 %v6822
    %6824 = vmatprep.subr.mxu0 0.0
    %6825 = vmatpush1.msra.mxu0 0.0
    %6826 = vmatprep.subr.mxu0 0.0
    %6827 = vmatpush1.msra.mxu0 0.0
    %6828 = vmatprep.subr.mxu0 0.0
    %6829 = vmatpush1.msra.mxu0 0.0
    %6830 = vmatprep.subr.mxu0 0.0
    %6831 = vmatpush1.msra.mxu0 0.0
    %6832 = vmatprep.subr.mxu0 0.0
    %6833 = vmatpush1.msra.mxu0 0.0
    %6834 = vmatprep.subr.mxu0 0.0
    %6835 = vmatpush1.msra.mxu0 0.0
    %6836 = vmatprep.subr.mxu0 0.0
    %6837 = vmatpush1.msra.mxu0 0.0
    %6838 = vmatprep.subr.mxu0 0.0
    %6839 = vmatpush1.msra.mxu0 0.0
    %6840 = vmatprep.subr.mxu0 0.0
    %6841 = vmatpush1.msra.mxu0 0.0
    %6842 = vmatprep.subr.mxu0 0.0
    %6843 = vmatpush1.msra.mxu0 0.0
    %6844 = vmatprep.subr.mxu0 0.0
    %6845 = vmatpush1.msra.mxu0 0.0
    %6846 = vmatprep.subr.mxu0 0.0
    %6847 = vmatpush1.msra.mxu0 0.0
    %6848 = vmatprep.subr.mxu0 0.0
    %6849 = vmatpush1.msra.mxu0 0.0
    %6850 = vmatprep.subr.mxu0 0.0
    %6851 = vmatpush1.msra.mxu0 0.0
    %6852 = vmatprep.subr.mxu0 0.0
    %6853 = vmatpush1.msra.mxu0 0.0
    %6854 = vmatprep.subr.mxu0 0.0
    %6855 = vmatpush1.msra.mxu0 0.0
    %6856 = vmatprep.mubr.f32.mxu0 0.0
    %v6857 = vand.u32 %v6238, 4294901760
    %v6858 = vsub.f32 %v6238, %v6857
    %v6859 = vand.u32 %v6858, 4294901760
    %6860 = vmatmul.mubr.f32.gmra.mrb[0].mxu0 %v6859
    %v6861 = vpop.f32.mrb[0].mxu0
    %v6862 = vadd.f32 %v6724, %v6861
    %v6863 = vpop.f32.mrb[0].mxu0
    %6864 = vmatprep.mubr.f32.mxu0 0.0
    %v6865 = vand.u32 %v6239, 4294901760
    %v6866 = vsub.f32 %v6239, %v6865
    %v6867 = vand.u32 %v6866, 4294901760
    %6868 = vmatmul.mubr.f32.gmra.mrb[0].mxu0 %v6867
    %v6869 = vpop.f32.mrb[0].mxu0
    %v6870 = vadd.f32 %v6731, %v6869
    %v6871 = vpop.f32.mrb[0].mxu0
    %6872 = vmatprep.mubr.f32.mxu0 0.0
    %v6873 = vand.u32 %v6240, 4294901760
    %v6874 = vsub.f32 %v6240, %v6873
    %v6875 = vand.u32 %v6874, 4294901760
    %6876 = vmatmul.mubr.f32.gmra.mrb[0].mxu0 %v6875
    %v6877 = vpop.f32.mrb[0].mxu0
    %v6878 = vadd.f32 %v6738, %v6877
    %v6879 = vpop.f32.mrb[0].mxu0
    %6880 = vmatprep.mubr.f32.mxu0 0.0
    %v6881 = vand.u32 %v6241, 4294901760
    %v6882 = vsub.f32 %v6241, %v6881
    %v6883 = vand.u32 %v6882, 4294901760
    %6884 = vmatmul.mubr.f32.gmra.mrb[0].mxu0 %v6883
    %v6885 = vpop.f32.mrb[0].mxu0
    %v6886 = vadd.f32 %v6745, %v6885
    %v6887 = vpop.f32.mrb[0].mxu0
    %6888 = vmatprep.mubr.f32.mxu0 0.0
    %v6889 = vand.u32 %v6242, 4294901760
    %v6890 = vsub.f32 %v6242, %v6889
    %v6891 = vand.u32 %v6890, 4294901760
    %6892 = vmatmul.mubr.f32.gmra.mrb[0].mxu0 %v6891
    %v6893 = vpop.f32.mrb[0].mxu0
    %v6894 = vadd.f32 %v6752, %v6893
    %v6895 = vpop.f32.mrb[0].mxu0
    %6896 = vmatprep.mubr.f32.mxu0 0.0
    %v6897 = vand.u32 %v6243, 4294901760
    %v6898 = vsub.f32 %v6243, %v6897
    %v6899 = vand.u32 %v6898, 4294901760
    %6900 = vmatmul.mubr.f32.gmra.mrb[0].mxu0 %v6899
    %v6901 = vpop.f32.mrb[0].mxu0
    %v6902 = vadd.f32 %v6759, %v6901
    %v6903 = vpop.f32.mrb[0].mxu0
    %6904 = vmatprep.mubr.f32.mxu0 0.0
    %v6905 = vand.u32 %v6244, 4294901760
    %v6906 = vsub.f32 %v6244, %v6905
    %v6907 = vand.u32 %v6906, 4294901760
    %6908 = vmatmul.mubr.f32.gmra.mrb[0].mxu0 %v6907
    %v6909 = vpop.f32.mrb[0].mxu0
    %v6910 = vadd.f32 %v6766, %v6909
    %v6911 = vpop.f32.mrb[0].mxu0
    %6912 = vmatprep.mubr.f32.mxu0 0.0
    %v6913 = vand.u32 %v6245, 4294901760
    %v6914 = vsub.f32 %v6245, %v6913
    %v6915 = vand.u32 %v6914, 4294901760
    %6916 = vmatmul.mubr.f32.gmra.mrb[0].mxu0 %v6915
    %v6917 = vpop.f32.mrb[0].mxu0
    %v6918 = vadd.f32 %v6773, %v6917
    %v6919 = vpop.f32.mrb[0].mxu0
    %6920 = vdwg.mxu0
    %6921 = vmatprep.subr.mxu0 0.0
    %v6922 = vand.u32 %v6246, 4294901760
    %v6923 = vsub.f32 %v6246, %v6922
    %v6924 = vand.u32 %v6923, 4294901760
    %6925 = vmatpush1.msra.mxu0 %v6924
    %6926 = vmatprep.subr.mxu0 0.0
    %v6927 = vand.u32 %v6247, 4294901760
    %v6928 = vsub.f32 %v6247, %v6927
    %v6929 = vand.u32 %v6928, 4294901760
    %6930 = vmatpush1.msra.mxu0 %v6929
    %6931 = vmatprep.subr.mxu0 0.0
    %v6932 = vand.u32 %v6248, 4294901760
    %v6933 = vsub.f32 %v6248, %v6932
    %v6934 = vand.u32 %v6933, 4294901760
    %6935 = vmatpush1.msra.mxu0 %v6934
    %6936 = vmatprep.subr.mxu0 0.0
    %v6937 = vand.u32 %v6249, 4294901760
    %v6938 = vsub.f32 %v6249, %v6937
    %v6939 = vand.u32 %v6938, 4294901760
    %6940 = vmatpush1.msra.mxu0 %v6939
    %6941 = vmatprep.subr.mxu0 0.0
    %v6942 = vand.u32 %v6250, 4294901760
    %v6943 = vsub.f32 %v6250, %v6942
    %v6944 = vand.u32 %v6943, 4294901760
    %6945 = vmatpush1.msra.mxu0 %v6944
    %6946 = vmatprep.subr.mxu0 0.0
    %v6947 = vand.u32 %v6251, 4294901760
    %v6948 = vsub.f32 %v6251, %v6947
    %v6949 = vand.u32 %v6948, 4294901760
    %6950 = vmatpush1.msra.mxu0 %v6949
    %6951 = vmatprep.subr.mxu0 0.0
    %v6952 = vand.u32 %v6252, 4294901760
    %v6953 = vsub.f32 %v6252, %v6952
    %v6954 = vand.u32 %v6953, 4294901760
    %6955 = vmatpush1.msra.mxu0 %v6954
    %6956 = vmatprep.subr.mxu0 0.0
    %v6957 = vand.u32 %v6253, 4294901760
    %v6958 = vsub.f32 %v6253, %v6957
    %v6959 = vand.u32 %v6958, 4294901760
    %6960 = vmatpush1.msra.mxu0 %v6959
    %6961 = vmatprep.subr.mxu0 0.0
    %v6962 = vand.u32 %v6254, 4294901760
    %v6963 = vsub.f32 %v6254, %v6962
    %v6964 = vand.u32 %v6963, 4294901760
    %6965 = vmatpush1.msra.mxu0 %v6964
    %6966 = vmatprep.subr.mxu0 0.0
    %v6967 = vand.u32 %v6255, 4294901760
    %v6968 = vsub.f32 %v6255, %v6967
    %v6969 = vand.u32 %v6968, 4294901760
    %6970 = vmatpush1.msra.mxu0 %v6969
    %6971 = vmatprep.subr.mxu0 0.0
    %v6972 = vand.u32 %v6256, 4294901760
    %v6973 = vsub.f32 %v6256, %v6972
    %v6974 = vand.u32 %v6973, 4294901760
    %6975 = vmatpush1.msra.mxu0 %v6974
    %6976 = vmatprep.subr.mxu0 0.0
    %v6977 = vand.u32 %v6257, 4294901760
    %v6978 = vsub.f32 %v6257, %v6977
    %v6979 = vand.u32 %v6978, 4294901760
    %6980 = vmatpush1.msra.mxu0 %v6979
    %6981 = vmatprep.subr.mxu0 0.0
    %v6982 = vand.u32 %v6258, 4294901760
    %v6983 = vsub.f32 %v6258, %v6982
    %v6984 = vand.u32 %v6983, 4294901760
    %6985 = vmatpush1.msra.mxu0 %v6984
    %6986 = vmatprep.subr.mxu0 0.0
    %v6987 = vand.u32 %v6259, 4294901760
    %v6988 = vsub.f32 %v6259, %v6987
    %v6989 = vand.u32 %v6988, 4294901760
    %6990 = vmatpush1.msra.mxu0 %v6989
    %6991 = vmatprep.subr.mxu0 0.0
    %v6992 = vand.u32 %v6260, 4294901760
    %v6993 = vsub.f32 %v6260, %v6992
    %v6994 = vand.u32 %v6993, 4294901760
    %6995 = vmatpush1.msra.mxu0 %v6994
    %6996 = vmatprep.subr.mxu0 0.0
    %v6997 = vand.u32 %v6261, 4294901760
    %v6998 = vsub.f32 %v6261, %v6997
    %v6999 = vand.u32 %v6998, 4294901760
    %7000 = vmatpush1.msra.mxu0 %v6999
    %7001 = vmatprep.subr.mxu0 0.0
    %7002 = vmatpush1.msra.mxu0 0.0
    %7003 = vmatprep.subr.mxu0 0.0
    %7004 = vmatpush1.msra.mxu0 0.0
    %7005 = vmatprep.subr.mxu0 0.0
    %7006 = vmatpush1.msra.mxu0 0.0
    %7007 = vmatprep.subr.mxu0 0.0
    %7008 = vmatpush1.msra.mxu0 0.0
    %7009 = vmatprep.subr.mxu0 0.0
    %7010 = vmatpush1.msra.mxu0 0.0
    %7011 = vmatprep.subr.mxu0 0.0
    %7012 = vmatpush1.msra.mxu0 0.0
    %7013 = vmatprep.subr.mxu0 0.0
    %7014 = vmatpush1.msra.mxu0 0.0
    %7015 = vmatprep.subr.mxu0 0.0
    %7016 = vmatpush1.msra.mxu0 0.0
    %7017 = vmatprep.subr.mxu0 0.0
    %7018 = vmatpush1.msra.mxu0 0.0
    %7019 = vmatprep.subr.mxu0 0.0
    %7020 = vmatpush1.msra.mxu0 0.0
    %7021 = vmatprep.subr.mxu0 0.0
    %7022 = vmatpush1.msra.mxu0 0.0
    %7023 = vmatprep.subr.mxu0 0.0
    %7024 = vmatpush1.msra.mxu0 0.0
    %7025 = vmatprep.subr.mxu0 0.0
    %7026 = vmatpush1.msra.mxu0 0.0
    %7027 = vmatprep.subr.mxu0 0.0
    %7028 = vmatpush1.msra.mxu0 0.0
    %7029 = vmatprep.subr.mxu0 0.0
    %7030 = vmatpush1.msra.mxu0 0.0
    %7031 = vmatprep.subr.mxu0 0.0
    %7032 = vmatpush1.msra.mxu0 0.0
    %7033 = vmatprep.mubr.f32.mxu0 0.0
    %v7034 = vand.u32 %v6238, 4294901760
    %7035 = vmatmul.mubr.f32.gmra.mrb[0].mxu0 %v7034
    %v7036 = vpop.f32.mrb[0].mxu0
    %v7037 = vadd.f32 %v6862, %v7036
    %v7038 = vpop.f32.mrb[0].mxu0
    %7039 = vmatprep.mubr.f32.mxu0 0.0
    %v7040 = vand.u32 %v6239, 4294901760
    %7041 = vmatmul.mubr.f32.gmra.mrb[0].mxu0 %v7040
    %v7042 = vpop.f32.mrb[0].mxu0
    %v7043 = vadd.f32 %v6870, %v7042
    %v7044 = vpop.f32.mrb[0].mxu0
    %7045 = vmatprep.mubr.f32.mxu0 0.0
    %v7046 = vand.u32 %v6240, 4294901760
    %7047 = vmatmul.mubr.f32.gmra.mrb[0].mxu0 %v7046
    %v7048 = vpop.f32.mrb[0].mxu0
    %v7049 = vadd.f32 %v6878, %v7048
    %v7050 = vpop.f32.mrb[0].mxu0
    %7051 = vmatprep.mubr.f32.mxu0 0.0
    %v7052 = vand.u32 %v6241, 4294901760
    %7053 = vmatmul.mubr.f32.gmra.mrb[0].mxu0 %v7052
    %v7054 = vpop.f32.mrb[0].mxu0
    %v7055 = vadd.f32 %v6886, %v7054
    %v7056 = vpop.f32.mrb[0].mxu0
    %7057 = vmatprep.mubr.f32.mxu0 0.0
    %v7058 = vand.u32 %v6242, 4294901760
    %7059 = vmatmul.mubr.f32.gmra.mrb[0].mxu0 %v7058
    %v7060 = vpop.f32.mrb[0].mxu0
    %v7061 = vadd.f32 %v6894, %v7060
    %v7062 = vpop.f32.mrb[0].mxu0
    %7063 = vmatprep.mubr.f32.mxu0 0.0
    %v7064 = vand.u32 %v6243, 4294901760
    %7065 = vmatmul.mubr.f32.gmra.mrb[0].mxu0 %v7064
    %v7066 = vpop.f32.mrb[0].mxu0
    %v7067 = vadd.f32 %v6902, %v7066
    %v7068 = vpop.f32.mrb[0].mxu0
    %7069 = vmatprep.mubr.f32.mxu0 0.0
    %v7070 = vand.u32 %v6244, 4294901760
    %7071 = vmatmul.mubr.f32.gmra.mrb[0].mxu0 %v7070
    %v7072 = vpop.f32.mrb[0].mxu0
    %v7073 = vadd.f32 %v6910, %v7072
    %v7074 = vpop.f32.mrb[0].mxu0
    %7075 = vmatprep.mubr.f32.mxu0 0.0
    %v7076 = vand.u32 %v6245, 4294901760
    %7077 = vmatmul.mubr.f32.gmra.mrb[0].mxu0 %v7076
    %v7078 = vpop.f32.mrb[0].mxu0
    %v7079 = vadd.f32 %v6918, %v7078
    %v7080 = vpop.f32.mrb[0].mxu0
    %7081 = vdwg.mxu0
    %7082 = vmatprep.subr.mxu0 0.0
    %v7083 = vand.u32 %v6246, 4294901760
    %7084 = vmatpush1.msra.mxu0 %v7083
    %7085 = vmatprep.subr.mxu0 0.0
    %v7086 = vand.u32 %v6247, 4294901760
    %7087 = vmatpush1.msra.mxu0 %v7086
    %7088 = vmatprep.subr.mxu0 0.0
    %v7089 = vand.u32 %v6248, 4294901760
    %7090 = vmatpush1.msra.mxu0 %v7089
    %7091 = vmatprep.subr.mxu0 0.0
    %v7092 = vand.u32 %v6249, 4294901760
    %7093 = vmatpush1.msra.mxu0 %v7092
    %7094 = vmatprep.subr.mxu0 0.0
    %v7095 = vand.u32 %v6250, 4294901760
    %7096 = vmatpush1.msra.mxu0 %v7095
    %7097 = vmatprep.subr.mxu0 0.0
    %v7098 = vand.u32 %v6251, 4294901760
    %7099 = vmatpush1.msra.mxu0 %v7098
    %7100 = vmatprep.subr.mxu0 0.0
    %v7101 = vand.u32 %v6252, 4294901760
    %7102 = vmatpush1.msra.mxu0 %v7101
    %7103 = vmatprep.subr.mxu0 0.0
    %v7104 = vand.u32 %v6253, 4294901760
    %7105 = vmatpush1.msra.mxu0 %v7104
    %7106 = vmatprep.subr.mxu0 0.0
    %v7107 = vand.u32 %v6254, 4294901760
    %7108 = vmatpush1.msra.mxu0 %v7107
    %7109 = vmatprep.subr.mxu0 0.0
    %v7110 = vand.u32 %v6255, 4294901760
    %7111 = vmatpush1.msra.mxu0 %v7110
    %7112 = vmatprep.subr.mxu0 0.0
    %v7113 = vand.u32 %v6256, 4294901760
    %7114 = vmatpush1.msra.mxu0 %v7113
    %7115 = vmatprep.subr.mxu0 0.0
    %v7116 = vand.u32 %v6257, 4294901760
    %7117 = vmatpush1.msra.mxu0 %v7116
    %7118 = vmatprep.subr.mxu0 0.0
    %v7119 = vand.u32 %v6258, 4294901760
    %7120 = vmatpush1.msra.mxu0 %v7119
    %7121 = vmatprep.subr.mxu0 0.0
    %v7122 = vand.u32 %v6259, 4294901760
    %7123 = vmatpush1.msra.mxu0 %v7122
    %7124 = vmatprep.subr.mxu0 0.0
    %v7125 = vand.u32 %v6260, 4294901760
    %7126 = vmatpush1.msra.mxu0 %v7125
    %7127 = vmatprep.subr.mxu0 0.0
    %v7128 = vand.u32 %v6261, 4294901760
    %7129 = vmatpush1.msra.mxu0 %v7128
    %7130 = vmatprep.subr.mxu0 0.0
    %7131 = vmatpush1.msra.mxu0 0.0
    %7132 = vmatprep.subr.mxu0 0.0
    %7133 = vmatpush1.msra.mxu0 0.0
    %7134 = vmatprep.subr.mxu0 0.0
    %7135 = vmatpush1.msra.mxu0 0.0
    %7136 = vmatprep.subr.mxu0 0.0
    %7137 = vmatpush1.msra.mxu0 0.0
    %7138 = vmatprep.subr.mxu0 0.0
    %7139 = vmatpush1.msra.mxu0 0.0
    %7140 = vmatprep.subr.mxu0 0.0
    %7141 = vmatpush1.msra.mxu0 0.0
    %7142 = vmatprep.subr.mxu0 0.0
    %7143 = vmatpush1.msra.mxu0 0.0
    %7144 = vmatprep.subr.mxu0 0.0
    %7145 = vmatpush1.msra.mxu0 0.0
    %7146 = vmatprep.subr.mxu0 0.0
    %7147 = vmatpush1.msra.mxu0 0.0
    %7148 = vmatprep.subr.mxu0 0.0
    %7149 = vmatpush1.msra.mxu0 0.0
    %7150 = vmatprep.subr.mxu0 0.0
    %7151 = vmatpush1.msra.mxu0 0.0
    %7152 = vmatprep.subr.mxu0 0.0
    %7153 = vmatpush1.msra.mxu0 0.0
    %7154 = vmatprep.subr.mxu0 0.0
    %7155 = vmatpush1.msra.mxu0 0.0
    %7156 = vmatprep.subr.mxu0 0.0
    %7157 = vmatpush1.msra.mxu0 0.0
    %7158 = vmatprep.subr.mxu0 0.0
    %7159 = vmatpush1.msra.mxu0 0.0
    %7160 = vmatprep.subr.mxu0 0.0
    %7161 = vmatpush1.msra.mxu0 0.0
    %7162 = vmatprep.mubr.f32.mxu0 0.0
    %v7163 = vand.u32 %v6238, 4294901760
    %7164 = vmatmul.mubr.f32.gmra.mrb[0].mxu0 %v7163
    %v7165 = vpop.f32.mrb[0].mxu0
    %v7166 = vadd.f32 %v7037, %v7165
    %v7167 = vpop.f32.mrb[0].mxu0
    %7168 = vmatprep.mubr.f32.mxu0 0.0
    %v7169 = vand.u32 %v6239, 4294901760
    %7170 = vmatmul.mubr.f32.gmra.mrb[0].mxu0 %v7169
    %v7171 = vpop.f32.mrb[0].mxu0
    %v7172 = vadd.f32 %v7043, %v7171
    %v7173 = vpop.f32.mrb[0].mxu0
    %7174 = vmatprep.mubr.f32.mxu0 0.0
    %v7175 = vand.u32 %v6240, 4294901760
    %7176 = vmatmul.mubr.f32.gmra.mrb[0].mxu0 %v7175
    %v7177 = vpop.f32.mrb[0].mxu0
    %v7178 = vadd.f32 %v7049, %v7177
    %v7179 = vpop.f32.mrb[0].mxu0
    %7180 = vmatprep.mubr.f32.mxu0 0.0
    %v7181 = vand.u32 %v6241, 4294901760
    %7182 = vmatmul.mubr.f32.gmra.mrb[0].mxu0 %v7181
    %v7183 = vpop.f32.mrb[0].mxu0
    %v7184 = vadd.f32 %v7055, %v7183
    %v7185 = vpop.f32.mrb[0].mxu0
    %7186 = vmatprep.mubr.f32.mxu0 0.0
    %v7187 = vand.u32 %v6242, 4294901760
    %7188 = vmatmul.mubr.f32.gmra.mrb[0].mxu0 %v7187
    %v7189 = vpop.f32.mrb[0].mxu0
    %v7190 = vadd.f32 %v7061, %v7189
    %v7191 = vpop.f32.mrb[0].mxu0
    %7192 = vmatprep.mubr.f32.mxu0 0.0
    %v7193 = vand.u32 %v6243, 4294901760
    %7194 = vmatmul.mubr.f32.gmra.mrb[0].mxu0 %v7193
    %v7195 = vpop.f32.mrb[0].mxu0
    %v7196 = vadd.f32 %v7067, %v7195
    %v7197 = vpop.f32.mrb[0].mxu0
    %7198 = vmatprep.mubr.f32.mxu0 0.0
    %v7199 = vand.u32 %v6244, 4294901760
    %7200 = vmatmul.mubr.f32.gmra.mrb[0].mxu0 %v7199
    %v7201 = vpop.f32.mrb[0].mxu0
    %v7202 = vadd.f32 %v7073, %v7201
    %v7203 = vpop.f32.mrb[0].mxu0
    %7204 = vmatprep.mubr.f32.mxu0 0.0
    %v7205 = vand.u32 %v6245, 4294901760
    %7206 = vmatmul.mubr.f32.gmra.mrb[0].mxu0 %v7205
    %v7207 = vpop.f32.mrb[0].mxu0
    %v7208 = vadd.f32 %v7079, %v7207
    %v7209 = vpop.f32.mrb[0].mxu0
    %7210 = vdwg.mxu0
    %v7211 = vmax.f32 %v7166, 0.0
    %v7212 = vmax.f32 %v7172, 0.0
    %v7213 = vmax.f32 %v7178, 0.0
    %v7214 = vmax.f32 %v7184, 0.0
    %v7215 = vmax.f32 %v7190, 0.0
    %v7216 = vmax.f32 %v7196, 0.0
    %v7217 = vmax.f32 %v7202, 0.0
    %v7218 = vmax.f32 %v7208, 0.0
    %v7219 = vld [vmem:[%s6] sm:$0xff]
    %v7220 = vld [vmem:[#allocation3] sm:$0x1]
    %v7222 = vlaneseq
    %v7223 = vshrl.u32 %v7222, 7
    %v7224 = vsub.s32 0, %v7223
    %v7225 = vrot.slane %v7220, %v7224
    %7226 = vset.pattern.permute.xlu0 0
    %7227 = vperm.xlu0 %7226, %v7225
    %v7228 = vpop.permute.xlu0 %7227
    %7230 = vmatprep.subr.mxu0 0.0
    %v7231 = vand.u32 %v7211, 4294901760
    %7232 = vmatpush1.xpose.msra.mxu0 %v7231
    %7233 = vmatprep.subr.mxu0 0.0
    %v7234 = vand.u32 %v7212, 4294901760
    %7235 = vmatpush1.xpose.msra.mxu0 %v7234
    %7236 = vmatprep.subr.mxu0 0.0
    %v7237 = vand.u32 %v7213, 4294901760
    %7238 = vmatpush1.xpose.msra.mxu0 %v7237
    %7239 = vmatprep.subr.mxu0 0.0
    %v7240 = vand.u32 %v7214, 4294901760
    %7241 = vmatpush1.xpose.msra.mxu0 %v7240
    %7242 = vmatprep.subr.mxu0 0.0
    %v7243 = vand.u32 %v7215, 4294901760
    %7244 = vmatpush1.xpose.msra.mxu0 %v7243
    %7245 = vmatprep.subr.mxu0 0.0
    %v7246 = vand.u32 %v7216, 4294901760
    %7247 = vmatpush1.xpose.msra.mxu0 %v7246
    %7248 = vmatprep.subr.mxu0 0.0
    %v7249 = vand.u32 %v7217, 4294901760
    %7250 = vmatpush1.xpose.msra.mxu0 %v7249
    %7251 = vmatprep.subr.mxu0 0.0
    %v7252 = vand.u32 %v7218, 4294901760
    %7253 = vmatpush1.xpose.msra.mxu0 %v7252
    %7254 = vmatprep.subr.mxu0 0.0
    %7255 = vmatpush1.xpose.msra.mxu0 0.0
    %7256 = vmatprep.subr.mxu0 0.0
    %7257 = vmatpush1.xpose.msra.mxu0 0.0
    %7258 = vmatprep.subr.mxu0 0.0
    %7259 = vmatpush1.xpose.msra.mxu0 0.0
    %7260 = vmatprep.subr.mxu0 0.0
    %7261 = vmatpush1.xpose.msra.mxu0 0.0
    %7262 = vmatprep.subr.mxu0 0.0
    %7263 = vmatpush1.xpose.msra.mxu0 0.0
    %7264 = vmatprep.subr.mxu0 0.0
    %7265 = vmatpush1.xpose.msra.mxu0 0.0
    %7266 = vmatprep.subr.mxu0 0.0
    %7267 = vmatpush1.xpose.msra.mxu0 0.0
    %7268 = vmatprep.subr.mxu0 0.0
    %7269 = vmatpush1.xpose.msra.mxu0 0.0
    %7270 = vmatprep.subr.mxu0 0.0
    %7271 = vmatpush1.xpose.msra.mxu0 0.0
    %7272 = vmatprep.subr.mxu0 0.0
    %7273 = vmatpush1.xpose.msra.mxu0 0.0
    %7274 = vmatprep.subr.mxu0 0.0
    %7275 = vmatpush1.xpose.msra.mxu0 0.0
    %7276 = vmatprep.subr.mxu0 0.0
    %7277 = vmatpush1.xpose.msra.mxu0 0.0
    %7278 = vmatprep.subr.mxu0 0.0
    %7279 = vmatpush1.xpose.msra.mxu0 0.0
    %7280 = vmatprep.subr.mxu0 0.0
    %7281 = vmatpush1.xpose.msra.mxu0 0.0
    %7282 = vmatprep.subr.mxu0 0.0
    %7283 = vmatpush1.xpose.msra.mxu0 0.0
    %7284 = vmatprep.subr.mxu0 0.0
    %7285 = vmatpush1.xpose.msra.mxu0 0.0
    %7286 = vmatprep.subr.mxu0 0.0
    %7287 = vmatpush1.xpose.msra.mxu0 0.0
    %7288 = vmatprep.subr.mxu0 0.0
    %7289 = vmatpush1.xpose.msra.mxu0 0.0
    %7290 = vmatprep.subr.mxu0 0.0
    %7291 = vmatpush1.xpose.msra.mxu0 0.0
    %7292 = vmatprep.subr.mxu0 0.0
    %7293 = vmatpush1.xpose.msra.mxu0 0.0
    %7294 = vmatprep.subr.mxu0 0.0
    %7295 = vmatpush1.xpose.msra.mxu0 0.0
    %7296 = vmatprep.subr.mxu0 0.0
    %7297 = vmatpush1.xpose.msra.mxu0 0.0
    %7298 = vmatprep.subr.mxu0 0.0
    %7299 = vmatpush1.xpose.msra.mxu0 0.0
    %7300 = vmatprep.subr.mxu0 0.0
    %7301 = vmatpush1.xpose.msra.mxu0 0.0
    %7302 = vmatprep.mubr.f32.mxu0 0.0
    %v7303 = vand.u32 %v7219, 4294901760
    %v7304 = vsub.f32 %v7219, %v7303
    %v7305 = vand.u32 %v7304, 4294901760
    %v7306 = vsub.f32 %v7304, %v7305
    %v7307 = vand.u32 %v7306, 4294901760
    %7308 = vmatmul.mubr.f32.gmra.mrb[0].mxu0 %v7307
    %v7309 = vpop.f32.mrb[0].mxu0
    %v7310 = vadd.f32 %v7228, %v7309
    %v7311 = vpop.f32.mrb[0].mxu0
    %7312 = vdwg.mxu0
    %7313 = vmatprep.subr.mxu0 0.0
    %v7314 = vand.u32 %v7211, 4294901760
    %v7315 = vsub.f32 %v7211, %v7314
    %v7316 = vand.u32 %v7315, 4294901760
    %v7317 = vsub.f32 %v7315, %v7316
    %v7318 = vand.u32 %v7317, 4294901760
    %7319 = vmatpush1.xpose.msra.mxu0 %v7318
    %7320 = vmatprep.subr.mxu0 0.0
    %v7321 = vand.u32 %v7212, 4294901760
    %v7322 = vsub.f32 %v7212, %v7321
    %v7323 = vand.u32 %v7322, 4294901760
    %v7324 = vsub.f32 %v7322, %v7323
    %v7325 = vand.u32 %v7324, 4294901760
    %7326 = vmatpush1.xpose.msra.mxu0 %v7325
    %7327 = vmatprep.subr.mxu0 0.0
    %v7328 = vand.u32 %v7213, 4294901760
    %v7329 = vsub.f32 %v7213, %v7328
    %v7330 = vand.u32 %v7329, 4294901760
    %v7331 = vsub.f32 %v7329, %v7330
    %v7332 = vand.u32 %v7331, 4294901760
    %7333 = vmatpush1.xpose.msra.mxu0 %v7332
    %7334 = vmatprep.subr.mxu0 0.0
    %v7335 = vand.u32 %v7214, 4294901760
    %v7336 = vsub.f32 %v7214, %v7335
    %v7337 = vand.u32 %v7336, 4294901760
    %v7338 = vsub.f32 %v7336, %v7337
    %v7339 = vand.u32 %v7338, 4294901760
    %7340 = vmatpush1.xpose.msra.mxu0 %v7339
    %7341 = vmatprep.subr.mxu0 0.0
    %v7342 = vand.u32 %v7215, 4294901760
    %v7343 = vsub.f32 %v7215, %v7342
    %v7344 = vand.u32 %v7343, 4294901760
    %v7345 = vsub.f32 %v7343, %v7344
    %v7346 = vand.u32 %v7345, 4294901760
    %7347 = vmatpush1.xpose.msra.mxu0 %v7346
    %7348 = vmatprep.subr.mxu0 0.0
    %v7349 = vand.u32 %v7216, 4294901760
    %v7350 = vsub.f32 %v7216, %v7349
    %v7351 = vand.u32 %v7350, 4294901760
    %v7352 = vsub.f32 %v7350, %v7351
    %v7353 = vand.u32 %v7352, 4294901760
    %7354 = vmatpush1.xpose.msra.mxu0 %v7353
    %7355 = vmatprep.subr.mxu0 0.0
    %v7356 = vand.u32 %v7217, 4294901760
    %v7357 = vsub.f32 %v7217, %v7356
    %v7358 = vand.u32 %v7357, 4294901760
    %v7359 = vsub.f32 %v7357, %v7358
    %v7360 = vand.u32 %v7359, 4294901760
    %7361 = vmatpush1.xpose.msra.mxu0 %v7360
    %7362 = vmatprep.subr.mxu0 0.0
    %v7363 = vand.u32 %v7218, 4294901760
    %v7364 = vsub.f32 %v7218, %v7363
    %v7365 = vand.u32 %v7364, 4294901760
    %v7366 = vsub.f32 %v7364, %v7365
    %v7367 = vand.u32 %v7366, 4294901760
    %7368 = vmatpush1.xpose.msra.mxu0 %v7367
    %7369 = vmatprep.subr.mxu0 0.0
    %7370 = vmatpush1.xpose.msra.mxu0 0.0
    %7371 = vmatprep.subr.mxu0 0.0
    %7372 = vmatpush1.xpose.msra.mxu0 0.0
    %7373 = vmatprep.subr.mxu0 0.0
    %7374 = vmatpush1.xpose.msra.mxu0 0.0
    %7375 = vmatprep.subr.mxu0 0.0
    %7376 = vmatpush1.xpose.msra.mxu0 0.0
    %7377 = vmatprep.subr.mxu0 0.0
    %7378 = vmatpush1.xpose.msra.mxu0 0.0
    %7379 = vmatprep.subr.mxu0 0.0
    %7380 = vmatpush1.xpose.msra.mxu0 0.0
    %7381 = vmatprep.subr.mxu0 0.0
    %7382 = vmatpush1.xpose.msra.mxu0 0.0
    %7383 = vmatprep.subr.mxu0 0.0
    %7384 = vmatpush1.xpose.msra.mxu0 0.0
    %7385 = vmatprep.subr.mxu0 0.0
    %7386 = vmatpush1.xpose.msra.mxu0 0.0
    %7387 = vmatprep.subr.mxu0 0.0
    %7388 = vmatpush1.xpose.msra.mxu0 0.0
    %7389 = vmatprep.subr.mxu0 0.0
    %7390 = vmatpush1.xpose.msra.mxu0 0.0
    %7391 = vmatprep.subr.mxu0 0.0
    %7392 = vmatpush1.xpose.msra.mxu0 0.0
    %7393 = vmatprep.subr.mxu0 0.0
    %7394 = vmatpush1.xpose.msra.mxu0 0.0
    %7395 = vmatprep.subr.mxu0 0.0
    %7396 = vmatpush1.xpose.msra.mxu0 0.0
    %7397 = vmatprep.subr.mxu0 0.0
    %7398 = vmatpush1.xpose.msra.mxu0 0.0
    %7399 = vmatprep.subr.mxu0 0.0
    %7400 = vmatpush1.xpose.msra.mxu0 0.0
    %7401 = vmatprep.subr.mxu0 0.0
    %7402 = vmatpush1.xpose.msra.mxu0 0.0
    %7403 = vmatprep.subr.mxu0 0.0
    %7404 = vmatpush1.xpose.msra.mxu0 0.0
    %7405 = vmatprep.subr.mxu0 0.0
    %7406 = vmatpush1.xpose.msra.mxu0 0.0
    %7407 = vmatprep.subr.mxu0 0.0
    %7408 = vmatpush1.xpose.msra.mxu0 0.0
    %7409 = vmatprep.subr.mxu0 0.0
    %7410 = vmatpush1.xpose.msra.mxu0 0.0
    %7411 = vmatprep.subr.mxu0 0.0
    %7412 = vmatpush1.xpose.msra.mxu0 0.0
    %7413 = vmatprep.subr.mxu0 0.0
    %7414 = vmatpush1.xpose.msra.mxu0 0.0
    %7415 = vmatprep.subr.mxu0 0.0
    %7416 = vmatpush1.xpose.msra.mxu0 0.0
    %7417 = vmatprep.mubr.f32.mxu0 0.0
    %v7418 = vand.u32 %v7219, 4294901760
    %7419 = vmatmul.mubr.f32.gmra.mrb[0].mxu0 %v7418
    %v7420 = vpop.f32.mrb[0].mxu0
    %v7421 = vadd.f32 %v7310, %v7420
    %v7422 = vpop.f32.mrb[0].mxu0
    %7423 = vdwg.mxu0
    %7424 = vmatprep.subr.mxu0 0.0
    %v7425 = vand.u32 %v7211, 4294901760
    %v7426 = vsub.f32 %v7211, %v7425
    %7427 = vmatpush1.xpose.msra.mxu0 %v7426
    %7428 = vmatprep.subr.mxu0 0.0
    %v7429 = vand.u32 %v7212, 4294901760
    %v7430 = vsub.f32 %v7212, %v7429
    %7431 = vmatpush1.xpose.msra.mxu0 %v7430
    %7432 = vmatprep.subr.mxu0 0.0
    %v7433 = vand.u32 %v7213, 4294901760
    %v7434 = vsub.f32 %v7213, %v7433
    %7435 = vmatpush1.xpose.msra.mxu0 %v7434
    %7436 = vmatprep.subr.mxu0 0.0
    %v7437 = vand.u32 %v7214, 4294901760
    %v7438 = vsub.f32 %v7214, %v7437
    %7439 = vmatpush1.xpose.msra.mxu0 %v7438
    %7440 = vmatprep.subr.mxu0 0.0
    %v7441 = vand.u32 %v7215, 4294901760
    %v7442 = vsub.f32 %v7215, %v7441
    %7443 = vmatpush1.xpose.msra.mxu0 %v7442
    %7444 = vmatprep.subr.mxu0 0.0
    %v7445 = vand.u32 %v7216, 4294901760
    %v7446 = vsub.f32 %v7216, %v7445
    %7447 = vmatpush1.xpose.msra.mxu0 %v7446
    %7448 = vmatprep.subr.mxu0 0.0
    %v7449 = vand.u32 %v7217, 4294901760
    %v7450 = vsub.f32 %v7217, %v7449
    %7451 = vmatpush1.xpose.msra.mxu0 %v7450
    %7452 = vmatprep.subr.mxu0 0.0
    %v7453 = vand.u32 %v7218, 4294901760
    %v7454 = vsub.f32 %v7218, %v7453
    %7455 = vmatpush1.xpose.msra.mxu0 %v7454
    %7456 = vmatprep.subr.mxu0 0.0
    %7457 = vmatpush1.xpose.msra.mxu0 0.0
    %7458 = vmatprep.subr.mxu0 0.0
    %7459 = vmatpush1.xpose.msra.mxu0 0.0
    %7460 = vmatprep.subr.mxu0 0.0
    %7461 = vmatpush1.xpose.msra.mxu0 0.0
    %7462 = vmatprep.subr.mxu0 0.0
    %7463 = vmatpush1.xpose.msra.mxu0 0.0
    %7464 = vmatprep.subr.mxu0 0.0
    %7465 = vmatpush1.xpose.msra.mxu0 0.0
    %7466 = vmatprep.subr.mxu0 0.0
    %7467 = vmatpush1.xpose.msra.mxu0 0.0
    %7468 = vmatprep.subr.mxu0 0.0
    %7469 = vmatpush1.xpose.msra.mxu0 0.0
    %7470 = vmatprep.subr.mxu0 0.0
    %7471 = vmatpush1.xpose.msra.mxu0 0.0
    %7472 = vmatprep.subr.mxu0 0.0
    %7473 = vmatpush1.xpose.msra.mxu0 0.0
    %7474 = vmatprep.subr.mxu0 0.0
    %7475 = vmatpush1.xpose.msra.mxu0 0.0
    %7476 = vmatprep.subr.mxu0 0.0
    %7477 = vmatpush1.xpose.msra.mxu0 0.0
    %7478 = vmatprep.subr.mxu0 0.0
    %7479 = vmatpush1.xpose.msra.mxu0 0.0
    %7480 = vmatprep.subr.mxu0 0.0
    %7481 = vmatpush1.xpose.msra.mxu0 0.0
    %7482 = vmatprep.subr.mxu0 0.0
    %7483 = vmatpush1.xpose.msra.mxu0 0.0
    %7484 = vmatprep.subr.mxu0 0.0
    %7485 = vmatpush1.xpose.msra.mxu0 0.0
    %7486 = vmatprep.subr.mxu0 0.0
    %7487 = vmatpush1.xpose.msra.mxu0 0.0
    %7488 = vmatprep.subr.mxu0 0.0
    %7489 = vmatpush1.xpose.msra.mxu0 0.0
    %7490 = vmatprep.subr.mxu0 0.0
    %7491 = vmatpush1.xpose.msra.mxu0 0.0
    %7492 = vmatprep.subr.mxu0 0.0
    %7493 = vmatpush1.xpose.msra.mxu0 0.0
    %7494 = vmatprep.subr.mxu0 0.0
    %7495 = vmatpush1.xpose.msra.mxu0 0.0
    %7496 = vmatprep.subr.mxu0 0.0
    %7497 = vmatpush1.xpose.msra.mxu0 0.0
    %7498 = vmatprep.subr.mxu0 0.0
    %7499 = vmatpush1.xpose.msra.mxu0 0.0
    %7500 = vmatprep.subr.mxu0 0.0
    %7501 = vmatpush1.xpose.msra.mxu0 0.0
    %7502 = vmatprep.subr.mxu0 0.0
    %7503 = vmatpush1.xpose.msra.mxu0 0.0
    %7504 = vmatprep.mubr.f32.mxu0 0.0
    %v7505 = vand.u32 %v7219, 4294901760
    %v7506 = vsub.f32 %v7219, %v7505
    %7507 = vmatmul.mubr.f32.gmra.mrb[0].mxu0 %v7506
    %v7508 = vpop.f32.mrb[0].mxu0
    %v7509 = vadd.f32 %v7421, %v7508
    %v7510 = vpop.f32.mrb[0].mxu0
    %7511 = vdwg.mxu0
    %7512 = vmatprep.subr.mxu0 0.0
    %v7513 = vand.u32 %v7211, 4294901760
    %7514 = vmatpush1.xpose.msra.mxu0 %v7513
    %7515 = vmatprep.subr.mxu0 0.0
    %v7516 = vand.u32 %v7212, 4294901760
    %7517 = vmatpush1.xpose.msra.mxu0 %v7516
    %7518 = vmatprep.subr.mxu0 0.0
    %v7519 = vand.u32 %v7213, 4294901760
    %7520 = vmatpush1.xpose.msra.mxu0 %v7519
    %7521 = vmatprep.subr.mxu0 0.0
    %v7522 = vand.u32 %v7214, 4294901760
    %7523 = vmatpush1.xpose.msra.mxu0 %v7522
    %7524 = vmatprep.subr.mxu0 0.0
    %v7525 = vand.u32 %v7215, 4294901760
    %7526 = vmatpush1.xpose.msra.mxu0 %v7525
    %7527 = vmatprep.subr.mxu0 0.0
    %v7528 = vand.u32 %v7216, 4294901760
    %7529 = vmatpush1.xpose.msra.mxu0 %v7528
    %7530 = vmatprep.subr.mxu0 0.0
    %v7531 = vand.u32 %v7217, 4294901760
    %7532 = vmatpush1.xpose.msra.mxu0 %v7531
    %7533 = vmatprep.subr.mxu0 0.0
    %v7534 = vand.u32 %v7218, 4294901760
    %7535 = vmatpush1.xpose.msra.mxu0 %v7534
    %7536 = vmatprep.subr.mxu0 0.0
    %7537 = vmatpush1.xpose.msra.mxu0 0.0
    %7538 = vmatprep.subr.mxu0 0.0
    %7539 = vmatpush1.xpose.msra.mxu0 0.0
    %7540 = vmatprep.subr.mxu0 0.0
    %7541 = vmatpush1.xpose.msra.mxu0 0.0
    %7542 = vmatprep.subr.mxu0 0.0
    %7543 = vmatpush1.xpose.msra.mxu0 0.0
    %7544 = vmatprep.subr.mxu0 0.0
    %7545 = vmatpush1.xpose.msra.mxu0 0.0
    %7546 = vmatprep.subr.mxu0 0.0
    %7547 = vmatpush1.xpose.msra.mxu0 0.0
    %7548 = vmatprep.subr.mxu0 0.0
    %7549 = vmatpush1.xpose.msra.mxu0 0.0
    %7550 = vmatprep.subr.mxu0 0.0
    %7551 = vmatpush1.xpose.msra.mxu0 0.0
    %7552 = vmatprep.subr.mxu0 0.0
    %7553 = vmatpush1.xpose.msra.mxu0 0.0
    %7554 = vmatprep.subr.mxu0 0.0
    %7555 = vmatpush1.xpose.msra.mxu0 0.0
    %7556 = vmatprep.subr.mxu0 0.0
    %7557 = vmatpush1.xpose.msra.mxu0 0.0
    %7558 = vmatprep.subr.mxu0 0.0
    %7559 = vmatpush1.xpose.msra.mxu0 0.0
    %7560 = vmatprep.subr.mxu0 0.0
    %7561 = vmatpush1.xpose.msra.mxu0 0.0
    %7562 = vmatprep.subr.mxu0 0.0
    %7563 = vmatpush1.xpose.msra.mxu0 0.0
    %7564 = vmatprep.subr.mxu0 0.0
    %7565 = vmatpush1.xpose.msra.mxu0 0.0
    %7566 = vmatprep.subr.mxu0 0.0
    %7567 = vmatpush1.xpose.msra.mxu0 0.0
    %7568 = vmatprep.subr.mxu0 0.0
    %7569 = vmatpush1.xpose.msra.mxu0 0.0
    %7570 = vmatprep.subr.mxu0 0.0
    %7571 = vmatpush1.xpose.msra.mxu0 0.0
    %7572 = vmatprep.subr.mxu0 0.0
    %7573 = vmatpush1.xpose.msra.mxu0 0.0
    %7574 = vmatprep.subr.mxu0 0.0
    %7575 = vmatpush1.xpose.msra.mxu0 0.0
    %7576 = vmatprep.subr.mxu0 0.0
    %7577 = vmatpush1.xpose.msra.mxu0 0.0
    %7578 = vmatprep.subr.mxu0 0.0
    %7579 = vmatpush1.xpose.msra.mxu0 0.0
    %7580 = vmatprep.subr.mxu0 0.0
    %7581 = vmatpush1.xpose.msra.mxu0 0.0
    %7582 = vmatprep.subr.mxu0 0.0
    %7583 = vmatpush1.xpose.msra.mxu0 0.0
    %7584 = vmatprep.mubr.f32.mxu0 0.0
    %v7585 = vand.u32 %v7219, 4294901760
    %v7586 = vsub.f32 %v7219, %v7585
    %v7587 = vand.u32 %v7586, 4294901760
    %7588 = vmatmul.mubr.f32.gmra.mrb[0].mxu0 %v7587
    %v7589 = vpop.f32.mrb[0].mxu0
    %v7590 = vadd.f32 %v7509, %v7589
    %v7591 = vpop.f32.mrb[0].mxu0
    %7592 = vdwg.mxu0
    %7593 = vmatprep.subr.mxu0 0.0
    %v7594 = vand.u32 %v7211, 4294901760
    %v7595 = vsub.f32 %v7211, %v7594
    %v7596 = vand.u32 %v7595, 4294901760
    %7597 = vmatpush1.xpose.msra.mxu0 %v7596
    %7598 = vmatprep.subr.mxu0 0.0
    %v7599 = vand.u32 %v7212, 4294901760
    %v7600 = vsub.f32 %v7212, %v7599
    %v7601 = vand.u32 %v7600, 4294901760
    %7602 = vmatpush1.xpose.msra.mxu0 %v7601
    %7603 = vmatprep.subr.mxu0 0.0
    %v7604 = vand.u32 %v7213, 4294901760
    %v7605 = vsub.f32 %v7213, %v7604
    %v7606 = vand.u32 %v7605, 4294901760
    %7607 = vmatpush1.xpose.msra.mxu0 %v7606
    %7608 = vmatprep.subr.mxu0 0.0
    %v7609 = vand.u32 %v7214, 4294901760
    %v7610 = vsub.f32 %v7214, %v7609
    %v7611 = vand.u32 %v7610, 4294901760
    %7612 = vmatpush1.xpose.msra.mxu0 %v7611
    %7613 = vmatprep.subr.mxu0 0.0
    %v7614 = vand.u32 %v7215, 4294901760
    %v7615 = vsub.f32 %v7215, %v7614
    %v7616 = vand.u32 %v7615, 4294901760
    %7617 = vmatpush1.xpose.msra.mxu0 %v7616
    %7618 = vmatprep.subr.mxu0 0.0
    %v7619 = vand.u32 %v7216, 4294901760
    %v7620 = vsub.f32 %v7216, %v7619
    %v7621 = vand.u32 %v7620, 4294901760
    %7622 = vmatpush1.xpose.msra.mxu0 %v7621
    %7623 = vmatprep.subr.mxu0 0.0
    %v7624 = vand.u32 %v7217, 4294901760
    %v7625 = vsub.f32 %v7217, %v7624
    %v7626 = vand.u32 %v7625, 4294901760
    %7627 = vmatpush1.xpose.msra.mxu0 %v7626
    %7628 = vmatprep.subr.mxu0 0.0
    %v7629 = vand.u32 %v7218, 4294901760
    %v7630 = vsub.f32 %v7218, %v7629
    %v7631 = vand.u32 %v7630, 4294901760
    %7632 = vmatpush1.xpose.msra.mxu0 %v7631
    %7633 = vmatprep.subr.mxu0 0.0
    %7634 = vmatpush1.xpose.msra.mxu0 0.0
    %7635 = vmatprep.subr.mxu0 0.0
    %7636 = vmatpush1.xpose.msra.mxu0 0.0
    %7637 = vmatprep.subr.mxu0 0.0
    %7638 = vmatpush1.xpose.msra.mxu0 0.0
    %7639 = vmatprep.subr.mxu0 0.0
    %7640 = vmatpush1.xpose.msra.mxu0 0.0
    %7641 = vmatprep.subr.mxu0 0.0
    %7642 = vmatpush1.xpose.msra.mxu0 0.0
    %7643 = vmatprep.subr.mxu0 0.0
    %7644 = vmatpush1.xpose.msra.mxu0 0.0
    %7645 = vmatprep.subr.mxu0 0.0
    %7646 = vmatpush1.xpose.msra.mxu0 0.0
    %7647 = vmatprep.subr.mxu0 0.0
    %7648 = vmatpush1.xpose.msra.mxu0 0.0
    %7649 = vmatprep.subr.mxu0 0.0
    %7650 = vmatpush1.xpose.msra.mxu0 0.0
    %7651 = vmatprep.subr.mxu0 0.0
    %7652 = vmatpush1.xpose.msra.mxu0 0.0
    %7653 = vmatprep.subr.mxu0 0.0
    %7654 = vmatpush1.xpose.msra.mxu0 0.0
    %7655 = vmatprep.subr.mxu0 0.0
    %7656 = vmatpush1.xpose.msra.mxu0 0.0
    %7657 = vmatprep.subr.mxu0 0.0
    %7658 = vmatpush1.xpose.msra.mxu0 0.0
    %7659 = vmatprep.subr.mxu0 0.0
    %7660 = vmatpush1.xpose.msra.mxu0 0.0
    %7661 = vmatprep.subr.mxu0 0.0
    %7662 = vmatpush1.xpose.msra.mxu0 0.0
    %7663 = vmatprep.subr.mxu0 0.0
    %7664 = vmatpush1.xpose.msra.mxu0 0.0
    %7665 = vmatprep.subr.mxu0 0.0
    %7666 = vmatpush1.xpose.msra.mxu0 0.0
    %7667 = vmatprep.subr.mxu0 0.0
    %7668 = vmatpush1.xpose.msra.mxu0 0.0
    %7669 = vmatprep.subr.mxu0 0.0
    %7670 = vmatpush1.xpose.msra.mxu0 0.0
    %7671 = vmatprep.subr.mxu0 0.0
    %7672 = vmatpush1.xpose.msra.mxu0 0.0
    %7673 = vmatprep.subr.mxu0 0.0
    %7674 = vmatpush1.xpose.msra.mxu0 0.0
    %7675 = vmatprep.subr.mxu0 0.0
    %7676 = vmatpush1.xpose.msra.mxu0 0.0
    %7677 = vmatprep.subr.mxu0 0.0
    %7678 = vmatpush1.xpose.msra.mxu0 0.0
    %7679 = vmatprep.subr.mxu0 0.0
    %7680 = vmatpush1.xpose.msra.mxu0 0.0
    %7681 = vmatprep.mubr.f32.mxu0 0.0
    %v7682 = vand.u32 %v7219, 4294901760
    %7683 = vmatmul.mubr.f32.gmra.mrb[0].mxu0 %v7682
    %v7684 = vpop.f32.mrb[0].mxu0
    %v7685 = vadd.f32 %v7590, %v7684
    %v7686 = vpop.f32.mrb[0].mxu0
    %7687 = vdwg.mxu0
    %7688 = vmatprep.subr.mxu0 0.0
    %v7689 = vand.u32 %v7211, 4294901760
    %7690 = vmatpush1.xpose.msra.mxu0 %v7689
    %7691 = vmatprep.subr.mxu0 0.0
    %v7692 = vand.u32 %v7212, 4294901760
    %7693 = vmatpush1.xpose.msra.mxu0 %v7692
    %7694 = vmatprep.subr.mxu0 0.0
    %v7695 = vand.u32 %v7213, 4294901760
    %7696 = vmatpush1.xpose.msra.mxu0 %v7695
    %7697 = vmatprep.subr.mxu0 0.0
    %v7698 = vand.u32 %v7214, 4294901760
    %7699 = vmatpush1.xpose.msra.mxu0 %v7698
    %7700 = vmatprep.subr.mxu0 0.0
    %v7701 = vand.u32 %v7215, 4294901760
    %7702 = vmatpush1.xpose.msra.mxu0 %v7701
    %7703 = vmatprep.subr.mxu0 0.0
    %v7704 = vand.u32 %v7216, 4294901760
    %7705 = vmatpush1.xpose.msra.mxu0 %v7704
    %7706 = vmatprep.subr.mxu0 0.0
    %v7707 = vand.u32 %v7217, 4294901760
    %7708 = vmatpush1.xpose.msra.mxu0 %v7707
    %7709 = vmatprep.subr.mxu0 0.0
    %v7710 = vand.u32 %v7218, 4294901760
    %7711 = vmatpush1.xpose.msra.mxu0 %v7710
    %7712 = vmatprep.subr.mxu0 0.0
    %7713 = vmatpush1.xpose.msra.mxu0 0.0
    %7714 = vmatprep.subr.mxu0 0.0
    %7715 = vmatpush1.xpose.msra.mxu0 0.0
    %7716 = vmatprep.subr.mxu0 0.0
    %7717 = vmatpush1.xpose.msra.mxu0 0.0
    %7718 = vmatprep.subr.mxu0 0.0
    %7719 = vmatpush1.xpose.msra.mxu0 0.0
    %7720 = vmatprep.subr.mxu0 0.0
    %7721 = vmatpush1.xpose.msra.mxu0 0.0
    %7722 = vmatprep.subr.mxu0 0.0
    %7723 = vmatpush1.xpose.msra.mxu0 0.0
    %7724 = vmatprep.subr.mxu0 0.0
    %7725 = vmatpush1.xpose.msra.mxu0 0.0
    %7726 = vmatprep.subr.mxu0 0.0
    %7727 = vmatpush1.xpose.msra.mxu0 0.0
    %7728 = vmatprep.subr.mxu0 0.0
    %7729 = vmatpush1.xpose.msra.mxu0 0.0
    %7730 = vmatprep.subr.mxu0 0.0
    %7731 = vmatpush1.xpose.msra.mxu0 0.0
    %7732 = vmatprep.subr.mxu0 0.0
    %7733 = vmatpush1.xpose.msra.mxu0 0.0
    %7734 = vmatprep.subr.mxu0 0.0
    %7735 = vmatpush1.xpose.msra.mxu0 0.0
    %7736 = vmatprep.subr.mxu0 0.0
    %7737 = vmatpush1.xpose.msra.mxu0 0.0
    %7738 = vmatprep.subr.mxu0 0.0
    %7739 = vmatpush1.xpose.msra.mxu0 0.0
    %7740 = vmatprep.subr.mxu0 0.0
    %7741 = vmatpush1.xpose.msra.mxu0 0.0
    %7742 = vmatprep.subr.mxu0 0.0
    %7743 = vmatpush1.xpose.msra.mxu0 0.0
    %7744 = vmatprep.subr.mxu0 0.0
    %7745 = vmatpush1.xpose.msra.mxu0 0.0
    %7746 = vmatprep.subr.mxu0 0.0
    %7747 = vmatpush1.xpose.msra.mxu0 0.0
    %7748 = vmatprep.subr.mxu0 0.0
    %7749 = vmatpush1.xpose.msra.mxu0 0.0
    %7750 = vmatprep.subr.mxu0 0.0
    %7751 = vmatpush1.xpose.msra.mxu0 0.0
    %7752 = vmatprep.subr.mxu0 0.0
    %7753 = vmatpush1.xpose.msra.mxu0 0.0
    %7754 = vmatprep.subr.mxu0 0.0
    %7755 = vmatpush1.xpose.msra.mxu0 0.0
    %7756 = vmatprep.subr.mxu0 0.0
    %7757 = vmatpush1.xpose.msra.mxu0 0.0
    %7758 = vmatprep.subr.mxu0 0.0
    %7759 = vmatpush1.xpose.msra.mxu0 0.0
    %7760 = vmatprep.mubr.f32.mxu0 0.0
    %v7761 = vand.u32 %v7219, 4294901760
    %7762 = vmatmul.mubr.f32.gmra.mrb[0].mxu0 %v7761
    %v7763 = vpop.f32.mrb[0].mxu0
    %v7764 = vadd.f32 %v7685, %v7763
    %v7765 = vpop.f32.mrb[0].mxu0
    %7766 = vdwg.mxu0
    %v7767 = vxor.u32 %v7764, 2147483648
    %v7768 = vmul.f32 %v7767, 1.442695
    %v7769 = vpow.pop %v7768
    %v7770 = vadd.f32 %v7769, 1.0
    %v7771 = vrcp.pop %v7770
    %v7772 = vmul.f32 1.0, %v7771
    %vm7773 = vcmask 523264
    %7774 = vst.msk [vmem:[#allocation12] sm:$0xff] %vm7773, %v7772
    // Predicated region
    $region50: #{tpu_custom_call.1} parent=1 // pred_check
      _
    $region51: #{tpu_custom_call.1} parent=1 // pred_check_branch
      %7776 = sbr.rel (0) target = $region53
    $region52: #{tpu_custom_call.1} parent=1 // pred_region
      %s7778 = ssub.s32 128, 128
      %7779 = vsyncadd [#allocation6], %s7778
      %s7781 = sshll.u32 [#allocation12], 4
      %s7782 = int_to_ptr.vmem [resolvable:$true] %s7781
      %7784 = dma.vmem_to_hbm [thread:$0]  %s7782, 128, %s8, [#allocation6]
    $region53: #{tpu_custom_call.1} parent=1 // pred_fallthru
      _
    // Predicated region
    $region54: #{tpu_custom_call.1} parent=1 // pred_check
      _
    $region55: #{tpu_custom_call.1} parent=1 // pred_check_branch
      %7786 = sbr.rel (0) target = $region57
    $region56: #{tpu_custom_call.1} parent=1 // pred_region
      %7787 = dma.done [#allocation6], 128
    $region57: #{tpu_custom_call.1} parent=1 // pred_fallthru
      _
    %7788 = vsyncpa [#allocation5], 1
    %7789 = vsyncpa [#allocation8], 1
    %7790 = vsyncpa [#allocation11], 1
    %7791 = vsyncpa [#allocation6], 1

</llo_original>
